<compile_context>
chip_gen: v6e
topology: v6e:2x2x1
jax: 0.10.0
libtpu: 0.0.40
codegen_flags: <defaults>
</compile_context>

<pallas_src>
import jax
import jax.numpy as jnp
from jax.experimental import pallas as pl
from jax.experimental.pallas import tpu as pltpu


# ------------------------------ Pallas kernel -------------------------------
def _make_ldw_conv_kernel(gpb, cin_g, cout_g, h, w, stride, ksz=3):
    """Direct grouped 3x3 conv (padding=1) for one (batch, group-chunk) step.

    Refs:
      w_ref    : (G*Cout_g*Cin_g*9,) f32 in SMEM  (masked weights, flattened)
      x_ref    : (gpb, Cin_g, H, W)       in VMEM (unpadded input block)
      o_ref    : (gpb, Cout_g, Ho, Wo)    in VMEM (output block)
      xpad_ref : (gpb, Cin_g, H+2, W+2)   VMEM scratch (halo-padded planes)
    """
    hp, wp = h + 2, w + 2
    ho = (h - 1) // stride + 1
    wo = (w - 1) // stride + 1
    wk = cin_g * ksz * ksz          # weights per output channel
    wg = cout_g * wk                # weights per group

    def kernel(w_ref, x_ref, o_ref, xpad_ref):
        gb = pl.program_id(1)

        # Build halo-padded planes in VMEM (zero border + interior copy).
        # This replaces the wrapper-side jnp.pad -> no extra HBM round trip.
        xpad_ref[...] = jnp.zeros(xpad_ref.shape, xpad_ref.dtype)
        for gl in range(gpb):
            for ci in range(cin_g):
                xpad_ref[gl, ci, 1:1 + h, 1:1 + w] = x_ref[gl, ci]

        gbase = gb * (gpb * wg)     # dynamic only when groups are chunked
        for gl in range(gpb):
            base = gbase + gl * wg
            # cout_g f32 accumulators stay live; each shifted tap is loaded
            # just before use, reused across all output channels, then dies.
            accs = [jnp.zeros((ho, wo), jnp.float32) for _ in range(cout_g)]
            for ci in range(cin_g):
                for ky in range(ksz):
                    for kx in range(ksz):
                        if stride == 1:
                            tap = xpad_ref[gl, ci, ky:ky + ho, kx:kx + wo]
                        else:
                            tap = xpad_ref[gl, ci,
                                           pl.ds(ky, ho, stride),
                                           pl.ds(kx, wo, stride)]
                        tap = tap.astype(jnp.float32)
                        off = ci * ksz * ksz + ky * ksz + kx
                        for co in range(cout_g):
                            wv = w_ref[base + co * wk + off]
                            accs[co] = accs[co] + wv * tap
            for co in range(cout_g):
                o_ref[gl, co] = accs[co].astype(o_ref.dtype)

    return kernel


def _choose_groups_per_block(groups, n_batch, cin_g, h, w, itemsize):
    """Largest divisor of `groups` whose per-step block stays small, while
    keeping >= 2 total grid steps so both v7x TensorCores get work."""
    budget = 6 * 1024 * 1024
    divisors = [d for d in range(1, groups + 1) if groups % d == 0]
    best = 1
    for d in divisors:
        if 3 * d * cin_g * (h + 2) * (w + 2) * itemsize <= budget:
            best = d
    if n_batch == 1 and best == groups and groups > 1:
        smaller = [d for d in divisors if d < groups]
        if smaller:
            best = smaller[-1]
    return best


def _ldw_grouped_conv3x3(x_g, w_flat, *, cout_g, groups_per_block, stride):
    """x_g: (N, G, Cin_g, H, W), w_flat: (G*Cout_g*Cin_g*9,) f32
       -> (N, G, Cout_g, Ho, Wo) in x_g.dtype (f32 accumulation)."""
    n_batch, groups, cin_g, h, w = x_g.shape
    gpb = groups_per_block
    assert groups % gpb == 0
    n_gblk = groups // gpb
    ho = (h - 1) // stride + 1
    wo = (w - 1) // stride + 1
    out_dtype = x_g.dtype

    kernel = _make_ldw_conv_kernel(gpb, cin_g, cout_g, h, w, stride)

    itemsize = jnp.dtype(x_g.dtype).itemsize
    in_blk = gpb * cin_g * h * w * itemsize
    out_blk = gpb * cout_g * ho * wo * jnp.dtype(out_dtype).itemsize
    pad_blk = gpb * cin_g * (h + 2) * (w + 2) * itemsize
    vmem_limit = int(min(2 * (in_blk + out_blk) + pad_blk + (4 << 20),
                         48 << 20))        # valid on v7x's 64 MiB VMEM too

    f = pl.pallas_call(
        kernel,
        out_shape=jax.ShapeDtypeStruct((n_batch, groups, cout_g, ho, wo),
                                       out_dtype),
        grid=(n_batch, n_gblk),
        in_specs=[
            # Tiny masked weights: whole flat 1-D array resident in SMEM
            # (scalar reads -> broadcast multiplies on the VPU).
            # TODO(synk): for very large group counts, chunk groups over the
            # second grid axis and give the weights a per-chunk BlockSpec.
            pl.BlockSpec(memory_space=pltpu.MemorySpace.SMEM),
            # Unpadded per-(n, group-chunk) input block; halo built in-kernel.
            pl.BlockSpec((None, gpb, cin_g, h, w),
                         lambda n, gb: (n, gb, 0, 0, 0)),
        ],
        out_specs=pl.BlockSpec((None, gpb, cout_g, ho, wo),
                               lambda n, gb: (n, gb, 0, 0, 0)),
        scratch_shapes=[pltpu.VMEM((gpb, cin_g, h + 2, w + 2), x_g.dtype)],
        compiler_params=pltpu.CompilerParams(
            dimension_semantics=("parallel", "parallel"),
            vmem_limit_bytes=vmem_limit,
        ),
    )
    return f(w_flat, x_g)


# --------------------------- module forward (glue) ---------------------------
def learned_dw_conv_forward(x, dwconv_weight, mask_dw, *, groups, stride=1):
    """Learned_Dw_Conv.forward for global_progress < 45:
         weight = dwconv.weight * mask_dw
         return F.conv2d(x, weight, None, stride, 1, 1, groups)
       (the PyTorch forward hard-codes padding=1 on this branch).
       Activations keep their input dtype (pass bf16 x for lower HBM traffic
       if downstream tolerates it); accumulation is always f32."""
    w = (dwconv_weight * mask_dw).astype(jnp.float32)   # (Cout, Cin_g, 3, 3)
    n_batch, c_in, h, wdt = x.shape
    c_out, cin_g, kh, kw = w.shape
    g = groups
    cout_g = c_out // g
    assert c_in == cin_g * g and c_out == cout_g * g and kh == 3 and kw == 3

    # Channel split into groups is a pure view (no HBM copy); no pad, no cast.
    x_g = x.reshape(n_batch, g, cin_g, h, wdt)
    w_flat = w.reshape(-1)                               # (G*Cout_g*Cin_g*9,)

    gpb = _choose_groups_per_block(g, n_batch, cin_g, h, wdt,
                                   jnp.dtype(x.dtype).itemsize)
    out = _ldw_grouped_conv3x3(x_g, w_flat, cout_g=cout_g,
                               groups_per_block=gpb, stride=stride)
    ho, wo = out.shape[-2], out.shape[-1]
    return out.reshape(n_batch, c_out, ho, wo)


def init_learned_dw_conv(key, in_channels, out_channels, cardinality):
    """Parameter init matching the module's __init__ shapes (progress<45 path)."""
    group = out_channels // cardinality
    in_channel_per_group = in_channels // group
    dwconv_weight = 0.1 * jax.random.normal(
        key, (out_channels, in_channel_per_group, 3, 3), dtype=jnp.float32)
    mask_dw = jnp.ones_like(dwconv_weight)               # buffer of ones at init
    return dict(dwconv_weight=dwconv_weight, mask_dw=mask_dw, group=group)


if __name__ == "__main__":
    # Shapes consistent with the module's constraints:
    #   in_channels=8, out_channels=8, cardinality=4 -> group=2, Cin_g=4, Cout_g=4
    N, C_in, C_out, H, W = 2, 8, 8, 16, 16
    cardinality = 4
    stride = 1                     # dropout_rate must be 0 (self.drop undefined)

    key = jax.random.PRNGKey(0)
    kx, kp = jax.random.split(key)
    x = jax.random.normal(kx, (N, C_in, H, W), dtype=jnp.float32)
    params = init_learned_dw_conv(kp, C_in, C_out, cardinality)

    # Exercise the mask path (as after a pruning step): zero one (out,in) pair
    # per group, like _dropping_group does.
    mask_dw = params["mask_dw"].at[1, 2].set(0.0).at[5, 0].set(0.0)

    out = learned_dw_conv_forward(
        x, params["dwconv_weight"], mask_dw,
        groups=params["group"], stride=stride)
    out = jax.block_until_ready(out)

    # Reference: identical math (grouped 3x3 conv, padding=1, f32 accumulation).
    ref = jax.lax.conv_general_dilated(
        x, params["dwconv_weight"] * mask_dw,
        window_strides=(stride, stride), padding=((1, 1), (1, 1)),
        dimension_numbers=("NCHW", "OIHW", "NCHW"),
        feature_group_count=params["group"],
        precision=jax.lax.Precision.HIGHEST,
        preferred_element_type=jnp.float32)
    ref = jax.block_until_ready(ref)

    assert out.shape == (N, C_out, H, W)
    assert float(jnp.max(jnp.abs(out - ref))) < 1e-3
    print("KERNEL_OK")
</pallas_src>

<mosaic_0001>
module attributes {stable_mosaic.version = 11 : i64} {
  func.func @kernel(%arg0: i32, %arg1: i32, %arg2: memref<288xf32, #tpu.memory_space<smem>>, %arg3: memref<1x2x4x16x16xf32, #tpu.memory_space<vmem>>, %arg4: memref<1x2x4x16x16xf32, #tpu.memory_space<vmem>>, %arg5: memref<2x4x18x18xf32, #tpu.memory_space<vmem>>) attributes {dimension_semantics = [#tpu.dimension_semantics<parallel>, #tpu.dimension_semantics<parallel>], iteration_bounds = array<i64: 2, 1>, scalar_prefetch = 0 : i64, scratch_operands = 1 : i64, tpu.core_type = #tpu.core_type<tc>, window_params = [{transform_indices = @transform_0, window_bounds = array<i64: 288>}, {transform_indices = @transform_1, window_bounds = array<i64: 1, 2, 4, 16, 16>}, {transform_indices = @transform_2, window_bounds = array<i64: 1, 2, 4, 16, 16>}]} {
    %cst = arith.constant 0.000000e+00 : f32
    %0 = vector.broadcast %cst : f32 to vector<2x4x18x18xf32>
    %c0 = arith.constant 0 : index
    %c0_0 = arith.constant 0 : index
    %c0_1 = arith.constant 0 : index
    %c0_2 = arith.constant 0 : index
    %1 = vector.load %arg5[%c0, %c0_0, %c0_1, %c0_2] : memref<2x4x18x18xf32, #tpu.memory_space<vmem>>, vector<2x4x18x18xf32>
    tpu.vector_store %arg5[%c0, %c0_0, %c0_1, %c0_2], %0 {strides = array<i32>} : memref<2x4x18x18xf32, #tpu.memory_space<vmem>>, vector<2x4x18x18xf32>,
    %c0_3 = arith.constant 0 : index
    %c0_4 = arith.constant 0 : index
    %c0_5 = arith.constant 0 : index
    %c0_6 = arith.constant 0 : index
    %c0_7 = arith.constant 0 : index
    %2 = vector.load %arg3[%c0_3, %c0_4, %c0_5, %c0_6, %c0_7] : memref<1x2x4x16x16xf32, #tpu.memory_space<vmem>>, vector<1x1x1x16x16xf32>
    %3 = vector.shape_cast %2 : vector<1x1x1x16x16xf32> to vector<16x16xf32>
    %c0_8 = arith.constant 0 : index
    %c0_9 = arith.constant 0 : index
    %c1 = arith.constant 1 : index
    %c1_10 = arith.constant 1 : index
    %4 = vector.load %arg5[%c0_8, %c0_9, %c1, %c1_10] : memref<2x4x18x18xf32, #tpu.memory_space<vmem>>, vector<1x1x16x16xf32>
    %5 = vector.shape_cast %4 : vector<1x1x16x16xf32> to vector<16x16xf32>
    %6 = vector.shape_cast %3 : vector<16x16xf32> to vector<1x1x16x16xf32>
    tpu.vector_store %arg5[%c0_8, %c0_9, %c1, %c1_10], %6 {strides = array<i32>} : memref<2x4x18x18xf32, #tpu.memory_space<vmem>>, vector<1x1x16x16xf32>,
    %c0_11 = arith.constant 0 : index
    %c0_12 = arith.constant 0 : index
    %c1_13 = arith.constant 1 : index
    %c0_14 = arith.constant 0 : index
    %c0_15 = arith.constant 0 : index
    %7 = vector.load %arg3[%c0_11, %c0_12, %c1_13, %c0_14, %c0_15] : memref<1x2x4x16x16xf32, #tpu.memory_space<vmem>>, vector<1x1x1x16x16xf32>
    %8 = vector.shape_cast %7 : vector<1x1x1x16x16xf32> to vector<16x16xf32>
    %c0_16 = arith.constant 0 : index
    %c1_17 = arith.constant 1 : index
    %c1_18 = arith.constant 1 : index
    %c1_19 = arith.constant 1 : index
    %9 = vector.load %arg5[%c0_16, %c1_17, %c1_18, %c1_19] : memref<2x4x18x18xf32, #tpu.memory_space<vmem>>, vector<1x1x16x16xf32>
    %10 = vector.shape_cast %9 : vector<1x1x16x16xf32> to vector<16x16xf32>
    %11 = vector.shape_cast %8 : vector<16x16xf32> to vector<1x1x16x16xf32>
    tpu.vector_store %arg5[%c0_16, %c1_17, %c1_18, %c1_19], %11 {strides = array<i32>} : memref<2x4x18x18xf32, #tpu.memory_space<vmem>>, vector<1x1x16x16xf32>,
    %c0_20 = arith.constant 0 : index
    %c0_21 = arith.constant 0 : index
    %c2 = arith.constant 2 : index
    %c0_22 = arith.constant 0 : index
    %c0_23 = arith.constant 0 : index
    %12 = vector.load %arg3[%c0_20, %c0_21, %c2, %c0_22, %c0_23] : memref<1x2x4x16x16xf32, #tpu.memory_space<vmem>>, vector<1x1x1x16x16xf32>
    %13 = vector.shape_cast %12 : vector<1x1x1x16x16xf32> to vector<16x16xf32>
    %c0_24 = arith.constant 0 : index
    %c2_25 = arith.constant 2 : index
    %c1_26 = arith.constant 1 : index
    %c1_27 = arith.constant 1 : index
    %14 = vector.load %arg5[%c0_24, %c2_25, %c1_26, %c1_27] : memref<2x4x18x18xf32, #tpu.memory_space<vmem>>, vector<1x1x16x16xf32>
    %15 = vector.shape_cast %14 : vector<1x1x16x16xf32> to vector<16x16xf32>
    %16 = vector.shape_cast %13 : vector<16x16xf32> to vector<1x1x16x16xf32>
    tpu.vector_store %arg5[%c0_24, %c2_25, %c1_26, %c1_27], %16 {strides = array<i32>} : memref<2x4x18x18xf32, #tpu.memory_space<vmem>>, vector<1x1x16x16xf32>,
    %c0_28 = arith.constant 0 : index
    %c0_29 = arith.constant 0 : index
    %c3 = arith.constant 3 : index
    %c0_30 = arith.constant 0 : index
    %c0_31 = arith.constant 0 : index
    %17 = vector.load %arg3[%c0_28, %c0_29, %c3, %c0_30, %c0_31] : memref<1x2x4x16x16xf32, #tpu.memory_space<vmem>>, vector<1x1x1x16x16xf32>
    %18 = vector.shape_cast %17 : vector<1x1x1x16x16xf32> to vector<16x16xf32>
    %c0_32 = arith.constant 0 : index
    %c3_33 = arith.constant 3 : index
    %c1_34 = arith.constant 1 : index
    %c1_35 = arith.constant 1 : index
    %19 = vector.load %arg5[%c0_32, %c3_33, %c1_34, %c1_35] : memref<2x4x18x18xf32, #tpu.memory_space<vmem>>, vector<1x1x16x16xf32>
    %20 = vector.shape_cast %19 : vector<1x1x16x16xf32> to vector<16x16xf32>
    %21 = vector.shape_cast %18 : vector<16x16xf32> to vector<1x1x16x16xf32>
    tpu.vector_store %arg5[%c0_32, %c3_33, %c1_34, %c1_35], %21 {strides = array<i32>} : memref<2x4x18x18xf32, #tpu.memory_space<vmem>>, vector<1x1x16x16xf32>,
    %c0_36 = arith.constant 0 : index
    %c1_37 = arith.constant 1 : index
    %c0_38 = arith.constant 0 : index
    %c0_39 = arith.constant 0 : index
    %c0_40 = arith.constant 0 : index
    %22 = vector.load %arg3[%c0_36, %c1_37, %c0_38, %c0_39, %c0_40] : memref<1x2x4x16x16xf32, #tpu.memory_space<vmem>>, vector<1x1x1x16x16xf32>
    %23 = vector.shape_cast %22 : vector<1x1x1x16x16xf32> to vector<16x16xf32>
    %c1_41 = arith.constant 1 : index
    %c0_42 = arith.constant 0 : index
    %c1_43 = arith.constant 1 : index
    %c1_44 = arith.constant 1 : index
    %24 = vector.load %arg5[%c1_41, %c0_42, %c1_43, %c1_44] : memref<2x4x18x18xf32, #tpu.memory_space<vmem>>, vector<1x1x16x16xf32>
    %25 = vector.shape_cast %24 : vector<1x1x16x16xf32> to vector<16x16xf32>
    %26 = vector.shape_cast %23 : vector<16x16xf32> to vector<1x1x16x16xf32>
    tpu.vector_store %arg5[%c1_41, %c0_42, %c1_43, %c1_44], %26 {strides = array<i32>} : memref<2x4x18x18xf32, #tpu.memory_space<vmem>>, vector<1x1x16x16xf32>,
    %c0_45 = arith.constant 0 : index
    %c1_46 = arith.constant 1 : index
    %c1_47 = arith.constant 1 : index
    %c0_48 = arith.constant 0 : index
    %c0_49 = arith.constant 0 : index
    %27 = vector.load %arg3[%c0_45, %c1_46, %c1_47, %c0_48, %c0_49] : memref<1x2x4x16x16xf32, #tpu.memory_space<vmem>>, vector<1x1x1x16x16xf32>
    %28 = vector.shape_cast %27 : vector<1x1x1x16x16xf32> to vector<16x16xf32>
    %c1_50 = arith.constant 1 : index
    %c1_51 = arith.constant 1 : index
    %c1_52 = arith.constant 1 : index
    %c1_53 = arith.constant 1 : index
    %29 = vector.load %arg5[%c1_50, %c1_51, %c1_52, %c1_53] : memref<2x4x18x18xf32, #tpu.memory_space<vmem>>, vector<1x1x16x16xf32>
    %30 = vector.shape_cast %29 : vector<1x1x16x16xf32> to vector<16x16xf32>
    %31 = vector.shape_cast %28 : vector<16x16xf32> to vector<1x1x16x16xf32>
    tpu.vector_store %arg5[%c1_50, %c1_51, %c1_52, %c1_53], %31 {strides = array<i32>} : memref<2x4x18x18xf32, #tpu.memory_space<vmem>>, vector<1x1x16x16xf32>,
    %c0_54 = arith.constant 0 : index
    %c1_55 = arith.constant 1 : index
    %c2_56 = arith.constant 2 : index
    %c0_57 = arith.constant 0 : index
    %c0_58 = arith.constant 0 : index
    %32 = vector.load %arg3[%c0_54, %c1_55, %c2_56, %c0_57, %c0_58] : memref<1x2x4x16x16xf32, #tpu.memory_space<vmem>>, vector<1x1x1x16x16xf32>
    %33 = vector.shape_cast %32 : vector<1x1x1x16x16xf32> to vector<16x16xf32>
    %c1_59 = arith.constant 1 : index
    %c2_60 = arith.constant 2 : index
    %c1_61 = arith.constant 1 : index
    %c1_62 = arith.constant 1 : index
    %34 = vector.load %arg5[%c1_59, %c2_60, %c1_61, %c1_62] : memref<2x4x18x18xf32, #tpu.memory_space<vmem>>, vector<1x1x16x16xf32>
    %35 = vector.shape_cast %34 : vector<1x1x16x16xf32> to vector<16x16xf32>
    %36 = vector.shape_cast %33 : vector<16x16xf32> to vector<1x1x16x16xf32>
    tpu.vector_store %arg5[%c1_59, %c2_60, %c1_61, %c1_62], %36 {strides = array<i32>} : memref<2x4x18x18xf32, #tpu.memory_space<vmem>>, vector<1x1x16x16xf32>,
    %c0_63 = arith.constant 0 : index
    %c1_64 = arith.constant 1 : index
    %c3_65 = arith.constant 3 : index
    %c0_66 = arith.constant 0 : index
    %c0_67 = arith.constant 0 : index
    %37 = vector.load %arg3[%c0_63, %c1_64, %c3_65, %c0_66, %c0_67] : memref<1x2x4x16x16xf32, #tpu.memory_space<vmem>>, vector<1x1x1x16x16xf32>
    %38 = vector.shape_cast %37 : vector<1x1x1x16x16xf32> to vector<16x16xf32>
    %c1_68 = arith.constant 1 : index
    %c3_69 = arith.constant 3 : index
    %c1_70 = arith.constant 1 : index
    %c1_71 = arith.constant 1 : index
    %39 = vector.load %arg5[%c1_68, %c3_69, %c1_70, %c1_71] : memref<2x4x18x18xf32, #tpu.memory_space<vmem>>, vector<1x1x16x16xf32>
    %40 = vector.shape_cast %39 : vector<1x1x16x16xf32> to vector<16x16xf32>
    %41 = vector.shape_cast %38 : vector<16x16xf32> to vector<1x1x16x16xf32>
    tpu.vector_store %arg5[%c1_68, %c3_69, %c1_70, %c1_71], %41 {strides = array<i32>} : memref<2x4x18x18xf32, #tpu.memory_space<vmem>>, vector<1x1x16x16xf32>,
    %c288_i32 = arith.constant 288 : i32
    %42 = arith.muli %arg1, %c288_i32 : i32
    %c0_i32 = arith.constant 0 : i32
    %43 = arith.addi %42, %c0_i32 : i32
    %cst_72 = arith.constant 0.000000e+00 : f32
    %44 = vector.broadcast %cst_72 : f32 to vector<16x16xf32>
    %cst_73 = arith.constant 0.000000e+00 : f32
    %45 = vector.broadcast %cst_73 : f32 to vector<16x16xf32>
    %cst_74 = arith.constant 0.000000e+00 : f32
    %46 = vector.broadcast %cst_74 : f32 to vector<16x16xf32>
    %cst_75 = arith.constant 0.000000e+00 : f32
    %47 = vector.broadcast %cst_75 : f32 to vector<16x16xf32>
    %c0_76 = arith.constant 0 : index
    %c0_77 = arith.constant 0 : index
    %c0_78 = arith.constant 0 : index
    %c0_79 = arith.constant 0 : index
    %48 = vector.load %arg5[%c0_76, %c0_77, %c0_78, %c0_79] : memref<2x4x18x18xf32, #tpu.memory_space<vmem>>, vector<1x1x16x16xf32>
    %49 = vector.shape_cast %48 : vector<1x1x16x16xf32> to vector<16x16xf32>
    %c0_i32_80 = arith.constant 0 : i32
    %50 = arith.addi %43, %c0_i32_80 : i32
    %c0_i32_81 = arith.constant 0 : i32
    %51 = arith.addi %50, %c0_i32_81 : i32
    %52 = arith.index_cast %51 : i32 to index
    %53 = memref.load %arg2[%52] : memref<288xf32, #tpu.memory_space<smem>>
    %54 = vector.broadcast %53 : f32 to vector<16x16xf32>
    %55 = arith.mulf %54, %49 : vector<16x16xf32>
    %56 = arith.addf %44, %55 : vector<16x16xf32>
    %c36_i32 = arith.constant 36 : i32
    %57 = arith.addi %43, %c36_i32 : i32
    %c0_i32_82 = arith.constant 0 : i32
    %58 = arith.addi %57, %c0_i32_82 : i32
    %59 = arith.index_cast %58 : i32 to index
    %60 = memref.load %arg2[%59] : memref<288xf32, #tpu.memory_space<smem>>
    %61 = vector.broadcast %60 : f32 to vector<16x16xf32>
    %62 = arith.mulf %61, %49 : vector<16x16xf32>
    %63 = arith.addf %45, %62 : vector<16x16xf32>
    %c72_i32 = arith.constant 72 : i32
    %64 = arith.addi %43, %c72_i32 : i32
    %c0_i32_83 = arith.constant 0 : i32
    %65 = arith.addi %64, %c0_i32_83 : i32
    %66 = arith.index_cast %65 : i32 to index
    %67 = memref.load %arg2[%66] : memref<288xf32, #tpu.memory_space<smem>>
    %68 = vector.broadcast %67 : f32 to vector<16x16xf32>
    %69 = arith.mulf %68, %49 : vector<16x16xf32>
    %70 = arith.addf %46, %69 : vector<16x16xf32>
    %c108_i32 = arith.constant 108 : i32
    %71 = arith.addi %43, %c108_i32 : i32
    %c0_i32_84 = arith.constant 0 : i32
    %72 = arith.addi %71, %c0_i32_84 : i32
    %73 = arith.index_cast %72 : i32 to index
    %74 = memref.load %arg2[%73] : memref<288xf32, #tpu.memory_space<smem>>
    %75 = vector.broadcast %74 : f32 to vector<16x16xf32>
    %76 = arith.mulf %75, %49 : vector<16x16xf32>
    %77 = arith.addf %47, %76 : vector<16x16xf32>
    %c0_85 = arith.constant 0 : index
    %c0_86 = arith.constant 0 : index
    %c0_87 = arith.constant 0 : index
    %c1_88 = arith.constant 1 : index
    %78 = vector.load %arg5[%c0_85, %c0_86, %c0_87, %c1_88] : memref<2x4x18x18xf32, #tpu.memory_space<vmem>>, vector<1x1x16x16xf32>
    %79 = vector.shape_cast %78 : vector<1x1x16x16xf32> to vector<16x16xf32>
    %c0_i32_89 = arith.constant 0 : i32
    %80 = arith.addi %43, %c0_i32_89 : i32
    %c1_i32 = arith.constant 1 : i32
    %81 = arith.addi %80, %c1_i32 : i32
    %82 = arith.index_cast %81 : i32 to index
    %83 = memref.load %arg2[%82] : memref<288xf32, #tpu.memory_space<smem>>
    %84 = vector.broadcast %83 : f32 to vector<16x16xf32>
    %85 = arith.mulf %84, %79 : vector<16x16xf32>
    %86 = arith.addf %56, %85 : vector<16x16xf32>
    %c36_i32_90 = arith.constant 36 : i32
    %87 = arith.addi %43, %c36_i32_90 : i32
    %c1_i32_91 = arith.constant 1 : i32
    %88 = arith.addi %87, %c1_i32_91 : i32
    %89 = arith.index_cast %88 : i32 to index
    %90 = memref.load %arg2[%89] : memref<288xf32, #tpu.memory_space<smem>>
    %91 = vector.broadcast %90 : f32 to vector<16x16xf32>
    %92 = arith.mulf %91, %79 : vector<16x16xf32>
    %93 = arith.addf %63, %92 : vector<16x16xf32>
    %c72_i32_92 = arith.constant 72 : i32
    %94 = arith.addi %43, %c72_i32_92 : i32
    %c1_i32_93 = arith.constant 1 : i32
    %95 = arith.addi %94, %c1_i32_93 : i32
    %96 = arith.index_cast %95 : i32 to index
    %97 = memref.load %arg2[%96] : memref<288xf32, #tpu.memory_space<smem>>
    %98 = vector.broadcast %97 : f32 to vector<16x16xf32>
    %99 = arith.mulf %98, %79 : vector<16x16xf32>
    %100 = arith.addf %70, %99 : vector<16x16xf32>
    %c108_i32_94 = arith.constant 108 : i32
    %101 = arith.addi %43, %c108_i32_94 : i32
    %c1_i32_95 = arith.constant 1 : i32
    %102 = arith.addi %101, %c1_i32_95 : i32
    %103 = arith.index_cast %102 : i32 to index
    %104 = memref.load %arg2[%103] : memref<288xf32, #tpu.memory_space<smem>>
    %105 = vector.broadcast %104 : f32 to vector<16x16xf32>
    %106 = arith.mulf %105, %79 : vector<16x16xf32>
    %107 = arith.addf %77, %106 : vector<16x16xf32>
    %c0_96 = arith.constant 0 : index
    %c0_97 = arith.constant 0 : index
    %c0_98 = arith.constant 0 : index
    %c2_99 = arith.constant 2 : index
    %108 = vector.load %arg5[%c0_96, %c0_97, %c0_98, %c2_99] : memref<2x4x18x18xf32, #tpu.memory_space<vmem>>, vector<1x1x16x16xf32>
    %109 = vector.shape_cast %108 : vector<1x1x16x16xf32> to vector<16x16xf32>
    %c0_i32_100 = arith.constant 0 : i32
    %110 = arith.addi %43, %c0_i32_100 : i32
    %c2_i32 = arith.constant 2 : i32
    %111 = arith.addi %110, %c2_i32 : i32
    %112 = arith.index_cast %111 : i32 to index
    %113 = memref.load %arg2[%112] : memref<288xf32, #tpu.memory_space<smem>>
    %114 = vector.broadcast %113 : f32 to vector<16x16xf32>
    %115 = arith.mulf %114, %109 : vector<16x16xf32>
    %116 = arith.addf %86, %115 : vector<16x16xf32>
    %c36_i32_101 = arith.constant 36 : i32
    %117 = arith.addi %43, %c36_i32_101 : i32
    %c2_i32_102 = arith.constant 2 : i32
    %118 = arith.addi %117, %c2_i32_102 : i32
    %119 = arith.index_cast %118 : i32 to index
    %120 = memref.load %arg2[%119] : memref<288xf32, #tpu.memory_space<smem>>
    %121 = vector.broadcast %120 : f32 to vector<16x16xf32>
    %122 = arith.mulf %121, %109 : vector<16x16xf32>
    %123 = arith.addf %93, %122 : vector<16x16xf32>
    %c72_i32_103 = arith.constant 72 : i32
    %124 = arith.addi %43, %c72_i32_103 : i32
    %c2_i32_104 = arith.constant 2 : i32
    %125 = arith.addi %124, %c2_i32_104 : i32
    %126 = arith.index_cast %125 : i32 to index
    %127 = memref.load %arg2[%126] : memref<288xf32, #tpu.memory_space<smem>>
    %128 = vector.broadcast %127 : f32 to vector<16x16xf32>
    %129 = arith.mulf %128, %109 : vector<16x16xf32>
    %130 = arith.addf %100, %129 : vector<16x16xf32>
    %c108_i32_105 = arith.constant 108 : i32
    %131 = arith.addi %43, %c108_i32_105 : i32
    %c2_i32_106 = arith.constant 2 : i32
    %132 = arith.addi %131, %c2_i32_106 : i32
    %133 = arith.index_cast %132 : i32 to index
    %134 = memref.load %arg2[%133] : memref<288xf32, #tpu.memory_space<smem>>
    %135 = vector.broadcast %134 : f32 to vector<16x16xf32>
    %136 = arith.mulf %135, %109 : vector<16x16xf32>
    %137 = arith.addf %107, %136 : vector<16x16xf32>
    %c0_107 = arith.constant 0 : index
    %c0_108 = arith.constant 0 : index
    %c1_109 = arith.constant 1 : index
    %c0_110 = arith.constant 0 : index
    %138 = vector.load %arg5[%c0_107, %c0_108, %c1_109, %c0_110] : memref<2x4x18x18xf32, #tpu.memory_space<vmem>>, vector<1x1x16x16xf32>
    %139 = vector.shape_cast %138 : vector<1x1x16x16xf32> to vector<16x16xf32>
    %c0_i32_111 = arith.constant 0 : i32
    %140 = arith.addi %43, %c0_i32_111 : i32
    %c3_i32 = arith.constant 3 : i32
    %141 = arith.addi %140, %c3_i32 : i32
    %142 = arith.index_cast %141 : i32 to index
    %143 = memref.load %arg2[%142] : memref<288xf32, #tpu.memory_space<smem>>
    %144 = vector.broadcast %143 : f32 to vector<16x16xf32>
    %145 = arith.mulf %144, %139 : vector<16x16xf32>
    %146 = arith.addf %116, %145 : vector<16x16xf32>
    %c36_i32_112 = arith.constant 36 : i32
    %147 = arith.addi %43, %c36_i32_112 : i32
    %c3_i32_113 = arith.constant 3 : i32
    %148 = arith.addi %147, %c3_i32_113 : i32
    %149 = arith.index_cast %148 : i32 to index
    %150 = memref.load %arg2[%149] : memref<288xf32, #tpu.memory_space<smem>>
    %151 = vector.broadcast %150 : f32 to vector<16x16xf32>
    %152 = arith.mulf %151, %139 : vector<16x16xf32>
    %153 = arith.addf %123, %152 : vector<16x16xf32>
    %c72_i32_114 = arith.constant 72 : i32
    %154 = arith.addi %43, %c72_i32_114 : i32
    %c3_i32_115 = arith.constant 3 : i32
    %155 = arith.addi %154, %c3_i32_115 : i32
    %156 = arith.index_cast %155 : i32 to index
    %157 = memref.load %arg2[%156] : memref<288xf32, #tpu.memory_space<smem>>
    %158 = vector.broadcast %157 : f32 to vector<16x16xf32>
    %159 = arith.mulf %158, %139 : vector<16x16xf32>
    %160 = arith.addf %130, %159 : vector<16x16xf32>
    %c108_i32_116 = arith.constant 108 : i32
    %161 = arith.addi %43, %c108_i32_116 : i32
    %c3_i32_117 = arith.constant 3 : i32
    %162 = arith.addi %161, %c3_i32_117 : i32
    %163 = arith.index_cast %162 : i32 to index
    %164 = memref.load %arg2[%163] : memref<288xf32, #tpu.memory_space<smem>>
    %165 = vector.broadcast %164 : f32 to vector<16x16xf32>
    %166 = arith.mulf %165, %139 : vector<16x16xf32>
    %167 = arith.addf %137, %166 : vector<16x16xf32>
    %c0_118 = arith.constant 0 : index
    %c0_119 = arith.constant 0 : index
    %c1_120 = arith.constant 1 : index
    %c1_121 = arith.constant 1 : index
    %168 = vector.load %arg5[%c0_118, %c0_119, %c1_120, %c1_121] : memref<2x4x18x18xf32, #tpu.memory_space<vmem>>, vector<1x1x16x16xf32>
    %169 = vector.shape_cast %168 : vector<1x1x16x16xf32> to vector<16x16xf32>
    %c0_i32_122 = arith.constant 0 : i32
    %170 = arith.addi %43, %c0_i32_122 : i32
    %c4_i32 = arith.constant 4 : i32
    %171 = arith.addi %170, %c4_i32 : i32
    %172 = arith.index_cast %171 : i32 to index
    %173 = memref.load %arg2[%172] : memref<288xf32, #tpu.memory_space<smem>>
    %174 = vector.broadcast %173 : f32 to vector<16x16xf32>
    %175 = arith.mulf %174, %169 : vector<16x16xf32>
    %176 = arith.addf %146, %175 : vector<16x16xf32>
    %c36_i32_123 = arith.constant 36 : i32
    %177 = arith.addi %43, %c36_i32_123 : i32
    %c4_i32_124 = arith.constant 4 : i32
    %178 = arith.addi %177, %c4_i32_124 : i32
    %179 = arith.index_cast %178 : i32 to index
    %180 = memref.load %arg2[%179] : memref<288xf32, #tpu.memory_space<smem>>
    %181 = vector.broadcast %180 : f32 to vector<16x16xf32>
    %182 = arith.mulf %181, %169 : vector<16x16xf32>
    %183 = arith.addf %153, %182 : vector<16x16xf32>
    %c72_i32_125 = arith.constant 72 : i32
    %184 = arith.addi %43, %c72_i32_125 : i32
    %c4_i32_126 = arith.constant 4 : i32
    %185 = arith.addi %184, %c4_i32_126 : i32
    %186 = arith.index_cast %185 : i32 to index
    %187 = memref.load %arg2[%186] : memref<288xf32, #tpu.memory_space<smem>>
    %188 = vector.broadcast %187 : f32 to vector<16x16xf32>
    %189 = arith.mulf %188, %169 : vector<16x16xf32>
    %190 = arith.addf %160, %189 : vector<16x16xf32>
    %c108_i32_127 = arith.constant 108 : i32
    %191 = arith.addi %43, %c108_i32_127 : i32
    %c4_i32_128 = arith.constant 4 : i32
    %192 = arith.addi %191, %c4_i32_128 : i32
    %193 = arith.index_cast %192 : i32 to index
    %194 = memref.load %arg2[%193] : memref<288xf32, #tpu.memory_space<smem>>
    %195 = vector.broadcast %194 : f32 to vector<16x16xf32>
    %196 = arith.mulf %195, %169 : vector<16x16xf32>
    %197 = arith.addf %167, %196 : vector<16x16xf32>
    %c0_129 = arith.constant 0 : index
    %c0_130 = arith.constant 0 : index
    %c1_131 = arith.constant 1 : index
    %c2_132 = arith.constant 2 : index
    %198 = vector.load %arg5[%c0_129, %c0_130, %c1_131, %c2_132] : memref<2x4x18x18xf32, #tpu.memory_space<vmem>>, vector<1x1x16x16xf32>
    %199 = vector.shape_cast %198 : vector<1x1x16x16xf32> to vector<16x16xf32>
    %c0_i32_133 = arith.constant 0 : i32
    %200 = arith.addi %43, %c0_i32_133 : i32
    %c5_i32 = arith.constant 5 : i32
    %201 = arith.addi %200, %c5_i32 : i32
    %202 = arith.index_cast %201 : i32 to index
    %203 = memref.load %arg2[%202] : memref<288xf32, #tpu.memory_space<smem>>
    %204 = vector.broadcast %203 : f32 to vector<16x16xf32>
    %205 = arith.mulf %204, %199 : vector<16x16xf32>
    %206 = arith.addf %176, %205 : vector<16x16xf32>
    %c36_i32_134 = arith.constant 36 : i32
    %207 = arith.addi %43, %c36_i32_134 : i32
    %c5_i32_135 = arith.constant 5 : i32
    %208 = arith.addi %207, %c5_i32_135 : i32
    %209 = arith.index_cast %208 : i32 to index
    %210 = memref.load %arg2[%209] : memref<288xf32, #tpu.memory_space<smem>>
    %211 = vector.broadcast %210 : f32 to vector<16x16xf32>
    %212 = arith.mulf %211, %199 : vector<16x16xf32>
    %213 = arith.addf %183, %212 : vector<16x16xf32>
    %c72_i32_136 = arith.constant 72 : i32
    %214 = arith.addi %43, %c72_i32_136 : i32
    %c5_i32_137 = arith.constant 5 : i32
    %215 = arith.addi %214, %c5_i32_137 : i32
    %216 = arith.index_cast %215 : i32 to index
    %217 = memref.load %arg2[%216] : memref<288xf32, #tpu.memory_space<smem>>
    %218 = vector.broadcast %217 : f32 to vector<16x16xf32>
    %219 = arith.mulf %218, %199 : vector<16x16xf32>
    %220 = arith.addf %190, %219 : vector<16x16xf32>
    %c108_i32_138 = arith.constant 108 : i32
    %221 = arith.addi %43, %c108_i32_138 : i32
    %c5_i32_139 = arith.constant 5 : i32
    %222 = arith.addi %221, %c5_i32_139 : i32
    %223 = arith.index_cast %222 : i32 to index
    %224 = memref.load %arg2[%223] : memref<288xf32, #tpu.memory_space<smem>>
    %225 = vector.broadcast %224 : f32 to vector<16x16xf32>
    %226 = arith.mulf %225, %199 : vector<16x16xf32>
    %227 = arith.addf %197, %226 : vector<16x16xf32>
    %c0_140 = arith.constant 0 : index
    %c0_141 = arith.constant 0 : index
    %c2_142 = arith.constant 2 : index
    %c0_143 = arith.constant 0 : index
    %228 = vector.load %arg5[%c0_140, %c0_141, %c2_142, %c0_143] : memref<2x4x18x18xf32, #tpu.memory_space<vmem>>, vector<1x1x16x16xf32>
    %229 = vector.shape_cast %228 : vector<1x1x16x16xf32> to vector<16x16xf32>
    %c0_i32_144 = arith.constant 0 : i32
    %230 = arith.addi %43, %c0_i32_144 : i32
    %c6_i32 = arith.constant 6 : i32
    %231 = arith.addi %230, %c6_i32 : i32
    %232 = arith.index_cast %231 : i32 to index
    %233 = memref.load %arg2[%232] : memref<288xf32, #tpu.memory_space<smem>>
    %234 = vector.broadcast %233 : f32 to vector<16x16xf32>
    %235 = arith.mulf %234, %229 : vector<16x16xf32>
    %236 = arith.addf %206, %235 : vector<16x16xf32>
    %c36_i32_145 = arith.constant 36 : i32
    %237 = arith.addi %43, %c36_i32_145 : i32
    %c6_i32_146 = arith.constant 6 : i32
    %238 = arith.addi %237, %c6_i32_146 : i32
    %239 = arith.index_cast %238 : i32 to index
    %240 = memref.load %arg2[%239] : memref<288xf32, #tpu.memory_space<smem>>
    %241 = vector.broadcast %240 : f32 to vector<16x16xf32>
    %242 = arith.mulf %241, %229 : vector<16x16xf32>
    %243 = arith.addf %213, %242 : vector<16x16xf32>
    %c72_i32_147 = arith.constant 72 : i32
    %244 = arith.addi %43, %c72_i32_147 : i32
    %c6_i32_148 = arith.constant 6 : i32
    %245 = arith.addi %244, %c6_i32_148 : i32
    %246 = arith.index_cast %245 : i32 to index
    %247 = memref.load %arg2[%246] : memref<288xf32, #tpu.memory_space<smem>>
    %248 = vector.broadcast %247 : f32 to vector<16x16xf32>
    %249 = arith.mulf %248, %229 : vector<16x16xf32>
    %250 = arith.addf %220, %249 : vector<16x16xf32>
    %c108_i32_149 = arith.constant 108 : i32
    %251 = arith.addi %43, %c108_i32_149 : i32
    %c6_i32_150 = arith.constant 6 : i32
    %252 = arith.addi %251, %c6_i32_150 : i32
    %253 = arith.index_cast %252 : i32 to index
    %254 = memref.load %arg2[%253] : memref<288xf32, #tpu.memory_space<smem>>
    %255 = vector.broadcast %254 : f32 to vector<16x16xf32>
    %256 = arith.mulf %255, %229 : vector<16x16xf32>
    %257 = arith.addf %227, %256 : vector<16x16xf32>
    %c0_151 = arith.constant 0 : index
    %c0_152 = arith.constant 0 : index
    %c2_153 = arith.constant 2 : index
    %c1_154 = arith.constant 1 : index
    %258 = vector.load %arg5[%c0_151, %c0_152, %c2_153, %c1_154] : memref<2x4x18x18xf32, #tpu.memory_space<vmem>>, vector<1x1x16x16xf32>
    %259 = vector.shape_cast %258 : vector<1x1x16x16xf32> to vector<16x16xf32>
    %c0_i32_155 = arith.constant 0 : i32
    %260 = arith.addi %43, %c0_i32_155 : i32
    %c7_i32 = arith.constant 7 : i32
    %261 = arith.addi %260, %c7_i32 : i32
    %262 = arith.index_cast %261 : i32 to index
    %263 = memref.load %arg2[%262] : memref<288xf32, #tpu.memory_space<smem>>
    %264 = vector.broadcast %263 : f32 to vector<16x16xf32>
    %265 = arith.mulf %264, %259 : vector<16x16xf32>
    %266 = arith.addf %236, %265 : vector<16x16xf32>
    %c36_i32_156 = arith.constant 36 : i32
    %267 = arith.addi %43, %c36_i32_156 : i32
    %c7_i32_157 = arith.constant 7 : i32
    %268 = arith.addi %267, %c7_i32_157 : i32
    %269 = arith.index_cast %268 : i32 to index
    %270 = memref.load %arg2[%269] : memref<288xf32, #tpu.memory_space<smem>>
    %271 = vector.broadcast %270 : f32 to vector<16x16xf32>
    %272 = arith.mulf %271, %259 : vector<16x16xf32>
    %273 = arith.addf %243, %272 : vector<16x16xf32>
    %c72_i32_158 = arith.constant 72 : i32
    %274 = arith.addi %43, %c72_i32_158 : i32
    %c7_i32_159 = arith.constant 7 : i32
    %275 = arith.addi %274, %c7_i32_159 : i32
    %276 = arith.index_cast %275 : i32 to index
    %277 = memref.load %arg2[%276] : memref<288xf32, #tpu.memory_space<smem>>
    %278 = vector.broadcast %277 : f32 to vector<16x16xf32>
    %279 = arith.mulf %278, %259 : vector<16x16xf32>
    %280 = arith.addf %250, %279 : vector<16x16xf32>
    %c108_i32_160 = arith.constant 108 : i32
    %281 = arith.addi %43, %c108_i32_160 : i32
    %c7_i32_161 = arith.constant 7 : i32
    %282 = arith.addi %281, %c7_i32_161 : i32
    %283 = arith.index_cast %282 : i32 to index
    %284 = memref.load %arg2[%283] : memref<288xf32, #tpu.memory_space<smem>>
    %285 = vector.broadcast %284 : f32 to vector<16x16xf32>
    %286 = arith.mulf %285, %259 : vector<16x16xf32>
    %287 = arith.addf %257, %286 : vector<16x16xf32>
    %c0_162 = arith.constant 0 : index
    %c0_163 = arith.constant 0 : index
    %c2_164 = arith.constant 2 : index
    %c2_165 = arith.constant 2 : index
    %288 = vector.load %arg5[%c0_162, %c0_163, %c2_164, %c2_165] : memref<2x4x18x18xf32, #tpu.memory_space<vmem>>, vector<1x1x16x16xf32>
    %289 = vector.shape_cast %288 : vector<1x1x16x16xf32> to vector<16x16xf32>
    %c0_i32_166 = arith.constant 0 : i32
    %290 = arith.addi %43, %c0_i32_166 : i32
    %c8_i32 = arith.constant 8 : i32
    %291 = arith.addi %290, %c8_i32 : i32
    %292 = arith.index_cast %291 : i32 to index
    %293 = memref.load %arg2[%292] : memref<288xf32, #tpu.memory_space<smem>>
    %294 = vector.broadcast %293 : f32 to vector<16x16xf32>
    %295 = arith.mulf %294, %289 : vector<16x16xf32>
    %296 = arith.addf %266, %295 : vector<16x16xf32>
    %c36_i32_167 = arith.constant 36 : i32
    %297 = arith.addi %43, %c36_i32_167 : i32
    %c8_i32_168 = arith.constant 8 : i32
    %298 = arith.addi %297, %c8_i32_168 : i32
    %299 = arith.index_cast %298 : i32 to index
    %300 = memref.load %arg2[%299] : memref<288xf32, #tpu.memory_space<smem>>
    %301 = vector.broadcast %300 : f32 to vector<16x16xf32>
    %302 = arith.mulf %301, %289 : vector<16x16xf32>
    %303 = arith.addf %273, %302 : vector<16x16xf32>
    %c72_i32_169 = arith.constant 72 : i32
    %304 = arith.addi %43, %c72_i32_169 : i32
    %c8_i32_170 = arith.constant 8 : i32
    %305 = arith.addi %304, %c8_i32_170 : i32
    %306 = arith.index_cast %305 : i32 to index
    %307 = memref.load %arg2[%306] : memref<288xf32, #tpu.memory_space<smem>>
    %308 = vector.broadcast %307 : f32 to vector<16x16xf32>
    %309 = arith.mulf %308, %289 : vector<16x16xf32>
    %310 = arith.addf %280, %309 : vector<16x16xf32>
    %c108_i32_171 = arith.constant 108 : i32
    %311 = arith.addi %43, %c108_i32_171 : i32
    %c8_i32_172 = arith.constant 8 : i32
    %312 = arith.addi %311, %c8_i32_172 : i32
    %313 = arith.index_cast %312 : i32 to index
    %314 = memref.load %arg2[%313] : memref<288xf32, #tpu.memory_space<smem>>
    %315 = vector.broadcast %314 : f32 to vector<16x16xf32>
    %316 = arith.mulf %315, %289 : vector<16x16xf32>
    %317 = arith.addf %287, %316 : vector<16x16xf32>
    %c0_173 = arith.constant 0 : index
    %c1_174 = arith.constant 1 : index
    %c0_175 = arith.constant 0 : index
    %c0_176 = arith.constant 0 : index
    %318 = vector.load %arg5[%c0_173, %c1_174, %c0_175, %c0_176] : memref<2x4x18x18xf32, #tpu.memory_space<vmem>>, vector<1x1x16x16xf32>
    %319 = vector.shape_cast %318 : vector<1x1x16x16xf32> to vector<16x16xf32>
    %c0_i32_177 = arith.constant 0 : i32
    %320 = arith.addi %43, %c0_i32_177 : i32
    %c9_i32 = arith.constant 9 : i32
    %321 = arith.addi %320, %c9_i32 : i32
    %322 = arith.index_cast %321 : i32 to index
    %323 = memref.load %arg2[%322] : memref<288xf32, #tpu.memory_space<smem>>
    %324 = vector.broadcast %323 : f32 to vector<16x16xf32>
    %325 = arith.mulf %324, %319 : vector<16x16xf32>
    %326 = arith.addf %296, %325 : vector<16x16xf32>
    %c36_i32_178 = arith.constant 36 : i32
    %327 = arith.addi %43, %c36_i32_178 : i32
    %c9_i32_179 = arith.constant 9 : i32
    %328 = arith.addi %327, %c9_i32_179 : i32
    %329 = arith.index_cast %328 : i32 to index
    %330 = memref.load %arg2[%329] : memref<288xf32, #tpu.memory_space<smem>>
    %331 = vector.broadcast %330 : f32 to vector<16x16xf32>
    %332 = arith.mulf %331, %319 : vector<16x16xf32>
    %333 = arith.addf %303, %332 : vector<16x16xf32>
    %c72_i32_180 = arith.constant 72 : i32
    %334 = arith.addi %43, %c72_i32_180 : i32
    %c9_i32_181 = arith.constant 9 : i32
    %335 = arith.addi %334, %c9_i32_181 : i32
    %336 = arith.index_cast %335 : i32 to index
    %337 = memref.load %arg2[%336] : memref<288xf32, #tpu.memory_space<smem>>
    %338 = vector.broadcast %337 : f32 to vector<16x16xf32>
    %339 = arith.mulf %338, %319 : vector<16x16xf32>
    %340 = arith.addf %310, %339 : vector<16x16xf32>
    %c108_i32_182 = arith.constant 108 : i32
    %341 = arith.addi %43, %c108_i32_182 : i32
    %c9_i32_183 = arith.constant 9 : i32
    %342 = arith.addi %341, %c9_i32_183 : i32
    %343 = arith.index_cast %342 : i32 to index
    %344 = memref.load %arg2[%343] : memref<288xf32, #tpu.memory_space<smem>>
    %345 = vector.broadcast %344 : f32 to vector<16x16xf32>
    %346 = arith.mulf %345, %319 : vector<16x16xf32>
    %347 = arith.addf %317, %346 : vector<16x16xf32>
    %c0_184 = arith.constant 0 : index
    %c1_185 = arith.constant 1 : index
    %c0_186 = arith.constant 0 : index
    %c1_187 = arith.constant 1 : index
    %348 = vector.load %arg5[%c0_184, %c1_185, %c0_186, %c1_187] : memref<2x4x18x18xf32, #tpu.memory_space<vmem>>, vector<1x1x16x16xf32>
    %349 = vector.shape_cast %348 : vector<1x1x16x16xf32> to vector<16x16xf32>
    %c0_i32_188 = arith.constant 0 : i32
    %350 = arith.addi %43, %c0_i32_188 : i32
    %c10_i32 = arith.constant 10 : i32
    %351 = arith.addi %350, %c10_i32 : i32
    %352 = arith.index_cast %351 : i32 to index
    %353 = memref.load %arg2[%352] : memref<288xf32, #tpu.memory_space<smem>>
    %354 = vector.broadcast %353 : f32 to vector<16x16xf32>
    %355 = arith.mulf %354, %349 : vector<16x16xf32>
    %356 = arith.addf %326, %355 : vector<16x16xf32>
    %c36_i32_189 = arith.constant 36 : i32
    %357 = arith.addi %43, %c36_i32_189 : i32
    %c10_i32_190 = arith.constant 10 : i32
    %358 = arith.addi %357, %c10_i32_190 : i32
    %359 = arith.index_cast %358 : i32 to index
    %360 = memref.load %arg2[%359] : memref<288xf32, #tpu.memory_space<smem>>
    %361 = vector.broadcast %360 : f32 to vector<16x16xf32>
    %362 = arith.mulf %361, %349 : vector<16x16xf32>
    %363 = arith.addf %333, %362 : vector<16x16xf32>
    %c72_i32_191 = arith.constant 72 : i32
    %364 = arith.addi %43, %c72_i32_191 : i32
    %c10_i32_192 = arith.constant 10 : i32
    %365 = arith.addi %364, %c10_i32_192 : i32
    %366 = arith.index_cast %365 : i32 to index
    %367 = memref.load %arg2[%366] : memref<288xf32, #tpu.memory_space<smem>>
    %368 = vector.broadcast %367 : f32 to vector<16x16xf32>
    %369 = arith.mulf %368, %349 : vector<16x16xf32>
    %370 = arith.addf %340, %369 : vector<16x16xf32>
    %c108_i32_193 = arith.constant 108 : i32
    %371 = arith.addi %43, %c108_i32_193 : i32
    %c10_i32_194 = arith.constant 10 : i32
    %372 = arith.addi %371, %c10_i32_194 : i32
    %373 = arith.index_cast %372 : i32 to index
    %374 = memref.load %arg2[%373] : memref<288xf32, #tpu.memory_space<smem>>
    %375 = vector.broadcast %374 : f32 to vector<16x16xf32>
    %376 = arith.mulf %375, %349 : vector<16x16xf32>
    %377 = arith.addf %347, %376 : vector<16x16xf32>
    %c0_195 = arith.constant 0 : index
    %c1_196 = arith.constant 1 : index
    %c0_197 = arith.constant 0 : index
    %c2_198 = arith.constant 2 : index
    %378 = vector.load %arg5[%c0_195, %c1_196, %c0_197, %c2_198] : memref<2x4x18x18xf32, #tpu.memory_space<vmem>>, vector<1x1x16x16xf32>
    %379 = vector.shape_cast %378 : vector<1x1x16x16xf32> to vector<16x16xf32>
    %c0_i32_199 = arith.constant 0 : i32
    %380 = arith.addi %43, %c0_i32_199 : i32
    %c11_i32 = arith.constant 11 : i32
    %381 = arith.addi %380, %c11_i32 : i32
    %382 = arith.index_cast %381 : i32 to index
    %383 = memref.load %arg2[%382] : memref<288xf32, #tpu.memory_space<smem>>
    %384 = vector.broadcast %383 : f32 to vector<16x16xf32>
    %385 = arith.mulf %384, %379 : vector<16x16xf32>
    %386 = arith.addf %356, %385 : vector<16x16xf32>
    %c36_i32_200 = arith.constant 36 : i32
    %387 = arith.addi %43, %c36_i32_200 : i32
    %c11_i32_201 = arith.constant 11 : i32
    %388 = arith.addi %387, %c11_i32_201 : i32
    %389 = arith.index_cast %388 : i32 to index
    %390 = memref.load %arg2[%389] : memref<288xf32, #tpu.memory_space<smem>>
    %391 = vector.broadcast %390 : f32 to vector<16x16xf32>
    %392 = arith.mulf %391, %379 : vector<16x16xf32>
    %393 = arith.addf %363, %392 : vector<16x16xf32>
    %c72_i32_202 = arith.constant 72 : i32
    %394 = arith.addi %43, %c72_i32_202 : i32
    %c11_i32_203 = arith.constant 11 : i32
    %395 = arith.addi %394, %c11_i32_203 : i32
    %396 = arith.index_cast %395 : i32 to index
    %397 = memref.load %arg2[%396] : memref<288xf32, #tpu.memory_space<smem>>
    %398 = vector.broadcast %397 : f32 to vector<16x16xf32>
    %399 = arith.mulf %398, %379 : vector<16x16xf32>
    %400 = arith.addf %370, %399 : vector<16x16xf32>
    %c108_i32_204 = arith.constant 108 : i32
    %401 = arith.addi %43, %c108_i32_204 : i32
    %c11_i32_205 = arith.constant 11 : i32
    %402 = arith.addi %401, %c11_i32_205 : i32
    %403 = arith.index_cast %402 : i32 to index
    %404 = memref.load %arg2[%403] : memref<288xf32, #tpu.memory_space<smem>>
    %405 = vector.broadcast %404 : f32 to vector<16x16xf32>
    %406 = arith.mulf %405, %379 : vector<16x16xf32>
    %407 = arith.addf %377, %406 : vector<16x16xf32>
    %c0_206 = arith.constant 0 : index
    %c1_207 = arith.constant 1 : index
    %c1_208 = arith.constant 1 : index
    %c0_209 = arith.constant 0 : index
    %408 = vector.load %arg5[%c0_206, %c1_207, %c1_208, %c0_209] : memref<2x4x18x18xf32, #tpu.memory_space<vmem>>, vector<1x1x16x16xf32>
    %409 = vector.shape_cast %408 : vector<1x1x16x16xf32> to vector<16x16xf32>
    %c0_i32_210 = arith.constant 0 : i32
    %410 = arith.addi %43, %c0_i32_210 : i32
    %c12_i32 = arith.constant 12 : i32
    %411 = arith.addi %410, %c12_i32 : i32
    %412 = arith.index_cast %411 : i32 to index
    %413 = memref.load %arg2[%412] : memref<288xf32, #tpu.memory_space<smem>>
    %414 = vector.broadcast %413 : f32 to vector<16x16xf32>
    %415 = arith.mulf %414, %409 : vector<16x16xf32>
    %416 = arith.addf %386, %415 : vector<16x16xf32>
    %c36_i32_211 = arith.constant 36 : i32
    %417 = arith.addi %43, %c36_i32_211 : i32
    %c12_i32_212 = arith.constant 12 : i32
    %418 = arith.addi %417, %c12_i32_212 : i32
    %419 = arith.index_cast %418 : i32 to index
    %420 = memref.load %arg2[%419] : memref<288xf32, #tpu.memory_space<smem>>
    %421 = vector.broadcast %420 : f32 to vector<16x16xf32>
    %422 = arith.mulf %421, %409 : vector<16x16xf32>
    %423 = arith.addf %393, %422 : vector<16x16xf32>
    %c72_i32_213 = arith.constant 72 : i32
    %424 = arith.addi %43, %c72_i32_213 : i32
    %c12_i32_214 = arith.constant 12 : i32
    %425 = arith.addi %424, %c12_i32_214 : i32
    %426 = arith.index_cast %425 : i32 to index
    %427 = memref.load %arg2[%426] : memref<288xf32, #tpu.memory_space<smem>>
    %428 = vector.broadcast %427 : f32 to vector<16x16xf32>
    %429 = arith.mulf %428, %409 : vector<16x16xf32>
    %430 = arith.addf %400, %429 : vector<16x16xf32>
    %c108_i32_215 = arith.constant 108 : i32
    %431 = arith.addi %43, %c108_i32_215 : i32
    %c12_i32_216 = arith.constant 12 : i32
    %432 = arith.addi %431, %c12_i32_216 : i32
    %433 = arith.index_cast %432 : i32 to index
    %434 = memref.load %arg2[%433] : memref<288xf32, #tpu.memory_space<smem>>
    %435 = vector.broadcast %434 : f32 to vector<16x16xf32>
    %436 = arith.mulf %435, %409 : vector<16x16xf32>
    %437 = arith.addf %407, %436 : vector<16x16xf32>
    %c0_217 = arith.constant 0 : index
    %c1_218 = arith.constant 1 : index
    %c1_219 = arith.constant 1 : index
    %c1_220 = arith.constant 1 : index
    %438 = vector.load %arg5[%c0_217, %c1_218, %c1_219, %c1_220] : memref<2x4x18x18xf32, #tpu.memory_space<vmem>>, vector<1x1x16x16xf32>
    %439 = vector.shape_cast %438 : vector<1x1x16x16xf32> to vector<16x16xf32>
    %c0_i32_221 = arith.constant 0 : i32
    %440 = arith.addi %43, %c0_i32_221 : i32
    %c13_i32 = arith.constant 13 : i32
    %441 = arith.addi %440, %c13_i32 : i32
    %442 = arith.index_cast %441 : i32 to index
    %443 = memref.load %arg2[%442] : memref<288xf32, #tpu.memory_space<smem>>
    %444 = vector.broadcast %443 : f32 to vector<16x16xf32>
    %445 = arith.mulf %444, %439 : vector<16x16xf32>
    %446 = arith.addf %416, %445 : vector<16x16xf32>
    %c36_i32_222 = arith.constant 36 : i32
    %447 = arith.addi %43, %c36_i32_222 : i32
    %c13_i32_223 = arith.constant 13 : i32
    %448 = arith.addi %447, %c13_i32_223 : i32
    %449 = arith.index_cast %448 : i32 to index
    %450 = memref.load %arg2[%449] : memref<288xf32, #tpu.memory_space<smem>>
    %451 = vector.broadcast %450 : f32 to vector<16x16xf32>
    %452 = arith.mulf %451, %439 : vector<16x16xf32>
    %453 = arith.addf %423, %452 : vector<16x16xf32>
    %c72_i32_224 = arith.constant 72 : i32
    %454 = arith.addi %43, %c72_i32_224 : i32
    %c13_i32_225 = arith.constant 13 : i32
    %455 = arith.addi %454, %c13_i32_225 : i32
    %456 = arith.index_cast %455 : i32 to index
    %457 = memref.load %arg2[%456] : memref<288xf32, #tpu.memory_space<smem>>
    %458 = vector.broadcast %457 : f32 to vector<16x16xf32>
    %459 = arith.mulf %458, %439 : vector<16x16xf32>
    %460 = arith.addf %430, %459 : vector<16x16xf32>
    %c108_i32_226 = arith.constant 108 : i32
    %461 = arith.addi %43, %c108_i32_226 : i32
    %c13_i32_227 = arith.constant 13 : i32
    %462 = arith.addi %461, %c13_i32_227 : i32
    %463 = arith.index_cast %462 : i32 to index
    %464 = memref.load %arg2[%463] : memref<288xf32, #tpu.memory_space<smem>>
    %465 = vector.broadcast %464 : f32 to vector<16x16xf32>
    %466 = arith.mulf %465, %439 : vector<16x16xf32>
    %467 = arith.addf %437, %466 : vector<16x16xf32>
    %c0_228 = arith.constant 0 : index
    %c1_229 = arith.constant 1 : index
    %c1_230 = arith.constant 1 : index
    %c2_231 = arith.constant 2 : index
    %468 = vector.load %arg5[%c0_228, %c1_229, %c1_230, %c2_231] : memref<2x4x18x18xf32, #tpu.memory_space<vmem>>, vector<1x1x16x16xf32>
    %469 = vector.shape_cast %468 : vector<1x1x16x16xf32> to vector<16x16xf32>
    %c0_i32_232 = arith.constant 0 : i32
    %470 = arith.addi %43, %c0_i32_232 : i32
    %c14_i32 = arith.constant 14 : i32
    %471 = arith.addi %470, %c14_i32 : i32
    %472 = arith.index_cast %471 : i32 to index
    %473 = memref.load %arg2[%472] : memref<288xf32, #tpu.memory_space<smem>>
    %474 = vector.broadcast %473 : f32 to vector<16x16xf32>
    %475 = arith.mulf %474, %469 : vector<16x16xf32>
    %476 = arith.addf %446, %475 : vector<16x16xf32>
    %c36_i32_233 = arith.constant 36 : i32
    %477 = arith.addi %43, %c36_i32_233 : i32
    %c14_i32_234 = arith.constant 14 : i32
    %478 = arith.addi %477, %c14_i32_234 : i32
    %479 = arith.index_cast %478 : i32 to index
    %480 = memref.load %arg2[%479] : memref<288xf32, #tpu.memory_space<smem>>
    %481 = vector.broadcast %480 : f32 to vector<16x16xf32>
    %482 = arith.mulf %481, %469 : vector<16x16xf32>
    %483 = arith.addf %453, %482 : vector<16x16xf32>
    %c72_i32_235 = arith.constant 72 : i32
    %484 = arith.addi %43, %c72_i32_235 : i32
    %c14_i32_236 = arith.constant 14 : i32
    %485 = arith.addi %484, %c14_i32_236 : i32
    %486 = arith.index_cast %485 : i32 to index
    %487 = memref.load %arg2[%486] : memref<288xf32, #tpu.memory_space<smem>>
    %488 = vector.broadcast %487 : f32 to vector<16x16xf32>
    %489 = arith.mulf %488, %469 : vector<16x16xf32>
    %490 = arith.addf %460, %489 : vector<16x16xf32>
    %c108_i32_237 = arith.constant 108 : i32
    %491 = arith.addi %43, %c108_i32_237 : i32
    %c14_i32_238 = arith.constant 14 : i32
    %492 = arith.addi %491, %c14_i32_238 : i32
    %493 = arith.index_cast %492 : i32 to index
    %494 = memref.load %arg2[%493] : memref<288xf32, #tpu.memory_space<smem>>
    %495 = vector.broadcast %494 : f32 to vector<16x16xf32>
    %496 = arith.mulf %495, %469 : vector<16x16xf32>
    %497 = arith.addf %467, %496 : vector<16x16xf32>
    %c0_239 = arith.constant 0 : index
    %c1_240 = arith.constant 1 : index
    %c2_241 = arith.constant 2 : index
    %c0_242 = arith.constant 0 : index
    %498 = vector.load %arg5[%c0_239, %c1_240, %c2_241, %c0_242] : memref<2x4x18x18xf32, #tpu.memory_space<vmem>>, vector<1x1x16x16xf32>
    %499 = vector.shape_cast %498 : vector<1x1x16x16xf32> to vector<16x16xf32>
    %c0_i32_243 = arith.constant 0 : i32
    %500 = arith.addi %43, %c0_i32_243 : i32
    %c15_i32 = arith.constant 15 : i32
    %501 = arith.addi %500, %c15_i32 : i32
    %502 = arith.index_cast %501 : i32 to index
    %503 = memref.load %arg2[%502] : memref<288xf32, #tpu.memory_space<smem>>
    %504 = vector.broadcast %503 : f32 to vector<16x16xf32>
    %505 = arith.mulf %504, %499 : vector<16x16xf32>
    %506 = arith.addf %476, %505 : vector<16x16xf32>
    %c36_i32_244 = arith.constant 36 : i32
    %507 = arith.addi %43, %c36_i32_244 : i32
    %c15_i32_245 = arith.constant 15 : i32
    %508 = arith.addi %507, %c15_i32_245 : i32
    %509 = arith.index_cast %508 : i32 to index
    %510 = memref.load %arg2[%509] : memref<288xf32, #tpu.memory_space<smem>>
    %511 = vector.broadcast %510 : f32 to vector<16x16xf32>
    %512 = arith.mulf %511, %499 : vector<16x16xf32>
    %513 = arith.addf %483, %512 : vector<16x16xf32>
    %c72_i32_246 = arith.constant 72 : i32
    %514 = arith.addi %43, %c72_i32_246 : i32
    %c15_i32_247 = arith.constant 15 : i32
    %515 = arith.addi %514, %c15_i32_247 : i32
    %516 = arith.index_cast %515 : i32 to index
    %517 = memref.load %arg2[%516] : memref<288xf32, #tpu.memory_space<smem>>
    %518 = vector.broadcast %517 : f32 to vector<16x16xf32>
    %519 = arith.mulf %518, %499 : vector<16x16xf32>
    %520 = arith.addf %490, %519 : vector<16x16xf32>
    %c108_i32_248 = arith.constant 108 : i32
    %521 = arith.addi %43, %c108_i32_248 : i32
    %c15_i32_249 = arith.constant 15 : i32
    %522 = arith.addi %521, %c15_i32_249 : i32
    %523 = arith.index_cast %522 : i32 to index
    %524 = memref.load %arg2[%523] : memref<288xf32, #tpu.memory_space<smem>>
    %525 = vector.broadcast %524 : f32 to vector<16x16xf32>
    %526 = arith.mulf %525, %499 : vector<16x16xf32>
    %527 = arith.addf %497, %526 : vector<16x16xf32>
    %c0_250 = arith.constant 0 : index
    %c1_251 = arith.constant 1 : index
    %c2_252 = arith.constant 2 : index
    %c1_253 = arith.constant 1 : index
    %528 = vector.load %arg5[%c0_250, %c1_251, %c2_252, %c1_253] : memref<2x4x18x18xf32, #tpu.memory_space<vmem>>, vector<1x1x16x16xf32>
    %529 = vector.shape_cast %528 : vector<1x1x16x16xf32> to vector<16x16xf32>
    %c0_i32_254 = arith.constant 0 : i32
    %530 = arith.addi %43, %c0_i32_254 : i32
    %c16_i32 = arith.constant 16 : i32
    %531 = arith.addi %530, %c16_i32 : i32
    %532 = arith.index_cast %531 : i32 to index
    %533 = memref.load %arg2[%532] : memref<288xf32, #tpu.memory_space<smem>>
    %534 = vector.broadcast %533 : f32 to vector<16x16xf32>
    %535 = arith.mulf %534, %529 : vector<16x16xf32>
    %536 = arith.addf %506, %535 : vector<16x16xf32>
    %c36_i32_255 = arith.constant 36 : i32
    %537 = arith.addi %43, %c36_i32_255 : i32
    %c16_i32_256 = arith.constant 16 : i32
    %538 = arith.addi %537, %c16_i32_256 : i32
    %539 = arith.index_cast %538 : i32 to index
    %540 = memref.load %arg2[%539] : memref<288xf32, #tpu.memory_space<smem>>
    %541 = vector.broadcast %540 : f32 to vector<16x16xf32>
    %542 = arith.mulf %541, %529 : vector<16x16xf32>
    %543 = arith.addf %513, %542 : vector<16x16xf32>
    %c72_i32_257 = arith.constant 72 : i32
    %544 = arith.addi %43, %c72_i32_257 : i32
    %c16_i32_258 = arith.constant 16 : i32
    %545 = arith.addi %544, %c16_i32_258 : i32
    %546 = arith.index_cast %545 : i32 to index
    %547 = memref.load %arg2[%546] : memref<288xf32, #tpu.memory_space<smem>>
    %548 = vector.broadcast %547 : f32 to vector<16x16xf32>
    %549 = arith.mulf %548, %529 : vector<16x16xf32>
    %550 = arith.addf %520, %549 : vector<16x16xf32>
    %c108_i32_259 = arith.constant 108 : i32
    %551 = arith.addi %43, %c108_i32_259 : i32
    %c16_i32_260 = arith.constant 16 : i32
    %552 = arith.addi %551, %c16_i32_260 : i32
    %553 = arith.index_cast %552 : i32 to index
    %554 = memref.load %arg2[%553] : memref<288xf32, #tpu.memory_space<smem>>
    %555 = vector.broadcast %554 : f32 to vector<16x16xf32>
    %556 = arith.mulf %555, %529 : vector<16x16xf32>
    %557 = arith.addf %527, %556 : vector<16x16xf32>
    %c0_261 = arith.constant 0 : index
    %c1_262 = arith.constant 1 : index
    %c2_263 = arith.constant 2 : index
    %c2_264 = arith.constant 2 : index
    %558 = vector.load %arg5[%c0_261, %c1_262, %c2_263, %c2_264] : memref<2x4x18x18xf32, #tpu.memory_space<vmem>>, vector<1x1x16x16xf32>
    %559 = vector.shape_cast %558 : vector<1x1x16x16xf32> to vector<16x16xf32>
    %c0_i32_265 = arith.constant 0 : i32
    %560 = arith.addi %43, %c0_i32_265 : i32
    %c17_i32 = arith.constant 17 : i32
    %561 = arith.addi %560, %c17_i32 : i32
    %562 = arith.index_cast %561 : i32 to index
    %563 = memref.load %arg2[%562] : memref<288xf32, #tpu.memory_space<smem>>
    %564 = vector.broadcast %563 : f32 to vector<16x16xf32>
    %565 = arith.mulf %564, %559 : vector<16x16xf32>
    %566 = arith.addf %536, %565 : vector<16x16xf32>
    %c36_i32_266 = arith.constant 36 : i32
    %567 = arith.addi %43, %c36_i32_266 : i32
    %c17_i32_267 = arith.constant 17 : i32
    %568 = arith.addi %567, %c17_i32_267 : i32
    %569 = arith.index_cast %568 : i32 to index
    %570 = memref.load %arg2[%569] : memref<288xf32, #tpu.memory_space<smem>>
    %571 = vector.broadcast %570 : f32 to vector<16x16xf32>
    %572 = arith.mulf %571, %559 : vector<16x16xf32>
    %573 = arith.addf %543, %572 : vector<16x16xf32>
    %c72_i32_268 = arith.constant 72 : i32
    %574 = arith.addi %43, %c72_i32_268 : i32
    %c17_i32_269 = arith.constant 17 : i32
    %575 = arith.addi %574, %c17_i32_269 : i32
    %576 = arith.index_cast %575 : i32 to index
    %577 = memref.load %arg2[%576] : memref<288xf32, #tpu.memory_space<smem>>
    %578 = vector.broadcast %577 : f32 to vector<16x16xf32>
    %579 = arith.mulf %578, %559 : vector<16x16xf32>
    %580 = arith.addf %550, %579 : vector<16x16xf32>
    %c108_i32_270 = arith.constant 108 : i32
    %581 = arith.addi %43, %c108_i32_270 : i32
    %c17_i32_271 = arith.constant 17 : i32
    %582 = arith.addi %581, %c17_i32_271 : i32
    %583 = arith.index_cast %582 : i32 to index
    %584 = memref.load %arg2[%583] : memref<288xf32, #tpu.memory_space<smem>>
    %585 = vector.broadcast %584 : f32 to vector<16x16xf32>
    %586 = arith.mulf %585, %559 : vector<16x16xf32>
    %587 = arith.addf %557, %586 : vector<16x16xf32>
    %c0_272 = arith.constant 0 : index
    %c2_273 = arith.constant 2 : index
    %c0_274 = arith.constant 0 : index
    %c0_275 = arith.constant 0 : index
    %588 = vector.load %arg5[%c0_272, %c2_273, %c0_274, %c0_275] : memref<2x4x18x18xf32, #tpu.memory_space<vmem>>, vector<1x1x16x16xf32>
    %589 = vector.shape_cast %588 : vector<1x1x16x16xf32> to vector<16x16xf32>
    %c0_i32_276 = arith.constant 0 : i32
    %590 = arith.addi %43, %c0_i32_276 : i32
    %c18_i32 = arith.constant 18 : i32
    %591 = arith.addi %590, %c18_i32 : i32
    %592 = arith.index_cast %591 : i32 to index
    %593 = memref.load %arg2[%592] : memref<288xf32, #tpu.memory_space<smem>>
    %594 = vector.broadcast %593 : f32 to vector<16x16xf32>
    %595 = arith.mulf %594, %589 : vector<16x16xf32>
    %596 = arith.addf %566, %595 : vector<16x16xf32>
    %c36_i32_277 = arith.constant 36 : i32
    %597 = arith.addi %43, %c36_i32_277 : i32
    %c18_i32_278 = arith.constant 18 : i32
    %598 = arith.addi %597, %c18_i32_278 : i32
    %599 = arith.index_cast %598 : i32 to index
    %600 = memref.load %arg2[%599] : memref<288xf32, #tpu.memory_space<smem>>
    %601 = vector.broadcast %600 : f32 to vector<16x16xf32>
    %602 = arith.mulf %601, %589 : vector<16x16xf32>
    %603 = arith.addf %573, %602 : vector<16x16xf32>
    %c72_i32_279 = arith.constant 72 : i32
    %604 = arith.addi %43, %c72_i32_279 : i32
    %c18_i32_280 = arith.constant 18 : i32
    %605 = arith.addi %604, %c18_i32_280 : i32
    %606 = arith.index_cast %605 : i32 to index
    %607 = memref.load %arg2[%606] : memref<288xf32, #tpu.memory_space<smem>>
    %608 = vector.broadcast %607 : f32 to vector<16x16xf32>
    %609 = arith.mulf %608, %589 : vector<16x16xf32>
    %610 = arith.addf %580, %609 : vector<16x16xf32>
    %c108_i32_281 = arith.constant 108 : i32
    %611 = arith.addi %43, %c108_i32_281 : i32
    %c18_i32_282 = arith.constant 18 : i32
    %612 = arith.addi %611, %c18_i32_282 : i32
    %613 = arith.index_cast %612 : i32 to index
    %614 = memref.load %arg2[%613] : memref<288xf32, #tpu.memory_space<smem>>
    %615 = vector.broadcast %614 : f32 to vector<16x16xf32>
    %616 = arith.mulf %615, %589 : vector<16x16xf32>
    %617 = arith.addf %587, %616 : vector<16x16xf32>
    %c0_283 = arith.constant 0 : index
    %c2_284 = arith.constant 2 : index
    %c0_285 = arith.constant 0 : index
    %c1_286 = arith.constant 1 : index
    %618 = vector.load %arg5[%c0_283, %c2_284, %c0_285, %c1_286] : memref<2x4x18x18xf32, #tpu.memory_space<vmem>>, vector<1x1x16x16xf32>
    %619 = vector.shape_cast %618 : vector<1x1x16x16xf32> to vector<16x16xf32>
    %c0_i32_287 = arith.constant 0 : i32
    %620 = arith.addi %43, %c0_i32_287 : i32
    %c19_i32 = arith.constant 19 : i32
    %621 = arith.addi %620, %c19_i32 : i32
    %622 = arith.index_cast %621 : i32 to index
    %623 = memref.load %arg2[%622] : memref<288xf32, #tpu.memory_space<smem>>
    %624 = vector.broadcast %623 : f32 to vector<16x16xf32>
    %625 = arith.mulf %624, %619 : vector<16x16xf32>
    %626 = arith.addf %596, %625 : vector<16x16xf32>
    %c36_i32_288 = arith.constant 36 : i32
    %627 = arith.addi %43, %c36_i32_288 : i32
    %c19_i32_289 = arith.constant 19 : i32
    %628 = arith.addi %627, %c19_i32_289 : i32
    %629 = arith.index_cast %628 : i32 to index
    %630 = memref.load %arg2[%629] : memref<288xf32, #tpu.memory_space<smem>>
    %631 = vector.broadcast %630 : f32 to vector<16x16xf32>
    %632 = arith.mulf %631, %619 : vector<16x16xf32>
    %633 = arith.addf %603, %632 : vector<16x16xf32>
    %c72_i32_290 = arith.constant 72 : i32
    %634 = arith.addi %43, %c72_i32_290 : i32
    %c19_i32_291 = arith.constant 19 : i32
    %635 = arith.addi %634, %c19_i32_291 : i32
    %636 = arith.index_cast %635 : i32 to index
    %637 = memref.load %arg2[%636] : memref<288xf32, #tpu.memory_space<smem>>
    %638 = vector.broadcast %637 : f32 to vector<16x16xf32>
    %639 = arith.mulf %638, %619 : vector<16x16xf32>
    %640 = arith.addf %610, %639 : vector<16x16xf32>
    %c108_i32_292 = arith.constant 108 : i32
    %641 = arith.addi %43, %c108_i32_292 : i32
    %c19_i32_293 = arith.constant 19 : i32
    %642 = arith.addi %641, %c19_i32_293 : i32
    %643 = arith.index_cast %642 : i32 to index
    %644 = memref.load %arg2[%643] : memref<288xf32, #tpu.memory_space<smem>>
    %645 = vector.broadcast %644 : f32 to vector<16x16xf32>
    %646 = arith.mulf %645, %619 : vector<16x16xf32>
    %647 = arith.addf %617, %646 : vector<16x16xf32>
    %c0_294 = arith.constant 0 : index
    %c2_295 = arith.constant 2 : index
    %c0_296 = arith.constant 0 : index
    %c2_297 = arith.constant 2 : index
    %648 = vector.load %arg5[%c0_294, %c2_295, %c0_296, %c2_297] : memref<2x4x18x18xf32, #tpu.memory_space<vmem>>, vector<1x1x16x16xf32>
    %649 = vector.shape_cast %648 : vector<1x1x16x16xf32> to vector<16x16xf32>
    %c0_i32_298 = arith.constant 0 : i32
    %650 = arith.addi %43, %c0_i32_298 : i32
    %c20_i32 = arith.constant 20 : i32
    %651 = arith.addi %650, %c20_i32 : i32
    %652 = arith.index_cast %651 : i32 to index
    %653 = memref.load %arg2[%652] : memref<288xf32, #tpu.memory_space<smem>>
    %654 = vector.broadcast %653 : f32 to vector<16x16xf32>
    %655 = arith.mulf %654, %649 : vector<16x16xf32>
    %656 = arith.addf %626, %655 : vector<16x16xf32>
    %c36_i32_299 = arith.constant 36 : i32
    %657 = arith.addi %43, %c36_i32_299 : i32
    %c20_i32_300 = arith.constant 20 : i32
    %658 = arith.addi %657, %c20_i32_300 : i32
    %659 = arith.index_cast %658 : i32 to index
    %660 = memref.load %arg2[%659] : memref<288xf32, #tpu.memory_space<smem>>
    %661 = vector.broadcast %660 : f32 to vector<16x16xf32>
    %662 = arith.mulf %661, %649 : vector<16x16xf32>
    %663 = arith.addf %633, %662 : vector<16x16xf32>
    %c72_i32_301 = arith.constant 72 : i32
    %664 = arith.addi %43, %c72_i32_301 : i32
    %c20_i32_302 = arith.constant 20 : i32
    %665 = arith.addi %664, %c20_i32_302 : i32
    %666 = arith.index_cast %665 : i32 to index
    %667 = memref.load %arg2[%666] : memref<288xf32, #tpu.memory_space<smem>>
    %668 = vector.broadcast %667 : f32 to vector<16x16xf32>
    %669 = arith.mulf %668, %649 : vector<16x16xf32>
    %670 = arith.addf %640, %669 : vector<16x16xf32>
    %c108_i32_303 = arith.constant 108 : i32
    %671 = arith.addi %43, %c108_i32_303 : i32
    %c20_i32_304 = arith.constant 20 : i32
    %672 = arith.addi %671, %c20_i32_304 : i32
    %673 = arith.index_cast %672 : i32 to index
    %674 = memref.load %arg2[%673] : memref<288xf32, #tpu.memory_space<smem>>
    %675 = vector.broadcast %674 : f32 to vector<16x16xf32>
    %676 = arith.mulf %675, %649 : vector<16x16xf32>
    %677 = arith.addf %647, %676 : vector<16x16xf32>
    %c0_305 = arith.constant 0 : index
    %c2_306 = arith.constant 2 : index
    %c1_307 = arith.constant 1 : index
    %c0_308 = arith.constant 0 : index
    %678 = vector.load %arg5[%c0_305, %c2_306, %c1_307, %c0_308] : memref<2x4x18x18xf32, #tpu.memory_space<vmem>>, vector<1x1x16x16xf32>
    %679 = vector.shape_cast %678 : vector<1x1x16x16xf32> to vector<16x16xf32>
    %c0_i32_309 = arith.constant 0 : i32
    %680 = arith.addi %43, %c0_i32_309 : i32
    %c21_i32 = arith.constant 21 : i32
    %681 = arith.addi %680, %c21_i32 : i32
    %682 = arith.index_cast %681 : i32 to index
    %683 = memref.load %arg2[%682] : memref<288xf32, #tpu.memory_space<smem>>
    %684 = vector.broadcast %683 : f32 to vector<16x16xf32>
    %685 = arith.mulf %684, %679 : vector<16x16xf32>
    %686 = arith.addf %656, %685 : vector<16x16xf32>
    %c36_i32_310 = arith.constant 36 : i32
    %687 = arith.addi %43, %c36_i32_310 : i32
    %c21_i32_311 = arith.constant 21 : i32
    %688 = arith.addi %687, %c21_i32_311 : i32
    %689 = arith.index_cast %688 : i32 to index
    %690 = memref.load %arg2[%689] : memref<288xf32, #tpu.memory_space<smem>>
    %691 = vector.broadcast %690 : f32 to vector<16x16xf32>
    %692 = arith.mulf %691, %679 : vector<16x16xf32>
    %693 = arith.addf %663, %692 : vector<16x16xf32>
    %c72_i32_312 = arith.constant 72 : i32
    %694 = arith.addi %43, %c72_i32_312 : i32
    %c21_i32_313 = arith.constant 21 : i32
    %695 = arith.addi %694, %c21_i32_313 : i32
    %696 = arith.index_cast %695 : i32 to index
    %697 = memref.load %arg2[%696] : memref<288xf32, #tpu.memory_space<smem>>
    %698 = vector.broadcast %697 : f32 to vector<16x16xf32>
    %699 = arith.mulf %698, %679 : vector<16x16xf32>
    %700 = arith.addf %670, %699 : vector<16x16xf32>
    %c108_i32_314 = arith.constant 108 : i32
    %701 = arith.addi %43, %c108_i32_314 : i32
    %c21_i32_315 = arith.constant 21 : i32
    %702 = arith.addi %701, %c21_i32_315 : i32
    %703 = arith.index_cast %702 : i32 to index
    %704 = memref.load %arg2[%703] : memref<288xf32, #tpu.memory_space<smem>>
    %705 = vector.broadcast %704 : f32 to vector<16x16xf32>
    %706 = arith.mulf %705, %679 : vector<16x16xf32>
    %707 = arith.addf %677, %706 : vector<16x16xf32>
    %c0_316 = arith.constant 0 : index
    %c2_317 = arith.constant 2 : index
    %c1_318 = arith.constant 1 : index
    %c1_319 = arith.constant 1 : index
    %708 = vector.load %arg5[%c0_316, %c2_317, %c1_318, %c1_319] : memref<2x4x18x18xf32, #tpu.memory_space<vmem>>, vector<1x1x16x16xf32>
    %709 = vector.shape_cast %708 : vector<1x1x16x16xf32> to vector<16x16xf32>
    %c0_i32_320 = arith.constant 0 : i32
    %710 = arith.addi %43, %c0_i32_320 : i32
    %c22_i32 = arith.constant 22 : i32
    %711 = arith.addi %710, %c22_i32 : i32
    %712 = arith.index_cast %711 : i32 to index
    %713 = memref.load %arg2[%712] : memref<288xf32, #tpu.memory_space<smem>>
    %714 = vector.broadcast %713 : f32 to vector<16x16xf32>
    %715 = arith.mulf %714, %709 : vector<16x16xf32>
    %716 = arith.addf %686, %715 : vector<16x16xf32>
    %c36_i32_321 = arith.constant 36 : i32
    %717 = arith.addi %43, %c36_i32_321 : i32
    %c22_i32_322 = arith.constant 22 : i32
    %718 = arith.addi %717, %c22_i32_322 : i32
    %719 = arith.index_cast %718 : i32 to index
    %720 = memref.load %arg2[%719] : memref<288xf32, #tpu.memory_space<smem>>
    %721 = vector.broadcast %720 : f32 to vector<16x16xf32>
    %722 = arith.mulf %721, %709 : vector<16x16xf32>
    %723 = arith.addf %693, %722 : vector<16x16xf32>
    %c72_i32_323 = arith.constant 72 : i32
    %724 = arith.addi %43, %c72_i32_323 : i32
    %c22_i32_324 = arith.constant 22 : i32
    %725 = arith.addi %724, %c22_i32_324 : i32
    %726 = arith.index_cast %725 : i32 to index
    %727 = memref.load %arg2[%726] : memref<288xf32, #tpu.memory_space<smem>>
    %728 = vector.broadcast %727 : f32 to vector<16x16xf32>
    %729 = arith.mulf %728, %709 : vector<16x16xf32>
    %730 = arith.addf %700, %729 : vector<16x16xf32>
    %c108_i32_325 = arith.constant 108 : i32
    %731 = arith.addi %43, %c108_i32_325 : i32
    %c22_i32_326 = arith.constant 22 : i32
    %732 = arith.addi %731, %c22_i32_326 : i32
    %733 = arith.index_cast %732 : i32 to index
    %734 = memref.load %arg2[%733] : memref<288xf32, #tpu.memory_space<smem>>
    %735 = vector.broadcast %734 : f32 to vector<16x16xf32>
    %736 = arith.mulf %735, %709 : vector<16x16xf32>
    %737 = arith.addf %707, %736 : vector<16x16xf32>
    %c0_327 = arith.constant 0 : index
    %c2_328 = arith.constant 2 : index
    %c1_329 = arith.constant 1 : index
    %c2_330 = arith.constant 2 : index
    %738 = vector.load %arg5[%c0_327, %c2_328, %c1_329, %c2_330] : memref<2x4x18x18xf32, #tpu.memory_space<vmem>>, vector<1x1x16x16xf32>
    %739 = vector.shape_cast %738 : vector<1x1x16x16xf32> to vector<16x16xf32>
    %c0_i32_331 = arith.constant 0 : i32
    %740 = arith.addi %43, %c0_i32_331 : i32
    %c23_i32 = arith.constant 23 : i32
    %741 = arith.addi %740, %c23_i32 : i32
    %742 = arith.index_cast %741 : i32 to index
    %743 = memref.load %arg2[%742] : memref<288xf32, #tpu.memory_space<smem>>
    %744 = vector.broadcast %743 : f32 to vector<16x16xf32>
    %745 = arith.mulf %744, %739 : vector<16x16xf32>
    %746 = arith.addf %716, %745 : vector<16x16xf32>
    %c36_i32_332 = arith.constant 36 : i32
    %747 = arith.addi %43, %c36_i32_332 : i32
    %c23_i32_333 = arith.constant 23 : i32
    %748 = arith.addi %747, %c23_i32_333 : i32
    %749 = arith.index_cast %748 : i32 to index
    %750 = memref.load %arg2[%749] : memref<288xf32, #tpu.memory_space<smem>>
    %751 = vector.broadcast %750 : f32 to vector<16x16xf32>
    %752 = arith.mulf %751, %739 : vector<16x16xf32>
    %753 = arith.addf %723, %752 : vector<16x16xf32>
    %c72_i32_334 = arith.constant 72 : i32
    %754 = arith.addi %43, %c72_i32_334 : i32
    %c23_i32_335 = arith.constant 23 : i32
    %755 = arith.addi %754, %c23_i32_335 : i32
    %756 = arith.index_cast %755 : i32 to index
    %757 = memref.load %arg2[%756] : memref<288xf32, #tpu.memory_space<smem>>
    %758 = vector.broadcast %757 : f32 to vector<16x16xf32>
    %759 = arith.mulf %758, %739 : vector<16x16xf32>
    %760 = arith.addf %730, %759 : vector<16x16xf32>
    %c108_i32_336 = arith.constant 108 : i32
    %761 = arith.addi %43, %c108_i32_336 : i32
    %c23_i32_337 = arith.constant 23 : i32
    %762 = arith.addi %761, %c23_i32_337 : i32
    %763 = arith.index_cast %762 : i32 to index
    %764 = memref.load %arg2[%763] : memref<288xf32, #tpu.memory_space<smem>>
    %765 = vector.broadcast %764 : f32 to vector<16x16xf32>
    %766 = arith.mulf %765, %739 : vector<16x16xf32>
    %767 = arith.addf %737, %766 : vector<16x16xf32>
    %c0_338 = arith.constant 0 : index
    %c2_339 = arith.constant 2 : index
    %c2_340 = arith.constant 2 : index
    %c0_341 = arith.constant 0 : index
    %768 = vector.load %arg5[%c0_338, %c2_339, %c2_340, %c0_341] : memref<2x4x18x18xf32, #tpu.memory_space<vmem>>, vector<1x1x16x16xf32>
    %769 = vector.shape_cast %768 : vector<1x1x16x16xf32> to vector<16x16xf32>
    %c0_i32_342 = arith.constant 0 : i32
    %770 = arith.addi %43, %c0_i32_342 : i32
    %c24_i32 = arith.constant 24 : i32
    %771 = arith.addi %770, %c24_i32 : i32
    %772 = arith.index_cast %771 : i32 to index
    %773 = memref.load %arg2[%772] : memref<288xf32, #tpu.memory_space<smem>>
    %774 = vector.broadcast %773 : f32 to vector<16x16xf32>
    %775 = arith.mulf %774, %769 : vector<16x16xf32>
    %776 = arith.addf %746, %775 : vector<16x16xf32>
    %c36_i32_343 = arith.constant 36 : i32
    %777 = arith.addi %43, %c36_i32_343 : i32
    %c24_i32_344 = arith.constant 24 : i32
    %778 = arith.addi %777, %c24_i32_344 : i32
    %779 = arith.index_cast %778 : i32 to index
    %780 = memref.load %arg2[%779] : memref<288xf32, #tpu.memory_space<smem>>
    %781 = vector.broadcast %780 : f32 to vector<16x16xf32>
    %782 = arith.mulf %781, %769 : vector<16x16xf32>
    %783 = arith.addf %753, %782 : vector<16x16xf32>
    %c72_i32_345 = arith.constant 72 : i32
    %784 = arith.addi %43, %c72_i32_345 : i32
    %c24_i32_346 = arith.constant 24 : i32
    %785 = arith.addi %784, %c24_i32_346 : i32
    %786 = arith.index_cast %785 : i32 to index
    %787 = memref.load %arg2[%786] : memref<288xf32, #tpu.memory_space<smem>>
    %788 = vector.broadcast %787 : f32 to vector<16x16xf32>
    %789 = arith.mulf %788, %769 : vector<16x16xf32>
    %790 = arith.addf %760, %789 : vector<16x16xf32>
    %c108_i32_347 = arith.constant 108 : i32
    %791 = arith.addi %43, %c108_i32_347 : i32
    %c24_i32_348 = arith.constant 24 : i32
    %792 = arith.addi %791, %c24_i32_348 : i32
    %793 = arith.index_cast %792 : i32 to index
    %794 = memref.load %arg2[%793] : memref<288xf32, #tpu.memory_space<smem>>
    %795 = vector.broadcast %794 : f32 to vector<16x16xf32>
    %796 = arith.mulf %795, %769 : vector<16x16xf32>
    %797 = arith.addf %767, %796 : vector<16x16xf32>
    %c0_349 = arith.constant 0 : index
    %c2_350 = arith.constant 2 : index
    %c2_351 = arith.constant 2 : index
    %c1_352 = arith.constant 1 : index
    %798 = vector.load %arg5[%c0_349, %c2_350, %c2_351, %c1_352] : memref<2x4x18x18xf32, #tpu.memory_space<vmem>>, vector<1x1x16x16xf32>
    %799 = vector.shape_cast %798 : vector<1x1x16x16xf32> to vector<16x16xf32>
    %c0_i32_353 = arith.constant 0 : i32
    %800 = arith.addi %43, %c0_i32_353 : i32
    %c25_i32 = arith.constant 25 : i32
    %801 = arith.addi %800, %c25_i32 : i32
    %802 = arith.index_cast %801 : i32 to index
    %803 = memref.load %arg2[%802] : memref<288xf32, #tpu.memory_space<smem>>
    %804 = vector.broadcast %803 : f32 to vector<16x16xf32>
    %805 = arith.mulf %804, %799 : vector<16x16xf32>
    %806 = arith.addf %776, %805 : vector<16x16xf32>
    %c36_i32_354 = arith.constant 36 : i32
    %807 = arith.addi %43, %c36_i32_354 : i32
    %c25_i32_355 = arith.constant 25 : i32
    %808 = arith.addi %807, %c25_i32_355 : i32
    %809 = arith.index_cast %808 : i32 to index
    %810 = memref.load %arg2[%809] : memref<288xf32, #tpu.memory_space<smem>>
    %811 = vector.broadcast %810 : f32 to vector<16x16xf32>
    %812 = arith.mulf %811, %799 : vector<16x16xf32>
    %813 = arith.addf %783, %812 : vector<16x16xf32>
    %c72_i32_356 = arith.constant 72 : i32
    %814 = arith.addi %43, %c72_i32_356 : i32
    %c25_i32_357 = arith.constant 25 : i32
    %815 = arith.addi %814, %c25_i32_357 : i32
    %816 = arith.index_cast %815 : i32 to index
    %817 = memref.load %arg2[%816] : memref<288xf32, #tpu.memory_space<smem>>
    %818 = vector.broadcast %817 : f32 to vector<16x16xf32>
    %819 = arith.mulf %818, %799 : vector<16x16xf32>
    %820 = arith.addf %790, %819 : vector<16x16xf32>
    %c108_i32_358 = arith.constant 108 : i32
    %821 = arith.addi %43, %c108_i32_358 : i32
    %c25_i32_359 = arith.constant 25 : i32
    %822 = arith.addi %821, %c25_i32_359 : i32
    %823 = arith.index_cast %822 : i32 to index
    %824 = memref.load %arg2[%823] : memref<288xf32, #tpu.memory_space<smem>>
    %825 = vector.broadcast %824 : f32 to vector<16x16xf32>
    %826 = arith.mulf %825, %799 : vector<16x16xf32>
    %827 = arith.addf %797, %826 : vector<16x16xf32>
    %c0_360 = arith.constant 0 : index
    %c2_361 = arith.constant 2 : index
    %c2_362 = arith.constant 2 : index
    %c2_363 = arith.constant 2 : index
    %828 = vector.load %arg5[%c0_360, %c2_361, %c2_362, %c2_363] : memref<2x4x18x18xf32, #tpu.memory_space<vmem>>, vector<1x1x16x16xf32>
    %829 = vector.shape_cast %828 : vector<1x1x16x16xf32> to vector<16x16xf32>
    %c0_i32_364 = arith.constant 0 : i32
    %830 = arith.addi %43, %c0_i32_364 : i32
    %c26_i32 = arith.constant 26 : i32
    %831 = arith.addi %830, %c26_i32 : i32
    %832 = arith.index_cast %831 : i32 to index
    %833 = memref.load %arg2[%832] : memref<288xf32, #tpu.memory_space<smem>>
    %834 = vector.broadcast %833 : f32 to vector<16x16xf32>
    %835 = arith.mulf %834, %829 : vector<16x16xf32>
    %836 = arith.addf %806, %835 : vector<16x16xf32>
    %c36_i32_365 = arith.constant 36 : i32
    %837 = arith.addi %43, %c36_i32_365 : i32
    %c26_i32_366 = arith.constant 26 : i32
    %838 = arith.addi %837, %c26_i32_366 : i32
    %839 = arith.index_cast %838 : i32 to index
    %840 = memref.load %arg2[%839] : memref<288xf32, #tpu.memory_space<smem>>
    %841 = vector.broadcast %840 : f32 to vector<16x16xf32>
    %842 = arith.mulf %841, %829 : vector<16x16xf32>
    %843 = arith.addf %813, %842 : vector<16x16xf32>
    %c72_i32_367 = arith.constant 72 : i32
    %844 = arith.addi %43, %c72_i32_367 : i32
    %c26_i32_368 = arith.constant 26 : i32
    %845 = arith.addi %844, %c26_i32_368 : i32
    %846 = arith.index_cast %845 : i32 to index
    %847 = memref.load %arg2[%846] : memref<288xf32, #tpu.memory_space<smem>>
    %848 = vector.broadcast %847 : f32 to vector<16x16xf32>
    %849 = arith.mulf %848, %829 : vector<16x16xf32>
    %850 = arith.addf %820, %849 : vector<16x16xf32>
    %c108_i32_369 = arith.constant 108 : i32
    %851 = arith.addi %43, %c108_i32_369 : i32
    %c26_i32_370 = arith.constant 26 : i32
    %852 = arith.addi %851, %c26_i32_370 : i32
    %853 = arith.index_cast %852 : i32 to index
    %854 = memref.load %arg2[%853] : memref<288xf32, #tpu.memory_space<smem>>
    %855 = vector.broadcast %854 : f32 to vector<16x16xf32>
    %856 = arith.mulf %855, %829 : vector<16x16xf32>
    %857 = arith.addf %827, %856 : vector<16x16xf32>
    %c0_371 = arith.constant 0 : index
    %c3_372 = arith.constant 3 : index
    %c0_373 = arith.constant 0 : index
    %c0_374 = arith.constant 0 : index
    %858 = vector.load %arg5[%c0_371, %c3_372, %c0_373, %c0_374] : memref<2x4x18x18xf32, #tpu.memory_space<vmem>>, vector<1x1x16x16xf32>
    %859 = vector.shape_cast %858 : vector<1x1x16x16xf32> to vector<16x16xf32>
    %c0_i32_375 = arith.constant 0 : i32
    %860 = arith.addi %43, %c0_i32_375 : i32
    %c27_i32 = arith.constant 27 : i32
    %861 = arith.addi %860, %c27_i32 : i32
    %862 = arith.index_cast %861 : i32 to index
    %863 = memref.load %arg2[%862] : memref<288xf32, #tpu.memory_space<smem>>
    %864 = vector.broadcast %863 : f32 to vector<16x16xf32>
    %865 = arith.mulf %864, %859 : vector<16x16xf32>
    %866 = arith.addf %836, %865 : vector<16x16xf32>
    %c36_i32_376 = arith.constant 36 : i32
    %867 = arith.addi %43, %c36_i32_376 : i32
    %c27_i32_377 = arith.constant 27 : i32
    %868 = arith.addi %867, %c27_i32_377 : i32
    %869 = arith.index_cast %868 : i32 to index
    %870 = memref.load %arg2[%869] : memref<288xf32, #tpu.memory_space<smem>>
    %871 = vector.broadcast %870 : f32 to vector<16x16xf32>
    %872 = arith.mulf %871, %859 : vector<16x16xf32>
    %873 = arith.addf %843, %872 : vector<16x16xf32>
    %c72_i32_378 = arith.constant 72 : i32
    %874 = arith.addi %43, %c72_i32_378 : i32
    %c27_i32_379 = arith.constant 27 : i32
    %875 = arith.addi %874, %c27_i32_379 : i32
    %876 = arith.index_cast %875 : i32 to index
    %877 = memref.load %arg2[%876] : memref<288xf32, #tpu.memory_space<smem>>
    %878 = vector.broadcast %877 : f32 to vector<16x16xf32>
    %879 = arith.mulf %878, %859 : vector<16x16xf32>
    %880 = arith.addf %850, %879 : vector<16x16xf32>
    %c108_i32_380 = arith.constant 108 : i32
    %881 = arith.addi %43, %c108_i32_380 : i32
    %c27_i32_381 = arith.constant 27 : i32
    %882 = arith.addi %881, %c27_i32_381 : i32
    %883 = arith.index_cast %882 : i32 to index
    %884 = memref.load %arg2[%883] : memref<288xf32, #tpu.memory_space<smem>>
    %885 = vector.broadcast %884 : f32 to vector<16x16xf32>
    %886 = arith.mulf %885, %859 : vector<16x16xf32>
    %887 = arith.addf %857, %886 : vector<16x16xf32>
    %c0_382 = arith.constant 0 : index
    %c3_383 = arith.constant 3 : index
    %c0_384 = arith.constant 0 : index
    %c1_385 = arith.constant 1 : index
    %888 = vector.load %arg5[%c0_382, %c3_383, %c0_384, %c1_385] : memref<2x4x18x18xf32, #tpu.memory_space<vmem>>, vector<1x1x16x16xf32>
    %889 = vector.shape_cast %888 : vector<1x1x16x16xf32> to vector<16x16xf32>
    %c0_i32_386 = arith.constant 0 : i32
    %890 = arith.addi %43, %c0_i32_386 : i32
    %c28_i32 = arith.constant 28 : i32
    %891 = arith.addi %890, %c28_i32 : i32
    %892 = arith.index_cast %891 : i32 to index
    %893 = memref.load %arg2[%892] : memref<288xf32, #tpu.memory_space<smem>>
    %894 = vector.broadcast %893 : f32 to vector<16x16xf32>
    %895 = arith.mulf %894, %889 : vector<16x16xf32>
    %896 = arith.addf %866, %895 : vector<16x16xf32>
    %c36_i32_387 = arith.constant 36 : i32
    %897 = arith.addi %43, %c36_i32_387 : i32
    %c28_i32_388 = arith.constant 28 : i32
    %898 = arith.addi %897, %c28_i32_388 : i32
    %899 = arith.index_cast %898 : i32 to index
    %900 = memref.load %arg2[%899] : memref<288xf32, #tpu.memory_space<smem>>
    %901 = vector.broadcast %900 : f32 to vector<16x16xf32>
    %902 = arith.mulf %901, %889 : vector<16x16xf32>
    %903 = arith.addf %873, %902 : vector<16x16xf32>
    %c72_i32_389 = arith.constant 72 : i32
    %904 = arith.addi %43, %c72_i32_389 : i32
    %c28_i32_390 = arith.constant 28 : i32
    %905 = arith.addi %904, %c28_i32_390 : i32
    %906 = arith.index_cast %905 : i32 to index
    %907 = memref.load %arg2[%906] : memref<288xf32, #tpu.memory_space<smem>>
    %908 = vector.broadcast %907 : f32 to vector<16x16xf32>
    %909 = arith.mulf %908, %889 : vector<16x16xf32>
    %910 = arith.addf %880, %909 : vector<16x16xf32>
    %c108_i32_391 = arith.constant 108 : i32
    %911 = arith.addi %43, %c108_i32_391 : i32
    %c28_i32_392 = arith.constant 28 : i32
    %912 = arith.addi %911, %c28_i32_392 : i32
    %913 = arith.index_cast %912 : i32 to index
    %914 = memref.load %arg2[%913] : memref<288xf32, #tpu.memory_space<smem>>
    %915 = vector.broadcast %914 : f32 to vector<16x16xf32>
    %916 = arith.mulf %915, %889 : vector<16x16xf32>
    %917 = arith.addf %887, %916 : vector<16x16xf32>
    %c0_393 = arith.constant 0 : index
    %c3_394 = arith.constant 3 : index
    %c0_395 = arith.constant 0 : index
    %c2_396 = arith.constant 2 : index
    %918 = vector.load %arg5[%c0_393, %c3_394, %c0_395, %c2_396] : memref<2x4x18x18xf32, #tpu.memory_space<vmem>>, vector<1x1x16x16xf32>
    %919 = vector.shape_cast %918 : vector<1x1x16x16xf32> to vector<16x16xf32>
    %c0_i32_397 = arith.constant 0 : i32
    %920 = arith.addi %43, %c0_i32_397 : i32
    %c29_i32 = arith.constant 29 : i32
    %921 = arith.addi %920, %c29_i32 : i32
    %922 = arith.index_cast %921 : i32 to index
    %923 = memref.load %arg2[%922] : memref<288xf32, #tpu.memory_space<smem>>
    %924 = vector.broadcast %923 : f32 to vector<16x16xf32>
    %925 = arith.mulf %924, %919 : vector<16x16xf32>
    %926 = arith.addf %896, %925 : vector<16x16xf32>
    %c36_i32_398 = arith.constant 36 : i32
    %927 = arith.addi %43, %c36_i32_398 : i32
    %c29_i32_399 = arith.constant 29 : i32
    %928 = arith.addi %927, %c29_i32_399 : i32
    %929 = arith.index_cast %928 : i32 to index
    %930 = memref.load %arg2[%929] : memref<288xf32, #tpu.memory_space<smem>>
    %931 = vector.broadcast %930 : f32 to vector<16x16xf32>
    %932 = arith.mulf %931, %919 : vector<16x16xf32>
    %933 = arith.addf %903, %932 : vector<16x16xf32>
    %c72_i32_400 = arith.constant 72 : i32
    %934 = arith.addi %43, %c72_i32_400 : i32
    %c29_i32_401 = arith.constant 29 : i32
    %935 = arith.addi %934, %c29_i32_401 : i32
    %936 = arith.index_cast %935 : i32 to index
    %937 = memref.load %arg2[%936] : memref<288xf32, #tpu.memory_space<smem>>
    %938 = vector.broadcast %937 : f32 to vector<16x16xf32>
    %939 = arith.mulf %938, %919 : vector<16x16xf32>
    %940 = arith.addf %910, %939 : vector<16x16xf32>
    %c108_i32_402 = arith.constant 108 : i32
    %941 = arith.addi %43, %c108_i32_402 : i32
    %c29_i32_403 = arith.constant 29 : i32
    %942 = arith.addi %941, %c29_i32_403 : i32
    %943 = arith.index_cast %942 : i32 to index
    %944 = memref.load %arg2[%943] : memref<288xf32, #tpu.memory_space<smem>>
    %945 = vector.broadcast %944 : f32 to vector<16x16xf32>
    %946 = arith.mulf %945, %919 : vector<16x16xf32>
    %947 = arith.addf %917, %946 : vector<16x16xf32>
    %c0_404 = arith.constant 0 : index
    %c3_405 = arith.constant 3 : index
    %c1_406 = arith.constant 1 : index
    %c0_407 = arith.constant 0 : index
    %948 = vector.load %arg5[%c0_404, %c3_405, %c1_406, %c0_407] : memref<2x4x18x18xf32, #tpu.memory_space<vmem>>, vector<1x1x16x16xf32>
    %949 = vector.shape_cast %948 : vector<1x1x16x16xf32> to vector<16x16xf32>
    %c0_i32_408 = arith.constant 0 : i32
    %950 = arith.addi %43, %c0_i32_408 : i32
    %c30_i32 = arith.constant 30 : i32
    %951 = arith.addi %950, %c30_i32 : i32
    %952 = arith.index_cast %951 : i32 to index
    %953 = memref.load %arg2[%952] : memref<288xf32, #tpu.memory_space<smem>>
    %954 = vector.broadcast %953 : f32 to vector<16x16xf32>
    %955 = arith.mulf %954, %949 : vector<16x16xf32>
    %956 = arith.addf %926, %955 : vector<16x16xf32>
    %c36_i32_409 = arith.constant 36 : i32
    %957 = arith.addi %43, %c36_i32_409 : i32
    %c30_i32_410 = arith.constant 30 : i32
    %958 = arith.addi %957, %c30_i32_410 : i32
    %959 = arith.index_cast %958 : i32 to index
    %960 = memref.load %arg2[%959] : memref<288xf32, #tpu.memory_space<smem>>
    %961 = vector.broadcast %960 : f32 to vector<16x16xf32>
    %962 = arith.mulf %961, %949 : vector<16x16xf32>
    %963 = arith.addf %933, %962 : vector<16x16xf32>
    %c72_i32_411 = arith.constant 72 : i32
    %964 = arith.addi %43, %c72_i32_411 : i32
    %c30_i32_412 = arith.constant 30 : i32
    %965 = arith.addi %964, %c30_i32_412 : i32
    %966 = arith.index_cast %965 : i32 to index
    %967 = memref.load %arg2[%966] : memref<288xf32, #tpu.memory_space<smem>>
    %968 = vector.broadcast %967 : f32 to vector<16x16xf32>
    %969 = arith.mulf %968, %949 : vector<16x16xf32>
    %970 = arith.addf %940, %969 : vector<16x16xf32>
    %c108_i32_413 = arith.constant 108 : i32
    %971 = arith.addi %43, %c108_i32_413 : i32
    %c30_i32_414 = arith.constant 30 : i32
    %972 = arith.addi %971, %c30_i32_414 : i32
    %973 = arith.index_cast %972 : i32 to index
    %974 = memref.load %arg2[%973] : memref<288xf32, #tpu.memory_space<smem>>
    %975 = vector.broadcast %974 : f32 to vector<16x16xf32>
    %976 = arith.mulf %975, %949 : vector<16x16xf32>
    %977 = arith.addf %947, %976 : vector<16x16xf32>
    %c0_415 = arith.constant 0 : index
    %c3_416 = arith.constant 3 : index
    %c1_417 = arith.constant 1 : index
    %c1_418 = arith.constant 1 : index
    %978 = vector.load %arg5[%c0_415, %c3_416, %c1_417, %c1_418] : memref<2x4x18x18xf32, #tpu.memory_space<vmem>>, vector<1x1x16x16xf32>
    %979 = vector.shape_cast %978 : vector<1x1x16x16xf32> to vector<16x16xf32>
    %c0_i32_419 = arith.constant 0 : i32
    %980 = arith.addi %43, %c0_i32_419 : i32
    %c31_i32 = arith.constant 31 : i32
    %981 = arith.addi %980, %c31_i32 : i32
    %982 = arith.index_cast %981 : i32 to index
    %983 = memref.load %arg2[%982] : memref<288xf32, #tpu.memory_space<smem>>
    %984 = vector.broadcast %983 : f32 to vector<16x16xf32>
    %985 = arith.mulf %984, %979 : vector<16x16xf32>
    %986 = arith.addf %956, %985 : vector<16x16xf32>
    %c36_i32_420 = arith.constant 36 : i32
    %987 = arith.addi %43, %c36_i32_420 : i32
    %c31_i32_421 = arith.constant 31 : i32
    %988 = arith.addi %987, %c31_i32_421 : i32
    %989 = arith.index_cast %988 : i32 to index
    %990 = memref.load %arg2[%989] : memref<288xf32, #tpu.memory_space<smem>>
    %991 = vector.broadcast %990 : f32 to vector<16x16xf32>
    %992 = arith.mulf %991, %979 : vector<16x16xf32>
    %993 = arith.addf %963, %992 : vector<16x16xf32>
    %c72_i32_422 = arith.constant 72 : i32
    %994 = arith.addi %43, %c72_i32_422 : i32
    %c31_i32_423 = arith.constant 31 : i32
    %995 = arith.addi %994, %c31_i32_423 : i32
    %996 = arith.index_cast %995 : i32 to index
    %997 = memref.load %arg2[%996] : memref<288xf32, #tpu.memory_space<smem>>
    %998 = vector.broadcast %997 : f32 to vector<16x16xf32>
    %999 = arith.mulf %998, %979 : vector<16x16xf32>
    %1000 = arith.addf %970, %999 : vector<16x16xf32>
    %c108_i32_424 = arith.constant 108 : i32
    %1001 = arith.addi %43, %c108_i32_424 : i32
    %c31_i32_425 = arith.constant 31 : i32
    %1002 = arith.addi %1001, %c31_i32_425 : i32
    %1003 = arith.index_cast %1002 : i32 to index
    %1004 = memref.load %arg2[%1003] : memref<288xf32, #tpu.memory_space<smem>>
    %1005 = vector.broadcast %1004 : f32 to vector<16x16xf32>
    %1006 = arith.mulf %1005, %979 : vector<16x16xf32>
    %1007 = arith.addf %977, %1006 : vector<16x16xf32>
    %c0_426 = arith.constant 0 : index
    %c3_427 = arith.constant 3 : index
    %c1_428 = arith.constant 1 : index
    %c2_429 = arith.constant 2 : index
    %1008 = vector.load %arg5[%c0_426, %c3_427, %c1_428, %c2_429] : memref<2x4x18x18xf32, #tpu.memory_space<vmem>>, vector<1x1x16x16xf32>
    %1009 = vector.shape_cast %1008 : vector<1x1x16x16xf32> to vector<16x16xf32>
    %c0_i32_430 = arith.constant 0 : i32
    %1010 = arith.addi %43, %c0_i32_430 : i32
    %c32_i32 = arith.constant 32 : i32
    %1011 = arith.addi %1010, %c32_i32 : i32
    %1012 = arith.index_cast %1011 : i32 to index
    %1013 = memref.load %arg2[%1012] : memref<288xf32, #tpu.memory_space<smem>>
    %1014 = vector.broadcast %1013 : f32 to vector<16x16xf32>
    %1015 = arith.mulf %1014, %1009 : vector<16x16xf32>
    %1016 = arith.addf %986, %1015 : vector<16x16xf32>
    %c36_i32_431 = arith.constant 36 : i32
    %1017 = arith.addi %43, %c36_i32_431 : i32
    %c32_i32_432 = arith.constant 32 : i32
    %1018 = arith.addi %1017, %c32_i32_432 : i32
    %1019 = arith.index_cast %1018 : i32 to index
    %1020 = memref.load %arg2[%1019] : memref<288xf32, #tpu.memory_space<smem>>
    %1021 = vector.broadcast %1020 : f32 to vector<16x16xf32>
    %1022 = arith.mulf %1021, %1009 : vector<16x16xf32>
    %1023 = arith.addf %993, %1022 : vector<16x16xf32>
    %c72_i32_433 = arith.constant 72 : i32
    %1024 = arith.addi %43, %c72_i32_433 : i32
    %c32_i32_434 = arith.constant 32 : i32
    %1025 = arith.addi %1024, %c32_i32_434 : i32
    %1026 = arith.index_cast %1025 : i32 to index
    %1027 = memref.load %arg2[%1026] : memref<288xf32, #tpu.memory_space<smem>>
    %1028 = vector.broadcast %1027 : f32 to vector<16x16xf32>
    %1029 = arith.mulf %1028, %1009 : vector<16x16xf32>
    %1030 = arith.addf %1000, %1029 : vector<16x16xf32>
    %c108_i32_435 = arith.constant 108 : i32
    %1031 = arith.addi %43, %c108_i32_435 : i32
    %c32_i32_436 = arith.constant 32 : i32
    %1032 = arith.addi %1031, %c32_i32_436 : i32
    %1033 = arith.index_cast %1032 : i32 to index
    %1034 = memref.load %arg2[%1033] : memref<288xf32, #tpu.memory_space<smem>>
    %1035 = vector.broadcast %1034 : f32 to vector<16x16xf32>
    %1036 = arith.mulf %1035, %1009 : vector<16x16xf32>
    %1037 = arith.addf %1007, %1036 : vector<16x16xf32>
    %c0_437 = arith.constant 0 : index
    %c3_438 = arith.constant 3 : index
    %c2_439 = arith.constant 2 : index
    %c0_440 = arith.constant 0 : index
    %1038 = vector.load %arg5[%c0_437, %c3_438, %c2_439, %c0_440] : memref<2x4x18x18xf32, #tpu.memory_space<vmem>>, vector<1x1x16x16xf32>
    %1039 = vector.shape_cast %1038 : vector<1x1x16x16xf32> to vector<16x16xf32>
    %c0_i32_441 = arith.constant 0 : i32
    %1040 = arith.addi %43, %c0_i32_441 : i32
    %c33_i32 = arith.constant 33 : i32
    %1041 = arith.addi %1040, %c33_i32 : i32
    %1042 = arith.index_cast %1041 : i32 to index
    %1043 = memref.load %arg2[%1042] : memref<288xf32, #tpu.memory_space<smem>>
    %1044 = vector.broadcast %1043 : f32 to vector<16x16xf32>
    %1045 = arith.mulf %1044, %1039 : vector<16x16xf32>
    %1046 = arith.addf %1016, %1045 : vector<16x16xf32>
    %c36_i32_442 = arith.constant 36 : i32
    %1047 = arith.addi %43, %c36_i32_442 : i32
    %c33_i32_443 = arith.constant 33 : i32
    %1048 = arith.addi %1047, %c33_i32_443 : i32
    %1049 = arith.index_cast %1048 : i32 to index
    %1050 = memref.load %arg2[%1049] : memref<288xf32, #tpu.memory_space<smem>>
    %1051 = vector.broadcast %1050 : f32 to vector<16x16xf32>
    %1052 = arith.mulf %1051, %1039 : vector<16x16xf32>
    %1053 = arith.addf %1023, %1052 : vector<16x16xf32>
    %c72_i32_444 = arith.constant 72 : i32
    %1054 = arith.addi %43, %c72_i32_444 : i32
    %c33_i32_445 = arith.constant 33 : i32
    %1055 = arith.addi %1054, %c33_i32_445 : i32
    %1056 = arith.index_cast %1055 : i32 to index
    %1057 = memref.load %arg2[%1056] : memref<288xf32, #tpu.memory_space<smem>>
    %1058 = vector.broadcast %1057 : f32 to vector<16x16xf32>
    %1059 = arith.mulf %1058, %1039 : vector<16x16xf32>
    %1060 = arith.addf %1030, %1059 : vector<16x16xf32>
    %c108_i32_446 = arith.constant 108 : i32
    %1061 = arith.addi %43, %c108_i32_446 : i32
    %c33_i32_447 = arith.constant 33 : i32
    %1062 = arith.addi %1061, %c33_i32_447 : i32
    %1063 = arith.index_cast %1062 : i32 to index
    %1064 = memref.load %arg2[%1063] : memref<288xf32, #tpu.memory_space<smem>>
    %1065 = vector.broadcast %1064 : f32 to vector<16x16xf32>
    %1066 = arith.mulf %1065, %1039 : vector<16x16xf32>
    %1067 = arith.addf %1037, %1066 : vector<16x16xf32>
    %c0_448 = arith.constant 0 : index
    %c3_449 = arith.constant 3 : index
    %c2_450 = arith.constant 2 : index
    %c1_451 = arith.constant 1 : index
    %1068 = vector.load %arg5[%c0_448, %c3_449, %c2_450, %c1_451] : memref<2x4x18x18xf32, #tpu.memory_space<vmem>>, vector<1x1x16x16xf32>
    %1069 = vector.shape_cast %1068 : vector<1x1x16x16xf32> to vector<16x16xf32>
    %c0_i32_452 = arith.constant 0 : i32
    %1070 = arith.addi %43, %c0_i32_452 : i32
    %c34_i32 = arith.constant 34 : i32
    %1071 = arith.addi %1070, %c34_i32 : i32
    %1072 = arith.index_cast %1071 : i32 to index
    %1073 = memref.load %arg2[%1072] : memref<288xf32, #tpu.memory_space<smem>>
    %1074 = vector.broadcast %1073 : f32 to vector<16x16xf32>
    %1075 = arith.mulf %1074, %1069 : vector<16x16xf32>
    %1076 = arith.addf %1046, %1075 : vector<16x16xf32>
    %c36_i32_453 = arith.constant 36 : i32
    %1077 = arith.addi %43, %c36_i32_453 : i32
    %c34_i32_454 = arith.constant 34 : i32
    %1078 = arith.addi %1077, %c34_i32_454 : i32
    %1079 = arith.index_cast %1078 : i32 to index
    %1080 = memref.load %arg2[%1079] : memref<288xf32, #tpu.memory_space<smem>>
    %1081 = vector.broadcast %1080 : f32 to vector<16x16xf32>
    %1082 = arith.mulf %1081, %1069 : vector<16x16xf32>
    %1083 = arith.addf %1053, %1082 : vector<16x16xf32>
    %c72_i32_455 = arith.constant 72 : i32
    %1084 = arith.addi %43, %c72_i32_455 : i32
    %c34_i32_456 = arith.constant 34 : i32
    %1085 = arith.addi %1084, %c34_i32_456 : i32
    %1086 = arith.index_cast %1085 : i32 to index
    %1087 = memref.load %arg2[%1086] : memref<288xf32, #tpu.memory_space<smem>>
    %1088 = vector.broadcast %1087 : f32 to vector<16x16xf32>
    %1089 = arith.mulf %1088, %1069 : vector<16x16xf32>
    %1090 = arith.addf %1060, %1089 : vector<16x16xf32>
    %c108_i32_457 = arith.constant 108 : i32
    %1091 = arith.addi %43, %c108_i32_457 : i32
    %c34_i32_458 = arith.constant 34 : i32
    %1092 = arith.addi %1091, %c34_i32_458 : i32
    %1093 = arith.index_cast %1092 : i32 to index
    %1094 = memref.load %arg2[%1093] : memref<288xf32, #tpu.memory_space<smem>>
    %1095 = vector.broadcast %1094 : f32 to vector<16x16xf32>
    %1096 = arith.mulf %1095, %1069 : vector<16x16xf32>
    %1097 = arith.addf %1067, %1096 : vector<16x16xf32>
    %c0_459 = arith.constant 0 : index
    %c3_460 = arith.constant 3 : index
    %c2_461 = arith.constant 2 : index
    %c2_462 = arith.constant 2 : index
    %1098 = vector.load %arg5[%c0_459, %c3_460, %c2_461, %c2_462] : memref<2x4x18x18xf32, #tpu.memory_space<vmem>>, vector<1x1x16x16xf32>
    %1099 = vector.shape_cast %1098 : vector<1x1x16x16xf32> to vector<16x16xf32>
    %c0_i32_463 = arith.constant 0 : i32
    %1100 = arith.addi %43, %c0_i32_463 : i32
    %c35_i32 = arith.constant 35 : i32
    %1101 = arith.addi %1100, %c35_i32 : i32
    %1102 = arith.index_cast %1101 : i32 to index
    %1103 = memref.load %arg2[%1102] : memref<288xf32, #tpu.memory_space<smem>>
    %1104 = vector.broadcast %1103 : f32 to vector<16x16xf32>
    %1105 = arith.mulf %1104, %1099 : vector<16x16xf32>
    %1106 = arith.addf %1076, %1105 : vector<16x16xf32>
    %c36_i32_464 = arith.constant 36 : i32
    %1107 = arith.addi %43, %c36_i32_464 : i32
    %c35_i32_465 = arith.constant 35 : i32
    %1108 = arith.addi %1107, %c35_i32_465 : i32
    %1109 = arith.index_cast %1108 : i32 to index
    %1110 = memref.load %arg2[%1109] : memref<288xf32, #tpu.memory_space<smem>>
    %1111 = vector.broadcast %1110 : f32 to vector<16x16xf32>
    %1112 = arith.mulf %1111, %1099 : vector<16x16xf32>
    %1113 = arith.addf %1083, %1112 : vector<16x16xf32>
    %c72_i32_466 = arith.constant 72 : i32
    %1114 = arith.addi %43, %c72_i32_466 : i32
    %c35_i32_467 = arith.constant 35 : i32
    %1115 = arith.addi %1114, %c35_i32_467 : i32
    %1116 = arith.index_cast %1115 : i32 to index
    %1117 = memref.load %arg2[%1116] : memref<288xf32, #tpu.memory_space<smem>>
    %1118 = vector.broadcast %1117 : f32 to vector<16x16xf32>
    %1119 = arith.mulf %1118, %1099 : vector<16x16xf32>
    %1120 = arith.addf %1090, %1119 : vector<16x16xf32>
    %c108_i32_468 = arith.constant 108 : i32
    %1121 = arith.addi %43, %c108_i32_468 : i32
    %c35_i32_469 = arith.constant 35 : i32
    %1122 = arith.addi %1121, %c35_i32_469 : i32
    %1123 = arith.index_cast %1122 : i32 to index
    %1124 = memref.load %arg2[%1123] : memref<288xf32, #tpu.memory_space<smem>>
    %1125 = vector.broadcast %1124 : f32 to vector<16x16xf32>
    %1126 = arith.mulf %1125, %1099 : vector<16x16xf32>
    %1127 = arith.addf %1097, %1126 : vector<16x16xf32>
    %c0_470 = arith.constant 0 : index
    %c0_471 = arith.constant 0 : index
    %c0_472 = arith.constant 0 : index
    %c0_473 = arith.constant 0 : index
    %c0_474 = arith.constant 0 : index
    %1128 = vector.load %arg4[%c0_470, %c0_471, %c0_472, %c0_473, %c0_474] : memref<1x2x4x16x16xf32, #tpu.memory_space<vmem>>, vector<1x1x1x16x16xf32>
    %1129 = vector.shape_cast %1128 : vector<1x1x1x16x16xf32> to vector<16x16xf32>
    %1130 = vector.shape_cast %1106 : vector<16x16xf32> to vector<1x1x1x16x16xf32>
    tpu.vector_store %arg4[%c0_470, %c0_471, %c0_472, %c0_473, %c0_474], %1130 {strides = array<i32>} : memref<1x2x4x16x16xf32, #tpu.memory_space<vmem>>, vector<1x1x1x16x16xf32>,
    %c0_475 = arith.constant 0 : index
    %c0_476 = arith.constant 0 : index
    %c1_477 = arith.constant 1 : index
    %c0_478 = arith.constant 0 : index
    %c0_479 = arith.constant 0 : index
    %1131 = vector.load %arg4[%c0_475, %c0_476, %c1_477, %c0_478, %c0_479] : memref<1x2x4x16x16xf32, #tpu.memory_space<vmem>>, vector<1x1x1x16x16xf32>
    %1132 = vector.shape_cast %1131 : vector<1x1x1x16x16xf32> to vector<16x16xf32>
    %1133 = vector.shape_cast %1113 : vector<16x16xf32> to vector<1x1x1x16x16xf32>
    tpu.vector_store %arg4[%c0_475, %c0_476, %c1_477, %c0_478, %c0_479], %1133 {strides = array<i32>} : memref<1x2x4x16x16xf32, #tpu.memory_space<vmem>>, vector<1x1x1x16x16xf32>,
    %c0_480 = arith.constant 0 : index
    %c0_481 = arith.constant 0 : index
    %c2_482 = arith.constant 2 : index
    %c0_483 = arith.constant 0 : index
    %c0_484 = arith.constant 0 : index
    %1134 = vector.load %arg4[%c0_480, %c0_481, %c2_482, %c0_483, %c0_484] : memref<1x2x4x16x16xf32, #tpu.memory_space<vmem>>, vector<1x1x1x16x16xf32>
    %1135 = vector.shape_cast %1134 : vector<1x1x1x16x16xf32> to vector<16x16xf32>
    %1136 = vector.shape_cast %1120 : vector<16x16xf32> to vector<1x1x1x16x16xf32>
    tpu.vector_store %arg4[%c0_480, %c0_481, %c2_482, %c0_483, %c0_484], %1136 {strides = array<i32>} : memref<1x2x4x16x16xf32, #tpu.memory_space<vmem>>, vector<1x1x1x16x16xf32>,
    %c0_485 = arith.constant 0 : index
    %c0_486 = arith.constant 0 : index
    %c3_487 = arith.constant 3 : index
    %c0_488 = arith.constant 0 : index
    %c0_489 = arith.constant 0 : index
    %1137 = vector.load %arg4[%c0_485, %c0_486, %c3_487, %c0_488, %c0_489] : memref<1x2x4x16x16xf32, #tpu.memory_space<vmem>>, vector<1x1x1x16x16xf32>
    %1138 = vector.shape_cast %1137 : vector<1x1x1x16x16xf32> to vector<16x16xf32>
    %1139 = vector.shape_cast %1127 : vector<16x16xf32> to vector<1x1x1x16x16xf32>
    tpu.vector_store %arg4[%c0_485, %c0_486, %c3_487, %c0_488, %c0_489], %1139 {strides = array<i32>} : memref<1x2x4x16x16xf32, #tpu.memory_space<vmem>>, vector<1x1x1x16x16xf32>,
    %c144_i32 = arith.constant 144 : i32
    %1140 = arith.addi %42, %c144_i32 : i32
    %cst_490 = arith.constant 0.000000e+00 : f32
    %1141 = vector.broadcast %cst_490 : f32 to vector<16x16xf32>
    %cst_491 = arith.constant 0.000000e+00 : f32
    %1142 = vector.broadcast %cst_491 : f32 to vector<16x16xf32>
    %cst_492 = arith.constant 0.000000e+00 : f32
    %1143 = vector.broadcast %cst_492 : f32 to vector<16x16xf32>
    %cst_493 = arith.constant 0.000000e+00 : f32
    %1144 = vector.broadcast %cst_493 : f32 to vector<16x16xf32>
    %c1_494 = arith.constant 1 : index
    %c0_495 = arith.constant 0 : index
    %c0_496 = arith.constant 0 : index
    %c0_497 = arith.constant 0 : index
    %1145 = vector.load %arg5[%c1_494, %c0_495, %c0_496, %c0_497] : memref<2x4x18x18xf32, #tpu.memory_space<vmem>>, vector<1x1x16x16xf32>
    %1146 = vector.shape_cast %1145 : vector<1x1x16x16xf32> to vector<16x16xf32>
    %c0_i32_498 = arith.constant 0 : i32
    %1147 = arith.addi %1140, %c0_i32_498 : i32
    %c0_i32_499 = arith.constant 0 : i32
    %1148 = arith.addi %1147, %c0_i32_499 : i32
    %1149 = arith.index_cast %1148 : i32 to index
    %1150 = memref.load %arg2[%1149] : memref<288xf32, #tpu.memory_space<smem>>
    %1151 = vector.broadcast %1150 : f32 to vector<16x16xf32>
    %1152 = arith.mulf %1151, %1146 : vector<16x16xf32>
    %1153 = arith.addf %1141, %1152 : vector<16x16xf32>
    %c36_i32_500 = arith.constant 36 : i32
    %1154 = arith.addi %1140, %c36_i32_500 : i32
    %c0_i32_501 = arith.constant 0 : i32
    %1155 = arith.addi %1154, %c0_i32_501 : i32
    %1156 = arith.index_cast %1155 : i32 to index
    %1157 = memref.load %arg2[%1156] : memref<288xf32, #tpu.memory_space<smem>>
    %1158 = vector.broadcast %1157 : f32 to vector<16x16xf32>
    %1159 = arith.mulf %1158, %1146 : vector<16x16xf32>
    %1160 = arith.addf %1142, %1159 : vector<16x16xf32>
    %c72_i32_502 = arith.constant 72 : i32
    %1161 = arith.addi %1140, %c72_i32_502 : i32
    %c0_i32_503 = arith.constant 0 : i32
    %1162 = arith.addi %1161, %c0_i32_503 : i32
    %1163 = arith.index_cast %1162 : i32 to index
    %1164 = memref.load %arg2[%1163] : memref<288xf32, #tpu.memory_space<smem>>
    %1165 = vector.broadcast %1164 : f32 to vector<16x16xf32>
    %1166 = arith.mulf %1165, %1146 : vector<16x16xf32>
    %1167 = arith.addf %1143, %1166 : vector<16x16xf32>
    %c108_i32_504 = arith.constant 108 : i32
    %1168 = arith.addi %1140, %c108_i32_504 : i32
    %c0_i32_505 = arith.constant 0 : i32
    %1169 = arith.addi %1168, %c0_i32_505 : i32
    %1170 = arith.index_cast %1169 : i32 to index
    %1171 = memref.load %arg2[%1170] : memref<288xf32, #tpu.memory_space<smem>>
    %1172 = vector.broadcast %1171 : f32 to vector<16x16xf32>
    %1173 = arith.mulf %1172, %1146 : vector<16x16xf32>
    %1174 = arith.addf %1144, %1173 : vector<16x16xf32>
    %c1_506 = arith.constant 1 : index
    %c0_507 = arith.constant 0 : index
    %c0_508 = arith.constant 0 : index
    %c1_509 = arith.constant 1 : index
    %1175 = vector.load %arg5[%c1_506, %c0_507, %c0_508, %c1_509] : memref<2x4x18x18xf32, #tpu.memory_space<vmem>>, vector<1x1x16x16xf32>
    %1176 = vector.shape_cast %1175 : vector<1x1x16x16xf32> to vector<16x16xf32>
    %c0_i32_510 = arith.constant 0 : i32
    %1177 = arith.addi %1140, %c0_i32_510 : i32
    %c1_i32_511 = arith.constant 1 : i32
    %1178 = arith.addi %1177, %c1_i32_511 : i32
    %1179 = arith.index_cast %1178 : i32 to index
    %1180 = memref.load %arg2[%1179] : memref<288xf32, #tpu.memory_space<smem>>
    %1181 = vector.broadcast %1180 : f32 to vector<16x16xf32>
    %1182 = arith.mulf %1181, %1176 : vector<16x16xf32>
    %1183 = arith.addf %1153, %1182 : vector<16x16xf32>
    %c36_i32_512 = arith.constant 36 : i32
    %1184 = arith.addi %1140, %c36_i32_512 : i32
    %c1_i32_513 = arith.constant 1 : i32
    %1185 = arith.addi %1184, %c1_i32_513 : i32
    %1186 = arith.index_cast %1185 : i32 to index
    %1187 = memref.load %arg2[%1186] : memref<288xf32, #tpu.memory_space<smem>>
    %1188 = vector.broadcast %1187 : f32 to vector<16x16xf32>
    %1189 = arith.mulf %1188, %1176 : vector<16x16xf32>
    %1190 = arith.addf %1160, %1189 : vector<16x16xf32>
    %c72_i32_514 = arith.constant 72 : i32
    %1191 = arith.addi %1140, %c72_i32_514 : i32
    %c1_i32_515 = arith.constant 1 : i32
    %1192 = arith.addi %1191, %c1_i32_515 : i32
    %1193 = arith.index_cast %1192 : i32 to index
    %1194 = memref.load %arg2[%1193] : memref<288xf32, #tpu.memory_space<smem>>
    %1195 = vector.broadcast %1194 : f32 to vector<16x16xf32>
    %1196 = arith.mulf %1195, %1176 : vector<16x16xf32>
    %1197 = arith.addf %1167, %1196 : vector<16x16xf32>
    %c108_i32_516 = arith.constant 108 : i32
    %1198 = arith.addi %1140, %c108_i32_516 : i32
    %c1_i32_517 = arith.constant 1 : i32
    %1199 = arith.addi %1198, %c1_i32_517 : i32
    %1200 = arith.index_cast %1199 : i32 to index
    %1201 = memref.load %arg2[%1200] : memref<288xf32, #tpu.memory_space<smem>>
    %1202 = vector.broadcast %1201 : f32 to vector<16x16xf32>
    %1203 = arith.mulf %1202, %1176 : vector<16x16xf32>
    %1204 = arith.addf %1174, %1203 : vector<16x16xf32>
    %c1_518 = arith.constant 1 : index
    %c0_519 = arith.constant 0 : index
    %c0_520 = arith.constant 0 : index
    %c2_521 = arith.constant 2 : index
    %1205 = vector.load %arg5[%c1_518, %c0_519, %c0_520, %c2_521] : memref<2x4x18x18xf32, #tpu.memory_space<vmem>>, vector<1x1x16x16xf32>
    %1206 = vector.shape_cast %1205 : vector<1x1x16x16xf32> to vector<16x16xf32>
    %c0_i32_522 = arith.constant 0 : i32
    %1207 = arith.addi %1140, %c0_i32_522 : i32
    %c2_i32_523 = arith.constant 2 : i32
    %1208 = arith.addi %1207, %c2_i32_523 : i32
    %1209 = arith.index_cast %1208 : i32 to index
    %1210 = memref.load %arg2[%1209] : memref<288xf32, #tpu.memory_space<smem>>
    %1211 = vector.broadcast %1210 : f32 to vector<16x16xf32>
    %1212 = arith.mulf %1211, %1206 : vector<16x16xf32>
    %1213 = arith.addf %1183, %1212 : vector<16x16xf32>
    %c36_i32_524 = arith.constant 36 : i32
    %1214 = arith.addi %1140, %c36_i32_524 : i32
    %c2_i32_525 = arith.constant 2 : i32
    %1215 = arith.addi %1214, %c2_i32_525 : i32
    %1216 = arith.index_cast %1215 : i32 to index
    %1217 = memref.load %arg2[%1216] : memref<288xf32, #tpu.memory_space<smem>>
    %1218 = vector.broadcast %1217 : f32 to vector<16x16xf32>
    %1219 = arith.mulf %1218, %1206 : vector<16x16xf32>
    %1220 = arith.addf %1190, %1219 : vector<16x16xf32>
    %c72_i32_526 = arith.constant 72 : i32
    %1221 = arith.addi %1140, %c72_i32_526 : i32
    %c2_i32_527 = arith.constant 2 : i32
    %1222 = arith.addi %1221, %c2_i32_527 : i32
    %1223 = arith.index_cast %1222 : i32 to index
    %1224 = memref.load %arg2[%1223] : memref<288xf32, #tpu.memory_space<smem>>
    %1225 = vector.broadcast %1224 : f32 to vector<16x16xf32>
    %1226 = arith.mulf %1225, %1206 : vector<16x16xf32>
    %1227 = arith.addf %1197, %1226 : vector<16x16xf32>
    %c108_i32_528 = arith.constant 108 : i32
    %1228 = arith.addi %1140, %c108_i32_528 : i32
    %c2_i32_529 = arith.constant 2 : i32
    %1229 = arith.addi %1228, %c2_i32_529 : i32
    %1230 = arith.index_cast %1229 : i32 to index
    %1231 = memref.load %arg2[%1230] : memref<288xf32, #tpu.memory_space<smem>>
    %1232 = vector.broadcast %1231 : f32 to vector<16x16xf32>
    %1233 = arith.mulf %1232, %1206 : vector<16x16xf32>
    %1234 = arith.addf %1204, %1233 : vector<16x16xf32>
    %c1_530 = arith.constant 1 : index
    %c0_531 = arith.constant 0 : index
    %c1_532 = arith.constant 1 : index
    %c0_533 = arith.constant 0 : index
    %1235 = vector.load %arg5[%c1_530, %c0_531, %c1_532, %c0_533] : memref<2x4x18x18xf32, #tpu.memory_space<vmem>>, vector<1x1x16x16xf32>
    %1236 = vector.shape_cast %1235 : vector<1x1x16x16xf32> to vector<16x16xf32>
    %c0_i32_534 = arith.constant 0 : i32
    %1237 = arith.addi %1140, %c0_i32_534 : i32
    %c3_i32_535 = arith.constant 3 : i32
    %1238 = arith.addi %1237, %c3_i32_535 : i32
    %1239 = arith.index_cast %1238 : i32 to index
    %1240 = memref.load %arg2[%1239] : memref<288xf32, #tpu.memory_space<smem>>
    %1241 = vector.broadcast %1240 : f32 to vector<16x16xf32>
    %1242 = arith.mulf %1241, %1236 : vector<16x16xf32>
    %1243 = arith.addf %1213, %1242 : vector<16x16xf32>
    %c36_i32_536 = arith.constant 36 : i32
    %1244 = arith.addi %1140, %c36_i32_536 : i32
    %c3_i32_537 = arith.constant 3 : i32
    %1245 = arith.addi %1244, %c3_i32_537 : i32
    %1246 = arith.index_cast %1245 : i32 to index
    %1247 = memref.load %arg2[%1246] : memref<288xf32, #tpu.memory_space<smem>>
    %1248 = vector.broadcast %1247 : f32 to vector<16x16xf32>
    %1249 = arith.mulf %1248, %1236 : vector<16x16xf32>
    %1250 = arith.addf %1220, %1249 : vector<16x16xf32>
    %c72_i32_538 = arith.constant 72 : i32
    %1251 = arith.addi %1140, %c72_i32_538 : i32
    %c3_i32_539 = arith.constant 3 : i32
    %1252 = arith.addi %1251, %c3_i32_539 : i32
    %1253 = arith.index_cast %1252 : i32 to index
    %1254 = memref.load %arg2[%1253] : memref<288xf32, #tpu.memory_space<smem>>
    %1255 = vector.broadcast %1254 : f32 to vector<16x16xf32>
    %1256 = arith.mulf %1255, %1236 : vector<16x16xf32>
    %1257 = arith.addf %1227, %1256 : vector<16x16xf32>
    %c108_i32_540 = arith.constant 108 : i32
    %1258 = arith.addi %1140, %c108_i32_540 : i32
    %c3_i32_541 = arith.constant 3 : i32
    %1259 = arith.addi %1258, %c3_i32_541 : i32
    %1260 = arith.index_cast %1259 : i32 to index
    %1261 = memref.load %arg2[%1260] : memref<288xf32, #tpu.memory_space<smem>>
    %1262 = vector.broadcast %1261 : f32 to vector<16x16xf32>
    %1263 = arith.mulf %1262, %1236 : vector<16x16xf32>
    %1264 = arith.addf %1234, %1263 : vector<16x16xf32>
    %c1_542 = arith.constant 1 : index
    %c0_543 = arith.constant 0 : index
    %c1_544 = arith.constant 1 : index
    %c1_545 = arith.constant 1 : index
    %1265 = vector.load %arg5[%c1_542, %c0_543, %c1_544, %c1_545] : memref<2x4x18x18xf32, #tpu.memory_space<vmem>>, vector<1x1x16x16xf32>
    %1266 = vector.shape_cast %1265 : vector<1x1x16x16xf32> to vector<16x16xf32>
    %c0_i32_546 = arith.constant 0 : i32
    %1267 = arith.addi %1140, %c0_i32_546 : i32
    %c4_i32_547 = arith.constant 4 : i32
    %1268 = arith.addi %1267, %c4_i32_547 : i32
    %1269 = arith.index_cast %1268 : i32 to index
    %1270 = memref.load %arg2[%1269] : memref<288xf32, #tpu.memory_space<smem>>
    %1271 = vector.broadcast %1270 : f32 to vector<16x16xf32>
    %1272 = arith.mulf %1271, %1266 : vector<16x16xf32>
    %1273 = arith.addf %1243, %1272 : vector<16x16xf32>
    %c36_i32_548 = arith.constant 36 : i32
    %1274 = arith.addi %1140, %c36_i32_548 : i32
    %c4_i32_549 = arith.constant 4 : i32
    %1275 = arith.addi %1274, %c4_i32_549 : i32
    %1276 = arith.index_cast %1275 : i32 to index
    %1277 = memref.load %arg2[%1276] : memref<288xf32, #tpu.memory_space<smem>>
    %1278 = vector.broadcast %1277 : f32 to vector<16x16xf32>
    %1279 = arith.mulf %1278, %1266 : vector<16x16xf32>
    %1280 = arith.addf %1250, %1279 : vector<16x16xf32>
    %c72_i32_550 = arith.constant 72 : i32
    %1281 = arith.addi %1140, %c72_i32_550 : i32
    %c4_i32_551 = arith.constant 4 : i32
    %1282 = arith.addi %1281, %c4_i32_551 : i32
    %1283 = arith.index_cast %1282 : i32 to index
    %1284 = memref.load %arg2[%1283] : memref<288xf32, #tpu.memory_space<smem>>
    %1285 = vector.broadcast %1284 : f32 to vector<16x16xf32>
    %1286 = arith.mulf %1285, %1266 : vector<16x16xf32>
    %1287 = arith.addf %1257, %1286 : vector<16x16xf32>
    %c108_i32_552 = arith.constant 108 : i32
    %1288 = arith.addi %1140, %c108_i32_552 : i32
    %c4_i32_553 = arith.constant 4 : i32
    %1289 = arith.addi %1288, %c4_i32_553 : i32
    %1290 = arith.index_cast %1289 : i32 to index
    %1291 = memref.load %arg2[%1290] : memref<288xf32, #tpu.memory_space<smem>>
    %1292 = vector.broadcast %1291 : f32 to vector<16x16xf32>
    %1293 = arith.mulf %1292, %1266 : vector<16x16xf32>
    %1294 = arith.addf %1264, %1293 : vector<16x16xf32>
    %c1_554 = arith.constant 1 : index
    %c0_555 = arith.constant 0 : index
    %c1_556 = arith.constant 1 : index
    %c2_557 = arith.constant 2 : index
    %1295 = vector.load %arg5[%c1_554, %c0_555, %c1_556, %c2_557] : memref<2x4x18x18xf32, #tpu.memory_space<vmem>>, vector<1x1x16x16xf32>
    %1296 = vector.shape_cast %1295 : vector<1x1x16x16xf32> to vector<16x16xf32>
    %c0_i32_558 = arith.constant 0 : i32
    %1297 = arith.addi %1140, %c0_i32_558 : i32
    %c5_i32_559 = arith.constant 5 : i32
    %1298 = arith.addi %1297, %c5_i32_559 : i32
    %1299 = arith.index_cast %1298 : i32 to index
    %1300 = memref.load %arg2[%1299] : memref<288xf32, #tpu.memory_space<smem>>
    %1301 = vector.broadcast %1300 : f32 to vector<16x16xf32>
    %1302 = arith.mulf %1301, %1296 : vector<16x16xf32>
    %1303 = arith.addf %1273, %1302 : vector<16x16xf32>
    %c36_i32_560 = arith.constant 36 : i32
    %1304 = arith.addi %1140, %c36_i32_560 : i32
    %c5_i32_561 = arith.constant 5 : i32
    %1305 = arith.addi %1304, %c5_i32_561 : i32
    %1306 = arith.index_cast %1305 : i32 to index
    %1307 = memref.load %arg2[%1306] : memref<288xf32, #tpu.memory_space<smem>>
    %1308 = vector.broadcast %1307 : f32 to vector<16x16xf32>
    %1309 = arith.mulf %1308, %1296 : vector<16x16xf32>
    %1310 = arith.addf %1280, %1309 : vector<16x16xf32>
    %c72_i32_562 = arith.constant 72 : i32
    %1311 = arith.addi %1140, %c72_i32_562 : i32
    %c5_i32_563 = arith.constant 5 : i32
    %1312 = arith.addi %1311, %c5_i32_563 : i32
    %1313 = arith.index_cast %1312 : i32 to index
    %1314 = memref.load %arg2[%1313] : memref<288xf32, #tpu.memory_space<smem>>
    %1315 = vector.broadcast %1314 : f32 to vector<16x16xf32>
    %1316 = arith.mulf %1315, %1296 : vector<16x16xf32>
    %1317 = arith.addf %1287, %1316 : vector<16x16xf32>
    %c108_i32_564 = arith.constant 108 : i32
    %1318 = arith.addi %1140, %c108_i32_564 : i32
    %c5_i32_565 = arith.constant 5 : i32
    %1319 = arith.addi %1318, %c5_i32_565 : i32
    %1320 = arith.index_cast %1319 : i32 to index
    %1321 = memref.load %arg2[%1320] : memref<288xf32, #tpu.memory_space<smem>>
    %1322 = vector.broadcast %1321 : f32 to vector<16x16xf32>
    %1323 = arith.mulf %1322, %1296 : vector<16x16xf32>
    %1324 = arith.addf %1294, %1323 : vector<16x16xf32>
    %c1_566 = arith.constant 1 : index
    %c0_567 = arith.constant 0 : index
    %c2_568 = arith.constant 2 : index
    %c0_569 = arith.constant 0 : index
    %1325 = vector.load %arg5[%c1_566, %c0_567, %c2_568, %c0_569] : memref<2x4x18x18xf32, #tpu.memory_space<vmem>>, vector<1x1x16x16xf32>
    %1326 = vector.shape_cast %1325 : vector<1x1x16x16xf32> to vector<16x16xf32>
    %c0_i32_570 = arith.constant 0 : i32
    %1327 = arith.addi %1140, %c0_i32_570 : i32
    %c6_i32_571 = arith.constant 6 : i32
    %1328 = arith.addi %1327, %c6_i32_571 : i32
    %1329 = arith.index_cast %1328 : i32 to index
    %1330 = memref.load %arg2[%1329] : memref<288xf32, #tpu.memory_space<smem>>
    %1331 = vector.broadcast %1330 : f32 to vector<16x16xf32>
    %1332 = arith.mulf %1331, %1326 : vector<16x16xf32>
    %1333 = arith.addf %1303, %1332 : vector<16x16xf32>
    %c36_i32_572 = arith.constant 36 : i32
    %1334 = arith.addi %1140, %c36_i32_572 : i32
    %c6_i32_573 = arith.constant 6 : i32
    %1335 = arith.addi %1334, %c6_i32_573 : i32
    %1336 = arith.index_cast %1335 : i32 to index
    %1337 = memref.load %arg2[%1336] : memref<288xf32, #tpu.memory_space<smem>>
    %1338 = vector.broadcast %1337 : f32 to vector<16x16xf32>
    %1339 = arith.mulf %1338, %1326 : vector<16x16xf32>
    %1340 = arith.addf %1310, %1339 : vector<16x16xf32>
    %c72_i32_574 = arith.constant 72 : i32
    %1341 = arith.addi %1140, %c72_i32_574 : i32
    %c6_i32_575 = arith.constant 6 : i32
    %1342 = arith.addi %1341, %c6_i32_575 : i32
    %1343 = arith.index_cast %1342 : i32 to index
    %1344 = memref.load %arg2[%1343] : memref<288xf32, #tpu.memory_space<smem>>
    %1345 = vector.broadcast %1344 : f32 to vector<16x16xf32>
    %1346 = arith.mulf %1345, %1326 : vector<16x16xf32>
    %1347 = arith.addf %1317, %1346 : vector<16x16xf32>
    %c108_i32_576 = arith.constant 108 : i32
    %1348 = arith.addi %1140, %c108_i32_576 : i32
    %c6_i32_577 = arith.constant 6 : i32
    %1349 = arith.addi %1348, %c6_i32_577 : i32
    %1350 = arith.index_cast %1349 : i32 to index
    %1351 = memref.load %arg2[%1350] : memref<288xf32, #tpu.memory_space<smem>>
    %1352 = vector.broadcast %1351 : f32 to vector<16x16xf32>
    %1353 = arith.mulf %1352, %1326 : vector<16x16xf32>
    %1354 = arith.addf %1324, %1353 : vector<16x16xf32>
    %c1_578 = arith.constant 1 : index
    %c0_579 = arith.constant 0 : index
    %c2_580 = arith.constant 2 : index
    %c1_581 = arith.constant 1 : index
    %1355 = vector.load %arg5[%c1_578, %c0_579, %c2_580, %c1_581] : memref<2x4x18x18xf32, #tpu.memory_space<vmem>>, vector<1x1x16x16xf32>
    %1356 = vector.shape_cast %1355 : vector<1x1x16x16xf32> to vector<16x16xf32>
    %c0_i32_582 = arith.constant 0 : i32
    %1357 = arith.addi %1140, %c0_i32_582 : i32
    %c7_i32_583 = arith.constant 7 : i32
    %1358 = arith.addi %1357, %c7_i32_583 : i32
    %1359 = arith.index_cast %1358 : i32 to index
    %1360 = memref.load %arg2[%1359] : memref<288xf32, #tpu.memory_space<smem>>
    %1361 = vector.broadcast %1360 : f32 to vector<16x16xf32>
    %1362 = arith.mulf %1361, %1356 : vector<16x16xf32>
    %1363 = arith.addf %1333, %1362 : vector<16x16xf32>
    %c36_i32_584 = arith.constant 36 : i32
    %1364 = arith.addi %1140, %c36_i32_584 : i32
    %c7_i32_585 = arith.constant 7 : i32
    %1365 = arith.addi %1364, %c7_i32_585 : i32
    %1366 = arith.index_cast %1365 : i32 to index
    %1367 = memref.load %arg2[%1366] : memref<288xf32, #tpu.memory_space<smem>>
    %1368 = vector.broadcast %1367 : f32 to vector<16x16xf32>
    %1369 = arith.mulf %1368, %1356 : vector<16x16xf32>
    %1370 = arith.addf %1340, %1369 : vector<16x16xf32>
    %c72_i32_586 = arith.constant 72 : i32
    %1371 = arith.addi %1140, %c72_i32_586 : i32
    %c7_i32_587 = arith.constant 7 : i32
    %1372 = arith.addi %1371, %c7_i32_587 : i32
    %1373 = arith.index_cast %1372 : i32 to index
    %1374 = memref.load %arg2[%1373] : memref<288xf32, #tpu.memory_space<smem>>
    %1375 = vector.broadcast %1374 : f32 to vector<16x16xf32>
    %1376 = arith.mulf %1375, %1356 : vector<16x16xf32>
    %1377 = arith.addf %1347, %1376 : vector<16x16xf32>
    %c108_i32_588 = arith.constant 108 : i32
    %1378 = arith.addi %1140, %c108_i32_588 : i32
    %c7_i32_589 = arith.constant 7 : i32
    %1379 = arith.addi %1378, %c7_i32_589 : i32
    %1380 = arith.index_cast %1379 : i32 to index
    %1381 = memref.load %arg2[%1380] : memref<288xf32, #tpu.memory_space<smem>>
    %1382 = vector.broadcast %1381 : f32 to vector<16x16xf32>
    %1383 = arith.mulf %1382, %1356 : vector<16x16xf32>
    %1384 = arith.addf %1354, %1383 : vector<16x16xf32>
    %c1_590 = arith.constant 1 : index
    %c0_591 = arith.constant 0 : index
    %c2_592 = arith.constant 2 : index
    %c2_593 = arith.constant 2 : index
    %1385 = vector.load %arg5[%c1_590, %c0_591, %c2_592, %c2_593] : memref<2x4x18x18xf32, #tpu.memory_space<vmem>>, vector<1x1x16x16xf32>
    %1386 = vector.shape_cast %1385 : vector<1x1x16x16xf32> to vector<16x16xf32>
    %c0_i32_594 = arith.constant 0 : i32
    %1387 = arith.addi %1140, %c0_i32_594 : i32
    %c8_i32_595 = arith.constant 8 : i32
    %1388 = arith.addi %1387, %c8_i32_595 : i32
    %1389 = arith.index_cast %1388 : i32 to index
    %1390 = memref.load %arg2[%1389] : memref<288xf32, #tpu.memory_space<smem>>
    %1391 = vector.broadcast %1390 : f32 to vector<16x16xf32>
    %1392 = arith.mulf %1391, %1386 : vector<16x16xf32>
    %1393 = arith.addf %1363, %1392 : vector<16x16xf32>
    %c36_i32_596 = arith.constant 36 : i32
    %1394 = arith.addi %1140, %c36_i32_596 : i32
    %c8_i32_597 = arith.constant 8 : i32
    %1395 = arith.addi %1394, %c8_i32_597 : i32
    %1396 = arith.index_cast %1395 : i32 to index
    %1397 = memref.load %arg2[%1396] : memref<288xf32, #tpu.memory_space<smem>>
    %1398 = vector.broadcast %1397 : f32 to vector<16x16xf32>
    %1399 = arith.mulf %1398, %1386 : vector<16x16xf32>
    %1400 = arith.addf %1370, %1399 : vector<16x16xf32>
    %c72_i32_598 = arith.constant 72 : i32
    %1401 = arith.addi %1140, %c72_i32_598 : i32
    %c8_i32_599 = arith.constant 8 : i32
    %1402 = arith.addi %1401, %c8_i32_599 : i32
    %1403 = arith.index_cast %1402 : i32 to index
    %1404 = memref.load %arg2[%1403] : memref<288xf32, #tpu.memory_space<smem>>
    %1405 = vector.broadcast %1404 : f32 to vector<16x16xf32>
    %1406 = arith.mulf %1405, %1386 : vector<16x16xf32>
    %1407 = arith.addf %1377, %1406 : vector<16x16xf32>
    %c108_i32_600 = arith.constant 108 : i32
    %1408 = arith.addi %1140, %c108_i32_600 : i32
    %c8_i32_601 = arith.constant 8 : i32
    %1409 = arith.addi %1408, %c8_i32_601 : i32
    %1410 = arith.index_cast %1409 : i32 to index
    %1411 = memref.load %arg2[%1410] : memref<288xf32, #tpu.memory_space<smem>>
    %1412 = vector.broadcast %1411 : f32 to vector<16x16xf32>
    %1413 = arith.mulf %1412, %1386 : vector<16x16xf32>
    %1414 = arith.addf %1384, %1413 : vector<16x16xf32>
    %c1_602 = arith.constant 1 : index
    %c1_603 = arith.constant 1 : index
    %c0_604 = arith.constant 0 : index
    %c0_605 = arith.constant 0 : index
    %1415 = vector.load %arg5[%c1_602, %c1_603, %c0_604, %c0_605] : memref<2x4x18x18xf32, #tpu.memory_space<vmem>>, vector<1x1x16x16xf32>
    %1416 = vector.shape_cast %1415 : vector<1x1x16x16xf32> to vector<16x16xf32>
    %c0_i32_606 = arith.constant 0 : i32
    %1417 = arith.addi %1140, %c0_i32_606 : i32
    %c9_i32_607 = arith.constant 9 : i32
    %1418 = arith.addi %1417, %c9_i32_607 : i32
    %1419 = arith.index_cast %1418 : i32 to index
    %1420 = memref.load %arg2[%1419] : memref<288xf32, #tpu.memory_space<smem>>
    %1421 = vector.broadcast %1420 : f32 to vector<16x16xf32>
    %1422 = arith.mulf %1421, %1416 : vector<16x16xf32>
    %1423 = arith.addf %1393, %1422 : vector<16x16xf32>
    %c36_i32_608 = arith.constant 36 : i32
    %1424 = arith.addi %1140, %c36_i32_608 : i32
    %c9_i32_609 = arith.constant 9 : i32
    %1425 = arith.addi %1424, %c9_i32_609 : i32
    %1426 = arith.index_cast %1425 : i32 to index
    %1427 = memref.load %arg2[%1426] : memref<288xf32, #tpu.memory_space<smem>>
    %1428 = vector.broadcast %1427 : f32 to vector<16x16xf32>
    %1429 = arith.mulf %1428, %1416 : vector<16x16xf32>
    %1430 = arith.addf %1400, %1429 : vector<16x16xf32>
    %c72_i32_610 = arith.constant 72 : i32
    %1431 = arith.addi %1140, %c72_i32_610 : i32
    %c9_i32_611 = arith.constant 9 : i32
    %1432 = arith.addi %1431, %c9_i32_611 : i32
    %1433 = arith.index_cast %1432 : i32 to index
    %1434 = memref.load %arg2[%1433] : memref<288xf32, #tpu.memory_space<smem>>
    %1435 = vector.broadcast %1434 : f32 to vector<16x16xf32>
    %1436 = arith.mulf %1435, %1416 : vector<16x16xf32>
    %1437 = arith.addf %1407, %1436 : vector<16x16xf32>
    %c108_i32_612 = arith.constant 108 : i32
    %1438 = arith.addi %1140, %c108_i32_612 : i32
    %c9_i32_613 = arith.constant 9 : i32
    %1439 = arith.addi %1438, %c9_i32_613 : i32
    %1440 = arith.index_cast %1439 : i32 to index
    %1441 = memref.load %arg2[%1440] : memref<288xf32, #tpu.memory_space<smem>>
    %1442 = vector.broadcast %1441 : f32 to vector<16x16xf32>
    %1443 = arith.mulf %1442, %1416 : vector<16x16xf32>
    %1444 = arith.addf %1414, %1443 : vector<16x16xf32>
    %c1_614 = arith.constant 1 : index
    %c1_615 = arith.constant 1 : index
    %c0_616 = arith.constant 0 : index
    %c1_617 = arith.constant 1 : index
    %1445 = vector.load %arg5[%c1_614, %c1_615, %c0_616, %c1_617] : memref<2x4x18x18xf32, #tpu.memory_space<vmem>>, vector<1x1x16x16xf32>
    %1446 = vector.shape_cast %1445 : vector<1x1x16x16xf32> to vector<16x16xf32>
    %c0_i32_618 = arith.constant 0 : i32
    %1447 = arith.addi %1140, %c0_i32_618 : i32
    %c10_i32_619 = arith.constant 10 : i32
    %1448 = arith.addi %1447, %c10_i32_619 : i32
    %1449 = arith.index_cast %1448 : i32 to index
    %1450 = memref.load %arg2[%1449] : memref<288xf32, #tpu.memory_space<smem>>
    %1451 = vector.broadcast %1450 : f32 to vector<16x16xf32>
    %1452 = arith.mulf %1451, %1446 : vector<16x16xf32>
    %1453 = arith.addf %1423, %1452 : vector<16x16xf32>
    %c36_i32_620 = arith.constant 36 : i32
    %1454 = arith.addi %1140, %c36_i32_620 : i32
    %c10_i32_621 = arith.constant 10 : i32
    %1455 = arith.addi %1454, %c10_i32_621 : i32
    %1456 = arith.index_cast %1455 : i32 to index
    %1457 = memref.load %arg2[%1456] : memref<288xf32, #tpu.memory_space<smem>>
    %1458 = vector.broadcast %1457 : f32 to vector<16x16xf32>
    %1459 = arith.mulf %1458, %1446 : vector<16x16xf32>
    %1460 = arith.addf %1430, %1459 : vector<16x16xf32>
    %c72_i32_622 = arith.constant 72 : i32
    %1461 = arith.addi %1140, %c72_i32_622 : i32
    %c10_i32_623 = arith.constant 10 : i32
    %1462 = arith.addi %1461, %c10_i32_623 : i32
    %1463 = arith.index_cast %1462 : i32 to index
    %1464 = memref.load %arg2[%1463] : memref<288xf32, #tpu.memory_space<smem>>
    %1465 = vector.broadcast %1464 : f32 to vector<16x16xf32>
    %1466 = arith.mulf %1465, %1446 : vector<16x16xf32>
    %1467 = arith.addf %1437, %1466 : vector<16x16xf32>
    %c108_i32_624 = arith.constant 108 : i32
    %1468 = arith.addi %1140, %c108_i32_624 : i32
    %c10_i32_625 = arith.constant 10 : i32
    %1469 = arith.addi %1468, %c10_i32_625 : i32
    %1470 = arith.index_cast %1469 : i32 to index
    %1471 = memref.load %arg2[%1470] : memref<288xf32, #tpu.memory_space<smem>>
    %1472 = vector.broadcast %1471 : f32 to vector<16x16xf32>
    %1473 = arith.mulf %1472, %1446 : vector<16x16xf32>
    %1474 = arith.addf %1444, %1473 : vector<16x16xf32>
    %c1_626 = arith.constant 1 : index
    %c1_627 = arith.constant 1 : index
    %c0_628 = arith.constant 0 : index
    %c2_629 = arith.constant 2 : index
    %1475 = vector.load %arg5[%c1_626, %c1_627, %c0_628, %c2_629] : memref<2x4x18x18xf32, #tpu.memory_space<vmem>>, vector<1x1x16x16xf32>
    %1476 = vector.shape_cast %1475 : vector<1x1x16x16xf32> to vector<16x16xf32>
    %c0_i32_630 = arith.constant 0 : i32
    %1477 = arith.addi %1140, %c0_i32_630 : i32
    %c11_i32_631 = arith.constant 11 : i32
    %1478 = arith.addi %1477, %c11_i32_631 : i32
    %1479 = arith.index_cast %1478 : i32 to index
    %1480 = memref.load %arg2[%1479] : memref<288xf32, #tpu.memory_space<smem>>
    %1481 = vector.broadcast %1480 : f32 to vector<16x16xf32>
    %1482 = arith.mulf %1481, %1476 : vector<16x16xf32>
    %1483 = arith.addf %1453, %1482 : vector<16x16xf32>
    %c36_i32_632 = arith.constant 36 : i32
    %1484 = arith.addi %1140, %c36_i32_632 : i32
    %c11_i32_633 = arith.constant 11 : i32
    %1485 = arith.addi %1484, %c11_i32_633 : i32
    %1486 = arith.index_cast %1485 : i32 to index
    %1487 = memref.load %arg2[%1486] : memref<288xf32, #tpu.memory_space<smem>>
    %1488 = vector.broadcast %1487 : f32 to vector<16x16xf32>
    %1489 = arith.mulf %1488, %1476 : vector<16x16xf32>
    %1490 = arith.addf %1460, %1489 : vector<16x16xf32>
    %c72_i32_634 = arith.constant 72 : i32
    %1491 = arith.addi %1140, %c72_i32_634 : i32
    %c11_i32_635 = arith.constant 11 : i32
    %1492 = arith.addi %1491, %c11_i32_635 : i32
    %1493 = arith.index_cast %1492 : i32 to index
    %1494 = memref.load %arg2[%1493] : memref<288xf32, #tpu.memory_space<smem>>
    %1495 = vector.broadcast %1494 : f32 to vector<16x16xf32>
    %1496 = arith.mulf %1495, %1476 : vector<16x16xf32>
    %1497 = arith.addf %1467, %1496 : vector<16x16xf32>
    %c108_i32_636 = arith.constant 108 : i32
    %1498 = arith.addi %1140, %c108_i32_636 : i32
    %c11_i32_637 = arith.constant 11 : i32
    %1499 = arith.addi %1498, %c11_i32_637 : i32
    %1500 = arith.index_cast %1499 : i32 to index
    %1501 = memref.load %arg2[%1500] : memref<288xf32, #tpu.memory_space<smem>>
    %1502 = vector.broadcast %1501 : f32 to vector<16x16xf32>
    %1503 = arith.mulf %1502, %1476 : vector<16x16xf32>
    %1504 = arith.addf %1474, %1503 : vector<16x16xf32>
    %c1_638 = arith.constant 1 : index
    %c1_639 = arith.constant 1 : index
    %c1_640 = arith.constant 1 : index
    %c0_641 = arith.constant 0 : index
    %1505 = vector.load %arg5[%c1_638, %c1_639, %c1_640, %c0_641] : memref<2x4x18x18xf32, #tpu.memory_space<vmem>>, vector<1x1x16x16xf32>
    %1506 = vector.shape_cast %1505 : vector<1x1x16x16xf32> to vector<16x16xf32>
    %c0_i32_642 = arith.constant 0 : i32
    %1507 = arith.addi %1140, %c0_i32_642 : i32
    %c12_i32_643 = arith.constant 12 : i32
    %1508 = arith.addi %1507, %c12_i32_643 : i32
    %1509 = arith.index_cast %1508 : i32 to index
    %1510 = memref.load %arg2[%1509] : memref<288xf32, #tpu.memory_space<smem>>
    %1511 = vector.broadcast %1510 : f32 to vector<16x16xf32>
    %1512 = arith.mulf %1511, %1506 : vector<16x16xf32>
    %1513 = arith.addf %1483, %1512 : vector<16x16xf32>
    %c36_i32_644 = arith.constant 36 : i32
    %1514 = arith.addi %1140, %c36_i32_644 : i32
    %c12_i32_645 = arith.constant 12 : i32
    %1515 = arith.addi %1514, %c12_i32_645 : i32
    %1516 = arith.index_cast %1515 : i32 to index
    %1517 = memref.load %arg2[%1516] : memref<288xf32, #tpu.memory_space<smem>>
    %1518 = vector.broadcast %1517 : f32 to vector<16x16xf32>
    %1519 = arith.mulf %1518, %1506 : vector<16x16xf32>
    %1520 = arith.addf %1490, %1519 : vector<16x16xf32>
    %c72_i32_646 = arith.constant 72 : i32
    %1521 = arith.addi %1140, %c72_i32_646 : i32
    %c12_i32_647 = arith.constant 12 : i32
    %1522 = arith.addi %1521, %c12_i32_647 : i32
    %1523 = arith.index_cast %1522 : i32 to index
    %1524 = memref.load %arg2[%1523] : memref<288xf32, #tpu.memory_space<smem>>
    %1525 = vector.broadcast %1524 : f32 to vector<16x16xf32>
    %1526 = arith.mulf %1525, %1506 : vector<16x16xf32>
    %1527 = arith.addf %1497, %1526 : vector<16x16xf32>
    %c108_i32_648 = arith.constant 108 : i32
    %1528 = arith.addi %1140, %c108_i32_648 : i32
    %c12_i32_649 = arith.constant 12 : i32
    %1529 = arith.addi %1528, %c12_i32_649 : i32
    %1530 = arith.index_cast %1529 : i32 to index
    %1531 = memref.load %arg2[%1530] : memref<288xf32, #tpu.memory_space<smem>>
    %1532 = vector.broadcast %1531 : f32 to vector<16x16xf32>
    %1533 = arith.mulf %1532, %1506 : vector<16x16xf32>
    %1534 = arith.addf %1504, %1533 : vector<16x16xf32>
    %c1_650 = arith.constant 1 : index
    %c1_651 = arith.constant 1 : index
    %c1_652 = arith.constant 1 : index
    %c1_653 = arith.constant 1 : index
    %1535 = vector.load %arg5[%c1_650, %c1_651, %c1_652, %c1_653] : memref<2x4x18x18xf32, #tpu.memory_space<vmem>>, vector<1x1x16x16xf32>
    %1536 = vector.shape_cast %1535 : vector<1x1x16x16xf32> to vector<16x16xf32>
    %c0_i32_654 = arith.constant 0 : i32
    %1537 = arith.addi %1140, %c0_i32_654 : i32
    %c13_i32_655 = arith.constant 13 : i32
    %1538 = arith.addi %1537, %c13_i32_655 : i32
    %1539 = arith.index_cast %1538 : i32 to index
    %1540 = memref.load %arg2[%1539] : memref<288xf32, #tpu.memory_space<smem>>
    %1541 = vector.broadcast %1540 : f32 to vector<16x16xf32>
    %1542 = arith.mulf %1541, %1536 : vector<16x16xf32>
    %1543 = arith.addf %1513, %1542 : vector<16x16xf32>
    %c36_i32_656 = arith.constant 36 : i32
    %1544 = arith.addi %1140, %c36_i32_656 : i32
    %c13_i32_657 = arith.constant 13 : i32
    %1545 = arith.addi %1544, %c13_i32_657 : i32
    %1546 = arith.index_cast %1545 : i32 to index
    %1547 = memref.load %arg2[%1546] : memref<288xf32, #tpu.memory_space<smem>>
    %1548 = vector.broadcast %1547 : f32 to vector<16x16xf32>
    %1549 = arith.mulf %1548, %1536 : vector<16x16xf32>
    %1550 = arith.addf %1520, %1549 : vector<16x16xf32>
    %c72_i32_658 = arith.constant 72 : i32
    %1551 = arith.addi %1140, %c72_i32_658 : i32
    %c13_i32_659 = arith.constant 13 : i32
    %1552 = arith.addi %1551, %c13_i32_659 : i32
    %1553 = arith.index_cast %1552 : i32 to index
    %1554 = memref.load %arg2[%1553] : memref<288xf32, #tpu.memory_space<smem>>
    %1555 = vector.broadcast %1554 : f32 to vector<16x16xf32>
    %1556 = arith.mulf %1555, %1536 : vector<16x16xf32>
    %1557 = arith.addf %1527, %1556 : vector<16x16xf32>
    %c108_i32_660 = arith.constant 108 : i32
    %1558 = arith.addi %1140, %c108_i32_660 : i32
    %c13_i32_661 = arith.constant 13 : i32
    %1559 = arith.addi %1558, %c13_i32_661 : i32
    %1560 = arith.index_cast %1559 : i32 to index
    %1561 = memref.load %arg2[%1560] : memref<288xf32, #tpu.memory_space<smem>>
    %1562 = vector.broadcast %1561 : f32 to vector<16x16xf32>
    %1563 = arith.mulf %1562, %1536 : vector<16x16xf32>
    %1564 = arith.addf %1534, %1563 : vector<16x16xf32>
    %c1_662 = arith.constant 1 : index
    %c1_663 = arith.constant 1 : index
    %c1_664 = arith.constant 1 : index
    %c2_665 = arith.constant 2 : index
    %1565 = vector.load %arg5[%c1_662, %c1_663, %c1_664, %c2_665] : memref<2x4x18x18xf32, #tpu.memory_space<vmem>>, vector<1x1x16x16xf32>
    %1566 = vector.shape_cast %1565 : vector<1x1x16x16xf32> to vector<16x16xf32>
    %c0_i32_666 = arith.constant 0 : i32
    %1567 = arith.addi %1140, %c0_i32_666 : i32
    %c14_i32_667 = arith.constant 14 : i32
    %1568 = arith.addi %1567, %c14_i32_667 : i32
    %1569 = arith.index_cast %1568 : i32 to index
    %1570 = memref.load %arg2[%1569] : memref<288xf32, #tpu.memory_space<smem>>
    %1571 = vector.broadcast %1570 : f32 to vector<16x16xf32>
    %1572 = arith.mulf %1571, %1566 : vector<16x16xf32>
    %1573 = arith.addf %1543, %1572 : vector<16x16xf32>
    %c36_i32_668 = arith.constant 36 : i32
    %1574 = arith.addi %1140, %c36_i32_668 : i32
    %c14_i32_669 = arith.constant 14 : i32
    %1575 = arith.addi %1574, %c14_i32_669 : i32
    %1576 = arith.index_cast %1575 : i32 to index
    %1577 = memref.load %arg2[%1576] : memref<288xf32, #tpu.memory_space<smem>>
    %1578 = vector.broadcast %1577 : f32 to vector<16x16xf32>
    %1579 = arith.mulf %1578, %1566 : vector<16x16xf32>
    %1580 = arith.addf %1550, %1579 : vector<16x16xf32>
    %c72_i32_670 = arith.constant 72 : i32
    %1581 = arith.addi %1140, %c72_i32_670 : i32
    %c14_i32_671 = arith.constant 14 : i32
    %1582 = arith.addi %1581, %c14_i32_671 : i32
    %1583 = arith.index_cast %1582 : i32 to index
    %1584 = memref.load %arg2[%1583] : memref<288xf32, #tpu.memory_space<smem>>
    %1585 = vector.broadcast %1584 : f32 to vector<16x16xf32>
    %1586 = arith.mulf %1585, %1566 : vector<16x16xf32>
    %1587 = arith.addf %1557, %1586 : vector<16x16xf32>
    %c108_i32_672 = arith.constant 108 : i32
    %1588 = arith.addi %1140, %c108_i32_672 : i32
    %c14_i32_673 = arith.constant 14 : i32
    %1589 = arith.addi %1588, %c14_i32_673 : i32
    %1590 = arith.index_cast %1589 : i32 to index
    %1591 = memref.load %arg2[%1590] : memref<288xf32, #tpu.memory_space<smem>>
    %1592 = vector.broadcast %1591 : f32 to vector<16x16xf32>
    %1593 = arith.mulf %1592, %1566 : vector<16x16xf32>
    %1594 = arith.addf %1564, %1593 : vector<16x16xf32>
    %c1_674 = arith.constant 1 : index
    %c1_675 = arith.constant 1 : index
    %c2_676 = arith.constant 2 : index
    %c0_677 = arith.constant 0 : index
    %1595 = vector.load %arg5[%c1_674, %c1_675, %c2_676, %c0_677] : memref<2x4x18x18xf32, #tpu.memory_space<vmem>>, vector<1x1x16x16xf32>
    %1596 = vector.shape_cast %1595 : vector<1x1x16x16xf32> to vector<16x16xf32>
    %c0_i32_678 = arith.constant 0 : i32
    %1597 = arith.addi %1140, %c0_i32_678 : i32
    %c15_i32_679 = arith.constant 15 : i32
    %1598 = arith.addi %1597, %c15_i32_679 : i32
    %1599 = arith.index_cast %1598 : i32 to index
    %1600 = memref.load %arg2[%1599] : memref<288xf32, #tpu.memory_space<smem>>
    %1601 = vector.broadcast %1600 : f32 to vector<16x16xf32>
    %1602 = arith.mulf %1601, %1596 : vector<16x16xf32>
    %1603 = arith.addf %1573, %1602 : vector<16x16xf32>
    %c36_i32_680 = arith.constant 36 : i32
    %1604 = arith.addi %1140, %c36_i32_680 : i32
    %c15_i32_681 = arith.constant 15 : i32
    %1605 = arith.addi %1604, %c15_i32_681 : i32
    %1606 = arith.index_cast %1605 : i32 to index
    %1607 = memref.load %arg2[%1606] : memref<288xf32, #tpu.memory_space<smem>>
    %1608 = vector.broadcast %1607 : f32 to vector<16x16xf32>
    %1609 = arith.mulf %1608, %1596 : vector<16x16xf32>
    %1610 = arith.addf %1580, %1609 : vector<16x16xf32>
    %c72_i32_682 = arith.constant 72 : i32
    %1611 = arith.addi %1140, %c72_i32_682 : i32
    %c15_i32_683 = arith.constant 15 : i32
    %1612 = arith.addi %1611, %c15_i32_683 : i32
    %1613 = arith.index_cast %1612 : i32 to index
    %1614 = memref.load %arg2[%1613] : memref<288xf32, #tpu.memory_space<smem>>
    %1615 = vector.broadcast %1614 : f32 to vector<16x16xf32>
    %1616 = arith.mulf %1615, %1596 : vector<16x16xf32>
    %1617 = arith.addf %1587, %1616 : vector<16x16xf32>
    %c108_i32_684 = arith.constant 108 : i32
    %1618 = arith.addi %1140, %c108_i32_684 : i32
    %c15_i32_685 = arith.constant 15 : i32
    %1619 = arith.addi %1618, %c15_i32_685 : i32
    %1620 = arith.index_cast %1619 : i32 to index
    %1621 = memref.load %arg2[%1620] : memref<288xf32, #tpu.memory_space<smem>>
    %1622 = vector.broadcast %1621 : f32 to vector<16x16xf32>
    %1623 = arith.mulf %1622, %1596 : vector<16x16xf32>
    %1624 = arith.addf %1594, %1623 : vector<16x16xf32>
    %c1_686 = arith.constant 1 : index
    %c1_687 = arith.constant 1 : index
    %c2_688 = arith.constant 2 : index
    %c1_689 = arith.constant 1 : index
    %1625 = vector.load %arg5[%c1_686, %c1_687, %c2_688, %c1_689] : memref<2x4x18x18xf32, #tpu.memory_space<vmem>>, vector<1x1x16x16xf32>
    %1626 = vector.shape_cast %1625 : vector<1x1x16x16xf32> to vector<16x16xf32>
    %c0_i32_690 = arith.constant 0 : i32
    %1627 = arith.addi %1140, %c0_i32_690 : i32
    %c16_i32_691 = arith.constant 16 : i32
    %1628 = arith.addi %1627, %c16_i32_691 : i32
    %1629 = arith.index_cast %1628 : i32 to index
    %1630 = memref.load %arg2[%1629] : memref<288xf32, #tpu.memory_space<smem>>
    %1631 = vector.broadcast %1630 : f32 to vector<16x16xf32>
    %1632 = arith.mulf %1631, %1626 : vector<16x16xf32>
    %1633 = arith.addf %1603, %1632 : vector<16x16xf32>
    %c36_i32_692 = arith.constant 36 : i32
    %1634 = arith.addi %1140, %c36_i32_692 : i32
    %c16_i32_693 = arith.constant 16 : i32
    %1635 = arith.addi %1634, %c16_i32_693 : i32
    %1636 = arith.index_cast %1635 : i32 to index
    %1637 = memref.load %arg2[%1636] : memref<288xf32, #tpu.memory_space<smem>>
    %1638 = vector.broadcast %1637 : f32 to vector<16x16xf32>
    %1639 = arith.mulf %1638, %1626 : vector<16x16xf32>
    %1640 = arith.addf %1610, %1639 : vector<16x16xf32>
    %c72_i32_694 = arith.constant 72 : i32
    %1641 = arith.addi %1140, %c72_i32_694 : i32
    %c16_i32_695 = arith.constant 16 : i32
    %1642 = arith.addi %1641, %c16_i32_695 : i32
    %1643 = arith.index_cast %1642 : i32 to index
    %1644 = memref.load %arg2[%1643] : memref<288xf32, #tpu.memory_space<smem>>
    %1645 = vector.broadcast %1644 : f32 to vector<16x16xf32>
    %1646 = arith.mulf %1645, %1626 : vector<16x16xf32>
    %1647 = arith.addf %1617, %1646 : vector<16x16xf32>
    %c108_i32_696 = arith.constant 108 : i32
    %1648 = arith.addi %1140, %c108_i32_696 : i32
    %c16_i32_697 = arith.constant 16 : i32
    %1649 = arith.addi %1648, %c16_i32_697 : i32
    %1650 = arith.index_cast %1649 : i32 to index
    %1651 = memref.load %arg2[%1650] : memref<288xf32, #tpu.memory_space<smem>>
    %1652 = vector.broadcast %1651 : f32 to vector<16x16xf32>
    %1653 = arith.mulf %1652, %1626 : vector<16x16xf32>
    %1654 = arith.addf %1624, %1653 : vector<16x16xf32>
    %c1_698 = arith.constant 1 : index
    %c1_699 = arith.constant 1 : index
    %c2_700 = arith.constant 2 : index
    %c2_701 = arith.constant 2 : index
    %1655 = vector.load %arg5[%c1_698, %c1_699, %c2_700, %c2_701] : memref<2x4x18x18xf32, #tpu.memory_space<vmem>>, vector<1x1x16x16xf32>
    %1656 = vector.shape_cast %1655 : vector<1x1x16x16xf32> to vector<16x16xf32>
    %c0_i32_702 = arith.constant 0 : i32
    %1657 = arith.addi %1140, %c0_i32_702 : i32
    %c17_i32_703 = arith.constant 17 : i32
    %1658 = arith.addi %1657, %c17_i32_703 : i32
    %1659 = arith.index_cast %1658 : i32 to index
    %1660 = memref.load %arg2[%1659] : memref<288xf32, #tpu.memory_space<smem>>
    %1661 = vector.broadcast %1660 : f32 to vector<16x16xf32>
    %1662 = arith.mulf %1661, %1656 : vector<16x16xf32>
    %1663 = arith.addf %1633, %1662 : vector<16x16xf32>
    %c36_i32_704 = arith.constant 36 : i32
    %1664 = arith.addi %1140, %c36_i32_704 : i32
    %c17_i32_705 = arith.constant 17 : i32
    %1665 = arith.addi %1664, %c17_i32_705 : i32
    %1666 = arith.index_cast %1665 : i32 to index
    %1667 = memref.load %arg2[%1666] : memref<288xf32, #tpu.memory_space<smem>>
    %1668 = vector.broadcast %1667 : f32 to vector<16x16xf32>
    %1669 = arith.mulf %1668, %1656 : vector<16x16xf32>
    %1670 = arith.addf %1640, %1669 : vector<16x16xf32>
    %c72_i32_706 = arith.constant 72 : i32
    %1671 = arith.addi %1140, %c72_i32_706 : i32
    %c17_i32_707 = arith.constant 17 : i32
    %1672 = arith.addi %1671, %c17_i32_707 : i32
    %1673 = arith.index_cast %1672 : i32 to index
    %1674 = memref.load %arg2[%1673] : memref<288xf32, #tpu.memory_space<smem>>
    %1675 = vector.broadcast %1674 : f32 to vector<16x16xf32>
    %1676 = arith.mulf %1675, %1656 : vector<16x16xf32>
    %1677 = arith.addf %1647, %1676 : vector<16x16xf32>
    %c108_i32_708 = arith.constant 108 : i32
    %1678 = arith.addi %1140, %c108_i32_708 : i32
    %c17_i32_709 = arith.constant 17 : i32
    %1679 = arith.addi %1678, %c17_i32_709 : i32
    %1680 = arith.index_cast %1679 : i32 to index
    %1681 = memref.load %arg2[%1680] : memref<288xf32, #tpu.memory_space<smem>>
    %1682 = vector.broadcast %1681 : f32 to vector<16x16xf32>
    %1683 = arith.mulf %1682, %1656 : vector<16x16xf32>
    %1684 = arith.addf %1654, %1683 : vector<16x16xf32>
    %c1_710 = arith.constant 1 : index
    %c2_711 = arith.constant 2 : index
    %c0_712 = arith.constant 0 : index
    %c0_713 = arith.constant 0 : index
    %1685 = vector.load %arg5[%c1_710, %c2_711, %c0_712, %c0_713] : memref<2x4x18x18xf32, #tpu.memory_space<vmem>>, vector<1x1x16x16xf32>
    %1686 = vector.shape_cast %1685 : vector<1x1x16x16xf32> to vector<16x16xf32>
    %c0_i32_714 = arith.constant 0 : i32
    %1687 = arith.addi %1140, %c0_i32_714 : i32
    %c18_i32_715 = arith.constant 18 : i32
    %1688 = arith.addi %1687, %c18_i32_715 : i32
    %1689 = arith.index_cast %1688 : i32 to index
    %1690 = memref.load %arg2[%1689] : memref<288xf32, #tpu.memory_space<smem>>
    %1691 = vector.broadcast %1690 : f32 to vector<16x16xf32>
    %1692 = arith.mulf %1691, %1686 : vector<16x16xf32>
    %1693 = arith.addf %1663, %1692 : vector<16x16xf32>
    %c36_i32_716 = arith.constant 36 : i32
    %1694 = arith.addi %1140, %c36_i32_716 : i32
    %c18_i32_717 = arith.constant 18 : i32
    %1695 = arith.addi %1694, %c18_i32_717 : i32
    %1696 = arith.index_cast %1695 : i32 to index
    %1697 = memref.load %arg2[%1696] : memref<288xf32, #tpu.memory_space<smem>>
    %1698 = vector.broadcast %1697 : f32 to vector<16x16xf32>
    %1699 = arith.mulf %1698, %1686 : vector<16x16xf32>
    %1700 = arith.addf %1670, %1699 : vector<16x16xf32>
    %c72_i32_718 = arith.constant 72 : i32
    %1701 = arith.addi %1140, %c72_i32_718 : i32
    %c18_i32_719 = arith.constant 18 : i32
    %1702 = arith.addi %1701, %c18_i32_719 : i32
    %1703 = arith.index_cast %1702 : i32 to index
    %1704 = memref.load %arg2[%1703] : memref<288xf32, #tpu.memory_space<smem>>
    %1705 = vector.broadcast %1704 : f32 to vector<16x16xf32>
    %1706 = arith.mulf %1705, %1686 : vector<16x16xf32>
    %1707 = arith.addf %1677, %1706 : vector<16x16xf32>
    %c108_i32_720 = arith.constant 108 : i32
    %1708 = arith.addi %1140, %c108_i32_720 : i32
    %c18_i32_721 = arith.constant 18 : i32
    %1709 = arith.addi %1708, %c18_i32_721 : i32
    %1710 = arith.index_cast %1709 : i32 to index
    %1711 = memref.load %arg2[%1710] : memref<288xf32, #tpu.memory_space<smem>>
    %1712 = vector.broadcast %1711 : f32 to vector<16x16xf32>
    %1713 = arith.mulf %1712, %1686 : vector<16x16xf32>
    %1714 = arith.addf %1684, %1713 : vector<16x16xf32>
    %c1_722 = arith.constant 1 : index
    %c2_723 = arith.constant 2 : index
    %c0_724 = arith.constant 0 : index
    %c1_725 = arith.constant 1 : index
    %1715 = vector.load %arg5[%c1_722, %c2_723, %c0_724, %c1_725] : memref<2x4x18x18xf32, #tpu.memory_space<vmem>>, vector<1x1x16x16xf32>
    %1716 = vector.shape_cast %1715 : vector<1x1x16x16xf32> to vector<16x16xf32>
    %c0_i32_726 = arith.constant 0 : i32
    %1717 = arith.addi %1140, %c0_i32_726 : i32
    %c19_i32_727 = arith.constant 19 : i32
    %1718 = arith.addi %1717, %c19_i32_727 : i32
    %1719 = arith.index_cast %1718 : i32 to index
    %1720 = memref.load %arg2[%1719] : memref<288xf32, #tpu.memory_space<smem>>
    %1721 = vector.broadcast %1720 : f32 to vector<16x16xf32>
    %1722 = arith.mulf %1721, %1716 : vector<16x16xf32>
    %1723 = arith.addf %1693, %1722 : vector<16x16xf32>
    %c36_i32_728 = arith.constant 36 : i32
    %1724 = arith.addi %1140, %c36_i32_728 : i32
    %c19_i32_729 = arith.constant 19 : i32
    %1725 = arith.addi %1724, %c19_i32_729 : i32
    %1726 = arith.index_cast %1725 : i32 to index
    %1727 = memref.load %arg2[%1726] : memref<288xf32, #tpu.memory_space<smem>>
    %1728 = vector.broadcast %1727 : f32 to vector<16x16xf32>
    %1729 = arith.mulf %1728, %1716 : vector<16x16xf32>
    %1730 = arith.addf %1700, %1729 : vector<16x16xf32>
    %c72_i32_730 = arith.constant 72 : i32
    %1731 = arith.addi %1140, %c72_i32_730 : i32
    %c19_i32_731 = arith.constant 19 : i32
    %1732 = arith.addi %1731, %c19_i32_731 : i32
    %1733 = arith.index_cast %1732 : i32 to index
    %1734 = memref.load %arg2[%1733] : memref<288xf32, #tpu.memory_space<smem>>
    %1735 = vector.broadcast %1734 : f32 to vector<16x16xf32>
    %1736 = arith.mulf %1735, %1716 : vector<16x16xf32>
    %1737 = arith.addf %1707, %1736 : vector<16x16xf32>
    %c108_i32_732 = arith.constant 108 : i32
    %1738 = arith.addi %1140, %c108_i32_732 : i32
    %c19_i32_733 = arith.constant 19 : i32
    %1739 = arith.addi %1738, %c19_i32_733 : i32
    %1740 = arith.index_cast %1739 : i32 to index
    %1741 = memref.load %arg2[%1740] : memref<288xf32, #tpu.memory_space<smem>>
    %1742 = vector.broadcast %1741 : f32 to vector<16x16xf32>
    %1743 = arith.mulf %1742, %1716 : vector<16x16xf32>
    %1744 = arith.addf %1714, %1743 : vector<16x16xf32>
    %c1_734 = arith.constant 1 : index
    %c2_735 = arith.constant 2 : index
    %c0_736 = arith.constant 0 : index
    %c2_737 = arith.constant 2 : index
    %1745 = vector.load %arg5[%c1_734, %c2_735, %c0_736, %c2_737] : memref<2x4x18x18xf32, #tpu.memory_space<vmem>>, vector<1x1x16x16xf32>
    %1746 = vector.shape_cast %1745 : vector<1x1x16x16xf32> to vector<16x16xf32>
    %c0_i32_738 = arith.constant 0 : i32
    %1747 = arith.addi %1140, %c0_i32_738 : i32
    %c20_i32_739 = arith.constant 20 : i32
    %1748 = arith.addi %1747, %c20_i32_739 : i32
    %1749 = arith.index_cast %1748 : i32 to index
    %1750 = memref.load %arg2[%1749] : memref<288xf32, #tpu.memory_space<smem>>
    %1751 = vector.broadcast %1750 : f32 to vector<16x16xf32>
    %1752 = arith.mulf %1751, %1746 : vector<16x16xf32>
    %1753 = arith.addf %1723, %1752 : vector<16x16xf32>
    %c36_i32_740 = arith.constant 36 : i32
    %1754 = arith.addi %1140, %c36_i32_740 : i32
    %c20_i32_741 = arith.constant 20 : i32
    %1755 = arith.addi %1754, %c20_i32_741 : i32
    %1756 = arith.index_cast %1755 : i32 to index
    %1757 = memref.load %arg2[%1756] : memref<288xf32, #tpu.memory_space<smem>>
    %1758 = vector.broadcast %1757 : f32 to vector<16x16xf32>
    %1759 = arith.mulf %1758, %1746 : vector<16x16xf32>
    %1760 = arith.addf %1730, %1759 : vector<16x16xf32>
    %c72_i32_742 = arith.constant 72 : i32
    %1761 = arith.addi %1140, %c72_i32_742 : i32
    %c20_i32_743 = arith.constant 20 : i32
    %1762 = arith.addi %1761, %c20_i32_743 : i32
    %1763 = arith.index_cast %1762 : i32 to index
    %1764 = memref.load %arg2[%1763] : memref<288xf32, #tpu.memory_space<smem>>
    %1765 = vector.broadcast %1764 : f32 to vector<16x16xf32>
    %1766 = arith.mulf %1765, %1746 : vector<16x16xf32>
    %1767 = arith.addf %1737, %1766 : vector<16x16xf32>
    %c108_i32_744 = arith.constant 108 : i32
    %1768 = arith.addi %1140, %c108_i32_744 : i32
    %c20_i32_745 = arith.constant 20 : i32
    %1769 = arith.addi %1768, %c20_i32_745 : i32
    %1770 = arith.index_cast %1769 : i32 to index
    %1771 = memref.load %arg2[%1770] : memref<288xf32, #tpu.memory_space<smem>>
    %1772 = vector.broadcast %1771 : f32 to vector<16x16xf32>
    %1773 = arith.mulf %1772, %1746 : vector<16x16xf32>
    %1774 = arith.addf %1744, %1773 : vector<16x16xf32>
    %c1_746 = arith.constant 1 : index
    %c2_747 = arith.constant 2 : index
    %c1_748 = arith.constant 1 : index
    %c0_749 = arith.constant 0 : index
    %1775 = vector.load %arg5[%c1_746, %c2_747, %c1_748, %c0_749] : memref<2x4x18x18xf32, #tpu.memory_space<vmem>>, vector<1x1x16x16xf32>
    %1776 = vector.shape_cast %1775 : vector<1x1x16x16xf32> to vector<16x16xf32>
    %c0_i32_750 = arith.constant 0 : i32
    %1777 = arith.addi %1140, %c0_i32_750 : i32
    %c21_i32_751 = arith.constant 21 : i32
    %1778 = arith.addi %1777, %c21_i32_751 : i32
    %1779 = arith.index_cast %1778 : i32 to index
    %1780 = memref.load %arg2[%1779] : memref<288xf32, #tpu.memory_space<smem>>
    %1781 = vector.broadcast %1780 : f32 to vector<16x16xf32>
    %1782 = arith.mulf %1781, %1776 : vector<16x16xf32>
    %1783 = arith.addf %1753, %1782 : vector<16x16xf32>
    %c36_i32_752 = arith.constant 36 : i32
    %1784 = arith.addi %1140, %c36_i32_752 : i32
    %c21_i32_753 = arith.constant 21 : i32
    %1785 = arith.addi %1784, %c21_i32_753 : i32
    %1786 = arith.index_cast %1785 : i32 to index
    %1787 = memref.load %arg2[%1786] : memref<288xf32, #tpu.memory_space<smem>>
    %1788 = vector.broadcast %1787 : f32 to vector<16x16xf32>
    %1789 = arith.mulf %1788, %1776 : vector<16x16xf32>
    %1790 = arith.addf %1760, %1789 : vector<16x16xf32>
    %c72_i32_754 = arith.constant 72 : i32
    %1791 = arith.addi %1140, %c72_i32_754 : i32
    %c21_i32_755 = arith.constant 21 : i32
    %1792 = arith.addi %1791, %c21_i32_755 : i32
    %1793 = arith.index_cast %1792 : i32 to index
    %1794 = memref.load %arg2[%1793] : memref<288xf32, #tpu.memory_space<smem>>
    %1795 = vector.broadcast %1794 : f32 to vector<16x16xf32>
    %1796 = arith.mulf %1795, %1776 : vector<16x16xf32>
    %1797 = arith.addf %1767, %1796 : vector<16x16xf32>
    %c108_i32_756 = arith.constant 108 : i32
    %1798 = arith.addi %1140, %c108_i32_756 : i32
    %c21_i32_757 = arith.constant 21 : i32
    %1799 = arith.addi %1798, %c21_i32_757 : i32
    %1800 = arith.index_cast %1799 : i32 to index
    %1801 = memref.load %arg2[%1800] : memref<288xf32, #tpu.memory_space<smem>>
    %1802 = vector.broadcast %1801 : f32 to vector<16x16xf32>
    %1803 = arith.mulf %1802, %1776 : vector<16x16xf32>
    %1804 = arith.addf %1774, %1803 : vector<16x16xf32>
    %c1_758 = arith.constant 1 : index
    %c2_759 = arith.constant 2 : index
    %c1_760 = arith.constant 1 : index
    %c1_761 = arith.constant 1 : index
    %1805 = vector.load %arg5[%c1_758, %c2_759, %c1_760, %c1_761] : memref<2x4x18x18xf32, #tpu.memory_space<vmem>>, vector<1x1x16x16xf32>
    %1806 = vector.shape_cast %1805 : vector<1x1x16x16xf32> to vector<16x16xf32>
    %c0_i32_762 = arith.constant 0 : i32
    %1807 = arith.addi %1140, %c0_i32_762 : i32
    %c22_i32_763 = arith.constant 22 : i32
    %1808 = arith.addi %1807, %c22_i32_763 : i32
    %1809 = arith.index_cast %1808 : i32 to index
    %1810 = memref.load %arg2[%1809] : memref<288xf32, #tpu.memory_space<smem>>
    %1811 = vector.broadcast %1810 : f32 to vector<16x16xf32>
    %1812 = arith.mulf %1811, %1806 : vector<16x16xf32>
    %1813 = arith.addf %1783, %1812 : vector<16x16xf32>
    %c36_i32_764 = arith.constant 36 : i32
    %1814 = arith.addi %1140, %c36_i32_764 : i32
    %c22_i32_765 = arith.constant 22 : i32
    %1815 = arith.addi %1814, %c22_i32_765 : i32
    %1816 = arith.index_cast %1815 : i32 to index
    %1817 = memref.load %arg2[%1816] : memref<288xf32, #tpu.memory_space<smem>>
    %1818 = vector.broadcast %1817 : f32 to vector<16x16xf32>
    %1819 = arith.mulf %1818, %1806 : vector<16x16xf32>
    %1820 = arith.addf %1790, %1819 : vector<16x16xf32>
    %c72_i32_766 = arith.constant 72 : i32
    %1821 = arith.addi %1140, %c72_i32_766 : i32
    %c22_i32_767 = arith.constant 22 : i32
    %1822 = arith.addi %1821, %c22_i32_767 : i32
    %1823 = arith.index_cast %1822 : i32 to index
    %1824 = memref.load %arg2[%1823] : memref<288xf32, #tpu.memory_space<smem>>
    %1825 = vector.broadcast %1824 : f32 to vector<16x16xf32>
    %1826 = arith.mulf %1825, %1806 : vector<16x16xf32>
    %1827 = arith.addf %1797, %1826 : vector<16x16xf32>
    %c108_i32_768 = arith.constant 108 : i32
    %1828 = arith.addi %1140, %c108_i32_768 : i32
    %c22_i32_769 = arith.constant 22 : i32
    %1829 = arith.addi %1828, %c22_i32_769 : i32
    %1830 = arith.index_cast %1829 : i32 to index
    %1831 = memref.load %arg2[%1830] : memref<288xf32, #tpu.memory_space<smem>>
    %1832 = vector.broadcast %1831 : f32 to vector<16x16xf32>
    %1833 = arith.mulf %1832, %1806 : vector<16x16xf32>
    %1834 = arith.addf %1804, %1833 : vector<16x16xf32>
    %c1_770 = arith.constant 1 : index
    %c2_771 = arith.constant 2 : index
    %c1_772 = arith.constant 1 : index
    %c2_773 = arith.constant 2 : index
    %1835 = vector.load %arg5[%c1_770, %c2_771, %c1_772, %c2_773] : memref<2x4x18x18xf32, #tpu.memory_space<vmem>>, vector<1x1x16x16xf32>
    %1836 = vector.shape_cast %1835 : vector<1x1x16x16xf32> to vector<16x16xf32>
    %c0_i32_774 = arith.constant 0 : i32
    %1837 = arith.addi %1140, %c0_i32_774 : i32
    %c23_i32_775 = arith.constant 23 : i32
    %1838 = arith.addi %1837, %c23_i32_775 : i32
    %1839 = arith.index_cast %1838 : i32 to index
    %1840 = memref.load %arg2[%1839] : memref<288xf32, #tpu.memory_space<smem>>
    %1841 = vector.broadcast %1840 : f32 to vector<16x16xf32>
    %1842 = arith.mulf %1841, %1836 : vector<16x16xf32>
    %1843 = arith.addf %1813, %1842 : vector<16x16xf32>
    %c36_i32_776 = arith.constant 36 : i32
    %1844 = arith.addi %1140, %c36_i32_776 : i32
    %c23_i32_777 = arith.constant 23 : i32
    %1845 = arith.addi %1844, %c23_i32_777 : i32
    %1846 = arith.index_cast %1845 : i32 to index
    %1847 = memref.load %arg2[%1846] : memref<288xf32, #tpu.memory_space<smem>>
    %1848 = vector.broadcast %1847 : f32 to vector<16x16xf32>
    %1849 = arith.mulf %1848, %1836 : vector<16x16xf32>
    %1850 = arith.addf %1820, %1849 : vector<16x16xf32>
    %c72_i32_778 = arith.constant 72 : i32
    %1851 = arith.addi %1140, %c72_i32_778 : i32
    %c23_i32_779 = arith.constant 23 : i32
    %1852 = arith.addi %1851, %c23_i32_779 : i32
    %1853 = arith.index_cast %1852 : i32 to index
    %1854 = memref.load %arg2[%1853] : memref<288xf32, #tpu.memory_space<smem>>
    %1855 = vector.broadcast %1854 : f32 to vector<16x16xf32>
    %1856 = arith.mulf %1855, %1836 : vector<16x16xf32>
    %1857 = arith.addf %1827, %1856 : vector<16x16xf32>
    %c108_i32_780 = arith.constant 108 : i32
    %1858 = arith.addi %1140, %c108_i32_780 : i32
    %c23_i32_781 = arith.constant 23 : i32
    %1859 = arith.addi %1858, %c23_i32_781 : i32
    %1860 = arith.index_cast %1859 : i32 to index
    %1861 = memref.load %arg2[%1860] : memref<288xf32, #tpu.memory_space<smem>>
    %1862 = vector.broadcast %1861 : f32 to vector<16x16xf32>
    %1863 = arith.mulf %1862, %1836 : vector<16x16xf32>
    %1864 = arith.addf %1834, %1863 : vector<16x16xf32>
    %c1_782 = arith.constant 1 : index
    %c2_783 = arith.constant 2 : index
    %c2_784 = arith.constant 2 : index
    %c0_785 = arith.constant 0 : index
    %1865 = vector.load %arg5[%c1_782, %c2_783, %c2_784, %c0_785] : memref<2x4x18x18xf32, #tpu.memory_space<vmem>>, vector<1x1x16x16xf32>
    %1866 = vector.shape_cast %1865 : vector<1x1x16x16xf32> to vector<16x16xf32>
    %c0_i32_786 = arith.constant 0 : i32
    %1867 = arith.addi %1140, %c0_i32_786 : i32
    %c24_i32_787 = arith.constant 24 : i32
    %1868 = arith.addi %1867, %c24_i32_787 : i32
    %1869 = arith.index_cast %1868 : i32 to index
    %1870 = memref.load %arg2[%1869] : memref<288xf32, #tpu.memory_space<smem>>
    %1871 = vector.broadcast %1870 : f32 to vector<16x16xf32>
    %1872 = arith.mulf %1871, %1866 : vector<16x16xf32>
    %1873 = arith.addf %1843, %1872 : vector<16x16xf32>
    %c36_i32_788 = arith.constant 36 : i32
    %1874 = arith.addi %1140, %c36_i32_788 : i32
    %c24_i32_789 = arith.constant 24 : i32
    %1875 = arith.addi %1874, %c24_i32_789 : i32
    %1876 = arith.index_cast %1875 : i32 to index
    %1877 = memref.load %arg2[%1876] : memref<288xf32, #tpu.memory_space<smem>>
    %1878 = vector.broadcast %1877 : f32 to vector<16x16xf32>
    %1879 = arith.mulf %1878, %1866 : vector<16x16xf32>
    %1880 = arith.addf %1850, %1879 : vector<16x16xf32>
    %c72_i32_790 = arith.constant 72 : i32
    %1881 = arith.addi %1140, %c72_i32_790 : i32
    %c24_i32_791 = arith.constant 24 : i32
    %1882 = arith.addi %1881, %c24_i32_791 : i32
    %1883 = arith.index_cast %1882 : i32 to index
    %1884 = memref.load %arg2[%1883] : memref<288xf32, #tpu.memory_space<smem>>
    %1885 = vector.broadcast %1884 : f32 to vector<16x16xf32>
    %1886 = arith.mulf %1885, %1866 : vector<16x16xf32>
    %1887 = arith.addf %1857, %1886 : vector<16x16xf32>
    %c108_i32_792 = arith.constant 108 : i32
    %1888 = arith.addi %1140, %c108_i32_792 : i32
    %c24_i32_793 = arith.constant 24 : i32
    %1889 = arith.addi %1888, %c24_i32_793 : i32
    %1890 = arith.index_cast %1889 : i32 to index
    %1891 = memref.load %arg2[%1890] : memref<288xf32, #tpu.memory_space<smem>>
    %1892 = vector.broadcast %1891 : f32 to vector<16x16xf32>
    %1893 = arith.mulf %1892, %1866 : vector<16x16xf32>
    %1894 = arith.addf %1864, %1893 : vector<16x16xf32>
    %c1_794 = arith.constant 1 : index
    %c2_795 = arith.constant 2 : index
    %c2_796 = arith.constant 2 : index
    %c1_797 = arith.constant 1 : index
    %1895 = vector.load %arg5[%c1_794, %c2_795, %c2_796, %c1_797] : memref<2x4x18x18xf32, #tpu.memory_space<vmem>>, vector<1x1x16x16xf32>
    %1896 = vector.shape_cast %1895 : vector<1x1x16x16xf32> to vector<16x16xf32>
    %c0_i32_798 = arith.constant 0 : i32
    %1897 = arith.addi %1140, %c0_i32_798 : i32
    %c25_i32_799 = arith.constant 25 : i32
    %1898 = arith.addi %1897, %c25_i32_799 : i32
    %1899 = arith.index_cast %1898 : i32 to index
    %1900 = memref.load %arg2[%1899] : memref<288xf32, #tpu.memory_space<smem>>
    %1901 = vector.broadcast %1900 : f32 to vector<16x16xf32>
    %1902 = arith.mulf %1901, %1896 : vector<16x16xf32>
    %1903 = arith.addf %1873, %1902 : vector<16x16xf32>
    %c36_i32_800 = arith.constant 36 : i32
    %1904 = arith.addi %1140, %c36_i32_800 : i32
    %c25_i32_801 = arith.constant 25 : i32
    %1905 = arith.addi %1904, %c25_i32_801 : i32
    %1906 = arith.index_cast %1905 : i32 to index
    %1907 = memref.load %arg2[%1906] : memref<288xf32, #tpu.memory_space<smem>>
    %1908 = vector.broadcast %1907 : f32 to vector<16x16xf32>
    %1909 = arith.mulf %1908, %1896 : vector<16x16xf32>
    %1910 = arith.addf %1880, %1909 : vector<16x16xf32>
    %c72_i32_802 = arith.constant 72 : i32
    %1911 = arith.addi %1140, %c72_i32_802 : i32
    %c25_i32_803 = arith.constant 25 : i32
    %1912 = arith.addi %1911, %c25_i32_803 : i32
    %1913 = arith.index_cast %1912 : i32 to index
    %1914 = memref.load %arg2[%1913] : memref<288xf32, #tpu.memory_space<smem>>
    %1915 = vector.broadcast %1914 : f32 to vector<16x16xf32>
    %1916 = arith.mulf %1915, %1896 : vector<16x16xf32>
    %1917 = arith.addf %1887, %1916 : vector<16x16xf32>
    %c108_i32_804 = arith.constant 108 : i32
    %1918 = arith.addi %1140, %c108_i32_804 : i32
    %c25_i32_805 = arith.constant 25 : i32
    %1919 = arith.addi %1918, %c25_i32_805 : i32
    %1920 = arith.index_cast %1919 : i32 to index
    %1921 = memref.load %arg2[%1920] : memref<288xf32, #tpu.memory_space<smem>>
    %1922 = vector.broadcast %1921 : f32 to vector<16x16xf32>
    %1923 = arith.mulf %1922, %1896 : vector<16x16xf32>
    %1924 = arith.addf %1894, %1923 : vector<16x16xf32>
    %c1_806 = arith.constant 1 : index
    %c2_807 = arith.constant 2 : index
    %c2_808 = arith.constant 2 : index
    %c2_809 = arith.constant 2 : index
    %1925 = vector.load %arg5[%c1_806, %c2_807, %c2_808, %c2_809] : memref<2x4x18x18xf32, #tpu.memory_space<vmem>>, vector<1x1x16x16xf32>
    %1926 = vector.shape_cast %1925 : vector<1x1x16x16xf32> to vector<16x16xf32>
    %c0_i32_810 = arith.constant 0 : i32
    %1927 = arith.addi %1140, %c0_i32_810 : i32
    %c26_i32_811 = arith.constant 26 : i32
    %1928 = arith.addi %1927, %c26_i32_811 : i32
    %1929 = arith.index_cast %1928 : i32 to index
    %1930 = memref.load %arg2[%1929] : memref<288xf32, #tpu.memory_space<smem>>
    %1931 = vector.broadcast %1930 : f32 to vector<16x16xf32>
    %1932 = arith.mulf %1931, %1926 : vector<16x16xf32>
    %1933 = arith.addf %1903, %1932 : vector<16x16xf32>
    %c36_i32_812 = arith.constant 36 : i32
    %1934 = arith.addi %1140, %c36_i32_812 : i32
    %c26_i32_813 = arith.constant 26 : i32
    %1935 = arith.addi %1934, %c26_i32_813 : i32
    %1936 = arith.index_cast %1935 : i32 to index
    %1937 = memref.load %arg2[%1936] : memref<288xf32, #tpu.memory_space<smem>>
    %1938 = vector.broadcast %1937 : f32 to vector<16x16xf32>
    %1939 = arith.mulf %1938, %1926 : vector<16x16xf32>
    %1940 = arith.addf %1910, %1939 : vector<16x16xf32>
    %c72_i32_814 = arith.constant 72 : i32
    %1941 = arith.addi %1140, %c72_i32_814 : i32
    %c26_i32_815 = arith.constant 26 : i32
    %1942 = arith.addi %1941, %c26_i32_815 : i32
    %1943 = arith.index_cast %1942 : i32 to index
    %1944 = memref.load %arg2[%1943] : memref<288xf32, #tpu.memory_space<smem>>
    %1945 = vector.broadcast %1944 : f32 to vector<16x16xf32>
    %1946 = arith.mulf %1945, %1926 : vector<16x16xf32>
    %1947 = arith.addf %1917, %1946 : vector<16x16xf32>
    %c108_i32_816 = arith.constant 108 : i32
    %1948 = arith.addi %1140, %c108_i32_816 : i32
    %c26_i32_817 = arith.constant 26 : i32
    %1949 = arith.addi %1948, %c26_i32_817 : i32
    %1950 = arith.index_cast %1949 : i32 to index
    %1951 = memref.load %arg2[%1950] : memref<288xf32, #tpu.memory_space<smem>>
    %1952 = vector.broadcast %1951 : f32 to vector<16x16xf32>
    %1953 = arith.mulf %1952, %1926 : vector<16x16xf32>
    %1954 = arith.addf %1924, %1953 : vector<16x16xf32>
    %c1_818 = arith.constant 1 : index
    %c3_819 = arith.constant 3 : index
    %c0_820 = arith.constant 0 : index
    %c0_821 = arith.constant 0 : index
    %1955 = vector.load %arg5[%c1_818, %c3_819, %c0_820, %c0_821] : memref<2x4x18x18xf32, #tpu.memory_space<vmem>>, vector<1x1x16x16xf32>
    %1956 = vector.shape_cast %1955 : vector<1x1x16x16xf32> to vector<16x16xf32>
    %c0_i32_822 = arith.constant 0 : i32
    %1957 = arith.addi %1140, %c0_i32_822 : i32
    %c27_i32_823 = arith.constant 27 : i32
    %1958 = arith.addi %1957, %c27_i32_823 : i32
    %1959 = arith.index_cast %1958 : i32 to index
    %1960 = memref.load %arg2[%1959] : memref<288xf32, #tpu.memory_space<smem>>
    %1961 = vector.broadcast %1960 : f32 to vector<16x16xf32>
    %1962 = arith.mulf %1961, %1956 : vector<16x16xf32>
    %1963 = arith.addf %1933, %1962 : vector<16x16xf32>
    %c36_i32_824 = arith.constant 36 : i32
    %1964 = arith.addi %1140, %c36_i32_824 : i32
    %c27_i32_825 = arith.constant 27 : i32
    %1965 = arith.addi %1964, %c27_i32_825 : i32
    %1966 = arith.index_cast %1965 : i32 to index
    %1967 = memref.load %arg2[%1966] : memref<288xf32, #tpu.memory_space<smem>>
    %1968 = vector.broadcast %1967 : f32 to vector<16x16xf32>
    %1969 = arith.mulf %1968, %1956 : vector<16x16xf32>
    %1970 = arith.addf %1940, %1969 : vector<16x16xf32>
    %c72_i32_826 = arith.constant 72 : i32
    %1971 = arith.addi %1140, %c72_i32_826 : i32
    %c27_i32_827 = arith.constant 27 : i32
    %1972 = arith.addi %1971, %c27_i32_827 : i32
    %1973 = arith.index_cast %1972 : i32 to index
    %1974 = memref.load %arg2[%1973] : memref<288xf32, #tpu.memory_space<smem>>
    %1975 = vector.broadcast %1974 : f32 to vector<16x16xf32>
    %1976 = arith.mulf %1975, %1956 : vector<16x16xf32>
    %1977 = arith.addf %1947, %1976 : vector<16x16xf32>
    %c108_i32_828 = arith.constant 108 : i32
    %1978 = arith.addi %1140, %c108_i32_828 : i32
    %c27_i32_829 = arith.constant 27 : i32
    %1979 = arith.addi %1978, %c27_i32_829 : i32
    %1980 = arith.index_cast %1979 : i32 to index
    %1981 = memref.load %arg2[%1980] : memref<288xf32, #tpu.memory_space<smem>>
    %1982 = vector.broadcast %1981 : f32 to vector<16x16xf32>
    %1983 = arith.mulf %1982, %1956 : vector<16x16xf32>
    %1984 = arith.addf %1954, %1983 : vector<16x16xf32>
    %c1_830 = arith.constant 1 : index
    %c3_831 = arith.constant 3 : index
    %c0_832 = arith.constant 0 : index
    %c1_833 = arith.constant 1 : index
    %1985 = vector.load %arg5[%c1_830, %c3_831, %c0_832, %c1_833] : memref<2x4x18x18xf32, #tpu.memory_space<vmem>>, vector<1x1x16x16xf32>
    %1986 = vector.shape_cast %1985 : vector<1x1x16x16xf32> to vector<16x16xf32>
    %c0_i32_834 = arith.constant 0 : i32
    %1987 = arith.addi %1140, %c0_i32_834 : i32
    %c28_i32_835 = arith.constant 28 : i32
    %1988 = arith.addi %1987, %c28_i32_835 : i32
    %1989 = arith.index_cast %1988 : i32 to index
    %1990 = memref.load %arg2[%1989] : memref<288xf32, #tpu.memory_space<smem>>
    %1991 = vector.broadcast %1990 : f32 to vector<16x16xf32>
    %1992 = arith.mulf %1991, %1986 : vector<16x16xf32>
    %1993 = arith.addf %1963, %1992 : vector<16x16xf32>
    %c36_i32_836 = arith.constant 36 : i32
    %1994 = arith.addi %1140, %c36_i32_836 : i32
    %c28_i32_837 = arith.constant 28 : i32
    %1995 = arith.addi %1994, %c28_i32_837 : i32
    %1996 = arith.index_cast %1995 : i32 to index
    %1997 = memref.load %arg2[%1996] : memref<288xf32, #tpu.memory_space<smem>>
    %1998 = vector.broadcast %1997 : f32 to vector<16x16xf32>
    %1999 = arith.mulf %1998, %1986 : vector<16x16xf32>
    %2000 = arith.addf %1970, %1999 : vector<16x16xf32>
    %c72_i32_838 = arith.constant 72 : i32
    %2001 = arith.addi %1140, %c72_i32_838 : i32
    %c28_i32_839 = arith.constant 28 : i32
    %2002 = arith.addi %2001, %c28_i32_839 : i32
    %2003 = arith.index_cast %2002 : i32 to index
    %2004 = memref.load %arg2[%2003] : memref<288xf32, #tpu.memory_space<smem>>
    %2005 = vector.broadcast %2004 : f32 to vector<16x16xf32>
    %2006 = arith.mulf %2005, %1986 : vector<16x16xf32>
    %2007 = arith.addf %1977, %2006 : vector<16x16xf32>
    %c108_i32_840 = arith.constant 108 : i32
    %2008 = arith.addi %1140, %c108_i32_840 : i32
    %c28_i32_841 = arith.constant 28 : i32
    %2009 = arith.addi %2008, %c28_i32_841 : i32
    %2010 = arith.index_cast %2009 : i32 to index
    %2011 = memref.load %arg2[%2010] : memref<288xf32, #tpu.memory_space<smem>>
    %2012 = vector.broadcast %2011 : f32 to vector<16x16xf32>
    %2013 = arith.mulf %2012, %1986 : vector<16x16xf32>
    %2014 = arith.addf %1984, %2013 : vector<16x16xf32>
    %c1_842 = arith.constant 1 : index
    %c3_843 = arith.constant 3 : index
    %c0_844 = arith.constant 0 : index
    %c2_845 = arith.constant 2 : index
    %2015 = vector.load %arg5[%c1_842, %c3_843, %c0_844, %c2_845] : memref<2x4x18x18xf32, #tpu.memory_space<vmem>>, vector<1x1x16x16xf32>
    %2016 = vector.shape_cast %2015 : vector<1x1x16x16xf32> to vector<16x16xf32>
    %c0_i32_846 = arith.constant 0 : i32
    %2017 = arith.addi %1140, %c0_i32_846 : i32
    %c29_i32_847 = arith.constant 29 : i32
    %2018 = arith.addi %2017, %c29_i32_847 : i32
    %2019 = arith.index_cast %2018 : i32 to index
    %2020 = memref.load %arg2[%2019] : memref<288xf32, #tpu.memory_space<smem>>
    %2021 = vector.broadcast %2020 : f32 to vector<16x16xf32>
    %2022 = arith.mulf %2021, %2016 : vector<16x16xf32>
    %2023 = arith.addf %1993, %2022 : vector<16x16xf32>
    %c36_i32_848 = arith.constant 36 : i32
    %2024 = arith.addi %1140, %c36_i32_848 : i32
    %c29_i32_849 = arith.constant 29 : i32
    %2025 = arith.addi %2024, %c29_i32_849 : i32
    %2026 = arith.index_cast %2025 : i32 to index
    %2027 = memref.load %arg2[%2026] : memref<288xf32, #tpu.memory_space<smem>>
    %2028 = vector.broadcast %2027 : f32 to vector<16x16xf32>
    %2029 = arith.mulf %2028, %2016 : vector<16x16xf32>
    %2030 = arith.addf %2000, %2029 : vector<16x16xf32>
    %c72_i32_850 = arith.constant 72 : i32
    %2031 = arith.addi %1140, %c72_i32_850 : i32
    %c29_i32_851 = arith.constant 29 : i32
    %2032 = arith.addi %2031, %c29_i32_851 : i32
    %2033 = arith.index_cast %2032 : i32 to index
    %2034 = memref.load %arg2[%2033] : memref<288xf32, #tpu.memory_space<smem>>
    %2035 = vector.broadcast %2034 : f32 to vector<16x16xf32>
    %2036 = arith.mulf %2035, %2016 : vector<16x16xf32>
    %2037 = arith.addf %2007, %2036 : vector<16x16xf32>
    %c108_i32_852 = arith.constant 108 : i32
    %2038 = arith.addi %1140, %c108_i32_852 : i32
    %c29_i32_853 = arith.constant 29 : i32
    %2039 = arith.addi %2038, %c29_i32_853 : i32
    %2040 = arith.index_cast %2039 : i32 to index
    %2041 = memref.load %arg2[%2040] : memref<288xf32, #tpu.memory_space<smem>>
    %2042 = vector.broadcast %2041 : f32 to vector<16x16xf32>
    %2043 = arith.mulf %2042, %2016 : vector<16x16xf32>
    %2044 = arith.addf %2014, %2043 : vector<16x16xf32>
    %c1_854 = arith.constant 1 : index
    %c3_855 = arith.constant 3 : index
    %c1_856 = arith.constant 1 : index
    %c0_857 = arith.constant 0 : index
    %2045 = vector.load %arg5[%c1_854, %c3_855, %c1_856, %c0_857] : memref<2x4x18x18xf32, #tpu.memory_space<vmem>>, vector<1x1x16x16xf32>
    %2046 = vector.shape_cast %2045 : vector<1x1x16x16xf32> to vector<16x16xf32>
    %c0_i32_858 = arith.constant 0 : i32
    %2047 = arith.addi %1140, %c0_i32_858 : i32
    %c30_i32_859 = arith.constant 30 : i32
    %2048 = arith.addi %2047, %c30_i32_859 : i32
    %2049 = arith.index_cast %2048 : i32 to index
    %2050 = memref.load %arg2[%2049] : memref<288xf32, #tpu.memory_space<smem>>
    %2051 = vector.broadcast %2050 : f32 to vector<16x16xf32>
    %2052 = arith.mulf %2051, %2046 : vector<16x16xf32>
    %2053 = arith.addf %2023, %2052 : vector<16x16xf32>
    %c36_i32_860 = arith.constant 36 : i32
    %2054 = arith.addi %1140, %c36_i32_860 : i32
    %c30_i32_861 = arith.constant 30 : i32
    %2055 = arith.addi %2054, %c30_i32_861 : i32
    %2056 = arith.index_cast %2055 : i32 to index
    %2057 = memref.load %arg2[%2056] : memref<288xf32, #tpu.memory_space<smem>>
    %2058 = vector.broadcast %2057 : f32 to vector<16x16xf32>
    %2059 = arith.mulf %2058, %2046 : vector<16x16xf32>
    %2060 = arith.addf %2030, %2059 : vector<16x16xf32>
    %c72_i32_862 = arith.constant 72 : i32
    %2061 = arith.addi %1140, %c72_i32_862 : i32
    %c30_i32_863 = arith.constant 30 : i32
    %2062 = arith.addi %2061, %c30_i32_863 : i32
    %2063 = arith.index_cast %2062 : i32 to index
    %2064 = memref.load %arg2[%2063] : memref<288xf32, #tpu.memory_space<smem>>
    %2065 = vector.broadcast %2064 : f32 to vector<16x16xf32>
    %2066 = arith.mulf %2065, %2046 : vector<16x16xf32>
    %2067 = arith.addf %2037, %2066 : vector<16x16xf32>
    %c108_i32_864 = arith.constant 108 : i32
    %2068 = arith.addi %1140, %c108_i32_864 : i32
    %c30_i32_865 = arith.constant 30 : i32
    %2069 = arith.addi %2068, %c30_i32_865 : i32
    %2070 = arith.index_cast %2069 : i32 to index
    %2071 = memref.load %arg2[%2070] : memref<288xf32, #tpu.memory_space<smem>>
    %2072 = vector.broadcast %2071 : f32 to vector<16x16xf32>
    %2073 = arith.mulf %2072, %2046 : vector<16x16xf32>
    %2074 = arith.addf %2044, %2073 : vector<16x16xf32>
    %c1_866 = arith.constant 1 : index
    %c3_867 = arith.constant 3 : index
    %c1_868 = arith.constant 1 : index
    %c1_869 = arith.constant 1 : index
    %2075 = vector.load %arg5[%c1_866, %c3_867, %c1_868, %c1_869] : memref<2x4x18x18xf32, #tpu.memory_space<vmem>>, vector<1x1x16x16xf32>
    %2076 = vector.shape_cast %2075 : vector<1x1x16x16xf32> to vector<16x16xf32>
    %c0_i32_870 = arith.constant 0 : i32
    %2077 = arith.addi %1140, %c0_i32_870 : i32
    %c31_i32_871 = arith.constant 31 : i32
    %2078 = arith.addi %2077, %c31_i32_871 : i32
    %2079 = arith.index_cast %2078 : i32 to index
    %2080 = memref.load %arg2[%2079] : memref<288xf32, #tpu.memory_space<smem>>
    %2081 = vector.broadcast %2080 : f32 to vector<16x16xf32>
    %2082 = arith.mulf %2081, %2076 : vector<16x16xf32>
    %2083 = arith.addf %2053, %2082 : vector<16x16xf32>
    %c36_i32_872 = arith.constant 36 : i32
    %2084 = arith.addi %1140, %c36_i32_872 : i32
    %c31_i32_873 = arith.constant 31 : i32
    %2085 = arith.addi %2084, %c31_i32_873 : i32
    %2086 = arith.index_cast %2085 : i32 to index
    %2087 = memref.load %arg2[%2086] : memref<288xf32, #tpu.memory_space<smem>>
    %2088 = vector.broadcast %2087 : f32 to vector<16x16xf32>
    %2089 = arith.mulf %2088, %2076 : vector<16x16xf32>
    %2090 = arith.addf %2060, %2089 : vector<16x16xf32>
    %c72_i32_874 = arith.constant 72 : i32
    %2091 = arith.addi %1140, %c72_i32_874 : i32
    %c31_i32_875 = arith.constant 31 : i32
    %2092 = arith.addi %2091, %c31_i32_875 : i32
    %2093 = arith.index_cast %2092 : i32 to index
    %2094 = memref.load %arg2[%2093] : memref<288xf32, #tpu.memory_space<smem>>
    %2095 = vector.broadcast %2094 : f32 to vector<16x16xf32>
    %2096 = arith.mulf %2095, %2076 : vector<16x16xf32>
    %2097 = arith.addf %2067, %2096 : vector<16x16xf32>
    %c108_i32_876 = arith.constant 108 : i32
    %2098 = arith.addi %1140, %c108_i32_876 : i32
    %c31_i32_877 = arith.constant 31 : i32
    %2099 = arith.addi %2098, %c31_i32_877 : i32
    %2100 = arith.index_cast %2099 : i32 to index
    %2101 = memref.load %arg2[%2100] : memref<288xf32, #tpu.memory_space<smem>>
    %2102 = vector.broadcast %2101 : f32 to vector<16x16xf32>
    %2103 = arith.mulf %2102, %2076 : vector<16x16xf32>
    %2104 = arith.addf %2074, %2103 : vector<16x16xf32>
    %c1_878 = arith.constant 1 : index
    %c3_879 = arith.constant 3 : index
    %c1_880 = arith.constant 1 : index
    %c2_881 = arith.constant 2 : index
    %2105 = vector.load %arg5[%c1_878, %c3_879, %c1_880, %c2_881] : memref<2x4x18x18xf32, #tpu.memory_space<vmem>>, vector<1x1x16x16xf32>
    %2106 = vector.shape_cast %2105 : vector<1x1x16x16xf32> to vector<16x16xf32>
    %c0_i32_882 = arith.constant 0 : i32
    %2107 = arith.addi %1140, %c0_i32_882 : i32
    %c32_i32_883 = arith.constant 32 : i32
    %2108 = arith.addi %2107, %c32_i32_883 : i32
    %2109 = arith.index_cast %2108 : i32 to index
    %2110 = memref.load %arg2[%2109] : memref<288xf32, #tpu.memory_space<smem>>
    %2111 = vector.broadcast %2110 : f32 to vector<16x16xf32>
    %2112 = arith.mulf %2111, %2106 : vector<16x16xf32>
    %2113 = arith.addf %2083, %2112 : vector<16x16xf32>
    %c36_i32_884 = arith.constant 36 : i32
    %2114 = arith.addi %1140, %c36_i32_884 : i32
    %c32_i32_885 = arith.constant 32 : i32
    %2115 = arith.addi %2114, %c32_i32_885 : i32
    %2116 = arith.index_cast %2115 : i32 to index
    %2117 = memref.load %arg2[%2116] : memref<288xf32, #tpu.memory_space<smem>>
    %2118 = vector.broadcast %2117 : f32 to vector<16x16xf32>
    %2119 = arith.mulf %2118, %2106 : vector<16x16xf32>
    %2120 = arith.addf %2090, %2119 : vector<16x16xf32>
    %c72_i32_886 = arith.constant 72 : i32
    %2121 = arith.addi %1140, %c72_i32_886 : i32
    %c32_i32_887 = arith.constant 32 : i32
    %2122 = arith.addi %2121, %c32_i32_887 : i32
    %2123 = arith.index_cast %2122 : i32 to index
    %2124 = memref.load %arg2[%2123] : memref<288xf32, #tpu.memory_space<smem>>
    %2125 = vector.broadcast %2124 : f32 to vector<16x16xf32>
    %2126 = arith.mulf %2125, %2106 : vector<16x16xf32>
    %2127 = arith.addf %2097, %2126 : vector<16x16xf32>
    %c108_i32_888 = arith.constant 108 : i32
    %2128 = arith.addi %1140, %c108_i32_888 : i32
    %c32_i32_889 = arith.constant 32 : i32
    %2129 = arith.addi %2128, %c32_i32_889 : i32
    %2130 = arith.index_cast %2129 : i32 to index
    %2131 = memref.load %arg2[%2130] : memref<288xf32, #tpu.memory_space<smem>>
    %2132 = vector.broadcast %2131 : f32 to vector<16x16xf32>
    %2133 = arith.mulf %2132, %2106 : vector<16x16xf32>
    %2134 = arith.addf %2104, %2133 : vector<16x16xf32>
    %c1_890 = arith.constant 1 : index
    %c3_891 = arith.constant 3 : index
    %c2_892 = arith.constant 2 : index
    %c0_893 = arith.constant 0 : index
    %2135 = vector.load %arg5[%c1_890, %c3_891, %c2_892, %c0_893] : memref<2x4x18x18xf32, #tpu.memory_space<vmem>>, vector<1x1x16x16xf32>
    %2136 = vector.shape_cast %2135 : vector<1x1x16x16xf32> to vector<16x16xf32>
    %c0_i32_894 = arith.constant 0 : i32
    %2137 = arith.addi %1140, %c0_i32_894 : i32
    %c33_i32_895 = arith.constant 33 : i32
    %2138 = arith.addi %2137, %c33_i32_895 : i32
    %2139 = arith.index_cast %2138 : i32 to index
    %2140 = memref.load %arg2[%2139] : memref<288xf32, #tpu.memory_space<smem>>
    %2141 = vector.broadcast %2140 : f32 to vector<16x16xf32>
    %2142 = arith.mulf %2141, %2136 : vector<16x16xf32>
    %2143 = arith.addf %2113, %2142 : vector<16x16xf32>
    %c36_i32_896 = arith.constant 36 : i32
    %2144 = arith.addi %1140, %c36_i32_896 : i32
    %c33_i32_897 = arith.constant 33 : i32
    %2145 = arith.addi %2144, %c33_i32_897 : i32
    %2146 = arith.index_cast %2145 : i32 to index
    %2147 = memref.load %arg2[%2146] : memref<288xf32, #tpu.memory_space<smem>>
    %2148 = vector.broadcast %2147 : f32 to vector<16x16xf32>
    %2149 = arith.mulf %2148, %2136 : vector<16x16xf32>
    %2150 = arith.addf %2120, %2149 : vector<16x16xf32>
    %c72_i32_898 = arith.constant 72 : i32
    %2151 = arith.addi %1140, %c72_i32_898 : i32
    %c33_i32_899 = arith.constant 33 : i32
    %2152 = arith.addi %2151, %c33_i32_899 : i32
    %2153 = arith.index_cast %2152 : i32 to index
    %2154 = memref.load %arg2[%2153] : memref<288xf32, #tpu.memory_space<smem>>
    %2155 = vector.broadcast %2154 : f32 to vector<16x16xf32>
    %2156 = arith.mulf %2155, %2136 : vector<16x16xf32>
    %2157 = arith.addf %2127, %2156 : vector<16x16xf32>
    %c108_i32_900 = arith.constant 108 : i32
    %2158 = arith.addi %1140, %c108_i32_900 : i32
    %c33_i32_901 = arith.constant 33 : i32
    %2159 = arith.addi %2158, %c33_i32_901 : i32
    %2160 = arith.index_cast %2159 : i32 to index
    %2161 = memref.load %arg2[%2160] : memref<288xf32, #tpu.memory_space<smem>>
    %2162 = vector.broadcast %2161 : f32 to vector<16x16xf32>
    %2163 = arith.mulf %2162, %2136 : vector<16x16xf32>
    %2164 = arith.addf %2134, %2163 : vector<16x16xf32>
    %c1_902 = arith.constant 1 : index
    %c3_903 = arith.constant 3 : index
    %c2_904 = arith.constant 2 : index
    %c1_905 = arith.constant 1 : index
    %2165 = vector.load %arg5[%c1_902, %c3_903, %c2_904, %c1_905] : memref<2x4x18x18xf32, #tpu.memory_space<vmem>>, vector<1x1x16x16xf32>
    %2166 = vector.shape_cast %2165 : vector<1x1x16x16xf32> to vector<16x16xf32>
    %c0_i32_906 = arith.constant 0 : i32
    %2167 = arith.addi %1140, %c0_i32_906 : i32
    %c34_i32_907 = arith.constant 34 : i32
    %2168 = arith.addi %2167, %c34_i32_907 : i32
    %2169 = arith.index_cast %2168 : i32 to index
    %2170 = memref.load %arg2[%2169] : memref<288xf32, #tpu.memory_space<smem>>
    %2171 = vector.broadcast %2170 : f32 to vector<16x16xf32>
    %2172 = arith.mulf %2171, %2166 : vector<16x16xf32>
    %2173 = arith.addf %2143, %2172 : vector<16x16xf32>
    %c36_i32_908 = arith.constant 36 : i32
    %2174 = arith.addi %1140, %c36_i32_908 : i32
    %c34_i32_909 = arith.constant 34 : i32
    %2175 = arith.addi %2174, %c34_i32_909 : i32
    %2176 = arith.index_cast %2175 : i32 to index
    %2177 = memref.load %arg2[%2176] : memref<288xf32, #tpu.memory_space<smem>>
    %2178 = vector.broadcast %2177 : f32 to vector<16x16xf32>
    %2179 = arith.mulf %2178, %2166 : vector<16x16xf32>
    %2180 = arith.addf %2150, %2179 : vector<16x16xf32>
    %c72_i32_910 = arith.constant 72 : i32
    %2181 = arith.addi %1140, %c72_i32_910 : i32
    %c34_i32_911 = arith.constant 34 : i32
    %2182 = arith.addi %2181, %c34_i32_911 : i32
    %2183 = arith.index_cast %2182 : i32 to index
    %2184 = memref.load %arg2[%2183] : memref<288xf32, #tpu.memory_space<smem>>
    %2185 = vector.broadcast %2184 : f32 to vector<16x16xf32>
    %2186 = arith.mulf %2185, %2166 : vector<16x16xf32>
    %2187 = arith.addf %2157, %2186 : vector<16x16xf32>
    %c108_i32_912 = arith.constant 108 : i32
    %2188 = arith.addi %1140, %c108_i32_912 : i32
    %c34_i32_913 = arith.constant 34 : i32
    %2189 = arith.addi %2188, %c34_i32_913 : i32
    %2190 = arith.index_cast %2189 : i32 to index
    %2191 = memref.load %arg2[%2190] : memref<288xf32, #tpu.memory_space<smem>>
    %2192 = vector.broadcast %2191 : f32 to vector<16x16xf32>
    %2193 = arith.mulf %2192, %2166 : vector<16x16xf32>
    %2194 = arith.addf %2164, %2193 : vector<16x16xf32>
    %c1_914 = arith.constant 1 : index
    %c3_915 = arith.constant 3 : index
    %c2_916 = arith.constant 2 : index
    %c2_917 = arith.constant 2 : index
    %2195 = vector.load %arg5[%c1_914, %c3_915, %c2_916, %c2_917] : memref<2x4x18x18xf32, #tpu.memory_space<vmem>>, vector<1x1x16x16xf32>
    %2196 = vector.shape_cast %2195 : vector<1x1x16x16xf32> to vector<16x16xf32>
    %c0_i32_918 = arith.constant 0 : i32
    %2197 = arith.addi %1140, %c0_i32_918 : i32
    %c35_i32_919 = arith.constant 35 : i32
    %2198 = arith.addi %2197, %c35_i32_919 : i32
    %2199 = arith.index_cast %2198 : i32 to index
    %2200 = memref.load %arg2[%2199] : memref<288xf32, #tpu.memory_space<smem>>
    %2201 = vector.broadcast %2200 : f32 to vector<16x16xf32>
    %2202 = arith.mulf %2201, %2196 : vector<16x16xf32>
    %2203 = arith.addf %2173, %2202 : vector<16x16xf32>
    %c36_i32_920 = arith.constant 36 : i32
    %2204 = arith.addi %1140, %c36_i32_920 : i32
    %c35_i32_921 = arith.constant 35 : i32
    %2205 = arith.addi %2204, %c35_i32_921 : i32
    %2206 = arith.index_cast %2205 : i32 to index
    %2207 = memref.load %arg2[%2206] : memref<288xf32, #tpu.memory_space<smem>>
    %2208 = vector.broadcast %2207 : f32 to vector<16x16xf32>
    %2209 = arith.mulf %2208, %2196 : vector<16x16xf32>
    %2210 = arith.addf %2180, %2209 : vector<16x16xf32>
    %c72_i32_922 = arith.constant 72 : i32
    %2211 = arith.addi %1140, %c72_i32_922 : i32
    %c35_i32_923 = arith.constant 35 : i32
    %2212 = arith.addi %2211, %c35_i32_923 : i32
    %2213 = arith.index_cast %2212 : i32 to index
    %2214 = memref.load %arg2[%2213] : memref<288xf32, #tpu.memory_space<smem>>
    %2215 = vector.broadcast %2214 : f32 to vector<16x16xf32>
    %2216 = arith.mulf %2215, %2196 : vector<16x16xf32>
    %2217 = arith.addf %2187, %2216 : vector<16x16xf32>
    %c108_i32_924 = arith.constant 108 : i32
    %2218 = arith.addi %1140, %c108_i32_924 : i32
    %c35_i32_925 = arith.constant 35 : i32
    %2219 = arith.addi %2218, %c35_i32_925 : i32
    %2220 = arith.index_cast %2219 : i32 to index
    %2221 = memref.load %arg2[%2220] : memref<288xf32, #tpu.memory_space<smem>>
    %2222 = vector.broadcast %2221 : f32 to vector<16x16xf32>
    %2223 = arith.mulf %2222, %2196 : vector<16x16xf32>
    %2224 = arith.addf %2194, %2223 : vector<16x16xf32>
    %c0_926 = arith.constant 0 : index
    %c1_927 = arith.constant 1 : index
    %c0_928 = arith.constant 0 : index
    %c0_929 = arith.constant 0 : index
    %c0_930 = arith.constant 0 : index
    %2225 = vector.load %arg4[%c0_926, %c1_927, %c0_928, %c0_929, %c0_930] : memref<1x2x4x16x16xf32, #tpu.memory_space<vmem>>, vector<1x1x1x16x16xf32>
    %2226 = vector.shape_cast %2225 : vector<1x1x1x16x16xf32> to vector<16x16xf32>
    %2227 = vector.shape_cast %2203 : vector<16x16xf32> to vector<1x1x1x16x16xf32>
    tpu.vector_store %arg4[%c0_926, %c1_927, %c0_928, %c0_929, %c0_930], %2227 {strides = array<i32>} : memref<1x2x4x16x16xf32, #tpu.memory_space<vmem>>, vector<1x1x1x16x16xf32>,
    %c0_931 = arith.constant 0 : index
    %c1_932 = arith.constant 1 : index
    %c1_933 = arith.constant 1 : index
    %c0_934 = arith.constant 0 : index
    %c0_935 = arith.constant 0 : index
    %2228 = vector.load %arg4[%c0_931, %c1_932, %c1_933, %c0_934, %c0_935] : memref<1x2x4x16x16xf32, #tpu.memory_space<vmem>>, vector<1x1x1x16x16xf32>
    %2229 = vector.shape_cast %2228 : vector<1x1x1x16x16xf32> to vector<16x16xf32>
    %2230 = vector.shape_cast %2210 : vector<16x16xf32> to vector<1x1x1x16x16xf32>
    tpu.vector_store %arg4[%c0_931, %c1_932, %c1_933, %c0_934, %c0_935], %2230 {strides = array<i32>} : memref<1x2x4x16x16xf32, #tpu.memory_space<vmem>>, vector<1x1x1x16x16xf32>,
    %c0_936 = arith.constant 0 : index
    %c1_937 = arith.constant 1 : index
    %c2_938 = arith.constant 2 : index
    %c0_939 = arith.constant 0 : index
    %c0_940 = arith.constant 0 : index
    %2231 = vector.load %arg4[%c0_936, %c1_937, %c2_938, %c0_939, %c0_940] : memref<1x2x4x16x16xf32, #tpu.memory_space<vmem>>, vector<1x1x1x16x16xf32>
    %2232 = vector.shape_cast %2231 : vector<1x1x1x16x16xf32> to vector<16x16xf32>
    %2233 = vector.shape_cast %2217 : vector<16x16xf32> to vector<1x1x1x16x16xf32>
    tpu.vector_store %arg4[%c0_936, %c1_937, %c2_938, %c0_939, %c0_940], %2233 {strides = array<i32>} : memref<1x2x4x16x16xf32, #tpu.memory_space<vmem>>, vector<1x1x1x16x16xf32>,
    %c0_941 = arith.constant 0 : index
    %c1_942 = arith.constant 1 : index
    %c3_943 = arith.constant 3 : index
    %c0_944 = arith.constant 0 : index
    %c0_945 = arith.constant 0 : index
    %2234 = vector.load %arg4[%c0_941, %c1_942, %c3_943, %c0_944, %c0_945] : memref<1x2x4x16x16xf32, #tpu.memory_space<vmem>>, vector<1x1x1x16x16xf32>
    %2235 = vector.shape_cast %2234 : vector<1x1x1x16x16xf32> to vector<16x16xf32>
    %2236 = vector.shape_cast %2224 : vector<16x16xf32> to vector<1x1x1x16x16xf32>
    tpu.vector_store %arg4[%c0_941, %c1_942, %c3_943, %c0_944, %c0_945], %2236 {strides = array<i32>} : memref<1x2x4x16x16xf32, #tpu.memory_space<vmem>>, vector<1x1x1x16x16xf32>,
    return
  }
  func.func @transform_0(%arg0: i32, %arg1: i32) -> i32 {
    %c0_i32 = arith.constant 0 : i32
    %c0_i32_0 = arith.constant 0 : i32
    return %c0_i32 : i32
  }
  func.func @transform_1(%arg0: i32, %arg1: i32) -> (i32, i32, i32, i32, i32) {
    %c0_i32 = arith.constant 0 : i32
    %c0_i32_0 = arith.constant 0 : i32
    %c0_i32_1 = arith.constant 0 : i32
    %c0_i32_2 = arith.constant 0 : i32
    return %arg0, %arg1, %c0_i32, %c0_i32_0, %c0_i32_1 : i32, i32, i32, i32, i32
  }
  func.func @transform_2(%arg0: i32, %arg1: i32) -> (i32, i32, i32, i32, i32) {
    %c0_i32 = arith.constant 0 : i32
    %c0_i32_0 = arith.constant 0 : i32
    %c0_i32_1 = arith.constant 0 : i32
    %c0_i32_2 = arith.constant 0 : i32
    return %arg0, %arg1, %c0_i32, %c0_i32_0, %c0_i32_1 : i32, i32, i32, i32, i32
  }
}

</mosaic_0001>

<llo_original>
// kernel: tpu_custom_call.1
$region0: #{tpu_custom_call.1}
  #allocation0 [shape = 'u32[]', space=smem, size = 0x4, offset = 0x4, fixed_abs, tag = 'smem constant byte address 0x4 - core index']
  #allocation1 [shape = 'u32[144,128]{1,0:T(1,128)}', space=vmem, size = 0x12000, scoped, tag = 'internal scratch']
  #allocation2 [shape = 'f32[2,4,18,18]{3,2,1,0:T(8,128)}', space=vmem, size = 0x18000, scoped, tag = 'scratch operand']
  %s0 = inlined_call_operand.hbm [shape: f32[288], index: 0, kind: input, shape index: {}]
  %s1 = inlined_call_operand.hbm [shape: f32[2,2,4,16,16], index: 1, kind: input, shape index: {}]
  %s2 = inlined_call_operand.hbm [shape: f32[2,2,4,16,16], index: 2, kind: output, shape index: {}]
  %s3 = sld [smem:[#allocation0]]
  $region49: #{tpu_custom_call.1} parent=0
    _
  %s5 = ssub.s32 1, %s3
  %s6 = scalar_select 0, %s5, %s3
  $region1: #{tpu_custom_call.1} parent=0
    #allocation3 [shape = 'u8[1536]{0}', space=smem, size = 0x600, scoped, tag = 'input window, operand 0, single buffered']
    #allocation4 [shape = 's32[2]{0}', space=sflag, size = 0x8, scoped, tag = 'scoped memory for tpu_custom_call.1']
    #allocation5 [shape = 's32[2]{0}', space=sflag, size = 0x8, scoped, tag = 'scoped memory for tpu_custom_call.1']
    #allocation6 [shape = 's32[2]{0}', space=sflag, size = 0x8, scoped, tag = 'scoped memory for tpu_custom_call.1']
    #allocation7 [shape = 'u8[131072]{0}', space=vmem, size = 0x20000, scoped, tag = 'input window, operand 1']
    #allocation8 [shape = 'u8[131072]{0}', space=vmem, size = 0x20000, scoped, tag = 'output window, operand 0']
    %7 = vsyncpa [#allocation6], 0
    %8 = vsyncpa [#allocation4], 0
    %s9 = scalar_lea.sflag [#allocation4], 1
    %10 = vsyncpa %s9, 0
    %11 = vsyncpa [#allocation5], 0
    %s12 = scalar_lea.sflag [#allocation5], 1
    %13 = vsyncpa %s12, 0
    loop: start=0, step=1, limit=4
    $region2: #{tpu_custom_call.1} parent=1 // loop_pre_header
      _
    $region3: #{tpu_custom_call.1} parent=1 // loop_header
      %s15 = sphi 0, %s19
      %p16 = scmp.ge.s32.totalorder %s15, 4
      %s22 = sphi 0, %s34
      %s23 = sphi 0, %s30
      %s24 = sphi 0, %s22
      %s25 = sphi 0, %s23
      %s26 = sphi 0, %s24
      %s27 = sphi 0, %s25
      %s35 = sphi 0, %s35
      %s37 = sphi 0, %s35
      %s38 = sphi 0, %s37
      %s52 = sphi 0, %s38
      %s60 = sphi 0, %s62
      %s63 = sphi 0, %s60
      %s64 = sphi 0, %s63
      %s80 = sphi 0, %s64
      %s88 = sphi 0, %s90
      %s91 = sphi 0, %s88
      %s92 = sphi 0, %s91
      %s108 = sphi 0, %s92
    $region4: #{tpu_custom_call.1} parent=1 // loop_header_branch
      %18 = sbr.rel (%p16) target = $region8
    $region5: #{tpu_custom_call.1} parent=1 // loop_body
      %s20 = ssub.s32 %s15, 1
      %s21 = ssub.s32 %s15, 2
      %s28 = sadd.s32 1, %s23
      %p29 = scmp.ge.s32.totalorder %s28, 1
      %s30 = scalar_select %p29, 0, %s28
      %s31 = sadd.s32 1, %s22
      %s32 = scalar_select %p29, %s31, %s22
      %p33 = scmp.ge.s32.totalorder %s32, 2
      %s34 = scalar_select %p33, 0, %s32
      %s36 = sadd.s32 %s35, 1
      %p39 = scmp.eq.s32.totalorder %s15, 1
      %p40 = scmp.ne.s32.totalorder %s35, %s37
      %p41 = scmp.eq.s32.totalorder %s15, 0
      %p42 = por %p40, %p41
      %p43 = scmp.ne.s32.totalorder %s35, %s37
      %p44 = scmp.eq.s32.totalorder %s20, 1
      %p45 = por %p43, %p44
      %p46 = scmp.ne.s32.totalorder %s37, %s38
      %p47 = scmp.eq.s32.totalorder %s20, 0
      %p48 = por %p46, %p47
      %p49 = scmp.ne.s32.totalorder %s37, %s38
      %p50 = scmp.eq.s32.totalorder %s21, 1
      %p51 = por %p49, %p50
      %p53 = scmp.ne.s32.totalorder %s38, %s52
      %p54 = scmp.eq.s32.totalorder %s21, 0
      %p55 = por %p53, %p54
      %s56 = ssub.s32 %s22, %s34
      %s57 = ssub.s32 %s23, %s30
      %s58 = sor.u32 %s56, %s57
      %p59 = scmp.eq.s32.totalorder %s58, 0
      %s61 = sadd.s32 %s60, 1
      %s62 = scalar_select %p59, %s60, %s61
      %p65 = pneg %p59
      %p66 = scmp.eq.s32.totalorder %s15, 1
      %p67 = por %p65, %p66
      %p68 = scmp.ne.s32.totalorder %s60, %s63
      %p69 = scmp.eq.s32.totalorder %s15, 0
      %p70 = por %p68, %p69
      %p71 = scmp.ne.s32.totalorder %s60, %s63
      %p72 = scmp.eq.s32.totalorder %s20, 1
      %p73 = por %p71, %p72
      %p74 = scmp.ne.s32.totalorder %s63, %s64
      %p75 = scmp.eq.s32.totalorder %s20, 0
      %p76 = por %p74, %p75
      %p77 = scmp.ne.s32.totalorder %s63, %s64
      %p78 = scmp.eq.s32.totalorder %s21, 1
      %p79 = por %p77, %p78
      %p81 = scmp.ne.s32.totalorder %s64, %s80
      %p82 = scmp.eq.s32.totalorder %s21, 0
      %p83 = por %p81, %p82
      %s84 = ssub.s32 %s22, %s34
      %s85 = ssub.s32 %s23, %s30
      %s86 = sor.u32 %s84, %s85
      %p87 = scmp.eq.s32.totalorder %s86, 0
      %s89 = sadd.s32 %s88, 1
      %s90 = scalar_select %p87, %s88, %s89
      %p93 = pneg %p87
      %p94 = scmp.eq.s32.totalorder %s15, 1
      %p95 = por %p93, %p94
      %p96 = scmp.ne.s32.totalorder %s88, %s91
      %p97 = scmp.eq.s32.totalorder %s15, 0
      %p98 = por %p96, %p97
      %p99 = scmp.ne.s32.totalorder %s88, %s91
      %p100 = scmp.eq.s32.totalorder %s20, 1
      %p101 = por %p99, %p100
      %p102 = scmp.ne.s32.totalorder %s91, %s92
      %p103 = scmp.eq.s32.totalorder %s20, 0
      %p104 = por %p102, %p103
      %p105 = scmp.ne.s32.totalorder %s91, %s92
      %p106 = scmp.eq.s32.totalorder %s21, 1
      %p107 = por %p105, %p106
      %p109 = scmp.ne.s32.totalorder %s92, %s108
      %p110 = scmp.eq.s32.totalorder %s21, 0
      %p111 = por %p109, %p110
      %p112 = scmp.le.s32.totalorder 1, %s15
      %p113 = scmp.lt.s32.totalorder %s15, 3
      %p114 = pnand %p112, %p113
      %p115 = pneg %p114
      // Predicated region
      $region9: #{tpu_custom_call.1} parent=5 // pred_check
        _
      $region10: #{tpu_custom_call.1} parent=5 // pred_check_branch
        %117 = sbr.rel (%p114) target = $region12
      $region11: #{tpu_custom_call.1} parent=5 // pred_region
        %s118 = ssub.s32 %s15, 1
        // Predicated region
        $region13: #{tpu_custom_call.1} parent=11 // pred_check
          %p119 = pneg %p48
        $region14: #{tpu_custom_call.1} parent=11 // pred_check_branch
          %121 = sbr.rel (%p119) target = $region16
        $region15: #{tpu_custom_call.1} parent=11 // pred_region
          %s123 = ssub.s32 48, 48
          %124 = vsyncadd [#allocation6], %s123
          %127 = dma.hbm_to_smem %s0, 48, [#allocation3], [#allocation6]
        $region16: #{tpu_custom_call.1} parent=11 // pred_fallthru
          _
      $region12: #{tpu_custom_call.1} parent=5 // pred_fallthru
        _
      %p128 = scmp.lt.s32.totalorder %s15, 2
      // Predicated region
      $region17: #{tpu_custom_call.1} parent=5 // pred_check
        %p129 = pneg %p128
      $region18: #{tpu_custom_call.1} parent=5 // pred_check_branch
        %131 = sbr.rel (%p129) target = $region20
      $region19: #{tpu_custom_call.1} parent=5 // pred_region
        // Predicated region
        $region21: #{tpu_custom_call.1} parent=19 // pred_check
          %p132 = pneg %p70
        $region22: #{tpu_custom_call.1} parent=19 // pred_check_branch
          %134 = sbr.rel (%p132) target = $region24
        $region23: #{tpu_custom_call.1} parent=19 // pred_region
          %s135 = sand.u32 %s60, 1
          %s136 = scalar_lea.sflag [#allocation4], %s135
          %s137 = sand.u32 %s60, 1
          %s138 = smul.addr %s137, 128
          %s139 = scalar_lea.vmem [#allocation7], %s138
          %s140 = smul.u32 2, %s23
          %s142 = ssub.s32 2048, 2048
          %143 = vsyncadd %s136, %s142
          %s144 = smul.addr %s140, 8
          %s145 = smul.addr %s22, 16
          %s146 = sadd.s32 %s144, %s145
          %s147 = smul.addr %s146, 128
          %s148 = scalar_lea.hbm %s1, %s147
          %s149 = sshll.u32 %s139, 4
          %s150 = int_to_ptr.vmem [resolvable:$true] %s149
          %155 = dma.hbm_to_vmem [thread:$0]  %s148, 2048, %s150, %s136, 128, 128, 8
        $region24: #{tpu_custom_call.1} parent=19 // pred_fallthru
          _
      $region20: #{tpu_custom_call.1} parent=5 // pred_fallthru
        _
      %p156 = scmp.le.s32.totalorder 1, %s15
      %p157 = scmp.lt.s32.totalorder %s15, 3
      %p158 = pnand %p156, %p157
      %p159 = pneg %p158
      // Predicated region
      $region25: #{tpu_custom_call.1} parent=5 // pred_check
        _
      $region26: #{tpu_custom_call.1} parent=5 // pred_check_branch
        %161 = sbr.rel (%p158) target = $region28
      $region27: #{tpu_custom_call.1} parent=5 // pred_region
        %s162 = ssub.s32 %s15, 1
        // Predicated region
        $region29: #{tpu_custom_call.1} parent=27 // pred_check
          %p163 = pneg %p48
        $region30: #{tpu_custom_call.1} parent=27 // pred_check_branch
          %165 = sbr.rel (%p163) target = $region32
        $region31: #{tpu_custom_call.1} parent=27 // pred_region
          %166 = dma.done [#allocation6], 48
        $region32: #{tpu_custom_call.1} parent=27 // pred_fallthru
          _
        %s167 = sand.u32 %s63, 1
        %s168 = scalar_lea.sflag [#allocation4], %s167
        %s169 = sand.u32 %s63, 1
        %s170 = smul.addr %s169, 128
        %s171 = scalar_lea.vmem [#allocation7], %s170
        // Predicated region
        $region33: #{tpu_custom_call.1} parent=27 // pred_check
          %p172 = pneg %p76
        $region34: #{tpu_custom_call.1} parent=27 // pred_check_branch
          %174 = sbr.rel (%p172) target = $region36
        $region35: #{tpu_custom_call.1} parent=27 // pred_region
          %175 = dma.done %s168, 2048
        $region36: #{tpu_custom_call.1} parent=27 // pred_fallthru
          _
        %176 = sfence
        %p177 = pneg %p48
        %p178 = pneg %p45
        %s179 = sand.u32 %s63, 1
        %s180 = scalar_lea.sflag [#allocation4], %s179
        %s181 = sand.u32 %s63, 1
        %s182 = smul.addr %s181, 128
        %s183 = scalar_lea.vmem [#allocation7], %s182
        %p184 = pneg %p76
        %p185 = pneg %p73
        %p186 = pneg %p104
        %p187 = pneg %p101
        %s188 = sand.u32 %s91, 1
        %s189 = scalar_lea.sflag [#allocation5], %s188
        %s190 = sand.u32 %s91, 1
        %s191 = smul.addr %s190, 128
        %s192 = scalar_lea.vmem [#allocation8], %s191
        %s193 = smul.u32 2, %s25
        %s194 = smul.u32 2, %s25
        %vm195 = vcmask 146432
        %196 = vst.msk [vmem:[#allocation2] sm:$0xff] %vm195, 0.0
        %197 = vst.msk [vmem:[#allocation2 + $0x8] sm:$0xff] %vm195, 0.0
        %vm198 = vcmask 140288
        %199 = vst.msk [vmem:[#allocation2 + $0x10] sm:$0x3] %vm198, 0.0
        %200 = vst.msk [vmem:[#allocation2 + $0x18] sm:$0xff] %vm195, 0.0
        %201 = vst.msk [vmem:[#allocation2 + $0x20] sm:$0xff] %vm195, 0.0
        %202 = vst.msk [vmem:[#allocation2 + $0x28] sm:$0x3] %vm198, 0.0
        %203 = vst.msk [vmem:[#allocation2 + $0x30] sm:$0xff] %vm195, 0.0
        %204 = vst.msk [vmem:[#allocation2 + $0x38] sm:$0xff] %vm195, 0.0
        %205 = vst.msk [vmem:[#allocation2 + $0x40] sm:$0x3] %vm198, 0.0
        %206 = vst.msk [vmem:[#allocation2 + $0x48] sm:$0xff] %vm195, 0.0
        %207 = vst.msk [vmem:[#allocation2 + $0x50] sm:$0xff] %vm195, 0.0
        %208 = vst.msk [vmem:[#allocation2 + $0x58] sm:$0x3] %vm198, 0.0
        %209 = vst.msk [vmem:[#allocation2 + $0x60] sm:$0xff] %vm195, 0.0
        %210 = vst.msk [vmem:[#allocation2 + $0x68] sm:$0xff] %vm195, 0.0
        %211 = vst.msk [vmem:[#allocation2 + $0x70] sm:$0x3] %vm198, 0.0
        %212 = vst.msk [vmem:[#allocation2 + $0x78] sm:$0xff] %vm195, 0.0
        %213 = vst.msk [vmem:[#allocation2 + $0x80] sm:$0xff] %vm195, 0.0
        %214 = vst.msk [vmem:[#allocation2 + $0x88] sm:$0x3] %vm198, 0.0
        %215 = vst.msk [vmem:[#allocation2 + $0x90] sm:$0xff] %vm195, 0.0
        %216 = vst.msk [vmem:[#allocation2 + $0x98] sm:$0xff] %vm195, 0.0
        %217 = vst.msk [vmem:[#allocation2 + $0xa0] sm:$0x3] %vm198, 0.0
        %218 = vst.msk [vmem:[#allocation2 + $0xa8] sm:$0xff] %vm195, 0.0
        %219 = vst.msk [vmem:[#allocation2 + $0xb0] sm:$0xff] %vm195, 0.0
        %220 = vst.msk [vmem:[#allocation2 + $0xb8] sm:$0x3] %vm198, 0.0
        %v221 = vld [vmem:[%s171] sm:$0xff]
        %v222 = vld [vmem:[%s171 + $0x8] sm:$0xff]
        %225 = vrot.lane.b32.xlu0 %v221, 1
        %v226 = vpop.permute.xlu0 %225
        %227 = vrot.lane.b32.xlu0 %v222, 1
        %v228 = vpop.permute.xlu0 %227
        %vm231 = vcmask 138248
        %232 = vst.msk [vmem:[#allocation2 + $0x1] sm:$0xff] %vm231, %v226
        %233 = vst.msk [vmem:[#allocation2 + $0x9] sm:$0xff] %vm231, %v228
        %s234 = scalar_lea.vmem %s171, 16 [#allocation7]
        %v235 = vld [vmem:[%s234] sm:$0xff]
        %v236 = vld [vmem:[%s234 + $0x8] sm:$0xff]
        %239 = vrot.lane.b32.xlu0 %v235, 1
        %v240 = vpop.permute.xlu0 %239
        %241 = vrot.lane.b32.xlu0 %v236, 1
        %v242 = vpop.permute.xlu0 %241
        %s245 = scalar_lea.vmem [#allocation2], 24
        %246 = vst.msk [vmem:[%s245 + $0x1] sm:$0xff] %vm231, %v240
        %247 = vst.msk [vmem:[%s245 + $0x9] sm:$0xff] %vm231, %v242
        %s248 = scalar_lea.vmem %s171, 32 [#allocation7]
        %v249 = vld [vmem:[%s248] sm:$0xff]
        %v250 = vld [vmem:[%s248 + $0x8] sm:$0xff]
        %253 = vrot.lane.b32.xlu0 %v249, 1
        %v254 = vpop.permute.xlu0 %253
        %255 = vrot.lane.b32.xlu0 %v250, 1
        %v256 = vpop.permute.xlu0 %255
        %s259 = scalar_lea.vmem [#allocation2], 48
        %260 = vst.msk [vmem:[%s259 + $0x1] sm:$0xff] %vm231, %v254
        %261 = vst.msk [vmem:[%s259 + $0x9] sm:$0xff] %vm231, %v256
        %s262 = scalar_lea.vmem %s171, 48 [#allocation7]
        %v263 = vld [vmem:[%s262] sm:$0xff]
        %v264 = vld [vmem:[%s262 + $0x8] sm:$0xff]
        %267 = vrot.lane.b32.xlu0 %v263, 1
        %v268 = vpop.permute.xlu0 %267
        %269 = vrot.lane.b32.xlu0 %v264, 1
        %v270 = vpop.permute.xlu0 %269
        %s273 = scalar_lea.vmem [#allocation2], 72
        %274 = vst.msk [vmem:[%s273 + $0x1] sm:$0xff] %vm231, %v268
        %275 = vst.msk [vmem:[%s273 + $0x9] sm:$0xff] %vm231, %v270
        %s276 = scalar_lea.vmem %s171, 64 [#allocation7]
        %v277 = vld [vmem:[%s276] sm:$0xff]
        %v278 = vld [vmem:[%s276 + $0x8] sm:$0xff]
        %281 = vrot.lane.b32.xlu0 %v277, 1
        %v282 = vpop.permute.xlu0 %281
        %283 = vrot.lane.b32.xlu0 %v278, 1
        %v284 = vpop.permute.xlu0 %283
        %s287 = scalar_lea.vmem [#allocation2], 96
        %288 = vst.msk [vmem:[%s287 + $0x1] sm:$0xff] %vm231, %v282
        %289 = vst.msk [vmem:[%s287 + $0x9] sm:$0xff] %vm231, %v284
        %s290 = scalar_lea.vmem %s171, 80 [#allocation7]
        %v291 = vld [vmem:[%s290] sm:$0xff]
        %v292 = vld [vmem:[%s290 + $0x8] sm:$0xff]
        %295 = vrot.lane.b32.xlu0 %v291, 1
        %v296 = vpop.permute.xlu0 %295
        %297 = vrot.lane.b32.xlu0 %v292, 1
        %v298 = vpop.permute.xlu0 %297
        %s301 = scalar_lea.vmem [#allocation2], 120
        %302 = vst.msk [vmem:[%s301 + $0x1] sm:$0xff] %vm231, %v296
        %303 = vst.msk [vmem:[%s301 + $0x9] sm:$0xff] %vm231, %v298
        %s304 = scalar_lea.vmem %s171, 96 [#allocation7]
        %v305 = vld [vmem:[%s304] sm:$0xff]
        %v306 = vld [vmem:[%s304 + $0x8] sm:$0xff]
        %309 = vrot.lane.b32.xlu0 %v305, 1
        %v310 = vpop.permute.xlu0 %309
        %311 = vrot.lane.b32.xlu0 %v306, 1
        %v312 = vpop.permute.xlu0 %311
        %s315 = scalar_lea.vmem [#allocation2], 144
        %316 = vst.msk [vmem:[%s315 + $0x1] sm:$0xff] %vm231, %v310
        %317 = vst.msk [vmem:[%s315 + $0x9] sm:$0xff] %vm231, %v312
        %s318 = scalar_lea.vmem %s171, 112 [#allocation7]
        %v319 = vld [vmem:[%s318] sm:$0xff]
        %v320 = vld [vmem:[%s318 + $0x8] sm:$0xff]
        %323 = vrot.lane.b32.xlu0 %v319, 1
        %v324 = vpop.permute.xlu0 %323
        %325 = vrot.lane.b32.xlu0 %v320, 1
        %v326 = vpop.permute.xlu0 %325
        %s329 = scalar_lea.vmem [#allocation2], 168
        %330 = vst.msk [vmem:[%s329 + $0x1] sm:$0xff] %vm231, %v324
        %331 = vst.msk [vmem:[%s329 + $0x9] sm:$0xff] %vm231, %v326
        %s332 = smul.u32 %s25, 288
        %v333 = vld [vmem:[#allocation2] sm:$0xff]
        %v334 = vld [vmem:[#allocation2 + $0x8] sm:$0xff]
        %s335 = sld [smem:[#allocation3 + %s332]]
        %v336 = vstv %s335
        %v337 = vmul.f32 %v336, %v333
        %v338 = vmul.f32 %v336, %v334
        %v339 = vadd.f32 %v337, 0.0
        %v340 = vadd.f32 %v338, 0.0
        %s341 = sadd.s32 %s332, 36
        %s342 = sld [smem:[#allocation3 + %s341]]
        %v343 = vstv %s342
        %v344 = vmul.f32 %v343, %v333
        %v345 = vmul.f32 %v343, %v334
        %v346 = vadd.f32 %v344, 0.0
        %v347 = vadd.f32 %v345, 0.0
        %s348 = sadd.s32 %s332, 72
        %s349 = sld [smem:[#allocation3 + %s348]]
        %v350 = vstv %s349
        %v351 = vmul.f32 %v350, %v333
        %v352 = vmul.f32 %v350, %v334
        %v353 = vadd.f32 %v351, 0.0
        %v354 = vadd.f32 %v352, 0.0
        %s355 = sadd.s32 %s332, 108
        %s356 = sld [smem:[#allocation3 + %s355]]
        %v357 = vstv %s356
        %v358 = vmul.f32 %v357, %v333
        %v359 = vmul.f32 %v357, %v334
        %v360 = vadd.f32 %v358, 0.0
        %v361 = vadd.f32 %v359, 0.0
        %s362 = sadd.s32 %s332, 1
        %s363 = sld [smem:[#allocation3 + %s362]]
        %v364 = vstv %s363
        %v365 = vmul.f32 %v364, %v333
        %v366 = vmul.f32 %v364, %v334
        %369 = vrot.lane.b32.xlu0 %v365, 127
        %v370 = vpop.permute.xlu0 %369
        %371 = vrot.lane.b32.xlu0 %v366, 127
        %v372 = vpop.permute.xlu0 %371
        %v375 = vadd.f32 %v339, %v370
        %v376 = vadd.f32 %v340, %v372
        %s377 = sadd.s32 %s332, 37
        %s378 = sld [smem:[#allocation3 + %s377]]
        %v379 = vstv %s378
        %v380 = vmul.f32 %v379, %v333
        %v381 = vmul.f32 %v379, %v334
        %384 = vrot.lane.b32.xlu0 %v380, 127
        %v385 = vpop.permute.xlu0 %384
        %386 = vrot.lane.b32.xlu0 %v381, 127
        %v387 = vpop.permute.xlu0 %386
        %v390 = vadd.f32 %v346, %v385
        %v391 = vadd.f32 %v347, %v387
        %s392 = sadd.s32 %s332, 73
        %s393 = sld [smem:[#allocation3 + %s392]]
        %v394 = vstv %s393
        %v395 = vmul.f32 %v394, %v333
        %v396 = vmul.f32 %v394, %v334
        %399 = vrot.lane.b32.xlu0 %v395, 127
        %v400 = vpop.permute.xlu0 %399
        %401 = vrot.lane.b32.xlu0 %v396, 127
        %v402 = vpop.permute.xlu0 %401
        %v405 = vadd.f32 %v353, %v400
        %v406 = vadd.f32 %v354, %v402
        %s407 = sadd.s32 %s332, 109
        %s408 = sld [smem:[#allocation3 + %s407]]
        %v409 = vstv %s408
        %v410 = vmul.f32 %v409, %v333
        %v411 = vmul.f32 %v409, %v334
        %414 = vrot.lane.b32.xlu0 %v410, 127
        %v415 = vpop.permute.xlu0 %414
        %416 = vrot.lane.b32.xlu0 %v411, 127
        %v417 = vpop.permute.xlu0 %416
        %v420 = vadd.f32 %v360, %v415
        %v421 = vadd.f32 %v361, %v417
        %s422 = sadd.s32 %s332, 2
        %s423 = sld [smem:[#allocation3 + %s422]]
        %v424 = vstv %s423
        %v425 = vmul.f32 %v424, %v333
        %v426 = vmul.f32 %v424, %v334
        %429 = vrot.lane.b32.xlu0 %v425, 126
        %v430 = vpop.permute.xlu0 %429
        %431 = vrot.lane.b32.xlu0 %v426, 126
        %v432 = vpop.permute.xlu0 %431
        %v435 = vadd.f32 %v375, %v430
        %v436 = vadd.f32 %v376, %v432
        %s437 = sadd.s32 %s332, 38
        %s438 = sld [smem:[#allocation3 + %s437]]
        %v439 = vstv %s438
        %v440 = vmul.f32 %v439, %v333
        %v441 = vmul.f32 %v439, %v334
        %444 = vrot.lane.b32.xlu0 %v440, 126
        %v445 = vpop.permute.xlu0 %444
        %446 = vrot.lane.b32.xlu0 %v441, 126
        %v447 = vpop.permute.xlu0 %446
        %v450 = vadd.f32 %v390, %v445
        %v451 = vadd.f32 %v391, %v447
        %s452 = sadd.s32 %s332, 74
        %s453 = sld [smem:[#allocation3 + %s452]]
        %v454 = vstv %s453
        %v455 = vmul.f32 %v454, %v333
        %v456 = vmul.f32 %v454, %v334
        %459 = vrot.lane.b32.xlu0 %v455, 126
        %v460 = vpop.permute.xlu0 %459
        %461 = vrot.lane.b32.xlu0 %v456, 126
        %v462 = vpop.permute.xlu0 %461
        %v465 = vadd.f32 %v405, %v460
        %v466 = vadd.f32 %v406, %v462
        %s467 = sadd.s32 %s332, 110
        %s468 = sld [smem:[#allocation3 + %s467]]
        %v469 = vstv %s468
        %v470 = vmul.f32 %v469, %v333
        %v471 = vmul.f32 %v469, %v334
        %474 = vrot.lane.b32.xlu0 %v470, 126
        %v475 = vpop.permute.xlu0 %474
        %476 = vrot.lane.b32.xlu0 %v471, 126
        %v477 = vpop.permute.xlu0 %476
        %v480 = vadd.f32 %v420, %v475
        %v481 = vadd.f32 %v421, %v477
        %v482 = vld [vmem:[#allocation2 + $0x1] sm:$0xff]
        %v483 = vld [vmem:[#allocation2 + $0x9] sm:$0xff]
        %s484 = sadd.s32 %s332, 3
        %s485 = sld [smem:[#allocation3 + %s484]]
        %v486 = vstv %s485
        %v487 = vmul.f32 %v486, %v482
        %v488 = vmul.f32 %v486, %v483
        %v489 = vadd.f32 %v435, %v487
        %v490 = vadd.f32 %v436, %v488
        %s491 = sadd.s32 %s332, 39
        %s492 = sld [smem:[#allocation3 + %s491]]
        %v493 = vstv %s492
        %v494 = vmul.f32 %v493, %v482
        %v495 = vmul.f32 %v493, %v483
        %v496 = vadd.f32 %v450, %v494
        %v497 = vadd.f32 %v451, %v495
        %s498 = sadd.s32 %s332, 75
        %s499 = sld [smem:[#allocation3 + %s498]]
        %v500 = vstv %s499
        %v501 = vmul.f32 %v500, %v482
        %v502 = vmul.f32 %v500, %v483
        %v503 = vadd.f32 %v465, %v501
        %v504 = vadd.f32 %v466, %v502
        %s505 = sadd.s32 %s332, 111
        %s506 = sld [smem:[#allocation3 + %s505]]
        %v507 = vstv %s506
        %v508 = vmul.f32 %v507, %v482
        %v509 = vmul.f32 %v507, %v483
        %v510 = vadd.f32 %v480, %v508
        %v511 = vadd.f32 %v481, %v509
        %s512 = sadd.s32 %s332, 4
        %s513 = sld [smem:[#allocation3 + %s512]]
        %v514 = vstv %s513
        %v515 = vmul.f32 %v514, %v482
        %v516 = vmul.f32 %v514, %v483
        %519 = vrot.lane.b32.xlu0 %v515, 127
        %v520 = vpop.permute.xlu0 %519
        %521 = vrot.lane.b32.xlu0 %v516, 127
        %v522 = vpop.permute.xlu0 %521
        %v525 = vadd.f32 %v489, %v520
        %v526 = vadd.f32 %v490, %v522
        %s527 = sadd.s32 %s332, 40
        %s528 = sld [smem:[#allocation3 + %s527]]
        %v529 = vstv %s528
        %v530 = vmul.f32 %v529, %v482
        %v531 = vmul.f32 %v529, %v483
        %534 = vrot.lane.b32.xlu0 %v530, 127
        %v535 = vpop.permute.xlu0 %534
        %536 = vrot.lane.b32.xlu0 %v531, 127
        %v537 = vpop.permute.xlu0 %536
        %v540 = vadd.f32 %v496, %v535
        %v541 = vadd.f32 %v497, %v537
        %s542 = sadd.s32 %s332, 76
        %s543 = sld [smem:[#allocation3 + %s542]]
        %v544 = vstv %s543
        %v545 = vmul.f32 %v544, %v482
        %v546 = vmul.f32 %v544, %v483
        %549 = vrot.lane.b32.xlu0 %v545, 127
        %v550 = vpop.permute.xlu0 %549
        %551 = vrot.lane.b32.xlu0 %v546, 127
        %v552 = vpop.permute.xlu0 %551
        %v555 = vadd.f32 %v503, %v550
        %v556 = vadd.f32 %v504, %v552
        %s557 = sadd.s32 %s332, 112
        %s558 = sld [smem:[#allocation3 + %s557]]
        %v559 = vstv %s558
        %v560 = vmul.f32 %v559, %v482
        %v561 = vmul.f32 %v559, %v483
        %564 = vrot.lane.b32.xlu0 %v560, 127
        %v565 = vpop.permute.xlu0 %564
        %566 = vrot.lane.b32.xlu0 %v561, 127
        %v567 = vpop.permute.xlu0 %566
        %v570 = vadd.f32 %v510, %v565
        %v571 = vadd.f32 %v511, %v567
        %s572 = sadd.s32 %s332, 5
        %s573 = sld [smem:[#allocation3 + %s572]]
        %v574 = vstv %s573
        %v575 = vmul.f32 %v574, %v482
        %v576 = vmul.f32 %v574, %v483
        %579 = vrot.lane.b32.xlu0 %v575, 126
        %v580 = vpop.permute.xlu0 %579
        %581 = vrot.lane.b32.xlu0 %v576, 126
        %v582 = vpop.permute.xlu0 %581
        %v585 = vadd.f32 %v525, %v580
        %v586 = vadd.f32 %v526, %v582
        %s587 = sadd.s32 %s332, 41
        %s588 = sld [smem:[#allocation3 + %s587]]
        %v589 = vstv %s588
        %v590 = vmul.f32 %v589, %v482
        %v591 = vmul.f32 %v589, %v483
        %594 = vrot.lane.b32.xlu0 %v590, 126
        %v595 = vpop.permute.xlu0 %594
        %596 = vrot.lane.b32.xlu0 %v591, 126
        %v597 = vpop.permute.xlu0 %596
        %v600 = vadd.f32 %v540, %v595
        %v601 = vadd.f32 %v541, %v597
        %s602 = sadd.s32 %s332, 77
        %s603 = sld [smem:[#allocation3 + %s602]]
        %v604 = vstv %s603
        %v605 = vmul.f32 %v604, %v482
        %v606 = vmul.f32 %v604, %v483
        %609 = vrot.lane.b32.xlu0 %v605, 126
        %v610 = vpop.permute.xlu0 %609
        %611 = vrot.lane.b32.xlu0 %v606, 126
        %v612 = vpop.permute.xlu0 %611
        %v615 = vadd.f32 %v555, %v610
        %v616 = vadd.f32 %v556, %v612
        %s617 = sadd.s32 %s332, 113
        %s618 = sld [smem:[#allocation3 + %s617]]
        %v619 = vstv %s618
        %v620 = vmul.f32 %v619, %v482
        %v621 = vmul.f32 %v619, %v483
        %624 = vrot.lane.b32.xlu0 %v620, 126
        %v625 = vpop.permute.xlu0 %624
        %626 = vrot.lane.b32.xlu0 %v621, 126
        %v627 = vpop.permute.xlu0 %626
        %v630 = vadd.f32 %v570, %v625
        %v631 = vadd.f32 %v571, %v627
        %v632 = vld [vmem:[#allocation2 + $0x2] sm:$0xff]
        %v633 = vld [vmem:[#allocation2 + $0xa] sm:$0xff]
        %s634 = sadd.s32 %s332, 6
        %s635 = sld [smem:[#allocation3 + %s634]]
        %v636 = vstv %s635
        %v637 = vmul.f32 %v636, %v632
        %v638 = vmul.f32 %v636, %v633
        %v639 = vadd.f32 %v585, %v637
        %v640 = vadd.f32 %v586, %v638
        %s641 = sadd.s32 %s332, 42
        %s642 = sld [smem:[#allocation3 + %s641]]
        %v643 = vstv %s642
        %v644 = vmul.f32 %v643, %v632
        %v645 = vmul.f32 %v643, %v633
        %v646 = vadd.f32 %v600, %v644
        %v647 = vadd.f32 %v601, %v645
        %s648 = sadd.s32 %s332, 78
        %s649 = sld [smem:[#allocation3 + %s648]]
        %v650 = vstv %s649
        %v651 = vmul.f32 %v650, %v632
        %v652 = vmul.f32 %v650, %v633
        %v653 = vadd.f32 %v615, %v651
        %v654 = vadd.f32 %v616, %v652
        %s655 = sadd.s32 %s332, 114
        %s656 = sld [smem:[#allocation3 + %s655]]
        %v657 = vstv %s656
        %v658 = vmul.f32 %v657, %v632
        %v659 = vmul.f32 %v657, %v633
        %v660 = vadd.f32 %v630, %v658
        %v661 = vadd.f32 %v631, %v659
        %s662 = sadd.s32 %s332, 7
        %s663 = sld [smem:[#allocation3 + %s662]]
        %v664 = vstv %s663
        %v665 = vmul.f32 %v664, %v632
        %v666 = vmul.f32 %v664, %v633
        %669 = vrot.lane.b32.xlu0 %v665, 127
        %v670 = vpop.permute.xlu0 %669
        %671 = vrot.lane.b32.xlu0 %v666, 127
        %v672 = vpop.permute.xlu0 %671
        %v675 = vadd.f32 %v639, %v670
        %v676 = vadd.f32 %v640, %v672
        %s677 = sadd.s32 %s332, 43
        %s678 = sld [smem:[#allocation3 + %s677]]
        %v679 = vstv %s678
        %v680 = vmul.f32 %v679, %v632
        %v681 = vmul.f32 %v679, %v633
        %684 = vrot.lane.b32.xlu0 %v680, 127
        %v685 = vpop.permute.xlu0 %684
        %686 = vrot.lane.b32.xlu0 %v681, 127
        %v687 = vpop.permute.xlu0 %686
        %v690 = vadd.f32 %v646, %v685
        %v691 = vadd.f32 %v647, %v687
        %s692 = sadd.s32 %s332, 79
        %s693 = sld [smem:[#allocation3 + %s692]]
        %v694 = vstv %s693
        %v695 = vmul.f32 %v694, %v632
        %v696 = vmul.f32 %v694, %v633
        %699 = vrot.lane.b32.xlu0 %v695, 127
        %v700 = vpop.permute.xlu0 %699
        %701 = vrot.lane.b32.xlu0 %v696, 127
        %v702 = vpop.permute.xlu0 %701
        %v705 = vadd.f32 %v653, %v700
        %v706 = vadd.f32 %v654, %v702
        %s707 = sadd.s32 %s332, 115
        %s708 = sld [smem:[#allocation3 + %s707]]
        %v709 = vstv %s708
        %v710 = vmul.f32 %v709, %v632
        %v711 = vmul.f32 %v709, %v633
        %714 = vrot.lane.b32.xlu0 %v710, 127
        %v715 = vpop.permute.xlu0 %714
        %716 = vrot.lane.b32.xlu0 %v711, 127
        %v717 = vpop.permute.xlu0 %716
        %v720 = vadd.f32 %v660, %v715
        %v721 = vadd.f32 %v661, %v717
        %s722 = sadd.s32 %s332, 8
        %s723 = sld [smem:[#allocation3 + %s722]]
        %v724 = vstv %s723
        %v725 = vmul.f32 %v724, %v632
        %v726 = vmul.f32 %v724, %v633
        %729 = vrot.lane.b32.xlu0 %v725, 126
        %v730 = vpop.permute.xlu0 %729
        %731 = vrot.lane.b32.xlu0 %v726, 126
        %v732 = vpop.permute.xlu0 %731
        %v735 = vadd.f32 %v675, %v730
        %v736 = vadd.f32 %v676, %v732
        %s737 = sadd.s32 %s332, 44
        %s738 = sld [smem:[#allocation3 + %s737]]
        %v739 = vstv %s738
        %v740 = vmul.f32 %v739, %v632
        %v741 = vmul.f32 %v739, %v633
        %744 = vrot.lane.b32.xlu0 %v740, 126
        %v745 = vpop.permute.xlu0 %744
        %746 = vrot.lane.b32.xlu0 %v741, 126
        %v747 = vpop.permute.xlu0 %746
        %v750 = vadd.f32 %v690, %v745
        %v751 = vadd.f32 %v691, %v747
        %s752 = sadd.s32 %s332, 80
        %s753 = sld [smem:[#allocation3 + %s752]]
        %v754 = vstv %s753
        %v755 = vmul.f32 %v754, %v632
        %v756 = vmul.f32 %v754, %v633
        %759 = vrot.lane.b32.xlu0 %v755, 126
        %v760 = vpop.permute.xlu0 %759
        %761 = vrot.lane.b32.xlu0 %v756, 126
        %v762 = vpop.permute.xlu0 %761
        %v765 = vadd.f32 %v705, %v760
        %v766 = vadd.f32 %v706, %v762
        %s767 = sadd.s32 %s332, 116
        %s768 = sld [smem:[#allocation3 + %s767]]
        %v769 = vstv %s768
        %v770 = vmul.f32 %v769, %v632
        %v771 = vmul.f32 %v769, %v633
        %774 = vrot.lane.b32.xlu0 %v770, 126
        %v775 = vpop.permute.xlu0 %774
        %776 = vrot.lane.b32.xlu0 %v771, 126
        %v777 = vpop.permute.xlu0 %776
        %v780 = vadd.f32 %v720, %v775
        %v781 = vadd.f32 %v721, %v777
        %v782 = vld [vmem:[%s245] sm:$0xff]
        %v783 = vld [vmem:[%s245 + $0x8] sm:$0xff]
        %s784 = sadd.s32 %s332, 9
        %s785 = sld [smem:[#allocation3 + %s784]]
        %v786 = vstv %s785
        %v787 = vmul.f32 %v786, %v782
        %v788 = vmul.f32 %v786, %v783
        %v789 = vadd.f32 %v735, %v787
        %v790 = vadd.f32 %v736, %v788
        %s791 = sadd.s32 %s332, 45
        %s792 = sld [smem:[#allocation3 + %s791]]
        %v793 = vstv %s792
        %v794 = vmul.f32 %v793, %v782
        %v795 = vmul.f32 %v793, %v783
        %v796 = vadd.f32 %v750, %v794
        %v797 = vadd.f32 %v751, %v795
        %s798 = sadd.s32 %s332, 81
        %s799 = sld [smem:[#allocation3 + %s798]]
        %v800 = vstv %s799
        %v801 = vmul.f32 %v800, %v782
        %v802 = vmul.f32 %v800, %v783
        %v803 = vadd.f32 %v765, %v801
        %v804 = vadd.f32 %v766, %v802
        %s805 = sadd.s32 %s332, 117
        %s806 = sld [smem:[#allocation3 + %s805]]
        %v807 = vstv %s806
        %v808 = vmul.f32 %v807, %v782
        %v809 = vmul.f32 %v807, %v783
        %v810 = vadd.f32 %v780, %v808
        %v811 = vadd.f32 %v781, %v809
        %s812 = sadd.s32 %s332, 10
        %s813 = sld [smem:[#allocation3 + %s812]]
        %v814 = vstv %s813
        %v815 = vmul.f32 %v814, %v782
        %v816 = vmul.f32 %v814, %v783
        %819 = vrot.lane.b32.xlu0 %v815, 127
        %v820 = vpop.permute.xlu0 %819
        %821 = vrot.lane.b32.xlu0 %v816, 127
        %v822 = vpop.permute.xlu0 %821
        %v825 = vadd.f32 %v789, %v820
        %v826 = vadd.f32 %v790, %v822
        %s827 = sadd.s32 %s332, 46
        %s828 = sld [smem:[#allocation3 + %s827]]
        %v829 = vstv %s828
        %v830 = vmul.f32 %v829, %v782
        %v831 = vmul.f32 %v829, %v783
        %834 = vrot.lane.b32.xlu0 %v830, 127
        %v835 = vpop.permute.xlu0 %834
        %836 = vrot.lane.b32.xlu0 %v831, 127
        %v837 = vpop.permute.xlu0 %836
        %v840 = vadd.f32 %v796, %v835
        %v841 = vadd.f32 %v797, %v837
        %s842 = sadd.s32 %s332, 82
        %s843 = sld [smem:[#allocation3 + %s842]]
        %v844 = vstv %s843
        %v845 = vmul.f32 %v844, %v782
        %v846 = vmul.f32 %v844, %v783
        %849 = vrot.lane.b32.xlu0 %v845, 127
        %v850 = vpop.permute.xlu0 %849
        %851 = vrot.lane.b32.xlu0 %v846, 127
        %v852 = vpop.permute.xlu0 %851
        %v855 = vadd.f32 %v803, %v850
        %v856 = vadd.f32 %v804, %v852
        %s857 = sadd.s32 %s332, 118
        %s858 = sld [smem:[#allocation3 + %s857]]
        %v859 = vstv %s858
        %v860 = vmul.f32 %v859, %v782
        %v861 = vmul.f32 %v859, %v783
        %864 = vrot.lane.b32.xlu0 %v860, 127
        %v865 = vpop.permute.xlu0 %864
        %866 = vrot.lane.b32.xlu0 %v861, 127
        %v867 = vpop.permute.xlu0 %866
        %v870 = vadd.f32 %v810, %v865
        %v871 = vadd.f32 %v811, %v867
        %s872 = sadd.s32 %s332, 11
        %s873 = sld [smem:[#allocation3 + %s872]]
        %v874 = vstv %s873
        %v875 = vmul.f32 %v874, %v782
        %v876 = vmul.f32 %v874, %v783
        %879 = vrot.lane.b32.xlu0 %v875, 126
        %v880 = vpop.permute.xlu0 %879
        %881 = vrot.lane.b32.xlu0 %v876, 126
        %v882 = vpop.permute.xlu0 %881
        %v885 = vadd.f32 %v825, %v880
        %v886 = vadd.f32 %v826, %v882
        %s887 = sadd.s32 %s332, 47
        %s888 = sld [smem:[#allocation3 + %s887]]
        %v889 = vstv %s888
        %v890 = vmul.f32 %v889, %v782
        %v891 = vmul.f32 %v889, %v783
        %894 = vrot.lane.b32.xlu0 %v890, 126
        %v895 = vpop.permute.xlu0 %894
        %896 = vrot.lane.b32.xlu0 %v891, 126
        %v897 = vpop.permute.xlu0 %896
        %v900 = vadd.f32 %v840, %v895
        %v901 = vadd.f32 %v841, %v897
        %s902 = sadd.s32 %s332, 83
        %s903 = sld [smem:[#allocation3 + %s902]]
        %v904 = vstv %s903
        %v905 = vmul.f32 %v904, %v782
        %v906 = vmul.f32 %v904, %v783
        %909 = vrot.lane.b32.xlu0 %v905, 126
        %v910 = vpop.permute.xlu0 %909
        %911 = vrot.lane.b32.xlu0 %v906, 126
        %v912 = vpop.permute.xlu0 %911
        %v915 = vadd.f32 %v855, %v910
        %v916 = vadd.f32 %v856, %v912
        %s917 = sadd.s32 %s332, 119
        %s918 = sld [smem:[#allocation3 + %s917]]
        %v919 = vstv %s918
        %v920 = vmul.f32 %v919, %v782
        %v921 = vmul.f32 %v919, %v783
        %924 = vrot.lane.b32.xlu0 %v920, 126
        %v925 = vpop.permute.xlu0 %924
        %926 = vrot.lane.b32.xlu0 %v921, 126
        %v927 = vpop.permute.xlu0 %926
        %v930 = vadd.f32 %v870, %v925
        %v931 = vadd.f32 %v871, %v927
        %v932 = vld [vmem:[%s245 + $0x1] sm:$0xff]
        %v933 = vld [vmem:[%s245 + $0x9] sm:$0xff]
        %s934 = sadd.s32 %s332, 12
        %s935 = sld [smem:[#allocation3 + %s934]]
        %v936 = vstv %s935
        %v937 = vmul.f32 %v936, %v932
        %v938 = vmul.f32 %v936, %v933
        %v939 = vadd.f32 %v885, %v937
        %v940 = vadd.f32 %v886, %v938
        %s941 = sadd.s32 %s332, 48
        %s942 = sld [smem:[#allocation3 + %s941]]
        %v943 = vstv %s942
        %v944 = vmul.f32 %v943, %v932
        %v945 = vmul.f32 %v943, %v933
        %v946 = vadd.f32 %v900, %v944
        %v947 = vadd.f32 %v901, %v945
        %s948 = sadd.s32 %s332, 84
        %s949 = sld [smem:[#allocation3 + %s948]]
        %v950 = vstv %s949
        %v951 = vmul.f32 %v950, %v932
        %v952 = vmul.f32 %v950, %v933
        %v953 = vadd.f32 %v915, %v951
        %v954 = vadd.f32 %v916, %v952
        %s955 = sadd.s32 %s332, 120
        %s956 = sld [smem:[#allocation3 + %s955]]
        %v957 = vstv %s956
        %v958 = vmul.f32 %v957, %v932
        %v959 = vmul.f32 %v957, %v933
        %v960 = vadd.f32 %v930, %v958
        %v961 = vadd.f32 %v931, %v959
        %s962 = sadd.s32 %s332, 13
        %s963 = sld [smem:[#allocation3 + %s962]]
        %v964 = vstv %s963
        %v965 = vmul.f32 %v964, %v932
        %v966 = vmul.f32 %v964, %v933
        %969 = vrot.lane.b32.xlu0 %v965, 127
        %v970 = vpop.permute.xlu0 %969
        %971 = vrot.lane.b32.xlu0 %v966, 127
        %v972 = vpop.permute.xlu0 %971
        %v975 = vadd.f32 %v939, %v970
        %v976 = vadd.f32 %v940, %v972
        %s977 = sadd.s32 %s332, 49
        %s978 = sld [smem:[#allocation3 + %s977]]
        %v979 = vstv %s978
        %v980 = vmul.f32 %v979, %v932
        %v981 = vmul.f32 %v979, %v933
        %984 = vrot.lane.b32.xlu0 %v980, 127
        %v985 = vpop.permute.xlu0 %984
        %986 = vrot.lane.b32.xlu0 %v981, 127
        %v987 = vpop.permute.xlu0 %986
        %v990 = vadd.f32 %v946, %v985
        %v991 = vadd.f32 %v947, %v987
        %s992 = sadd.s32 %s332, 85
        %s993 = sld [smem:[#allocation3 + %s992]]
        %v994 = vstv %s993
        %v995 = vmul.f32 %v994, %v932
        %v996 = vmul.f32 %v994, %v933
        %999 = vrot.lane.b32.xlu0 %v995, 127
        %v1000 = vpop.permute.xlu0 %999
        %1001 = vrot.lane.b32.xlu0 %v996, 127
        %v1002 = vpop.permute.xlu0 %1001
        %v1005 = vadd.f32 %v953, %v1000
        %v1006 = vadd.f32 %v954, %v1002
        %s1007 = sadd.s32 %s332, 121
        %s1008 = sld [smem:[#allocation3 + %s1007]]
        %v1009 = vstv %s1008
        %v1010 = vmul.f32 %v1009, %v932
        %v1011 = vmul.f32 %v1009, %v933
        %1014 = vrot.lane.b32.xlu0 %v1010, 127
        %v1015 = vpop.permute.xlu0 %1014
        %1016 = vrot.lane.b32.xlu0 %v1011, 127
        %v1017 = vpop.permute.xlu0 %1016
        %v1020 = vadd.f32 %v960, %v1015
        %v1021 = vadd.f32 %v961, %v1017
        %s1022 = sadd.s32 %s332, 14
        %s1023 = sld [smem:[#allocation3 + %s1022]]
        %v1024 = vstv %s1023
        %v1025 = vmul.f32 %v1024, %v932
        %v1026 = vmul.f32 %v1024, %v933
        %1029 = vrot.lane.b32.xlu0 %v1025, 126
        %v1030 = vpop.permute.xlu0 %1029
        %1031 = vrot.lane.b32.xlu0 %v1026, 126
        %v1032 = vpop.permute.xlu0 %1031
        %v1035 = vadd.f32 %v975, %v1030
        %v1036 = vadd.f32 %v976, %v1032
        %s1037 = sadd.s32 %s332, 50
        %s1038 = sld [smem:[#allocation3 + %s1037]]
        %v1039 = vstv %s1038
        %v1040 = vmul.f32 %v1039, %v932
        %v1041 = vmul.f32 %v1039, %v933
        %1044 = vrot.lane.b32.xlu0 %v1040, 126
        %v1045 = vpop.permute.xlu0 %1044
        %1046 = vrot.lane.b32.xlu0 %v1041, 126
        %v1047 = vpop.permute.xlu0 %1046
        %v1050 = vadd.f32 %v990, %v1045
        %v1051 = vadd.f32 %v991, %v1047
        %s1052 = sadd.s32 %s332, 86
        %s1053 = sld [smem:[#allocation3 + %s1052]]
        %v1054 = vstv %s1053
        %v1055 = vmul.f32 %v1054, %v932
        %v1056 = vmul.f32 %v1054, %v933
        %1059 = vrot.lane.b32.xlu0 %v1055, 126
        %v1060 = vpop.permute.xlu0 %1059
        %1061 = vrot.lane.b32.xlu0 %v1056, 126
        %v1062 = vpop.permute.xlu0 %1061
        %v1065 = vadd.f32 %v1005, %v1060
        %v1066 = vadd.f32 %v1006, %v1062
        %s1067 = sadd.s32 %s332, 122
        %s1068 = sld [smem:[#allocation3 + %s1067]]
        %v1069 = vstv %s1068
        %v1070 = vmul.f32 %v1069, %v932
        %v1071 = vmul.f32 %v1069, %v933
        %1074 = vrot.lane.b32.xlu0 %v1070, 126
        %v1075 = vpop.permute.xlu0 %1074
        %1076 = vrot.lane.b32.xlu0 %v1071, 126
        %v1077 = vpop.permute.xlu0 %1076
        %v1080 = vadd.f32 %v1020, %v1075
        %v1081 = vadd.f32 %v1021, %v1077
        %v1082 = vld [vmem:[%s245 + $0x2] sm:$0xff]
        %v1083 = vld [vmem:[%s245 + $0xa] sm:$0xff]
        %s1084 = sadd.s32 %s332, 15
        %s1085 = sld [smem:[#allocation3 + %s1084]]
        %v1086 = vstv %s1085
        %v1087 = vmul.f32 %v1086, %v1082
        %v1088 = vmul.f32 %v1086, %v1083
        %v1089 = vadd.f32 %v1035, %v1087
        %v1090 = vadd.f32 %v1036, %v1088
        %s1091 = sadd.s32 %s332, 51
        %s1092 = sld [smem:[#allocation3 + %s1091]]
        %v1093 = vstv %s1092
        %v1094 = vmul.f32 %v1093, %v1082
        %v1095 = vmul.f32 %v1093, %v1083
        %v1096 = vadd.f32 %v1050, %v1094
        %v1097 = vadd.f32 %v1051, %v1095
        %s1098 = sadd.s32 %s332, 87
        %s1099 = sld [smem:[#allocation3 + %s1098]]
        %v1100 = vstv %s1099
        %v1101 = vmul.f32 %v1100, %v1082
        %v1102 = vmul.f32 %v1100, %v1083
        %v1103 = vadd.f32 %v1065, %v1101
        %v1104 = vadd.f32 %v1066, %v1102
        %s1105 = sadd.s32 %s332, 123
        %s1106 = sld [smem:[#allocation3 + %s1105]]
        %v1107 = vstv %s1106
        %v1108 = vmul.f32 %v1107, %v1082
        %v1109 = vmul.f32 %v1107, %v1083
        %v1110 = vadd.f32 %v1080, %v1108
        %v1111 = vadd.f32 %v1081, %v1109
        %s1112 = sadd.s32 %s332, 16
        %s1113 = sld [smem:[#allocation3 + %s1112]]
        %v1114 = vstv %s1113
        %v1115 = vmul.f32 %v1114, %v1082
        %v1116 = vmul.f32 %v1114, %v1083
        %1119 = vrot.lane.b32.xlu0 %v1115, 127
        %v1120 = vpop.permute.xlu0 %1119
        %1121 = vrot.lane.b32.xlu0 %v1116, 127
        %v1122 = vpop.permute.xlu0 %1121
        %v1125 = vadd.f32 %v1089, %v1120
        %v1126 = vadd.f32 %v1090, %v1122
        %s1127 = sadd.s32 %s332, 52
        %s1128 = sld [smem:[#allocation3 + %s1127]]
        %v1129 = vstv %s1128
        %v1130 = vmul.f32 %v1129, %v1082
        %v1131 = vmul.f32 %v1129, %v1083
        %1134 = vrot.lane.b32.xlu0 %v1130, 127
        %v1135 = vpop.permute.xlu0 %1134
        %1136 = vrot.lane.b32.xlu0 %v1131, 127
        %v1137 = vpop.permute.xlu0 %1136
        %v1140 = vadd.f32 %v1096, %v1135
        %v1141 = vadd.f32 %v1097, %v1137
        %s1142 = sadd.s32 %s332, 88
        %s1143 = sld [smem:[#allocation3 + %s1142]]
        %v1144 = vstv %s1143
        %v1145 = vmul.f32 %v1144, %v1082
        %v1146 = vmul.f32 %v1144, %v1083
        %1149 = vrot.lane.b32.xlu0 %v1145, 127
        %v1150 = vpop.permute.xlu0 %1149
        %1151 = vrot.lane.b32.xlu0 %v1146, 127
        %v1152 = vpop.permute.xlu0 %1151
        %v1155 = vadd.f32 %v1103, %v1150
        %v1156 = vadd.f32 %v1104, %v1152
        %s1157 = sadd.s32 %s332, 124
        %s1158 = sld [smem:[#allocation3 + %s1157]]
        %v1159 = vstv %s1158
        %v1160 = vmul.f32 %v1159, %v1082
        %v1161 = vmul.f32 %v1159, %v1083
        %1164 = vrot.lane.b32.xlu0 %v1160, 127
        %v1165 = vpop.permute.xlu0 %1164
        %1166 = vrot.lane.b32.xlu0 %v1161, 127
        %v1167 = vpop.permute.xlu0 %1166
        %v1170 = vadd.f32 %v1110, %v1165
        %v1171 = vadd.f32 %v1111, %v1167
        %s1172 = sadd.s32 %s332, 17
        %s1173 = sld [smem:[#allocation3 + %s1172]]
        %v1174 = vstv %s1173
        %v1175 = vmul.f32 %v1174, %v1082
        %v1176 = vmul.f32 %v1174, %v1083
        %1179 = vrot.lane.b32.xlu0 %v1175, 126
        %v1180 = vpop.permute.xlu0 %1179
        %1181 = vrot.lane.b32.xlu0 %v1176, 126
        %v1182 = vpop.permute.xlu0 %1181
        %v1185 = vadd.f32 %v1125, %v1180
        %v1186 = vadd.f32 %v1126, %v1182
        %s1187 = sadd.s32 %s332, 53
        %s1188 = sld [smem:[#allocation3 + %s1187]]
        %v1189 = vstv %s1188
        %v1190 = vmul.f32 %v1189, %v1082
        %v1191 = vmul.f32 %v1189, %v1083
        %1194 = vrot.lane.b32.xlu0 %v1190, 126
        %v1195 = vpop.permute.xlu0 %1194
        %1196 = vrot.lane.b32.xlu0 %v1191, 126
        %v1197 = vpop.permute.xlu0 %1196
        %v1200 = vadd.f32 %v1140, %v1195
        %v1201 = vadd.f32 %v1141, %v1197
        %s1202 = sadd.s32 %s332, 89
        %s1203 = sld [smem:[#allocation3 + %s1202]]
        %v1204 = vstv %s1203
        %v1205 = vmul.f32 %v1204, %v1082
        %v1206 = vmul.f32 %v1204, %v1083
        %1209 = vrot.lane.b32.xlu0 %v1205, 126
        %v1210 = vpop.permute.xlu0 %1209
        %1211 = vrot.lane.b32.xlu0 %v1206, 126
        %v1212 = vpop.permute.xlu0 %1211
        %v1215 = vadd.f32 %v1155, %v1210
        %v1216 = vadd.f32 %v1156, %v1212
        %s1217 = sadd.s32 %s332, 125
        %s1218 = sld [smem:[#allocation3 + %s1217]]
        %v1219 = vstv %s1218
        %v1220 = vmul.f32 %v1219, %v1082
        %v1221 = vmul.f32 %v1219, %v1083
        %1224 = vrot.lane.b32.xlu0 %v1220, 126
        %v1225 = vpop.permute.xlu0 %1224
        %1226 = vrot.lane.b32.xlu0 %v1221, 126
        %v1227 = vpop.permute.xlu0 %1226
        %v1230 = vadd.f32 %v1170, %v1225
        %v1231 = vadd.f32 %v1171, %v1227
        %v1232 = vld [vmem:[%s259] sm:$0xff]
        %v1233 = vld [vmem:[%s259 + $0x8] sm:$0xff]
        %s1234 = sadd.s32 %s332, 18
        %s1235 = sld [smem:[#allocation3 + %s1234]]
        %v1236 = vstv %s1235
        %v1237 = vmul.f32 %v1236, %v1232
        %v1238 = vmul.f32 %v1236, %v1233
        %v1239 = vadd.f32 %v1185, %v1237
        %v1240 = vadd.f32 %v1186, %v1238
        %s1241 = sadd.s32 %s332, 54
        %s1242 = sld [smem:[#allocation3 + %s1241]]
        %v1243 = vstv %s1242
        %v1244 = vmul.f32 %v1243, %v1232
        %v1245 = vmul.f32 %v1243, %v1233
        %v1246 = vadd.f32 %v1200, %v1244
        %v1247 = vadd.f32 %v1201, %v1245
        %s1248 = sadd.s32 %s332, 90
        %s1249 = sld [smem:[#allocation3 + %s1248]]
        %v1250 = vstv %s1249
        %v1251 = vmul.f32 %v1250, %v1232
        %v1252 = vmul.f32 %v1250, %v1233
        %v1253 = vadd.f32 %v1215, %v1251
        %v1254 = vadd.f32 %v1216, %v1252
        %s1255 = sadd.s32 %s332, 126
        %s1256 = sld [smem:[#allocation3 + %s1255]]
        %v1257 = vstv %s1256
        %v1258 = vmul.f32 %v1257, %v1232
        %v1259 = vmul.f32 %v1257, %v1233
        %v1260 = vadd.f32 %v1230, %v1258
        %v1261 = vadd.f32 %v1231, %v1259
        %s1262 = sadd.s32 %s332, 19
        %s1263 = sld [smem:[#allocation3 + %s1262]]
        %v1264 = vstv %s1263
        %v1265 = vmul.f32 %v1264, %v1232
        %v1266 = vmul.f32 %v1264, %v1233
        %1269 = vrot.lane.b32.xlu0 %v1265, 127
        %v1270 = vpop.permute.xlu0 %1269
        %1271 = vrot.lane.b32.xlu0 %v1266, 127
        %v1272 = vpop.permute.xlu0 %1271
        %v1275 = vadd.f32 %v1239, %v1270
        %v1276 = vadd.f32 %v1240, %v1272
        %s1277 = sadd.s32 %s332, 55
        %s1278 = sld [smem:[#allocation3 + %s1277]]
        %v1279 = vstv %s1278
        %v1280 = vmul.f32 %v1279, %v1232
        %v1281 = vmul.f32 %v1279, %v1233
        %1284 = vrot.lane.b32.xlu0 %v1280, 127
        %v1285 = vpop.permute.xlu0 %1284
        %1286 = vrot.lane.b32.xlu0 %v1281, 127
        %v1287 = vpop.permute.xlu0 %1286
        %v1290 = vadd.f32 %v1246, %v1285
        %v1291 = vadd.f32 %v1247, %v1287
        %s1292 = sadd.s32 %s332, 91
        %s1293 = sld [smem:[#allocation3 + %s1292]]
        %v1294 = vstv %s1293
        %v1295 = vmul.f32 %v1294, %v1232
        %v1296 = vmul.f32 %v1294, %v1233
        %1299 = vrot.lane.b32.xlu0 %v1295, 127
        %v1300 = vpop.permute.xlu0 %1299
        %1301 = vrot.lane.b32.xlu0 %v1296, 127
        %v1302 = vpop.permute.xlu0 %1301
        %v1305 = vadd.f32 %v1253, %v1300
        %v1306 = vadd.f32 %v1254, %v1302
        %s1307 = sadd.s32 %s332, 127
        %s1308 = sld [smem:[#allocation3 + %s1307]]
        %v1309 = vstv %s1308
        %v1310 = vmul.f32 %v1309, %v1232
        %v1311 = vmul.f32 %v1309, %v1233
        %1314 = vrot.lane.b32.xlu0 %v1310, 127
        %v1315 = vpop.permute.xlu0 %1314
        %1316 = vrot.lane.b32.xlu0 %v1311, 127
        %v1317 = vpop.permute.xlu0 %1316
        %v1320 = vadd.f32 %v1260, %v1315
        %v1321 = vadd.f32 %v1261, %v1317
        %s1322 = sadd.s32 %s332, 20
        %s1323 = sld [smem:[#allocation3 + %s1322]]
        %v1324 = vstv %s1323
        %v1325 = vmul.f32 %v1324, %v1232
        %v1326 = vmul.f32 %v1324, %v1233
        %1329 = vrot.lane.b32.xlu0 %v1325, 126
        %v1330 = vpop.permute.xlu0 %1329
        %1331 = vrot.lane.b32.xlu0 %v1326, 126
        %v1332 = vpop.permute.xlu0 %1331
        %v1335 = vadd.f32 %v1275, %v1330
        %v1336 = vadd.f32 %v1276, %v1332
        %s1337 = sadd.s32 %s332, 56
        %s1338 = sld [smem:[#allocation3 + %s1337]]
        %v1339 = vstv %s1338
        %v1340 = vmul.f32 %v1339, %v1232
        %v1341 = vmul.f32 %v1339, %v1233
        %1344 = vrot.lane.b32.xlu0 %v1340, 126
        %v1345 = vpop.permute.xlu0 %1344
        %1346 = vrot.lane.b32.xlu0 %v1341, 126
        %v1347 = vpop.permute.xlu0 %1346
        %v1350 = vadd.f32 %v1290, %v1345
        %v1351 = vadd.f32 %v1291, %v1347
        %s1352 = sadd.s32 %s332, 92
        %s1353 = sld [smem:[#allocation3 + %s1352]]
        %v1354 = vstv %s1353
        %v1355 = vmul.f32 %v1354, %v1232
        %v1356 = vmul.f32 %v1354, %v1233
        %1359 = vrot.lane.b32.xlu0 %v1355, 126
        %v1360 = vpop.permute.xlu0 %1359
        %1361 = vrot.lane.b32.xlu0 %v1356, 126
        %v1362 = vpop.permute.xlu0 %1361
        %v1365 = vadd.f32 %v1305, %v1360
        %v1366 = vadd.f32 %v1306, %v1362
        %s1367 = sadd.s32 %s332, 128
        %s1368 = sld [smem:[#allocation3 + %s1367]]
        %v1369 = vstv %s1368
        %v1370 = vmul.f32 %v1369, %v1232
        %v1371 = vmul.f32 %v1369, %v1233
        %1374 = vrot.lane.b32.xlu0 %v1370, 126
        %v1375 = vpop.permute.xlu0 %1374
        %1376 = vrot.lane.b32.xlu0 %v1371, 126
        %v1377 = vpop.permute.xlu0 %1376
        %v1380 = vadd.f32 %v1320, %v1375
        %v1381 = vadd.f32 %v1321, %v1377
        %v1382 = vld [vmem:[%s259 + $0x1] sm:$0xff]
        %v1383 = vld [vmem:[%s259 + $0x9] sm:$0xff]
        %s1384 = sadd.s32 %s332, 21
        %s1385 = sld [smem:[#allocation3 + %s1384]]
        %v1386 = vstv %s1385
        %v1387 = vmul.f32 %v1386, %v1382
        %v1388 = vmul.f32 %v1386, %v1383
        %v1389 = vadd.f32 %v1335, %v1387
        %v1390 = vadd.f32 %v1336, %v1388
        %s1391 = sadd.s32 %s332, 57
        %s1392 = sld [smem:[#allocation3 + %s1391]]
        %v1393 = vstv %s1392
        %v1394 = vmul.f32 %v1393, %v1382
        %v1395 = vmul.f32 %v1393, %v1383
        %v1396 = vadd.f32 %v1350, %v1394
        %v1397 = vadd.f32 %v1351, %v1395
        %s1398 = sadd.s32 %s332, 93
        %s1399 = sld [smem:[#allocation3 + %s1398]]
        %v1400 = vstv %s1399
        %v1401 = vmul.f32 %v1400, %v1382
        %v1402 = vmul.f32 %v1400, %v1383
        %v1403 = vadd.f32 %v1365, %v1401
        %v1404 = vadd.f32 %v1366, %v1402
        %s1405 = sadd.s32 %s332, 129
        %s1406 = sld [smem:[#allocation3 + %s1405]]
        %v1407 = vstv %s1406
        %v1408 = vmul.f32 %v1407, %v1382
        %v1409 = vmul.f32 %v1407, %v1383
        %v1410 = vadd.f32 %v1380, %v1408
        %v1411 = vadd.f32 %v1381, %v1409
        %s1412 = sadd.s32 %s332, 22
        %s1413 = sld [smem:[#allocation3 + %s1412]]
        %v1414 = vstv %s1413
        %v1415 = vmul.f32 %v1414, %v1382
        %v1416 = vmul.f32 %v1414, %v1383
        %1419 = vrot.lane.b32.xlu0 %v1415, 127
        %v1420 = vpop.permute.xlu0 %1419
        %1421 = vrot.lane.b32.xlu0 %v1416, 127
        %v1422 = vpop.permute.xlu0 %1421
        %v1425 = vadd.f32 %v1389, %v1420
        %v1426 = vadd.f32 %v1390, %v1422
        %s1427 = sadd.s32 %s332, 58
        %s1428 = sld [smem:[#allocation3 + %s1427]]
        %v1429 = vstv %s1428
        %v1430 = vmul.f32 %v1429, %v1382
        %v1431 = vmul.f32 %v1429, %v1383
        %1434 = vrot.lane.b32.xlu0 %v1430, 127
        %v1435 = vpop.permute.xlu0 %1434
        %1436 = vrot.lane.b32.xlu0 %v1431, 127
        %v1437 = vpop.permute.xlu0 %1436
        %v1440 = vadd.f32 %v1396, %v1435
        %v1441 = vadd.f32 %v1397, %v1437
        %s1442 = sadd.s32 %s332, 94
        %s1443 = sld [smem:[#allocation3 + %s1442]]
        %v1444 = vstv %s1443
        %v1445 = vmul.f32 %v1444, %v1382
        %v1446 = vmul.f32 %v1444, %v1383
        %1449 = vrot.lane.b32.xlu0 %v1445, 127
        %v1450 = vpop.permute.xlu0 %1449
        %1451 = vrot.lane.b32.xlu0 %v1446, 127
        %v1452 = vpop.permute.xlu0 %1451
        %v1455 = vadd.f32 %v1403, %v1450
        %v1456 = vadd.f32 %v1404, %v1452
        %s1457 = sadd.s32 %s332, 130
        %s1458 = sld [smem:[#allocation3 + %s1457]]
        %v1459 = vstv %s1458
        %v1460 = vmul.f32 %v1459, %v1382
        %v1461 = vmul.f32 %v1459, %v1383
        %1464 = vrot.lane.b32.xlu0 %v1460, 127
        %v1465 = vpop.permute.xlu0 %1464
        %1466 = vrot.lane.b32.xlu0 %v1461, 127
        %v1467 = vpop.permute.xlu0 %1466
        %v1470 = vadd.f32 %v1410, %v1465
        %v1471 = vadd.f32 %v1411, %v1467
        %s1472 = sadd.s32 %s332, 23
        %s1473 = sld [smem:[#allocation3 + %s1472]]
        %v1474 = vstv %s1473
        %v1475 = vmul.f32 %v1474, %v1382
        %v1476 = vmul.f32 %v1474, %v1383
        %1479 = vrot.lane.b32.xlu0 %v1475, 126
        %v1480 = vpop.permute.xlu0 %1479
        %1481 = vrot.lane.b32.xlu0 %v1476, 126
        %v1482 = vpop.permute.xlu0 %1481
        %v1485 = vadd.f32 %v1425, %v1480
        %v1486 = vadd.f32 %v1426, %v1482
        %s1487 = sadd.s32 %s332, 59
        %s1488 = sld [smem:[#allocation3 + %s1487]]
        %v1489 = vstv %s1488
        %v1490 = vmul.f32 %v1489, %v1382
        %v1491 = vmul.f32 %v1489, %v1383
        %1494 = vrot.lane.b32.xlu0 %v1490, 126
        %v1495 = vpop.permute.xlu0 %1494
        %1496 = vrot.lane.b32.xlu0 %v1491, 126
        %v1497 = vpop.permute.xlu0 %1496
        %v1500 = vadd.f32 %v1440, %v1495
        %v1501 = vadd.f32 %v1441, %v1497
        %s1502 = sadd.s32 %s332, 95
        %s1503 = sld [smem:[#allocation3 + %s1502]]
        %v1504 = vstv %s1503
        %v1505 = vmul.f32 %v1504, %v1382
        %v1506 = vmul.f32 %v1504, %v1383
        %1509 = vrot.lane.b32.xlu0 %v1505, 126
        %v1510 = vpop.permute.xlu0 %1509
        %1511 = vrot.lane.b32.xlu0 %v1506, 126
        %v1512 = vpop.permute.xlu0 %1511
        %v1515 = vadd.f32 %v1455, %v1510
        %v1516 = vadd.f32 %v1456, %v1512
        %s1517 = sadd.s32 %s332, 131
        %s1518 = sld [smem:[#allocation3 + %s1517]]
        %v1519 = vstv %s1518
        %v1520 = vmul.f32 %v1519, %v1382
        %v1521 = vmul.f32 %v1519, %v1383
        %1524 = vrot.lane.b32.xlu0 %v1520, 126
        %v1525 = vpop.permute.xlu0 %1524
        %1526 = vrot.lane.b32.xlu0 %v1521, 126
        %v1527 = vpop.permute.xlu0 %1526
        %v1530 = vadd.f32 %v1470, %v1525
        %v1531 = vadd.f32 %v1471, %v1527
        %v1532 = vld [vmem:[%s259 + $0x2] sm:$0xff]
        %v1533 = vld [vmem:[%s259 + $0xa] sm:$0xff]
        %s1534 = sadd.s32 %s332, 24
        %s1535 = sld [smem:[#allocation3 + %s1534]]
        %v1536 = vstv %s1535
        %v1537 = vmul.f32 %v1536, %v1532
        %v1538 = vmul.f32 %v1536, %v1533
        %v1539 = vadd.f32 %v1485, %v1537
        %v1540 = vadd.f32 %v1486, %v1538
        %s1541 = sadd.s32 %s332, 60
        %s1542 = sld [smem:[#allocation3 + %s1541]]
        %v1543 = vstv %s1542
        %v1544 = vmul.f32 %v1543, %v1532
        %v1545 = vmul.f32 %v1543, %v1533
        %v1546 = vadd.f32 %v1500, %v1544
        %v1547 = vadd.f32 %v1501, %v1545
        %s1548 = sadd.s32 %s332, 96
        %s1549 = sld [smem:[#allocation3 + %s1548]]
        %v1550 = vstv %s1549
        %v1551 = vmul.f32 %v1550, %v1532
        %v1552 = vmul.f32 %v1550, %v1533
        %v1553 = vadd.f32 %v1515, %v1551
        %v1554 = vadd.f32 %v1516, %v1552
        %s1555 = sadd.s32 %s332, 132
        %s1556 = sld [smem:[#allocation3 + %s1555]]
        %v1557 = vstv %s1556
        %v1558 = vmul.f32 %v1557, %v1532
        %v1559 = vmul.f32 %v1557, %v1533
        %v1560 = vadd.f32 %v1530, %v1558
        %v1561 = vadd.f32 %v1531, %v1559
        %s1562 = sadd.s32 %s332, 25
        %s1563 = sld [smem:[#allocation3 + %s1562]]
        %v1564 = vstv %s1563
        %v1565 = vmul.f32 %v1564, %v1532
        %v1566 = vmul.f32 %v1564, %v1533
        %1569 = vrot.lane.b32.xlu0 %v1565, 127
        %v1570 = vpop.permute.xlu0 %1569
        %1571 = vrot.lane.b32.xlu0 %v1566, 127
        %v1572 = vpop.permute.xlu0 %1571
        %v1575 = vadd.f32 %v1539, %v1570
        %v1576 = vadd.f32 %v1540, %v1572
        %s1577 = sadd.s32 %s332, 61
        %s1578 = sld [smem:[#allocation3 + %s1577]]
        %v1579 = vstv %s1578
        %v1580 = vmul.f32 %v1579, %v1532
        %v1581 = vmul.f32 %v1579, %v1533
        %1584 = vrot.lane.b32.xlu0 %v1580, 127
        %v1585 = vpop.permute.xlu0 %1584
        %1586 = vrot.lane.b32.xlu0 %v1581, 127
        %v1587 = vpop.permute.xlu0 %1586
        %v1590 = vadd.f32 %v1546, %v1585
        %v1591 = vadd.f32 %v1547, %v1587
        %s1592 = sadd.s32 %s332, 97
        %s1593 = sld [smem:[#allocation3 + %s1592]]
        %v1594 = vstv %s1593
        %v1595 = vmul.f32 %v1594, %v1532
        %v1596 = vmul.f32 %v1594, %v1533
        %1599 = vrot.lane.b32.xlu0 %v1595, 127
        %v1600 = vpop.permute.xlu0 %1599
        %1601 = vrot.lane.b32.xlu0 %v1596, 127
        %v1602 = vpop.permute.xlu0 %1601
        %v1605 = vadd.f32 %v1553, %v1600
        %v1606 = vadd.f32 %v1554, %v1602
        %s1607 = sadd.s32 %s332, 133
        %s1608 = sld [smem:[#allocation3 + %s1607]]
        %v1609 = vstv %s1608
        %v1610 = vmul.f32 %v1609, %v1532
        %v1611 = vmul.f32 %v1609, %v1533
        %1614 = vrot.lane.b32.xlu0 %v1610, 127
        %v1615 = vpop.permute.xlu0 %1614
        %1616 = vrot.lane.b32.xlu0 %v1611, 127
        %v1617 = vpop.permute.xlu0 %1616
        %v1620 = vadd.f32 %v1560, %v1615
        %v1621 = vadd.f32 %v1561, %v1617
        %s1622 = sadd.s32 %s332, 26
        %s1623 = sld [smem:[#allocation3 + %s1622]]
        %v1624 = vstv %s1623
        %v1625 = vmul.f32 %v1624, %v1532
        %v1626 = vmul.f32 %v1624, %v1533
        %1629 = vrot.lane.b32.xlu0 %v1625, 126
        %v1630 = vpop.permute.xlu0 %1629
        %1631 = vrot.lane.b32.xlu0 %v1626, 126
        %v1632 = vpop.permute.xlu0 %1631
        %v1635 = vadd.f32 %v1575, %v1630
        %v1636 = vadd.f32 %v1576, %v1632
        %s1637 = sadd.s32 %s332, 62
        %s1638 = sld [smem:[#allocation3 + %s1637]]
        %v1639 = vstv %s1638
        %v1640 = vmul.f32 %v1639, %v1532
        %v1641 = vmul.f32 %v1639, %v1533
        %1644 = vrot.lane.b32.xlu0 %v1640, 126
        %v1645 = vpop.permute.xlu0 %1644
        %1646 = vrot.lane.b32.xlu0 %v1641, 126
        %v1647 = vpop.permute.xlu0 %1646
        %v1650 = vadd.f32 %v1590, %v1645
        %v1651 = vadd.f32 %v1591, %v1647
        %s1652 = sadd.s32 %s332, 98
        %s1653 = sld [smem:[#allocation3 + %s1652]]
        %v1654 = vstv %s1653
        %v1655 = vmul.f32 %v1654, %v1532
        %v1656 = vmul.f32 %v1654, %v1533
        %1659 = vrot.lane.b32.xlu0 %v1655, 126
        %v1660 = vpop.permute.xlu0 %1659
        %1661 = vrot.lane.b32.xlu0 %v1656, 126
        %v1662 = vpop.permute.xlu0 %1661
        %v1665 = vadd.f32 %v1605, %v1660
        %v1666 = vadd.f32 %v1606, %v1662
        %s1667 = sadd.s32 %s332, 134
        %s1668 = sld [smem:[#allocation3 + %s1667]]
        %v1669 = vstv %s1668
        %v1670 = vmul.f32 %v1669, %v1532
        %v1671 = vmul.f32 %v1669, %v1533
        %1674 = vrot.lane.b32.xlu0 %v1670, 126
        %v1675 = vpop.permute.xlu0 %1674
        %1676 = vrot.lane.b32.xlu0 %v1671, 126
        %v1677 = vpop.permute.xlu0 %1676
        %v1680 = vadd.f32 %v1620, %v1675
        %v1681 = vadd.f32 %v1621, %v1677
        %v1682 = vld [vmem:[%s273] sm:$0xff]
        %v1683 = vld [vmem:[%s273 + $0x8] sm:$0xff]
        %s1684 = sadd.s32 %s332, 27
        %s1685 = sld [smem:[#allocation3 + %s1684]]
        %v1686 = vstv %s1685
        %v1687 = vmul.f32 %v1686, %v1682
        %v1688 = vmul.f32 %v1686, %v1683
        %v1689 = vadd.f32 %v1635, %v1687
        %v1690 = vadd.f32 %v1636, %v1688
        %s1691 = sadd.s32 %s332, 63
        %s1692 = sld [smem:[#allocation3 + %s1691]]
        %v1693 = vstv %s1692
        %v1694 = vmul.f32 %v1693, %v1682
        %v1695 = vmul.f32 %v1693, %v1683
        %v1696 = vadd.f32 %v1650, %v1694
        %v1697 = vadd.f32 %v1651, %v1695
        %s1698 = sadd.s32 %s332, 99
        %s1699 = sld [smem:[#allocation3 + %s1698]]
        %v1700 = vstv %s1699
        %v1701 = vmul.f32 %v1700, %v1682
        %v1702 = vmul.f32 %v1700, %v1683
        %v1703 = vadd.f32 %v1665, %v1701
        %v1704 = vadd.f32 %v1666, %v1702
        %s1705 = sadd.s32 %s332, 135
        %s1706 = sld [smem:[#allocation3 + %s1705]]
        %v1707 = vstv %s1706
        %v1708 = vmul.f32 %v1707, %v1682
        %v1709 = vmul.f32 %v1707, %v1683
        %v1710 = vadd.f32 %v1680, %v1708
        %v1711 = vadd.f32 %v1681, %v1709
        %s1712 = sadd.s32 %s332, 28
        %s1713 = sld [smem:[#allocation3 + %s1712]]
        %v1714 = vstv %s1713
        %v1715 = vmul.f32 %v1714, %v1682
        %v1716 = vmul.f32 %v1714, %v1683
        %1719 = vrot.lane.b32.xlu0 %v1715, 127
        %v1720 = vpop.permute.xlu0 %1719
        %1721 = vrot.lane.b32.xlu0 %v1716, 127
        %v1722 = vpop.permute.xlu0 %1721
        %v1725 = vadd.f32 %v1689, %v1720
        %v1726 = vadd.f32 %v1690, %v1722
        %s1727 = sadd.s32 %s332, 64
        %s1728 = sld [smem:[#allocation3 + %s1727]]
        %v1729 = vstv %s1728
        %v1730 = vmul.f32 %v1729, %v1682
        %v1731 = vmul.f32 %v1729, %v1683
        %1734 = vrot.lane.b32.xlu0 %v1730, 127
        %v1735 = vpop.permute.xlu0 %1734
        %1736 = vrot.lane.b32.xlu0 %v1731, 127
        %v1737 = vpop.permute.xlu0 %1736
        %v1740 = vadd.f32 %v1696, %v1735
        %v1741 = vadd.f32 %v1697, %v1737
        %s1742 = sadd.s32 %s332, 100
        %s1743 = sld [smem:[#allocation3 + %s1742]]
        %v1744 = vstv %s1743
        %v1745 = vmul.f32 %v1744, %v1682
        %v1746 = vmul.f32 %v1744, %v1683
        %1749 = vrot.lane.b32.xlu0 %v1745, 127
        %v1750 = vpop.permute.xlu0 %1749
        %1751 = vrot.lane.b32.xlu0 %v1746, 127
        %v1752 = vpop.permute.xlu0 %1751
        %v1755 = vadd.f32 %v1703, %v1750
        %v1756 = vadd.f32 %v1704, %v1752
        %s1757 = sadd.s32 %s332, 136
        %s1758 = sld [smem:[#allocation3 + %s1757]]
        %v1759 = vstv %s1758
        %v1760 = vmul.f32 %v1759, %v1682
        %v1761 = vmul.f32 %v1759, %v1683
        %1764 = vrot.lane.b32.xlu0 %v1760, 127
        %v1765 = vpop.permute.xlu0 %1764
        %1766 = vrot.lane.b32.xlu0 %v1761, 127
        %v1767 = vpop.permute.xlu0 %1766
        %v1770 = vadd.f32 %v1710, %v1765
        %v1771 = vadd.f32 %v1711, %v1767
        %s1772 = sadd.s32 %s332, 29
        %s1773 = sld [smem:[#allocation3 + %s1772]]
        %v1774 = vstv %s1773
        %v1775 = vmul.f32 %v1774, %v1682
        %v1776 = vmul.f32 %v1774, %v1683
        %1779 = vrot.lane.b32.xlu0 %v1775, 126
        %v1780 = vpop.permute.xlu0 %1779
        %1781 = vrot.lane.b32.xlu0 %v1776, 126
        %v1782 = vpop.permute.xlu0 %1781
        %v1785 = vadd.f32 %v1725, %v1780
        %v1786 = vadd.f32 %v1726, %v1782
        %s1787 = sadd.s32 %s332, 65
        %s1788 = sld [smem:[#allocation3 + %s1787]]
        %v1789 = vstv %s1788
        %v1790 = vmul.f32 %v1789, %v1682
        %v1791 = vmul.f32 %v1789, %v1683
        %1794 = vrot.lane.b32.xlu0 %v1790, 126
        %v1795 = vpop.permute.xlu0 %1794
        %1796 = vrot.lane.b32.xlu0 %v1791, 126
        %v1797 = vpop.permute.xlu0 %1796
        %v1800 = vadd.f32 %v1740, %v1795
        %v1801 = vadd.f32 %v1741, %v1797
        %s1802 = sadd.s32 %s332, 101
        %s1803 = sld [smem:[#allocation3 + %s1802]]
        %v1804 = vstv %s1803
        %v1805 = vmul.f32 %v1804, %v1682
        %v1806 = vmul.f32 %v1804, %v1683
        %1809 = vrot.lane.b32.xlu0 %v1805, 126
        %v1810 = vpop.permute.xlu0 %1809
        %1811 = vrot.lane.b32.xlu0 %v1806, 126
        %v1812 = vpop.permute.xlu0 %1811
        %v1815 = vadd.f32 %v1755, %v1810
        %v1816 = vadd.f32 %v1756, %v1812
        %s1817 = sadd.s32 %s332, 137
        %s1818 = sld [smem:[#allocation3 + %s1817]]
        %v1819 = vstv %s1818
        %v1820 = vmul.f32 %v1819, %v1682
        %v1821 = vmul.f32 %v1819, %v1683
        %1824 = vrot.lane.b32.xlu0 %v1820, 126
        %v1825 = vpop.permute.xlu0 %1824
        %1826 = vrot.lane.b32.xlu0 %v1821, 126
        %v1827 = vpop.permute.xlu0 %1826
        %v1830 = vadd.f32 %v1770, %v1825
        %v1831 = vadd.f32 %v1771, %v1827
        %v1832 = vld [vmem:[%s273 + $0x1] sm:$0xff]
        %v1833 = vld [vmem:[%s273 + $0x9] sm:$0xff]
        %s1834 = sadd.s32 %s332, 30
        %s1835 = sld [smem:[#allocation3 + %s1834]]
        %v1836 = vstv %s1835
        %v1837 = vmul.f32 %v1836, %v1832
        %v1838 = vmul.f32 %v1836, %v1833
        %v1839 = vadd.f32 %v1785, %v1837
        %v1840 = vadd.f32 %v1786, %v1838
        %s1841 = sadd.s32 %s332, 66
        %s1842 = sld [smem:[#allocation3 + %s1841]]
        %v1843 = vstv %s1842
        %v1844 = vmul.f32 %v1843, %v1832
        %v1845 = vmul.f32 %v1843, %v1833
        %v1846 = vadd.f32 %v1800, %v1844
        %v1847 = vadd.f32 %v1801, %v1845
        %s1848 = sadd.s32 %s332, 102
        %s1849 = sld [smem:[#allocation3 + %s1848]]
        %v1850 = vstv %s1849
        %v1851 = vmul.f32 %v1850, %v1832
        %v1852 = vmul.f32 %v1850, %v1833
        %v1853 = vadd.f32 %v1815, %v1851
        %v1854 = vadd.f32 %v1816, %v1852
        %s1855 = sadd.s32 %s332, 138
        %s1856 = sld [smem:[#allocation3 + %s1855]]
        %v1857 = vstv %s1856
        %v1858 = vmul.f32 %v1857, %v1832
        %v1859 = vmul.f32 %v1857, %v1833
        %v1860 = vadd.f32 %v1830, %v1858
        %v1861 = vadd.f32 %v1831, %v1859
        %s1862 = sadd.s32 %s332, 31
        %s1863 = sld [smem:[#allocation3 + %s1862]]
        %v1864 = vstv %s1863
        %v1865 = vmul.f32 %v1864, %v1832
        %v1866 = vmul.f32 %v1864, %v1833
        %1869 = vrot.lane.b32.xlu0 %v1865, 127
        %v1870 = vpop.permute.xlu0 %1869
        %1871 = vrot.lane.b32.xlu0 %v1866, 127
        %v1872 = vpop.permute.xlu0 %1871
        %v1875 = vadd.f32 %v1839, %v1870
        %v1876 = vadd.f32 %v1840, %v1872
        %s1877 = sadd.s32 %s332, 67
        %s1878 = sld [smem:[#allocation3 + %s1877]]
        %v1879 = vstv %s1878
        %v1880 = vmul.f32 %v1879, %v1832
        %v1881 = vmul.f32 %v1879, %v1833
        %1884 = vrot.lane.b32.xlu0 %v1880, 127
        %v1885 = vpop.permute.xlu0 %1884
        %1886 = vrot.lane.b32.xlu0 %v1881, 127
        %v1887 = vpop.permute.xlu0 %1886
        %v1890 = vadd.f32 %v1846, %v1885
        %v1891 = vadd.f32 %v1847, %v1887
        %s1892 = sadd.s32 %s332, 103
        %s1893 = sld [smem:[#allocation3 + %s1892]]
        %v1894 = vstv %s1893
        %v1895 = vmul.f32 %v1894, %v1832
        %v1896 = vmul.f32 %v1894, %v1833
        %1899 = vrot.lane.b32.xlu0 %v1895, 127
        %v1900 = vpop.permute.xlu0 %1899
        %1901 = vrot.lane.b32.xlu0 %v1896, 127
        %v1902 = vpop.permute.xlu0 %1901
        %v1905 = vadd.f32 %v1853, %v1900
        %v1906 = vadd.f32 %v1854, %v1902
        %s1907 = sadd.s32 %s332, 139
        %s1908 = sld [smem:[#allocation3 + %s1907]]
        %v1909 = vstv %s1908
        %v1910 = vmul.f32 %v1909, %v1832
        %v1911 = vmul.f32 %v1909, %v1833
        %1914 = vrot.lane.b32.xlu0 %v1910, 127
        %v1915 = vpop.permute.xlu0 %1914
        %1916 = vrot.lane.b32.xlu0 %v1911, 127
        %v1917 = vpop.permute.xlu0 %1916
        %v1920 = vadd.f32 %v1860, %v1915
        %v1921 = vadd.f32 %v1861, %v1917
        %s1922 = sadd.s32 %s332, 32
        %s1923 = sld [smem:[#allocation3 + %s1922]]
        %v1924 = vstv %s1923
        %v1925 = vmul.f32 %v1924, %v1832
        %v1926 = vmul.f32 %v1924, %v1833
        %1929 = vrot.lane.b32.xlu0 %v1925, 126
        %v1930 = vpop.permute.xlu0 %1929
        %1931 = vrot.lane.b32.xlu0 %v1926, 126
        %v1932 = vpop.permute.xlu0 %1931
        %v1935 = vadd.f32 %v1875, %v1930
        %v1936 = vadd.f32 %v1876, %v1932
        %s1937 = sadd.s32 %s332, 68
        %s1938 = sld [smem:[#allocation3 + %s1937]]
        %v1939 = vstv %s1938
        %v1940 = vmul.f32 %v1939, %v1832
        %v1941 = vmul.f32 %v1939, %v1833
        %1944 = vrot.lane.b32.xlu0 %v1940, 126
        %v1945 = vpop.permute.xlu0 %1944
        %1946 = vrot.lane.b32.xlu0 %v1941, 126
        %v1947 = vpop.permute.xlu0 %1946
        %v1950 = vadd.f32 %v1890, %v1945
        %v1951 = vadd.f32 %v1891, %v1947
        %s1952 = sadd.s32 %s332, 104
        %s1953 = sld [smem:[#allocation3 + %s1952]]
        %v1954 = vstv %s1953
        %v1955 = vmul.f32 %v1954, %v1832
        %v1956 = vmul.f32 %v1954, %v1833
        %1959 = vrot.lane.b32.xlu0 %v1955, 126
        %v1960 = vpop.permute.xlu0 %1959
        %1961 = vrot.lane.b32.xlu0 %v1956, 126
        %v1962 = vpop.permute.xlu0 %1961
        %v1965 = vadd.f32 %v1905, %v1960
        %v1966 = vadd.f32 %v1906, %v1962
        %s1967 = sadd.s32 %s332, 140
        %s1968 = sld [smem:[#allocation3 + %s1967]]
        %v1969 = vstv %s1968
        %v1970 = vmul.f32 %v1969, %v1832
        %v1971 = vmul.f32 %v1969, %v1833
        %1974 = vrot.lane.b32.xlu0 %v1970, 126
        %v1975 = vpop.permute.xlu0 %1974
        %1976 = vrot.lane.b32.xlu0 %v1971, 126
        %v1977 = vpop.permute.xlu0 %1976
        %v1980 = vadd.f32 %v1920, %v1975
        %v1981 = vadd.f32 %v1921, %v1977
        %v1982 = vld [vmem:[%s273 + $0x2] sm:$0xff]
        %v1983 = vld [vmem:[%s273 + $0xa] sm:$0xff]
        %s1984 = sadd.s32 %s332, 33
        %s1985 = sld [smem:[#allocation3 + %s1984]]
        %v1986 = vstv %s1985
        %v1987 = vmul.f32 %v1986, %v1982
        %v1988 = vmul.f32 %v1986, %v1983
        %v1989 = vadd.f32 %v1935, %v1987
        %v1990 = vadd.f32 %v1936, %v1988
        %s1991 = sadd.s32 %s332, 69
        %s1992 = sld [smem:[#allocation3 + %s1991]]
        %v1993 = vstv %s1992
        %v1994 = vmul.f32 %v1993, %v1982
        %v1995 = vmul.f32 %v1993, %v1983
        %v1996 = vadd.f32 %v1950, %v1994
        %v1997 = vadd.f32 %v1951, %v1995
        %s1998 = sadd.s32 %s332, 105
        %s1999 = sld [smem:[#allocation3 + %s1998]]
        %v2000 = vstv %s1999
        %v2001 = vmul.f32 %v2000, %v1982
        %v2002 = vmul.f32 %v2000, %v1983
        %v2003 = vadd.f32 %v1965, %v2001
        %v2004 = vadd.f32 %v1966, %v2002
        %s2005 = sadd.s32 %s332, 141
        %s2006 = sld [smem:[#allocation3 + %s2005]]
        %v2007 = vstv %s2006
        %v2008 = vmul.f32 %v2007, %v1982
        %v2009 = vmul.f32 %v2007, %v1983
        %v2010 = vadd.f32 %v1980, %v2008
        %v2011 = vadd.f32 %v1981, %v2009
        %s2012 = sadd.s32 %s332, 34
        %s2013 = sld [smem:[#allocation3 + %s2012]]
        %v2014 = vstv %s2013
        %v2015 = vmul.f32 %v2014, %v1982
        %v2016 = vmul.f32 %v2014, %v1983
        %2019 = vrot.lane.b32.xlu0 %v2015, 127
        %v2020 = vpop.permute.xlu0 %2019
        %2021 = vrot.lane.b32.xlu0 %v2016, 127
        %v2022 = vpop.permute.xlu0 %2021
        %v2025 = vadd.f32 %v1989, %v2020
        %v2026 = vadd.f32 %v1990, %v2022
        %s2027 = sadd.s32 %s332, 70
        %s2028 = sld [smem:[#allocation3 + %s2027]]
        %v2029 = vstv %s2028
        %v2030 = vmul.f32 %v2029, %v1982
        %v2031 = vmul.f32 %v2029, %v1983
        %2034 = vrot.lane.b32.xlu0 %v2030, 127
        %v2035 = vpop.permute.xlu0 %2034
        %2036 = vrot.lane.b32.xlu0 %v2031, 127
        %v2037 = vpop.permute.xlu0 %2036
        %v2040 = vadd.f32 %v1996, %v2035
        %v2041 = vadd.f32 %v1997, %v2037
        %s2042 = sadd.s32 %s332, 106
        %s2043 = sld [smem:[#allocation3 + %s2042]]
        %v2044 = vstv %s2043
        %v2045 = vmul.f32 %v2044, %v1982
        %v2046 = vmul.f32 %v2044, %v1983
        %2049 = vrot.lane.b32.xlu0 %v2045, 127
        %v2050 = vpop.permute.xlu0 %2049
        %2051 = vrot.lane.b32.xlu0 %v2046, 127
        %v2052 = vpop.permute.xlu0 %2051
        %v2055 = vadd.f32 %v2003, %v2050
        %v2056 = vadd.f32 %v2004, %v2052
        %s2057 = sadd.s32 %s332, 142
        %s2058 = sld [smem:[#allocation3 + %s2057]]
        %v2059 = vstv %s2058
        %v2060 = vmul.f32 %v2059, %v1982
        %v2061 = vmul.f32 %v2059, %v1983
        %2064 = vrot.lane.b32.xlu0 %v2060, 127
        %v2065 = vpop.permute.xlu0 %2064
        %2066 = vrot.lane.b32.xlu0 %v2061, 127
        %v2067 = vpop.permute.xlu0 %2066
        %v2070 = vadd.f32 %v2010, %v2065
        %v2071 = vadd.f32 %v2011, %v2067
        %s2072 = sadd.s32 %s332, 35
        %s2073 = sld [smem:[#allocation3 + %s2072]]
        %v2074 = vstv %s2073
        %v2075 = vmul.f32 %v2074, %v1982
        %v2076 = vmul.f32 %v2074, %v1983
        %2079 = vrot.lane.b32.xlu0 %v2075, 126
        %v2080 = vpop.permute.xlu0 %2079
        %2081 = vrot.lane.b32.xlu0 %v2076, 126
        %v2082 = vpop.permute.xlu0 %2081
        %v2085 = vadd.f32 %v2025, %v2080
        %v2086 = vadd.f32 %v2026, %v2082
        %s2087 = sadd.s32 %s332, 71
        %s2088 = sld [smem:[#allocation3 + %s2087]]
        %v2089 = vstv %s2088
        %v2090 = vmul.f32 %v2089, %v1982
        %v2091 = vmul.f32 %v2089, %v1983
        %2094 = vrot.lane.b32.xlu0 %v2090, 126
        %v2095 = vpop.permute.xlu0 %2094
        %2096 = vrot.lane.b32.xlu0 %v2091, 126
        %v2097 = vpop.permute.xlu0 %2096
        %v2100 = vadd.f32 %v2040, %v2095
        %v2101 = vadd.f32 %v2041, %v2097
        %s2102 = sadd.s32 %s332, 107
        %s2103 = sld [smem:[#allocation3 + %s2102]]
        %v2104 = vstv %s2103
        %v2105 = vmul.f32 %v2104, %v1982
        %v2106 = vmul.f32 %v2104, %v1983
        %2109 = vrot.lane.b32.xlu0 %v2105, 126
        %v2110 = vpop.permute.xlu0 %2109
        %2111 = vrot.lane.b32.xlu0 %v2106, 126
        %v2112 = vpop.permute.xlu0 %2111
        %v2115 = vadd.f32 %v2055, %v2110
        %v2116 = vadd.f32 %v2056, %v2112
        %s2117 = sadd.s32 %s332, 143
        %s2118 = sld [smem:[#allocation3 + %s2117]]
        %v2119 = vstv %s2118
        %v2120 = vmul.f32 %v2119, %v1982
        %v2121 = vmul.f32 %v2119, %v1983
        %2124 = vrot.lane.b32.xlu0 %v2120, 126
        %v2125 = vpop.permute.xlu0 %2124
        %2126 = vrot.lane.b32.xlu0 %v2121, 126
        %v2127 = vpop.permute.xlu0 %2126
        %v2130 = vadd.f32 %v2070, %v2125
        %v2131 = vadd.f32 %v2071, %v2127
        %vm2132 = vcmask 130048
        %2133 = vst.msk [vmem:[%s192] sm:$0xff] %vm2132, %v2085
        %2134 = vst.msk [vmem:[%s192 + $0x8] sm:$0xff] %vm2132, %v2086
        %s2135 = scalar_lea.vmem %s192, 16 [#allocation8]
        %2136 = vst.msk [vmem:[%s2135] sm:$0xff] %vm2132, %v2100
        %2137 = vst.msk [vmem:[%s2135 + $0x8] sm:$0xff] %vm2132, %v2101
        %s2138 = scalar_lea.vmem %s192, 32 [#allocation8]
        %2139 = vst.msk [vmem:[%s2138] sm:$0xff] %vm2132, %v2115
        %2140 = vst.msk [vmem:[%s2138 + $0x8] sm:$0xff] %vm2132, %v2116
        %s2141 = scalar_lea.vmem %s192, 48 [#allocation8]
        %2142 = vst.msk [vmem:[%s2141] sm:$0xff] %vm2132, %v2130
        %2143 = vst.msk [vmem:[%s2141 + $0x8] sm:$0xff] %vm2132, %v2131
        %s2144 = sadd.s32 %s332, 144
        %v2145 = vld [vmem:[%s287] sm:$0xff]
        %v2146 = vld [vmem:[%s287 + $0x8] sm:$0xff]
        %s2147 = sld [smem:[#allocation3 + %s2144]]
        %v2148 = vstv %s2147
        %v2149 = vmul.f32 %v2148, %v2145
        %v2150 = vmul.f32 %v2148, %v2146
        %v2151 = vadd.f32 %v2149, 0.0
        %v2152 = vadd.f32 %v2150, 0.0
        %s2153 = sadd.s32 %s332, 180
        %s2154 = sld [smem:[#allocation3 + %s2153]]
        %v2155 = vstv %s2154
        %v2156 = vmul.f32 %v2155, %v2145
        %v2157 = vmul.f32 %v2155, %v2146
        %v2158 = vadd.f32 %v2156, 0.0
        %v2159 = vadd.f32 %v2157, 0.0
        %s2160 = sadd.s32 %s332, 216
        %s2161 = sld [smem:[#allocation3 + %s2160]]
        %v2162 = vstv %s2161
        %v2163 = vmul.f32 %v2162, %v2145
        %v2164 = vmul.f32 %v2162, %v2146
        %v2165 = vadd.f32 %v2163, 0.0
        %v2166 = vadd.f32 %v2164, 0.0
        %s2167 = sadd.s32 %s332, 252
        %s2168 = sld [smem:[#allocation3 + %s2167]]
        %v2169 = vstv %s2168
        %v2170 = vmul.f32 %v2169, %v2145
        %v2171 = vmul.f32 %v2169, %v2146
        %v2172 = vadd.f32 %v2170, 0.0
        %v2173 = vadd.f32 %v2171, 0.0
        %s2174 = sadd.s32 %s332, 145
        %s2175 = sld [smem:[#allocation3 + %s2174]]
        %v2176 = vstv %s2175
        %v2177 = vmul.f32 %v2176, %v2145
        %v2178 = vmul.f32 %v2176, %v2146
        %2181 = vrot.lane.b32.xlu0 %v2177, 127
        %v2182 = vpop.permute.xlu0 %2181
        %2183 = vrot.lane.b32.xlu0 %v2178, 127
        %v2184 = vpop.permute.xlu0 %2183
        %v2187 = vadd.f32 %v2151, %v2182
        %v2188 = vadd.f32 %v2152, %v2184
        %s2189 = sadd.s32 %s332, 181
        %s2190 = sld [smem:[#allocation3 + %s2189]]
        %v2191 = vstv %s2190
        %v2192 = vmul.f32 %v2191, %v2145
        %v2193 = vmul.f32 %v2191, %v2146
        %2196 = vrot.lane.b32.xlu0 %v2192, 127
        %v2197 = vpop.permute.xlu0 %2196
        %2198 = vrot.lane.b32.xlu0 %v2193, 127
        %v2199 = vpop.permute.xlu0 %2198
        %v2202 = vadd.f32 %v2158, %v2197
        %v2203 = vadd.f32 %v2159, %v2199
        %s2204 = sadd.s32 %s332, 217
        %s2205 = sld [smem:[#allocation3 + %s2204]]
        %v2206 = vstv %s2205
        %v2207 = vmul.f32 %v2206, %v2145
        %v2208 = vmul.f32 %v2206, %v2146
        %2211 = vrot.lane.b32.xlu0 %v2207, 127
        %v2212 = vpop.permute.xlu0 %2211
        %2213 = vrot.lane.b32.xlu0 %v2208, 127
        %v2214 = vpop.permute.xlu0 %2213
        %v2217 = vadd.f32 %v2165, %v2212
        %v2218 = vadd.f32 %v2166, %v2214
        %s2219 = sadd.s32 %s332, 253
        %s2220 = sld [smem:[#allocation3 + %s2219]]
        %v2221 = vstv %s2220
        %v2222 = vmul.f32 %v2221, %v2145
        %v2223 = vmul.f32 %v2221, %v2146
        %2226 = vrot.lane.b32.xlu0 %v2222, 127
        %v2227 = vpop.permute.xlu0 %2226
        %2228 = vrot.lane.b32.xlu0 %v2223, 127
        %v2229 = vpop.permute.xlu0 %2228
        %v2232 = vadd.f32 %v2172, %v2227
        %v2233 = vadd.f32 %v2173, %v2229
        %s2234 = sadd.s32 %s332, 146
        %s2235 = sld [smem:[#allocation3 + %s2234]]
        %v2236 = vstv %s2235
        %v2237 = vmul.f32 %v2236, %v2145
        %v2238 = vmul.f32 %v2236, %v2146
        %2241 = vrot.lane.b32.xlu0 %v2237, 126
        %v2242 = vpop.permute.xlu0 %2241
        %2243 = vrot.lane.b32.xlu0 %v2238, 126
        %v2244 = vpop.permute.xlu0 %2243
        %v2247 = vadd.f32 %v2187, %v2242
        %v2248 = vadd.f32 %v2188, %v2244
        %s2249 = sadd.s32 %s332, 182
        %s2250 = sld [smem:[#allocation3 + %s2249]]
        %v2251 = vstv %s2250
        %v2252 = vmul.f32 %v2251, %v2145
        %v2253 = vmul.f32 %v2251, %v2146
        %2256 = vrot.lane.b32.xlu0 %v2252, 126
        %v2257 = vpop.permute.xlu0 %2256
        %2258 = vrot.lane.b32.xlu0 %v2253, 126
        %v2259 = vpop.permute.xlu0 %2258
        %v2262 = vadd.f32 %v2202, %v2257
        %v2263 = vadd.f32 %v2203, %v2259
        %s2264 = sadd.s32 %s332, 218
        %s2265 = sld [smem:[#allocation3 + %s2264]]
        %v2266 = vstv %s2265
        %v2267 = vmul.f32 %v2266, %v2145
        %v2268 = vmul.f32 %v2266, %v2146
        %2271 = vrot.lane.b32.xlu0 %v2267, 126
        %v2272 = vpop.permute.xlu0 %2271
        %2273 = vrot.lane.b32.xlu0 %v2268, 126
        %v2274 = vpop.permute.xlu0 %2273
        %v2277 = vadd.f32 %v2217, %v2272
        %v2278 = vadd.f32 %v2218, %v2274
        %s2279 = sadd.s32 %s332, 254
        %s2280 = sld [smem:[#allocation3 + %s2279]]
        %v2281 = vstv %s2280
        %v2282 = vmul.f32 %v2281, %v2145
        %v2283 = vmul.f32 %v2281, %v2146
        %2286 = vrot.lane.b32.xlu0 %v2282, 126
        %v2287 = vpop.permute.xlu0 %2286
        %2288 = vrot.lane.b32.xlu0 %v2283, 126
        %v2289 = vpop.permute.xlu0 %2288
        %v2292 = vadd.f32 %v2232, %v2287
        %v2293 = vadd.f32 %v2233, %v2289
        %v2294 = vld [vmem:[%s287 + $0x1] sm:$0xff]
        %v2295 = vld [vmem:[%s287 + $0x9] sm:$0xff]
        %s2296 = sadd.s32 %s332, 147
        %s2297 = sld [smem:[#allocation3 + %s2296]]
        %v2298 = vstv %s2297
        %v2299 = vmul.f32 %v2298, %v2294
        %v2300 = vmul.f32 %v2298, %v2295
        %v2301 = vadd.f32 %v2247, %v2299
        %v2302 = vadd.f32 %v2248, %v2300
        %s2303 = sadd.s32 %s332, 183
        %s2304 = sld [smem:[#allocation3 + %s2303]]
        %v2305 = vstv %s2304
        %v2306 = vmul.f32 %v2305, %v2294
        %v2307 = vmul.f32 %v2305, %v2295
        %v2308 = vadd.f32 %v2262, %v2306
        %v2309 = vadd.f32 %v2263, %v2307
        %s2310 = sadd.s32 %s332, 219
        %s2311 = sld [smem:[#allocation3 + %s2310]]
        %v2312 = vstv %s2311
        %v2313 = vmul.f32 %v2312, %v2294
        %v2314 = vmul.f32 %v2312, %v2295
        %v2315 = vadd.f32 %v2277, %v2313
        %v2316 = vadd.f32 %v2278, %v2314
        %s2317 = sadd.s32 %s332, 255
        %s2318 = sld [smem:[#allocation3 + %s2317]]
        %v2319 = vstv %s2318
        %v2320 = vmul.f32 %v2319, %v2294
        %v2321 = vmul.f32 %v2319, %v2295
        %v2322 = vadd.f32 %v2292, %v2320
        %v2323 = vadd.f32 %v2293, %v2321
        %s2324 = sadd.s32 %s332, 148
        %s2325 = sld [smem:[#allocation3 + %s2324]]
        %v2326 = vstv %s2325
        %v2327 = vmul.f32 %v2326, %v2294
        %v2328 = vmul.f32 %v2326, %v2295
        %2331 = vrot.lane.b32.xlu0 %v2327, 127
        %v2332 = vpop.permute.xlu0 %2331
        %2333 = vrot.lane.b32.xlu0 %v2328, 127
        %v2334 = vpop.permute.xlu0 %2333
        %v2337 = vadd.f32 %v2301, %v2332
        %v2338 = vadd.f32 %v2302, %v2334
        %s2339 = sadd.s32 %s332, 184
        %s2340 = sld [smem:[#allocation3 + %s2339]]
        %v2341 = vstv %s2340
        %v2342 = vmul.f32 %v2341, %v2294
        %v2343 = vmul.f32 %v2341, %v2295
        %2346 = vrot.lane.b32.xlu0 %v2342, 127
        %v2347 = vpop.permute.xlu0 %2346
        %2348 = vrot.lane.b32.xlu0 %v2343, 127
        %v2349 = vpop.permute.xlu0 %2348
        %v2352 = vadd.f32 %v2308, %v2347
        %v2353 = vadd.f32 %v2309, %v2349
        %s2354 = sadd.s32 %s332, 220
        %s2355 = sld [smem:[#allocation3 + %s2354]]
        %v2356 = vstv %s2355
        %v2357 = vmul.f32 %v2356, %v2294
        %v2358 = vmul.f32 %v2356, %v2295
        %2361 = vrot.lane.b32.xlu0 %v2357, 127
        %v2362 = vpop.permute.xlu0 %2361
        %2363 = vrot.lane.b32.xlu0 %v2358, 127
        %v2364 = vpop.permute.xlu0 %2363
        %v2367 = vadd.f32 %v2315, %v2362
        %v2368 = vadd.f32 %v2316, %v2364
        %s2369 = sadd.s32 %s332, 256
        %s2370 = sld [smem:[#allocation3 + %s2369]]
        %v2371 = vstv %s2370
        %v2372 = vmul.f32 %v2371, %v2294
        %v2373 = vmul.f32 %v2371, %v2295
        %2376 = vrot.lane.b32.xlu0 %v2372, 127
        %v2377 = vpop.permute.xlu0 %2376
        %2378 = vrot.lane.b32.xlu0 %v2373, 127
        %v2379 = vpop.permute.xlu0 %2378
        %v2382 = vadd.f32 %v2322, %v2377
        %v2383 = vadd.f32 %v2323, %v2379
        %s2384 = sadd.s32 %s332, 149
        %s2385 = sld [smem:[#allocation3 + %s2384]]
        %v2386 = vstv %s2385
        %v2387 = vmul.f32 %v2386, %v2294
        %v2388 = vmul.f32 %v2386, %v2295
        %2391 = vrot.lane.b32.xlu0 %v2387, 126
        %v2392 = vpop.permute.xlu0 %2391
        %2393 = vrot.lane.b32.xlu0 %v2388, 126
        %v2394 = vpop.permute.xlu0 %2393
        %v2397 = vadd.f32 %v2337, %v2392
        %v2398 = vadd.f32 %v2338, %v2394
        %s2399 = sadd.s32 %s332, 185
        %s2400 = sld [smem:[#allocation3 + %s2399]]
        %v2401 = vstv %s2400
        %v2402 = vmul.f32 %v2401, %v2294
        %v2403 = vmul.f32 %v2401, %v2295
        %2406 = vrot.lane.b32.xlu0 %v2402, 126
        %v2407 = vpop.permute.xlu0 %2406
        %2408 = vrot.lane.b32.xlu0 %v2403, 126
        %v2409 = vpop.permute.xlu0 %2408
        %v2412 = vadd.f32 %v2352, %v2407
        %v2413 = vadd.f32 %v2353, %v2409
        %s2414 = sadd.s32 %s332, 221
        %s2415 = sld [smem:[#allocation3 + %s2414]]
        %v2416 = vstv %s2415
        %v2417 = vmul.f32 %v2416, %v2294
        %v2418 = vmul.f32 %v2416, %v2295
        %2421 = vrot.lane.b32.xlu0 %v2417, 126
        %v2422 = vpop.permute.xlu0 %2421
        %2423 = vrot.lane.b32.xlu0 %v2418, 126
        %v2424 = vpop.permute.xlu0 %2423
        %v2427 = vadd.f32 %v2367, %v2422
        %v2428 = vadd.f32 %v2368, %v2424
        %s2429 = sadd.s32 %s332, 257
        %s2430 = sld [smem:[#allocation3 + %s2429]]
        %v2431 = vstv %s2430
        %v2432 = vmul.f32 %v2431, %v2294
        %v2433 = vmul.f32 %v2431, %v2295
        %2436 = vrot.lane.b32.xlu0 %v2432, 126
        %v2437 = vpop.permute.xlu0 %2436
        %2438 = vrot.lane.b32.xlu0 %v2433, 126
        %v2439 = vpop.permute.xlu0 %2438
        %v2442 = vadd.f32 %v2382, %v2437
        %v2443 = vadd.f32 %v2383, %v2439
        %v2444 = vld [vmem:[%s287 + $0x2] sm:$0xff]
        %v2445 = vld [vmem:[%s287 + $0xa] sm:$0xff]
        %s2446 = sadd.s32 %s332, 150
        %s2447 = sld [smem:[#allocation3 + %s2446]]
        %v2448 = vstv %s2447
        %v2449 = vmul.f32 %v2448, %v2444
        %v2450 = vmul.f32 %v2448, %v2445
        %v2451 = vadd.f32 %v2397, %v2449
        %v2452 = vadd.f32 %v2398, %v2450
        %s2453 = sadd.s32 %s332, 186
        %s2454 = sld [smem:[#allocation3 + %s2453]]
        %v2455 = vstv %s2454
        %v2456 = vmul.f32 %v2455, %v2444
        %v2457 = vmul.f32 %v2455, %v2445
        %v2458 = vadd.f32 %v2412, %v2456
        %v2459 = vadd.f32 %v2413, %v2457
        %s2460 = sadd.s32 %s332, 222
        %s2461 = sld [smem:[#allocation3 + %s2460]]
        %v2462 = vstv %s2461
        %v2463 = vmul.f32 %v2462, %v2444
        %v2464 = vmul.f32 %v2462, %v2445
        %v2465 = vadd.f32 %v2427, %v2463
        %v2466 = vadd.f32 %v2428, %v2464
        %s2467 = sadd.s32 %s332, 258
        %s2468 = sld [smem:[#allocation3 + %s2467]]
        %v2469 = vstv %s2468
        %v2470 = vmul.f32 %v2469, %v2444
        %v2471 = vmul.f32 %v2469, %v2445
        %v2472 = vadd.f32 %v2442, %v2470
        %v2473 = vadd.f32 %v2443, %v2471
        %s2474 = sadd.s32 %s332, 151
        %s2475 = sld [smem:[#allocation3 + %s2474]]
        %v2476 = vstv %s2475
        %v2477 = vmul.f32 %v2476, %v2444
        %v2478 = vmul.f32 %v2476, %v2445
        %2481 = vrot.lane.b32.xlu0 %v2477, 127
        %v2482 = vpop.permute.xlu0 %2481
        %2483 = vrot.lane.b32.xlu0 %v2478, 127
        %v2484 = vpop.permute.xlu0 %2483
        %v2487 = vadd.f32 %v2451, %v2482
        %v2488 = vadd.f32 %v2452, %v2484
        %s2489 = sadd.s32 %s332, 187
        %s2490 = sld [smem:[#allocation3 + %s2489]]
        %v2491 = vstv %s2490
        %v2492 = vmul.f32 %v2491, %v2444
        %v2493 = vmul.f32 %v2491, %v2445
        %2496 = vrot.lane.b32.xlu0 %v2492, 127
        %v2497 = vpop.permute.xlu0 %2496
        %2498 = vrot.lane.b32.xlu0 %v2493, 127
        %v2499 = vpop.permute.xlu0 %2498
        %v2502 = vadd.f32 %v2458, %v2497
        %v2503 = vadd.f32 %v2459, %v2499
        %s2504 = sadd.s32 %s332, 223
        %s2505 = sld [smem:[#allocation3 + %s2504]]
        %v2506 = vstv %s2505
        %v2507 = vmul.f32 %v2506, %v2444
        %v2508 = vmul.f32 %v2506, %v2445
        %2511 = vrot.lane.b32.xlu0 %v2507, 127
        %v2512 = vpop.permute.xlu0 %2511
        %2513 = vrot.lane.b32.xlu0 %v2508, 127
        %v2514 = vpop.permute.xlu0 %2513
        %v2517 = vadd.f32 %v2465, %v2512
        %v2518 = vadd.f32 %v2466, %v2514
        %s2519 = sadd.s32 %s332, 259
        %s2520 = sld [smem:[#allocation3 + %s2519]]
        %v2521 = vstv %s2520
        %v2522 = vmul.f32 %v2521, %v2444
        %v2523 = vmul.f32 %v2521, %v2445
        %2526 = vrot.lane.b32.xlu0 %v2522, 127
        %v2527 = vpop.permute.xlu0 %2526
        %2528 = vrot.lane.b32.xlu0 %v2523, 127
        %v2529 = vpop.permute.xlu0 %2528
        %v2532 = vadd.f32 %v2472, %v2527
        %v2533 = vadd.f32 %v2473, %v2529
        %s2534 = sadd.s32 %s332, 152
        %s2535 = sld [smem:[#allocation3 + %s2534]]
        %v2536 = vstv %s2535
        %v2537 = vmul.f32 %v2536, %v2444
        %v2538 = vmul.f32 %v2536, %v2445
        %2541 = vrot.lane.b32.xlu0 %v2537, 126
        %v2542 = vpop.permute.xlu0 %2541
        %2543 = vrot.lane.b32.xlu0 %v2538, 126
        %v2544 = vpop.permute.xlu0 %2543
        %v2547 = vadd.f32 %v2487, %v2542
        %v2548 = vadd.f32 %v2488, %v2544
        %s2549 = sadd.s32 %s332, 188
        %s2550 = sld [smem:[#allocation3 + %s2549]]
        %v2551 = vstv %s2550
        %v2552 = vmul.f32 %v2551, %v2444
        %v2553 = vmul.f32 %v2551, %v2445
        %2556 = vrot.lane.b32.xlu0 %v2552, 126
        %v2557 = vpop.permute.xlu0 %2556
        %2558 = vrot.lane.b32.xlu0 %v2553, 126
        %v2559 = vpop.permute.xlu0 %2558
        %v2562 = vadd.f32 %v2502, %v2557
        %v2563 = vadd.f32 %v2503, %v2559
        %s2564 = sadd.s32 %s332, 224
        %s2565 = sld [smem:[#allocation3 + %s2564]]
        %v2566 = vstv %s2565
        %v2567 = vmul.f32 %v2566, %v2444
        %v2568 = vmul.f32 %v2566, %v2445
        %2571 = vrot.lane.b32.xlu0 %v2567, 126
        %v2572 = vpop.permute.xlu0 %2571
        %2573 = vrot.lane.b32.xlu0 %v2568, 126
        %v2574 = vpop.permute.xlu0 %2573
        %v2577 = vadd.f32 %v2517, %v2572
        %v2578 = vadd.f32 %v2518, %v2574
        %s2579 = sadd.s32 %s332, 260
        %s2580 = sld [smem:[#allocation3 + %s2579]]
        %v2581 = vstv %s2580
        %v2582 = vmul.f32 %v2581, %v2444
        %v2583 = vmul.f32 %v2581, %v2445
        %2586 = vrot.lane.b32.xlu0 %v2582, 126
        %v2587 = vpop.permute.xlu0 %2586
        %2588 = vrot.lane.b32.xlu0 %v2583, 126
        %v2589 = vpop.permute.xlu0 %2588
        %v2592 = vadd.f32 %v2532, %v2587
        %v2593 = vadd.f32 %v2533, %v2589
        %v2594 = vld [vmem:[%s301] sm:$0xff]
        %v2595 = vld [vmem:[%s301 + $0x8] sm:$0xff]
        %s2596 = sadd.s32 %s332, 153
        %s2597 = sld [smem:[#allocation3 + %s2596]]
        %v2598 = vstv %s2597
        %v2599 = vmul.f32 %v2598, %v2594
        %v2600 = vmul.f32 %v2598, %v2595
        %v2601 = vadd.f32 %v2547, %v2599
        %v2602 = vadd.f32 %v2548, %v2600
        %s2603 = sadd.s32 %s332, 189
        %s2604 = sld [smem:[#allocation3 + %s2603]]
        %v2605 = vstv %s2604
        %v2606 = vmul.f32 %v2605, %v2594
        %v2607 = vmul.f32 %v2605, %v2595
        %v2608 = vadd.f32 %v2562, %v2606
        %v2609 = vadd.f32 %v2563, %v2607
        %s2610 = sadd.s32 %s332, 225
        %s2611 = sld [smem:[#allocation3 + %s2610]]
        %v2612 = vstv %s2611
        %v2613 = vmul.f32 %v2612, %v2594
        %v2614 = vmul.f32 %v2612, %v2595
        %v2615 = vadd.f32 %v2577, %v2613
        %v2616 = vadd.f32 %v2578, %v2614
        %s2617 = sadd.s32 %s332, 261
        %s2618 = sld [smem:[#allocation3 + %s2617]]
        %v2619 = vstv %s2618
        %v2620 = vmul.f32 %v2619, %v2594
        %v2621 = vmul.f32 %v2619, %v2595
        %v2622 = vadd.f32 %v2592, %v2620
        %v2623 = vadd.f32 %v2593, %v2621
        %s2624 = sadd.s32 %s332, 154
        %s2625 = sld [smem:[#allocation3 + %s2624]]
        %v2626 = vstv %s2625
        %v2627 = vmul.f32 %v2626, %v2594
        %v2628 = vmul.f32 %v2626, %v2595
        %2631 = vrot.lane.b32.xlu0 %v2627, 127
        %v2632 = vpop.permute.xlu0 %2631
        %2633 = vrot.lane.b32.xlu0 %v2628, 127
        %v2634 = vpop.permute.xlu0 %2633
        %v2637 = vadd.f32 %v2601, %v2632
        %v2638 = vadd.f32 %v2602, %v2634
        %s2639 = sadd.s32 %s332, 190
        %s2640 = sld [smem:[#allocation3 + %s2639]]
        %v2641 = vstv %s2640
        %v2642 = vmul.f32 %v2641, %v2594
        %v2643 = vmul.f32 %v2641, %v2595
        %2646 = vrot.lane.b32.xlu0 %v2642, 127
        %v2647 = vpop.permute.xlu0 %2646
        %2648 = vrot.lane.b32.xlu0 %v2643, 127
        %v2649 = vpop.permute.xlu0 %2648
        %v2652 = vadd.f32 %v2608, %v2647
        %v2653 = vadd.f32 %v2609, %v2649
        %s2654 = sadd.s32 %s332, 226
        %s2655 = sld [smem:[#allocation3 + %s2654]]
        %v2656 = vstv %s2655
        %v2657 = vmul.f32 %v2656, %v2594
        %v2658 = vmul.f32 %v2656, %v2595
        %2661 = vrot.lane.b32.xlu0 %v2657, 127
        %v2662 = vpop.permute.xlu0 %2661
        %2663 = vrot.lane.b32.xlu0 %v2658, 127
        %v2664 = vpop.permute.xlu0 %2663
        %v2667 = vadd.f32 %v2615, %v2662
        %v2668 = vadd.f32 %v2616, %v2664
        %s2669 = sadd.s32 %s332, 262
        %s2670 = sld [smem:[#allocation3 + %s2669]]
        %v2671 = vstv %s2670
        %v2672 = vmul.f32 %v2671, %v2594
        %v2673 = vmul.f32 %v2671, %v2595
        %2676 = vrot.lane.b32.xlu0 %v2672, 127
        %v2677 = vpop.permute.xlu0 %2676
        %2678 = vrot.lane.b32.xlu0 %v2673, 127
        %v2679 = vpop.permute.xlu0 %2678
        %v2682 = vadd.f32 %v2622, %v2677
        %v2683 = vadd.f32 %v2623, %v2679
        %s2684 = sadd.s32 %s332, 155
        %s2685 = sld [smem:[#allocation3 + %s2684]]
        %v2686 = vstv %s2685
        %v2687 = vmul.f32 %v2686, %v2594
        %v2688 = vmul.f32 %v2686, %v2595
        %2691 = vrot.lane.b32.xlu0 %v2687, 126
        %v2692 = vpop.permute.xlu0 %2691
        %2693 = vrot.lane.b32.xlu0 %v2688, 126
        %v2694 = vpop.permute.xlu0 %2693
        %v2697 = vadd.f32 %v2637, %v2692
        %v2698 = vadd.f32 %v2638, %v2694
        %s2699 = sadd.s32 %s332, 191
        %s2700 = sld [smem:[#allocation3 + %s2699]]
        %v2701 = vstv %s2700
        %v2702 = vmul.f32 %v2701, %v2594
        %v2703 = vmul.f32 %v2701, %v2595
        %2706 = vrot.lane.b32.xlu0 %v2702, 126
        %v2707 = vpop.permute.xlu0 %2706
        %2708 = vrot.lane.b32.xlu0 %v2703, 126
        %v2709 = vpop.permute.xlu0 %2708
        %v2712 = vadd.f32 %v2652, %v2707
        %v2713 = vadd.f32 %v2653, %v2709
        %s2714 = sadd.s32 %s332, 227
        %s2715 = sld [smem:[#allocation3 + %s2714]]
        %v2716 = vstv %s2715
        %v2717 = vmul.f32 %v2716, %v2594
        %v2718 = vmul.f32 %v2716, %v2595
        %2721 = vrot.lane.b32.xlu0 %v2717, 126
        %v2722 = vpop.permute.xlu0 %2721
        %2723 = vrot.lane.b32.xlu0 %v2718, 126
        %v2724 = vpop.permute.xlu0 %2723
        %v2727 = vadd.f32 %v2667, %v2722
        %v2728 = vadd.f32 %v2668, %v2724
        %s2729 = sadd.s32 %s332, 263
        %s2730 = sld [smem:[#allocation3 + %s2729]]
        %v2731 = vstv %s2730
        %v2732 = vmul.f32 %v2731, %v2594
        %v2733 = vmul.f32 %v2731, %v2595
        %2736 = vrot.lane.b32.xlu0 %v2732, 126
        %v2737 = vpop.permute.xlu0 %2736
        %2738 = vrot.lane.b32.xlu0 %v2733, 126
        %v2739 = vpop.permute.xlu0 %2738
        %v2742 = vadd.f32 %v2682, %v2737
        %v2743 = vadd.f32 %v2683, %v2739
        %v2744 = vld [vmem:[%s301 + $0x1] sm:$0xff]
        %v2745 = vld [vmem:[%s301 + $0x9] sm:$0xff]
        %s2746 = sadd.s32 %s332, 156
        %s2747 = sld [smem:[#allocation3 + %s2746]]
        %v2748 = vstv %s2747
        %v2749 = vmul.f32 %v2748, %v2744
        %v2750 = vmul.f32 %v2748, %v2745
        %v2751 = vadd.f32 %v2697, %v2749
        %v2752 = vadd.f32 %v2698, %v2750
        %s2753 = sadd.s32 %s332, 192
        %s2754 = sld [smem:[#allocation3 + %s2753]]
        %v2755 = vstv %s2754
        %v2756 = vmul.f32 %v2755, %v2744
        %v2757 = vmul.f32 %v2755, %v2745
        %v2758 = vadd.f32 %v2712, %v2756
        %v2759 = vadd.f32 %v2713, %v2757
        %s2760 = sadd.s32 %s332, 228
        %s2761 = sld [smem:[#allocation3 + %s2760]]
        %v2762 = vstv %s2761
        %v2763 = vmul.f32 %v2762, %v2744
        %v2764 = vmul.f32 %v2762, %v2745
        %v2765 = vadd.f32 %v2727, %v2763
        %v2766 = vadd.f32 %v2728, %v2764
        %s2767 = sadd.s32 %s332, 264
        %s2768 = sld [smem:[#allocation3 + %s2767]]
        %v2769 = vstv %s2768
        %v2770 = vmul.f32 %v2769, %v2744
        %v2771 = vmul.f32 %v2769, %v2745
        %v2772 = vadd.f32 %v2742, %v2770
        %v2773 = vadd.f32 %v2743, %v2771
        %s2774 = sadd.s32 %s332, 157
        %s2775 = sld [smem:[#allocation3 + %s2774]]
        %v2776 = vstv %s2775
        %v2777 = vmul.f32 %v2776, %v2744
        %v2778 = vmul.f32 %v2776, %v2745
        %2781 = vrot.lane.b32.xlu0 %v2777, 127
        %v2782 = vpop.permute.xlu0 %2781
        %2783 = vrot.lane.b32.xlu0 %v2778, 127
        %v2784 = vpop.permute.xlu0 %2783
        %v2787 = vadd.f32 %v2751, %v2782
        %v2788 = vadd.f32 %v2752, %v2784
        %s2789 = sadd.s32 %s332, 193
        %s2790 = sld [smem:[#allocation3 + %s2789]]
        %v2791 = vstv %s2790
        %v2792 = vmul.f32 %v2791, %v2744
        %v2793 = vmul.f32 %v2791, %v2745
        %2796 = vrot.lane.b32.xlu0 %v2792, 127
        %v2797 = vpop.permute.xlu0 %2796
        %2798 = vrot.lane.b32.xlu0 %v2793, 127
        %v2799 = vpop.permute.xlu0 %2798
        %v2802 = vadd.f32 %v2758, %v2797
        %v2803 = vadd.f32 %v2759, %v2799
        %s2804 = sadd.s32 %s332, 229
        %s2805 = sld [smem:[#allocation3 + %s2804]]
        %v2806 = vstv %s2805
        %v2807 = vmul.f32 %v2806, %v2744
        %v2808 = vmul.f32 %v2806, %v2745
        %2811 = vrot.lane.b32.xlu0 %v2807, 127
        %v2812 = vpop.permute.xlu0 %2811
        %2813 = vrot.lane.b32.xlu0 %v2808, 127
        %v2814 = vpop.permute.xlu0 %2813
        %v2817 = vadd.f32 %v2765, %v2812
        %v2818 = vadd.f32 %v2766, %v2814
        %s2819 = sadd.s32 %s332, 265
        %s2820 = sld [smem:[#allocation3 + %s2819]]
        %v2821 = vstv %s2820
        %v2822 = vmul.f32 %v2821, %v2744
        %v2823 = vmul.f32 %v2821, %v2745
        %2826 = vrot.lane.b32.xlu0 %v2822, 127
        %v2827 = vpop.permute.xlu0 %2826
        %2828 = vrot.lane.b32.xlu0 %v2823, 127
        %v2829 = vpop.permute.xlu0 %2828
        %v2832 = vadd.f32 %v2772, %v2827
        %v2833 = vadd.f32 %v2773, %v2829
        %s2834 = sadd.s32 %s332, 158
        %s2835 = sld [smem:[#allocation3 + %s2834]]
        %v2836 = vstv %s2835
        %v2837 = vmul.f32 %v2836, %v2744
        %v2838 = vmul.f32 %v2836, %v2745
        %2841 = vrot.lane.b32.xlu0 %v2837, 126
        %v2842 = vpop.permute.xlu0 %2841
        %2843 = vrot.lane.b32.xlu0 %v2838, 126
        %v2844 = vpop.permute.xlu0 %2843
        %v2847 = vadd.f32 %v2787, %v2842
        %v2848 = vadd.f32 %v2788, %v2844
        %s2849 = sadd.s32 %s332, 194
        %s2850 = sld [smem:[#allocation3 + %s2849]]
        %v2851 = vstv %s2850
        %v2852 = vmul.f32 %v2851, %v2744
        %v2853 = vmul.f32 %v2851, %v2745
        %2856 = vrot.lane.b32.xlu0 %v2852, 126
        %v2857 = vpop.permute.xlu0 %2856
        %2858 = vrot.lane.b32.xlu0 %v2853, 126
        %v2859 = vpop.permute.xlu0 %2858
        %v2862 = vadd.f32 %v2802, %v2857
        %v2863 = vadd.f32 %v2803, %v2859
        %s2864 = sadd.s32 %s332, 230
        %s2865 = sld [smem:[#allocation3 + %s2864]]
        %v2866 = vstv %s2865
        %v2867 = vmul.f32 %v2866, %v2744
        %v2868 = vmul.f32 %v2866, %v2745
        %2871 = vrot.lane.b32.xlu0 %v2867, 126
        %v2872 = vpop.permute.xlu0 %2871
        %2873 = vrot.lane.b32.xlu0 %v2868, 126
        %v2874 = vpop.permute.xlu0 %2873
        %v2877 = vadd.f32 %v2817, %v2872
        %v2878 = vadd.f32 %v2818, %v2874
        %s2879 = sadd.s32 %s332, 266
        %s2880 = sld [smem:[#allocation3 + %s2879]]
        %v2881 = vstv %s2880
        %v2882 = vmul.f32 %v2881, %v2744
        %v2883 = vmul.f32 %v2881, %v2745
        %2886 = vrot.lane.b32.xlu0 %v2882, 126
        %v2887 = vpop.permute.xlu0 %2886
        %2888 = vrot.lane.b32.xlu0 %v2883, 126
        %v2889 = vpop.permute.xlu0 %2888
        %v2892 = vadd.f32 %v2832, %v2887
        %v2893 = vadd.f32 %v2833, %v2889
        %v2894 = vld [vmem:[%s301 + $0x2] sm:$0xff]
        %v2895 = vld [vmem:[%s301 + $0xa] sm:$0xff]
        %s2896 = sadd.s32 %s332, 159
        %s2897 = sld [smem:[#allocation3 + %s2896]]
        %v2898 = vstv %s2897
        %v2899 = vmul.f32 %v2898, %v2894
        %v2900 = vmul.f32 %v2898, %v2895
        %v2901 = vadd.f32 %v2847, %v2899
        %v2902 = vadd.f32 %v2848, %v2900
        %s2903 = sadd.s32 %s332, 195
        %s2904 = sld [smem:[#allocation3 + %s2903]]
        %v2905 = vstv %s2904
        %v2906 = vmul.f32 %v2905, %v2894
        %v2907 = vmul.f32 %v2905, %v2895
        %v2908 = vadd.f32 %v2862, %v2906
        %v2909 = vadd.f32 %v2863, %v2907
        %s2910 = sadd.s32 %s332, 231
        %s2911 = sld [smem:[#allocation3 + %s2910]]
        %v2912 = vstv %s2911
        %v2913 = vmul.f32 %v2912, %v2894
        %v2914 = vmul.f32 %v2912, %v2895
        %v2915 = vadd.f32 %v2877, %v2913
        %v2916 = vadd.f32 %v2878, %v2914
        %s2917 = sadd.s32 %s332, 267
        %s2918 = sld [smem:[#allocation3 + %s2917]]
        %v2919 = vstv %s2918
        %v2920 = vmul.f32 %v2919, %v2894
        %v2921 = vmul.f32 %v2919, %v2895
        %v2922 = vadd.f32 %v2892, %v2920
        %v2923 = vadd.f32 %v2893, %v2921
        %s2924 = sadd.s32 %s332, 160
        %s2925 = sld [smem:[#allocation3 + %s2924]]
        %v2926 = vstv %s2925
        %v2927 = vmul.f32 %v2926, %v2894
        %v2928 = vmul.f32 %v2926, %v2895
        %2931 = vrot.lane.b32.xlu0 %v2927, 127
        %v2932 = vpop.permute.xlu0 %2931
        %2933 = vrot.lane.b32.xlu0 %v2928, 127
        %v2934 = vpop.permute.xlu0 %2933
        %v2937 = vadd.f32 %v2901, %v2932
        %v2938 = vadd.f32 %v2902, %v2934
        %s2939 = sadd.s32 %s332, 196
        %s2940 = sld [smem:[#allocation3 + %s2939]]
        %v2941 = vstv %s2940
        %v2942 = vmul.f32 %v2941, %v2894
        %v2943 = vmul.f32 %v2941, %v2895
        %2946 = vrot.lane.b32.xlu0 %v2942, 127
        %v2947 = vpop.permute.xlu0 %2946
        %2948 = vrot.lane.b32.xlu0 %v2943, 127
        %v2949 = vpop.permute.xlu0 %2948
        %v2952 = vadd.f32 %v2908, %v2947
        %v2953 = vadd.f32 %v2909, %v2949
        %s2954 = sadd.s32 %s332, 232
        %s2955 = sld [smem:[#allocation3 + %s2954]]
        %v2956 = vstv %s2955
        %v2957 = vmul.f32 %v2956, %v2894
        %v2958 = vmul.f32 %v2956, %v2895
        %2961 = vrot.lane.b32.xlu0 %v2957, 127
        %v2962 = vpop.permute.xlu0 %2961
        %2963 = vrot.lane.b32.xlu0 %v2958, 127
        %v2964 = vpop.permute.xlu0 %2963
        %v2967 = vadd.f32 %v2915, %v2962
        %v2968 = vadd.f32 %v2916, %v2964
        %s2969 = sadd.s32 %s332, 268
        %s2970 = sld [smem:[#allocation3 + %s2969]]
        %v2971 = vstv %s2970
        %v2972 = vmul.f32 %v2971, %v2894
        %v2973 = vmul.f32 %v2971, %v2895
        %2976 = vrot.lane.b32.xlu0 %v2972, 127
        %v2977 = vpop.permute.xlu0 %2976
        %2978 = vrot.lane.b32.xlu0 %v2973, 127
        %v2979 = vpop.permute.xlu0 %2978
        %v2982 = vadd.f32 %v2922, %v2977
        %v2983 = vadd.f32 %v2923, %v2979
        %s2984 = sadd.s32 %s332, 161
        %s2985 = sld [smem:[#allocation3 + %s2984]]
        %v2986 = vstv %s2985
        %v2987 = vmul.f32 %v2986, %v2894
        %v2988 = vmul.f32 %v2986, %v2895
        %2991 = vrot.lane.b32.xlu0 %v2987, 126
        %v2992 = vpop.permute.xlu0 %2991
        %2993 = vrot.lane.b32.xlu0 %v2988, 126
        %v2994 = vpop.permute.xlu0 %2993
        %v2997 = vadd.f32 %v2937, %v2992
        %v2998 = vadd.f32 %v2938, %v2994
        %s2999 = sadd.s32 %s332, 197
        %s3000 = sld [smem:[#allocation3 + %s2999]]
        %v3001 = vstv %s3000
        %v3002 = vmul.f32 %v3001, %v2894
        %v3003 = vmul.f32 %v3001, %v2895
        %3006 = vrot.lane.b32.xlu0 %v3002, 126
        %v3007 = vpop.permute.xlu0 %3006
        %3008 = vrot.lane.b32.xlu0 %v3003, 126
        %v3009 = vpop.permute.xlu0 %3008
        %v3012 = vadd.f32 %v2952, %v3007
        %v3013 = vadd.f32 %v2953, %v3009
        %s3014 = sadd.s32 %s332, 233
        %s3015 = sld [smem:[#allocation3 + %s3014]]
        %v3016 = vstv %s3015
        %v3017 = vmul.f32 %v3016, %v2894
        %v3018 = vmul.f32 %v3016, %v2895
        %3021 = vrot.lane.b32.xlu0 %v3017, 126
        %v3022 = vpop.permute.xlu0 %3021
        %3023 = vrot.lane.b32.xlu0 %v3018, 126
        %v3024 = vpop.permute.xlu0 %3023
        %v3027 = vadd.f32 %v2967, %v3022
        %v3028 = vadd.f32 %v2968, %v3024
        %s3029 = sadd.s32 %s332, 269
        %s3030 = sld [smem:[#allocation3 + %s3029]]
        %v3031 = vstv %s3030
        %v3032 = vmul.f32 %v3031, %v2894
        %v3033 = vmul.f32 %v3031, %v2895
        %3036 = vrot.lane.b32.xlu0 %v3032, 126
        %v3037 = vpop.permute.xlu0 %3036
        %3038 = vrot.lane.b32.xlu0 %v3033, 126
        %v3039 = vpop.permute.xlu0 %3038
        %v3042 = vadd.f32 %v2982, %v3037
        %v3043 = vadd.f32 %v2983, %v3039
        %v3044 = vld [vmem:[%s315] sm:$0xff]
        %v3045 = vld [vmem:[%s315 + $0x8] sm:$0xff]
        %s3046 = sadd.s32 %s332, 162
        %s3047 = sld [smem:[#allocation3 + %s3046]]
        %v3048 = vstv %s3047
        %v3049 = vmul.f32 %v3048, %v3044
        %v3050 = vmul.f32 %v3048, %v3045
        %v3051 = vadd.f32 %v2997, %v3049
        %v3052 = vadd.f32 %v2998, %v3050
        %s3053 = sadd.s32 %s332, 198
        %s3054 = sld [smem:[#allocation3 + %s3053]]
        %v3055 = vstv %s3054
        %v3056 = vmul.f32 %v3055, %v3044
        %v3057 = vmul.f32 %v3055, %v3045
        %v3058 = vadd.f32 %v3012, %v3056
        %v3059 = vadd.f32 %v3013, %v3057
        %s3060 = sadd.s32 %s332, 234
        %s3061 = sld [smem:[#allocation3 + %s3060]]
        %v3062 = vstv %s3061
        %v3063 = vmul.f32 %v3062, %v3044
        %v3064 = vmul.f32 %v3062, %v3045
        %v3065 = vadd.f32 %v3027, %v3063
        %v3066 = vadd.f32 %v3028, %v3064
        %s3067 = sadd.s32 %s332, 270
        %s3068 = sld [smem:[#allocation3 + %s3067]]
        %v3069 = vstv %s3068
        %v3070 = vmul.f32 %v3069, %v3044
        %v3071 = vmul.f32 %v3069, %v3045
        %v3072 = vadd.f32 %v3042, %v3070
        %v3073 = vadd.f32 %v3043, %v3071
        %s3074 = sadd.s32 %s332, 163
        %s3075 = sld [smem:[#allocation3 + %s3074]]
        %v3076 = vstv %s3075
        %v3077 = vmul.f32 %v3076, %v3044
        %v3078 = vmul.f32 %v3076, %v3045
        %3081 = vrot.lane.b32.xlu0 %v3077, 127
        %v3082 = vpop.permute.xlu0 %3081
        %3083 = vrot.lane.b32.xlu0 %v3078, 127
        %v3084 = vpop.permute.xlu0 %3083
        %v3087 = vadd.f32 %v3051, %v3082
        %v3088 = vadd.f32 %v3052, %v3084
        %s3089 = sadd.s32 %s332, 199
        %s3090 = sld [smem:[#allocation3 + %s3089]]
        %v3091 = vstv %s3090
        %v3092 = vmul.f32 %v3091, %v3044
        %v3093 = vmul.f32 %v3091, %v3045
        %3096 = vrot.lane.b32.xlu0 %v3092, 127
        %v3097 = vpop.permute.xlu0 %3096
        %3098 = vrot.lane.b32.xlu0 %v3093, 127
        %v3099 = vpop.permute.xlu0 %3098
        %v3102 = vadd.f32 %v3058, %v3097
        %v3103 = vadd.f32 %v3059, %v3099
        %s3104 = sadd.s32 %s332, 235
        %s3105 = sld [smem:[#allocation3 + %s3104]]
        %v3106 = vstv %s3105
        %v3107 = vmul.f32 %v3106, %v3044
        %v3108 = vmul.f32 %v3106, %v3045
        %3111 = vrot.lane.b32.xlu0 %v3107, 127
        %v3112 = vpop.permute.xlu0 %3111
        %3113 = vrot.lane.b32.xlu0 %v3108, 127
        %v3114 = vpop.permute.xlu0 %3113
        %v3117 = vadd.f32 %v3065, %v3112
        %v3118 = vadd.f32 %v3066, %v3114
        %s3119 = sadd.s32 %s332, 271
        %s3120 = sld [smem:[#allocation3 + %s3119]]
        %v3121 = vstv %s3120
        %v3122 = vmul.f32 %v3121, %v3044
        %v3123 = vmul.f32 %v3121, %v3045
        %3126 = vrot.lane.b32.xlu0 %v3122, 127
        %v3127 = vpop.permute.xlu0 %3126
        %3128 = vrot.lane.b32.xlu0 %v3123, 127
        %v3129 = vpop.permute.xlu0 %3128
        %v3132 = vadd.f32 %v3072, %v3127
        %v3133 = vadd.f32 %v3073, %v3129
        %s3134 = sadd.s32 %s332, 164
        %s3135 = sld [smem:[#allocation3 + %s3134]]
        %v3136 = vstv %s3135
        %v3137 = vmul.f32 %v3136, %v3044
        %v3138 = vmul.f32 %v3136, %v3045
        %3141 = vrot.lane.b32.xlu0 %v3137, 126
        %v3142 = vpop.permute.xlu0 %3141
        %3143 = vrot.lane.b32.xlu0 %v3138, 126
        %v3144 = vpop.permute.xlu0 %3143
        %v3147 = vadd.f32 %v3087, %v3142
        %v3148 = vadd.f32 %v3088, %v3144
        %s3149 = sadd.s32 %s332, 200
        %s3150 = sld [smem:[#allocation3 + %s3149]]
        %v3151 = vstv %s3150
        %v3152 = vmul.f32 %v3151, %v3044
        %v3153 = vmul.f32 %v3151, %v3045
        %3156 = vrot.lane.b32.xlu0 %v3152, 126
        %v3157 = vpop.permute.xlu0 %3156
        %3158 = vrot.lane.b32.xlu0 %v3153, 126
        %v3159 = vpop.permute.xlu0 %3158
        %v3162 = vadd.f32 %v3102, %v3157
        %v3163 = vadd.f32 %v3103, %v3159
        %s3164 = sadd.s32 %s332, 236
        %s3165 = sld [smem:[#allocation3 + %s3164]]
        %v3166 = vstv %s3165
        %v3167 = vmul.f32 %v3166, %v3044
        %v3168 = vmul.f32 %v3166, %v3045
        %3171 = vrot.lane.b32.xlu0 %v3167, 126
        %v3172 = vpop.permute.xlu0 %3171
        %3173 = vrot.lane.b32.xlu0 %v3168, 126
        %v3174 = vpop.permute.xlu0 %3173
        %v3177 = vadd.f32 %v3117, %v3172
        %v3178 = vadd.f32 %v3118, %v3174
        %s3179 = sadd.s32 %s332, 272
        %s3180 = sld [smem:[#allocation3 + %s3179]]
        %v3181 = vstv %s3180
        %v3182 = vmul.f32 %v3181, %v3044
        %v3183 = vmul.f32 %v3181, %v3045
        %3186 = vrot.lane.b32.xlu0 %v3182, 126
        %v3187 = vpop.permute.xlu0 %3186
        %3188 = vrot.lane.b32.xlu0 %v3183, 126
        %v3189 = vpop.permute.xlu0 %3188
        %v3192 = vadd.f32 %v3132, %v3187
        %v3193 = vadd.f32 %v3133, %v3189
        %v3194 = vld [vmem:[%s315 + $0x1] sm:$0xff]
        %v3195 = vld [vmem:[%s315 + $0x9] sm:$0xff]
        %s3196 = sadd.s32 %s332, 165
        %s3197 = sld [smem:[#allocation3 + %s3196]]
        %v3198 = vstv %s3197
        %v3199 = vmul.f32 %v3198, %v3194
        %v3200 = vmul.f32 %v3198, %v3195
        %v3201 = vadd.f32 %v3147, %v3199
        %v3202 = vadd.f32 %v3148, %v3200
        %s3203 = sadd.s32 %s332, 201
        %s3204 = sld [smem:[#allocation3 + %s3203]]
        %v3205 = vstv %s3204
        %v3206 = vmul.f32 %v3205, %v3194
        %v3207 = vmul.f32 %v3205, %v3195
        %v3208 = vadd.f32 %v3162, %v3206
        %v3209 = vadd.f32 %v3163, %v3207
        %s3210 = sadd.s32 %s332, 237
        %s3211 = sld [smem:[#allocation3 + %s3210]]
        %v3212 = vstv %s3211
        %v3213 = vmul.f32 %v3212, %v3194
        %v3214 = vmul.f32 %v3212, %v3195
        %v3215 = vadd.f32 %v3177, %v3213
        %v3216 = vadd.f32 %v3178, %v3214
        %s3217 = sadd.s32 %s332, 273
        %s3218 = sld [smem:[#allocation3 + %s3217]]
        %v3219 = vstv %s3218
        %v3220 = vmul.f32 %v3219, %v3194
        %v3221 = vmul.f32 %v3219, %v3195
        %v3222 = vadd.f32 %v3192, %v3220
        %v3223 = vadd.f32 %v3193, %v3221
        %s3224 = sadd.s32 %s332, 166
        %s3225 = sld [smem:[#allocation3 + %s3224]]
        %v3226 = vstv %s3225
        %v3227 = vmul.f32 %v3226, %v3194
        %v3228 = vmul.f32 %v3226, %v3195
        %3231 = vrot.lane.b32.xlu0 %v3227, 127
        %v3232 = vpop.permute.xlu0 %3231
        %3233 = vrot.lane.b32.xlu0 %v3228, 127
        %v3234 = vpop.permute.xlu0 %3233
        %v3237 = vadd.f32 %v3201, %v3232
        %v3238 = vadd.f32 %v3202, %v3234
        %s3239 = sadd.s32 %s332, 202
        %s3240 = sld [smem:[#allocation3 + %s3239]]
        %v3241 = vstv %s3240
        %v3242 = vmul.f32 %v3241, %v3194
        %v3243 = vmul.f32 %v3241, %v3195
        %3246 = vrot.lane.b32.xlu0 %v3242, 127
        %v3247 = vpop.permute.xlu0 %3246
        %3248 = vrot.lane.b32.xlu0 %v3243, 127
        %v3249 = vpop.permute.xlu0 %3248
        %v3252 = vadd.f32 %v3208, %v3247
        %v3253 = vadd.f32 %v3209, %v3249
        %s3254 = sadd.s32 %s332, 238
        %s3255 = sld [smem:[#allocation3 + %s3254]]
        %v3256 = vstv %s3255
        %v3257 = vmul.f32 %v3256, %v3194
        %v3258 = vmul.f32 %v3256, %v3195
        %3261 = vrot.lane.b32.xlu0 %v3257, 127
        %v3262 = vpop.permute.xlu0 %3261
        %3263 = vrot.lane.b32.xlu0 %v3258, 127
        %v3264 = vpop.permute.xlu0 %3263
        %v3267 = vadd.f32 %v3215, %v3262
        %v3268 = vadd.f32 %v3216, %v3264
        %s3269 = sadd.s32 %s332, 274
        %s3270 = sld [smem:[#allocation3 + %s3269]]
        %v3271 = vstv %s3270
        %v3272 = vmul.f32 %v3271, %v3194
        %v3273 = vmul.f32 %v3271, %v3195
        %3276 = vrot.lane.b32.xlu0 %v3272, 127
        %v3277 = vpop.permute.xlu0 %3276
        %3278 = vrot.lane.b32.xlu0 %v3273, 127
        %v3279 = vpop.permute.xlu0 %3278
        %v3282 = vadd.f32 %v3222, %v3277
        %v3283 = vadd.f32 %v3223, %v3279
        %s3284 = sadd.s32 %s332, 167
        %s3285 = sld [smem:[#allocation3 + %s3284]]
        %v3286 = vstv %s3285
        %v3287 = vmul.f32 %v3286, %v3194
        %v3288 = vmul.f32 %v3286, %v3195
        %3291 = vrot.lane.b32.xlu0 %v3287, 126
        %v3292 = vpop.permute.xlu0 %3291
        %3293 = vrot.lane.b32.xlu0 %v3288, 126
        %v3294 = vpop.permute.xlu0 %3293
        %v3297 = vadd.f32 %v3237, %v3292
        %v3298 = vadd.f32 %v3238, %v3294
        %s3299 = sadd.s32 %s332, 203
        %s3300 = sld [smem:[#allocation3 + %s3299]]
        %v3301 = vstv %s3300
        %v3302 = vmul.f32 %v3301, %v3194
        %v3303 = vmul.f32 %v3301, %v3195
        %3306 = vrot.lane.b32.xlu0 %v3302, 126
        %v3307 = vpop.permute.xlu0 %3306
        %3308 = vrot.lane.b32.xlu0 %v3303, 126
        %v3309 = vpop.permute.xlu0 %3308
        %v3312 = vadd.f32 %v3252, %v3307
        %v3313 = vadd.f32 %v3253, %v3309
        %s3314 = sadd.s32 %s332, 239
        %s3315 = sld [smem:[#allocation3 + %s3314]]
        %v3316 = vstv %s3315
        %v3317 = vmul.f32 %v3316, %v3194
        %v3318 = vmul.f32 %v3316, %v3195
        %3321 = vrot.lane.b32.xlu0 %v3317, 126
        %v3322 = vpop.permute.xlu0 %3321
        %3323 = vrot.lane.b32.xlu0 %v3318, 126
        %v3324 = vpop.permute.xlu0 %3323
        %v3327 = vadd.f32 %v3267, %v3322
        %v3328 = vadd.f32 %v3268, %v3324
        %s3329 = sadd.s32 %s332, 275
        %s3330 = sld [smem:[#allocation3 + %s3329]]
        %v3331 = vstv %s3330
        %v3332 = vmul.f32 %v3331, %v3194
        %v3333 = vmul.f32 %v3331, %v3195
        %3336 = vrot.lane.b32.xlu0 %v3332, 126
        %v3337 = vpop.permute.xlu0 %3336
        %3338 = vrot.lane.b32.xlu0 %v3333, 126
        %v3339 = vpop.permute.xlu0 %3338
        %v3342 = vadd.f32 %v3282, %v3337
        %v3343 = vadd.f32 %v3283, %v3339
        %v3344 = vld [vmem:[%s315 + $0x2] sm:$0xff]
        %v3345 = vld [vmem:[%s315 + $0xa] sm:$0xff]
        %s3346 = sadd.s32 %s332, 168
        %s3347 = sld [smem:[#allocation3 + %s3346]]
        %v3348 = vstv %s3347
        %v3349 = vmul.f32 %v3348, %v3344
        %v3350 = vmul.f32 %v3348, %v3345
        %v3351 = vadd.f32 %v3297, %v3349
        %v3352 = vadd.f32 %v3298, %v3350
        %s3353 = sadd.s32 %s332, 204
        %s3354 = sld [smem:[#allocation3 + %s3353]]
        %v3355 = vstv %s3354
        %v3356 = vmul.f32 %v3355, %v3344
        %v3357 = vmul.f32 %v3355, %v3345
        %v3358 = vadd.f32 %v3312, %v3356
        %v3359 = vadd.f32 %v3313, %v3357
        %s3360 = sadd.s32 %s332, 240
        %s3361 = sld [smem:[#allocation3 + %s3360]]
        %v3362 = vstv %s3361
        %v3363 = vmul.f32 %v3362, %v3344
        %v3364 = vmul.f32 %v3362, %v3345
        %v3365 = vadd.f32 %v3327, %v3363
        %v3366 = vadd.f32 %v3328, %v3364
        %s3367 = sadd.s32 %s332, 276
        %s3368 = sld [smem:[#allocation3 + %s3367]]
        %v3369 = vstv %s3368
        %v3370 = vmul.f32 %v3369, %v3344
        %v3371 = vmul.f32 %v3369, %v3345
        %v3372 = vadd.f32 %v3342, %v3370
        %v3373 = vadd.f32 %v3343, %v3371
        %s3374 = sadd.s32 %s332, 169
        %s3375 = sld [smem:[#allocation3 + %s3374]]
        %v3376 = vstv %s3375
        %v3377 = vmul.f32 %v3376, %v3344
        %v3378 = vmul.f32 %v3376, %v3345
        %3381 = vrot.lane.b32.xlu0 %v3377, 127
        %v3382 = vpop.permute.xlu0 %3381
        %3383 = vrot.lane.b32.xlu0 %v3378, 127
        %v3384 = vpop.permute.xlu0 %3383
        %v3387 = vadd.f32 %v3351, %v3382
        %v3388 = vadd.f32 %v3352, %v3384
        %s3389 = sadd.s32 %s332, 205
        %s3390 = sld [smem:[#allocation3 + %s3389]]
        %v3391 = vstv %s3390
        %v3392 = vmul.f32 %v3391, %v3344
        %v3393 = vmul.f32 %v3391, %v3345
        %3396 = vrot.lane.b32.xlu0 %v3392, 127
        %v3397 = vpop.permute.xlu0 %3396
        %3398 = vrot.lane.b32.xlu0 %v3393, 127
        %v3399 = vpop.permute.xlu0 %3398
        %v3402 = vadd.f32 %v3358, %v3397
        %v3403 = vadd.f32 %v3359, %v3399
        %s3404 = sadd.s32 %s332, 241
        %s3405 = sld [smem:[#allocation3 + %s3404]]
        %v3406 = vstv %s3405
        %v3407 = vmul.f32 %v3406, %v3344
        %v3408 = vmul.f32 %v3406, %v3345
        %3411 = vrot.lane.b32.xlu0 %v3407, 127
        %v3412 = vpop.permute.xlu0 %3411
        %3413 = vrot.lane.b32.xlu0 %v3408, 127
        %v3414 = vpop.permute.xlu0 %3413
        %v3417 = vadd.f32 %v3365, %v3412
        %v3418 = vadd.f32 %v3366, %v3414
        %s3419 = sadd.s32 %s332, 277
        %s3420 = sld [smem:[#allocation3 + %s3419]]
        %v3421 = vstv %s3420
        %v3422 = vmul.f32 %v3421, %v3344
        %v3423 = vmul.f32 %v3421, %v3345
        %3426 = vrot.lane.b32.xlu0 %v3422, 127
        %v3427 = vpop.permute.xlu0 %3426
        %3428 = vrot.lane.b32.xlu0 %v3423, 127
        %v3429 = vpop.permute.xlu0 %3428
        %v3432 = vadd.f32 %v3372, %v3427
        %v3433 = vadd.f32 %v3373, %v3429
        %s3434 = sadd.s32 %s332, 170
        %s3435 = sld [smem:[#allocation3 + %s3434]]
        %v3436 = vstv %s3435
        %v3437 = vmul.f32 %v3436, %v3344
        %v3438 = vmul.f32 %v3436, %v3345
        %3441 = vrot.lane.b32.xlu0 %v3437, 126
        %v3442 = vpop.permute.xlu0 %3441
        %3443 = vrot.lane.b32.xlu0 %v3438, 126
        %v3444 = vpop.permute.xlu0 %3443
        %v3447 = vadd.f32 %v3387, %v3442
        %v3448 = vadd.f32 %v3388, %v3444
        %s3449 = sadd.s32 %s332, 206
        %s3450 = sld [smem:[#allocation3 + %s3449]]
        %v3451 = vstv %s3450
        %v3452 = vmul.f32 %v3451, %v3344
        %v3453 = vmul.f32 %v3451, %v3345
        %3456 = vrot.lane.b32.xlu0 %v3452, 126
        %v3457 = vpop.permute.xlu0 %3456
        %3458 = vrot.lane.b32.xlu0 %v3453, 126
        %v3459 = vpop.permute.xlu0 %3458
        %v3462 = vadd.f32 %v3402, %v3457
        %v3463 = vadd.f32 %v3403, %v3459
        %s3464 = sadd.s32 %s332, 242
        %s3465 = sld [smem:[#allocation3 + %s3464]]
        %v3466 = vstv %s3465
        %v3467 = vmul.f32 %v3466, %v3344
        %v3468 = vmul.f32 %v3466, %v3345
        %3471 = vrot.lane.b32.xlu0 %v3467, 126
        %v3472 = vpop.permute.xlu0 %3471
        %3473 = vrot.lane.b32.xlu0 %v3468, 126
        %v3474 = vpop.permute.xlu0 %3473
        %v3477 = vadd.f32 %v3417, %v3472
        %v3478 = vadd.f32 %v3418, %v3474
        %s3479 = sadd.s32 %s332, 278
        %s3480 = sld [smem:[#allocation3 + %s3479]]
        %v3481 = vstv %s3480
        %v3482 = vmul.f32 %v3481, %v3344
        %v3483 = vmul.f32 %v3481, %v3345
        %3486 = vrot.lane.b32.xlu0 %v3482, 126
        %v3487 = vpop.permute.xlu0 %3486
        %3488 = vrot.lane.b32.xlu0 %v3483, 126
        %v3489 = vpop.permute.xlu0 %3488
        %v3492 = vadd.f32 %v3432, %v3487
        %v3493 = vadd.f32 %v3433, %v3489
        %v3494 = vld [vmem:[%s329] sm:$0xff]
        %v3495 = vld [vmem:[%s329 + $0x8] sm:$0xff]
        %s3496 = sadd.s32 %s332, 171
        %s3497 = sld [smem:[#allocation3 + %s3496]]
        %v3498 = vstv %s3497
        %v3499 = vmul.f32 %v3498, %v3494
        %v3500 = vmul.f32 %v3498, %v3495
        %v3501 = vadd.f32 %v3447, %v3499
        %v3502 = vadd.f32 %v3448, %v3500
        %s3503 = sadd.s32 %s332, 207
        %s3504 = sld [smem:[#allocation3 + %s3503]]
        %v3505 = vstv %s3504
        %v3506 = vmul.f32 %v3505, %v3494
        %v3507 = vmul.f32 %v3505, %v3495
        %v3508 = vadd.f32 %v3462, %v3506
        %v3509 = vadd.f32 %v3463, %v3507
        %s3510 = sadd.s32 %s332, 243
        %s3511 = sld [smem:[#allocation3 + %s3510]]
        %v3512 = vstv %s3511
        %v3513 = vmul.f32 %v3512, %v3494
        %v3514 = vmul.f32 %v3512, %v3495
        %v3515 = vadd.f32 %v3477, %v3513
        %v3516 = vadd.f32 %v3478, %v3514
        %s3517 = sadd.s32 %s332, 279
        %s3518 = sld [smem:[#allocation3 + %s3517]]
        %v3519 = vstv %s3518
        %v3520 = vmul.f32 %v3519, %v3494
        %v3521 = vmul.f32 %v3519, %v3495
        %v3522 = vadd.f32 %v3492, %v3520
        %v3523 = vadd.f32 %v3493, %v3521
        %s3524 = sadd.s32 %s332, 172
        %s3525 = sld [smem:[#allocation3 + %s3524]]
        %v3526 = vstv %s3525
        %v3527 = vmul.f32 %v3526, %v3494
        %v3528 = vmul.f32 %v3526, %v3495
        %3531 = vrot.lane.b32.xlu0 %v3527, 127
        %v3532 = vpop.permute.xlu0 %3531
        %3533 = vrot.lane.b32.xlu0 %v3528, 127
        %v3534 = vpop.permute.xlu0 %3533
        %v3537 = vadd.f32 %v3501, %v3532
        %v3538 = vadd.f32 %v3502, %v3534
        %s3539 = sadd.s32 %s332, 208
        %s3540 = sld [smem:[#allocation3 + %s3539]]
        %v3541 = vstv %s3540
        %v3542 = vmul.f32 %v3541, %v3494
        %v3543 = vmul.f32 %v3541, %v3495
        %3546 = vrot.lane.b32.xlu0 %v3542, 127
        %v3547 = vpop.permute.xlu0 %3546
        %3548 = vrot.lane.b32.xlu0 %v3543, 127
        %v3549 = vpop.permute.xlu0 %3548
        %v3552 = vadd.f32 %v3508, %v3547
        %v3553 = vadd.f32 %v3509, %v3549
        %s3554 = sadd.s32 %s332, 244
        %s3555 = sld [smem:[#allocation3 + %s3554]]
        %v3556 = vstv %s3555
        %v3557 = vmul.f32 %v3556, %v3494
        %v3558 = vmul.f32 %v3556, %v3495
        %3561 = vrot.lane.b32.xlu0 %v3557, 127
        %v3562 = vpop.permute.xlu0 %3561
        %3563 = vrot.lane.b32.xlu0 %v3558, 127
        %v3564 = vpop.permute.xlu0 %3563
        %v3567 = vadd.f32 %v3515, %v3562
        %v3568 = vadd.f32 %v3516, %v3564
        %s3569 = sadd.s32 %s332, 280
        %s3570 = sld [smem:[#allocation3 + %s3569]]
        %v3571 = vstv %s3570
        %v3572 = vmul.f32 %v3571, %v3494
        %v3573 = vmul.f32 %v3571, %v3495
        %3576 = vrot.lane.b32.xlu0 %v3572, 127
        %v3577 = vpop.permute.xlu0 %3576
        %3578 = vrot.lane.b32.xlu0 %v3573, 127
        %v3579 = vpop.permute.xlu0 %3578
        %v3582 = vadd.f32 %v3522, %v3577
        %v3583 = vadd.f32 %v3523, %v3579
        %s3584 = sadd.s32 %s332, 173
        %s3585 = sld [smem:[#allocation3 + %s3584]]
        %v3586 = vstv %s3585
        %v3587 = vmul.f32 %v3586, %v3494
        %v3588 = vmul.f32 %v3586, %v3495
        %3591 = vrot.lane.b32.xlu0 %v3587, 126
        %v3592 = vpop.permute.xlu0 %3591
        %3593 = vrot.lane.b32.xlu0 %v3588, 126
        %v3594 = vpop.permute.xlu0 %3593
        %v3597 = vadd.f32 %v3537, %v3592
        %v3598 = vadd.f32 %v3538, %v3594
        %s3599 = sadd.s32 %s332, 209
        %s3600 = sld [smem:[#allocation3 + %s3599]]
        %v3601 = vstv %s3600
        %v3602 = vmul.f32 %v3601, %v3494
        %v3603 = vmul.f32 %v3601, %v3495
        %3606 = vrot.lane.b32.xlu0 %v3602, 126
        %v3607 = vpop.permute.xlu0 %3606
        %3608 = vrot.lane.b32.xlu0 %v3603, 126
        %v3609 = vpop.permute.xlu0 %3608
        %v3612 = vadd.f32 %v3552, %v3607
        %v3613 = vadd.f32 %v3553, %v3609
        %s3614 = sadd.s32 %s332, 245
        %s3615 = sld [smem:[#allocation3 + %s3614]]
        %v3616 = vstv %s3615
        %v3617 = vmul.f32 %v3616, %v3494
        %v3618 = vmul.f32 %v3616, %v3495
        %3621 = vrot.lane.b32.xlu0 %v3617, 126
        %v3622 = vpop.permute.xlu0 %3621
        %3623 = vrot.lane.b32.xlu0 %v3618, 126
        %v3624 = vpop.permute.xlu0 %3623
        %v3627 = vadd.f32 %v3567, %v3622
        %v3628 = vadd.f32 %v3568, %v3624
        %s3629 = sadd.s32 %s332, 281
        %s3630 = sld [smem:[#allocation3 + %s3629]]
        %v3631 = vstv %s3630
        %v3632 = vmul.f32 %v3631, %v3494
        %v3633 = vmul.f32 %v3631, %v3495
        %3636 = vrot.lane.b32.xlu0 %v3632, 126
        %v3637 = vpop.permute.xlu0 %3636
        %3638 = vrot.lane.b32.xlu0 %v3633, 126
        %v3639 = vpop.permute.xlu0 %3638
        %v3642 = vadd.f32 %v3582, %v3637
        %v3643 = vadd.f32 %v3583, %v3639
        %v3644 = vld [vmem:[%s329 + $0x1] sm:$0xff]
        %v3645 = vld [vmem:[%s329 + $0x9] sm:$0xff]
        %s3646 = sadd.s32 %s332, 174
        %s3647 = sld [smem:[#allocation3 + %s3646]]
        %v3648 = vstv %s3647
        %v3649 = vmul.f32 %v3648, %v3644
        %v3650 = vmul.f32 %v3648, %v3645
        %v3651 = vadd.f32 %v3597, %v3649
        %v3652 = vadd.f32 %v3598, %v3650
        %s3653 = sadd.s32 %s332, 210
        %s3654 = sld [smem:[#allocation3 + %s3653]]
        %v3655 = vstv %s3654
        %v3656 = vmul.f32 %v3655, %v3644
        %v3657 = vmul.f32 %v3655, %v3645
        %v3658 = vadd.f32 %v3612, %v3656
        %v3659 = vadd.f32 %v3613, %v3657
        %s3660 = sadd.s32 %s332, 246
        %s3661 = sld [smem:[#allocation3 + %s3660]]
        %v3662 = vstv %s3661
        %v3663 = vmul.f32 %v3662, %v3644
        %v3664 = vmul.f32 %v3662, %v3645
        %v3665 = vadd.f32 %v3627, %v3663
        %v3666 = vadd.f32 %v3628, %v3664
        %s3667 = sadd.s32 %s332, 282
        %s3668 = sld [smem:[#allocation3 + %s3667]]
        %v3669 = vstv %s3668
        %v3670 = vmul.f32 %v3669, %v3644
        %v3671 = vmul.f32 %v3669, %v3645
        %v3672 = vadd.f32 %v3642, %v3670
        %v3673 = vadd.f32 %v3643, %v3671
        %s3674 = sadd.s32 %s332, 175
        %s3675 = sld [smem:[#allocation3 + %s3674]]
        %v3676 = vstv %s3675
        %v3677 = vmul.f32 %v3676, %v3644
        %v3678 = vmul.f32 %v3676, %v3645
        %3681 = vrot.lane.b32.xlu0 %v3677, 127
        %v3682 = vpop.permute.xlu0 %3681
        %3683 = vrot.lane.b32.xlu0 %v3678, 127
        %v3684 = vpop.permute.xlu0 %3683
        %v3687 = vadd.f32 %v3651, %v3682
        %v3688 = vadd.f32 %v3652, %v3684
        %s3689 = sadd.s32 %s332, 211
        %s3690 = sld [smem:[#allocation3 + %s3689]]
        %v3691 = vstv %s3690
        %v3692 = vmul.f32 %v3691, %v3644
        %v3693 = vmul.f32 %v3691, %v3645
        %3696 = vrot.lane.b32.xlu0 %v3692, 127
        %v3697 = vpop.permute.xlu0 %3696
        %3698 = vrot.lane.b32.xlu0 %v3693, 127
        %v3699 = vpop.permute.xlu0 %3698
        %v3702 = vadd.f32 %v3658, %v3697
        %v3703 = vadd.f32 %v3659, %v3699
        %s3704 = sadd.s32 %s332, 247
        %s3705 = sld [smem:[#allocation3 + %s3704]]
        %v3706 = vstv %s3705
        %v3707 = vmul.f32 %v3706, %v3644
        %v3708 = vmul.f32 %v3706, %v3645
        %3711 = vrot.lane.b32.xlu0 %v3707, 127
        %v3712 = vpop.permute.xlu0 %3711
        %3713 = vrot.lane.b32.xlu0 %v3708, 127
        %v3714 = vpop.permute.xlu0 %3713
        %v3717 = vadd.f32 %v3665, %v3712
        %v3718 = vadd.f32 %v3666, %v3714
        %s3719 = sadd.s32 %s332, 283
        %s3720 = sld [smem:[#allocation3 + %s3719]]
        %v3721 = vstv %s3720
        %v3722 = vmul.f32 %v3721, %v3644
        %v3723 = vmul.f32 %v3721, %v3645
        %3726 = vrot.lane.b32.xlu0 %v3722, 127
        %v3727 = vpop.permute.xlu0 %3726
        %3728 = vrot.lane.b32.xlu0 %v3723, 127
        %v3729 = vpop.permute.xlu0 %3728
        %v3732 = vadd.f32 %v3672, %v3727
        %v3733 = vadd.f32 %v3673, %v3729
        %s3734 = sadd.s32 %s332, 176
        %s3735 = sld [smem:[#allocation3 + %s3734]]
        %v3736 = vstv %s3735
        %v3737 = vmul.f32 %v3736, %v3644
        %v3738 = vmul.f32 %v3736, %v3645
        %3741 = vrot.lane.b32.xlu0 %v3737, 126
        %v3742 = vpop.permute.xlu0 %3741
        %3743 = vrot.lane.b32.xlu0 %v3738, 126
        %v3744 = vpop.permute.xlu0 %3743
        %v3747 = vadd.f32 %v3687, %v3742
        %v3748 = vadd.f32 %v3688, %v3744
        %s3749 = sadd.s32 %s332, 212
        %s3750 = sld [smem:[#allocation3 + %s3749]]
        %v3751 = vstv %s3750
        %v3752 = vmul.f32 %v3751, %v3644
        %v3753 = vmul.f32 %v3751, %v3645
        %3756 = vrot.lane.b32.xlu0 %v3752, 126
        %v3757 = vpop.permute.xlu0 %3756
        %3758 = vrot.lane.b32.xlu0 %v3753, 126
        %v3759 = vpop.permute.xlu0 %3758
        %v3762 = vadd.f32 %v3702, %v3757
        %v3763 = vadd.f32 %v3703, %v3759
        %s3764 = sadd.s32 %s332, 248
        %s3765 = sld [smem:[#allocation3 + %s3764]]
        %v3766 = vstv %s3765
        %v3767 = vmul.f32 %v3766, %v3644
        %v3768 = vmul.f32 %v3766, %v3645
        %3771 = vrot.lane.b32.xlu0 %v3767, 126
        %v3772 = vpop.permute.xlu0 %3771
        %3773 = vrot.lane.b32.xlu0 %v3768, 126
        %v3774 = vpop.permute.xlu0 %3773
        %v3777 = vadd.f32 %v3717, %v3772
        %v3778 = vadd.f32 %v3718, %v3774
        %s3779 = sadd.s32 %s332, 284
        %s3780 = sld [smem:[#allocation3 + %s3779]]
        %v3781 = vstv %s3780
        %v3782 = vmul.f32 %v3781, %v3644
        %v3783 = vmul.f32 %v3781, %v3645
        %3786 = vrot.lane.b32.xlu0 %v3782, 126
        %v3787 = vpop.permute.xlu0 %3786
        %3788 = vrot.lane.b32.xlu0 %v3783, 126
        %v3789 = vpop.permute.xlu0 %3788
        %v3792 = vadd.f32 %v3732, %v3787
        %v3793 = vadd.f32 %v3733, %v3789
        %v3794 = vld [vmem:[%s329 + $0x2] sm:$0xff]
        %v3795 = vld [vmem:[%s329 + $0xa] sm:$0xff]
        %s3796 = sadd.s32 %s332, 177
        %s3797 = sld [smem:[#allocation3 + %s3796]]
        %v3798 = vstv %s3797
        %v3799 = vmul.f32 %v3798, %v3794
        %v3800 = vmul.f32 %v3798, %v3795
        %v3801 = vadd.f32 %v3747, %v3799
        %v3802 = vadd.f32 %v3748, %v3800
        %s3803 = sadd.s32 %s332, 213
        %s3804 = sld [smem:[#allocation3 + %s3803]]
        %v3805 = vstv %s3804
        %v3806 = vmul.f32 %v3805, %v3794
        %v3807 = vmul.f32 %v3805, %v3795
        %v3808 = vadd.f32 %v3762, %v3806
        %v3809 = vadd.f32 %v3763, %v3807
        %s3810 = sadd.s32 %s332, 249
        %s3811 = sld [smem:[#allocation3 + %s3810]]
        %v3812 = vstv %s3811
        %v3813 = vmul.f32 %v3812, %v3794
        %v3814 = vmul.f32 %v3812, %v3795
        %v3815 = vadd.f32 %v3777, %v3813
        %v3816 = vadd.f32 %v3778, %v3814
        %s3817 = sadd.s32 %s332, 285
        %s3818 = sld [smem:[#allocation3 + %s3817]]
        %v3819 = vstv %s3818
        %v3820 = vmul.f32 %v3819, %v3794
        %v3821 = vmul.f32 %v3819, %v3795
        %v3822 = vadd.f32 %v3792, %v3820
        %v3823 = vadd.f32 %v3793, %v3821
        %s3824 = sadd.s32 %s332, 178
        %s3825 = sld [smem:[#allocation3 + %s3824]]
        %v3826 = vstv %s3825
        %v3827 = vmul.f32 %v3826, %v3794
        %v3828 = vmul.f32 %v3826, %v3795
        %3831 = vrot.lane.b32.xlu0 %v3827, 127
        %v3832 = vpop.permute.xlu0 %3831
        %3833 = vrot.lane.b32.xlu0 %v3828, 127
        %v3834 = vpop.permute.xlu0 %3833
        %v3837 = vadd.f32 %v3801, %v3832
        %v3838 = vadd.f32 %v3802, %v3834
        %s3839 = sadd.s32 %s332, 214
        %s3840 = sld [smem:[#allocation3 + %s3839]]
        %v3841 = vstv %s3840
        %v3842 = vmul.f32 %v3841, %v3794
        %v3843 = vmul.f32 %v3841, %v3795
        %3846 = vrot.lane.b32.xlu0 %v3842, 127
        %v3847 = vpop.permute.xlu0 %3846
        %3848 = vrot.lane.b32.xlu0 %v3843, 127
        %v3849 = vpop.permute.xlu0 %3848
        %v3852 = vadd.f32 %v3808, %v3847
        %v3853 = vadd.f32 %v3809, %v3849
        %s3854 = sadd.s32 %s332, 250
        %s3855 = sld [smem:[#allocation3 + %s3854]]
        %v3856 = vstv %s3855
        %v3857 = vmul.f32 %v3856, %v3794
        %v3858 = vmul.f32 %v3856, %v3795
        %3861 = vrot.lane.b32.xlu0 %v3857, 127
        %v3862 = vpop.permute.xlu0 %3861
        %3863 = vrot.lane.b32.xlu0 %v3858, 127
        %v3864 = vpop.permute.xlu0 %3863
        %v3867 = vadd.f32 %v3815, %v3862
        %v3868 = vadd.f32 %v3816, %v3864
        %s3869 = sadd.s32 %s332, 286
        %s3870 = sld [smem:[#allocation3 + %s3869]]
        %v3871 = vstv %s3870
        %v3872 = vmul.f32 %v3871, %v3794
        %v3873 = vmul.f32 %v3871, %v3795
        %3876 = vrot.lane.b32.xlu0 %v3872, 127
        %v3877 = vpop.permute.xlu0 %3876
        %3878 = vrot.lane.b32.xlu0 %v3873, 127
        %v3879 = vpop.permute.xlu0 %3878
        %v3882 = vadd.f32 %v3822, %v3877
        %v3883 = vadd.f32 %v3823, %v3879
        %s3884 = sadd.s32 %s332, 179
        %s3885 = sld [smem:[#allocation3 + %s3884]]
        %v3886 = vstv %s3885
        %v3887 = vmul.f32 %v3886, %v3794
        %v3888 = vmul.f32 %v3886, %v3795
        %3891 = vrot.lane.b32.xlu0 %v3887, 126
        %v3892 = vpop.permute.xlu0 %3891
        %3893 = vrot.lane.b32.xlu0 %v3888, 126
        %v3894 = vpop.permute.xlu0 %3893
        %v3897 = vadd.f32 %v3837, %v3892
        %v3898 = vadd.f32 %v3838, %v3894
        %s3899 = sadd.s32 %s332, 215
        %s3900 = sld [smem:[#allocation3 + %s3899]]
        %v3901 = vstv %s3900
        %v3902 = vmul.f32 %v3901, %v3794
        %v3903 = vmul.f32 %v3901, %v3795
        %3906 = vrot.lane.b32.xlu0 %v3902, 126
        %v3907 = vpop.permute.xlu0 %3906
        %3908 = vrot.lane.b32.xlu0 %v3903, 126
        %v3909 = vpop.permute.xlu0 %3908
        %v3912 = vadd.f32 %v3852, %v3907
        %v3913 = vadd.f32 %v3853, %v3909
        %s3914 = sadd.s32 %s332, 251
        %s3915 = sld [smem:[#allocation3 + %s3914]]
        %v3916 = vstv %s3915
        %v3917 = vmul.f32 %v3916, %v3794
        %v3918 = vmul.f32 %v3916, %v3795
        %3921 = vrot.lane.b32.xlu0 %v3917, 126
        %v3922 = vpop.permute.xlu0 %3921
        %3923 = vrot.lane.b32.xlu0 %v3918, 126
        %v3924 = vpop.permute.xlu0 %3923
        %v3927 = vadd.f32 %v3867, %v3922
        %v3928 = vadd.f32 %v3868, %v3924
        %s3929 = sadd.s32 %s332, 287
        %s3930 = sld [smem:[#allocation3 + %s3929]]
        %v3931 = vstv %s3930
        %v3932 = vmul.f32 %v3931, %v3794
        %v3933 = vmul.f32 %v3931, %v3795
        %3936 = vrot.lane.b32.xlu0 %v3932, 126
        %v3937 = vpop.permute.xlu0 %3936
        %3938 = vrot.lane.b32.xlu0 %v3933, 126
        %v3939 = vpop.permute.xlu0 %3938
        %v3942 = vadd.f32 %v3882, %v3937
        %v3943 = vadd.f32 %v3883, %v3939
        %s3944 = scalar_lea.vmem %s192, 64 [#allocation8]
        %3945 = vst.msk [vmem:[%s3944] sm:$0xff] %vm2132, %v3897
        %3946 = vst.msk [vmem:[%s3944 + $0x8] sm:$0xff] %vm2132, %v3898
        %s3947 = scalar_lea.vmem %s192, 80 [#allocation8]
        %3948 = vst.msk [vmem:[%s3947] sm:$0xff] %vm2132, %v3912
        %3949 = vst.msk [vmem:[%s3947 + $0x8] sm:$0xff] %vm2132, %v3913
        %s3950 = scalar_lea.vmem %s192, 96 [#allocation8]
        %3951 = vst.msk [vmem:[%s3950] sm:$0xff] %vm2132, %v3927
        %3952 = vst.msk [vmem:[%s3950 + $0x8] sm:$0xff] %vm2132, %v3928
        %s3953 = scalar_lea.vmem %s192, 112 [#allocation8]
        %3954 = vst.msk [vmem:[%s3953] sm:$0xff] %vm2132, %v3942
        %3955 = vst.msk [vmem:[%s3953 + $0x8] sm:$0xff] %vm2132, %v3943
        %s3956 = sand.u32 %s91, 1
        %s3957 = scalar_lea.sflag [#allocation5], %s3956
        %s3958 = sand.u32 %s91, 1
        %s3959 = smul.addr %s3958, 128
        %s3960 = scalar_lea.vmem [#allocation8], %s3959
        // Predicated region
        $region37: #{tpu_custom_call.1} parent=27 // pred_check
          %p3961 = pneg %p101
        $region38: #{tpu_custom_call.1} parent=27 // pred_check_branch
          %3963 = sbr.rel (%p3961) target = $region40
        $region39: #{tpu_custom_call.1} parent=27 // pred_region
          %s3964 = smul.u32 2, %s25
          %s3966 = ssub.s32 2048, 2048
          %3967 = vsyncadd %s3957, %s3966
          %s3968 = smul.addr %s3964, 8
          %s3969 = smul.addr %s24, 16
          %s3970 = sadd.s32 %s3968, %s3969
          %s3971 = smul.addr %s3970, 128
          %s3972 = scalar_lea.hbm %s2, %s3971
          %s3973 = sshll.u32 %s3960, 4
          %s3974 = int_to_ptr.vmem [resolvable:$true] %s3973
          %3979 = dma.vmem_to_hbm [thread:$0]  %s3974, 2048, %s3972, %s3957, 128, 128, 8
        $region40: #{tpu_custom_call.1} parent=27 // pred_fallthru
          _
      $region28: #{tpu_custom_call.1} parent=5 // pred_fallthru
        _
      %p3980 = scmp.le.s32.totalorder 2, %s15
      // Predicated region
      $region41: #{tpu_custom_call.1} parent=5 // pred_check
        %p3981 = pneg %p3980
      $region42: #{tpu_custom_call.1} parent=5 // pred_check_branch
        %3983 = sbr.rel (%p3981) target = $region44
      $region43: #{tpu_custom_call.1} parent=5 // pred_region
        %s3984 = ssub.s32 %s15, 2
        // Predicated region
        $region45: #{tpu_custom_call.1} parent=43 // pred_check
          %p3985 = pneg %p107
        $region46: #{tpu_custom_call.1} parent=43 // pred_check_branch
          %3987 = sbr.rel (%p3985) target = $region48
        $region47: #{tpu_custom_call.1} parent=43 // pred_region
          %s3988 = sand.u32 %s92, 1
          %s3989 = scalar_lea.sflag [#allocation5], %s3988
          %s3990 = sand.u32 %s92, 1
          %s3991 = smul.addr %s3990, 128
          %s3992 = scalar_lea.vmem [#allocation8], %s3991
          %3993 = dma.done %s3989, 2048
        $region48: #{tpu_custom_call.1} parent=43 // pred_fallthru
          _
      $region44: #{tpu_custom_call.1} parent=5 // pred_fallthru
        _
    $region6: #{tpu_custom_call.1} parent=1 // loop_footer
      %s19 = sadd.s32 1, %s15
    $region7: #{tpu_custom_call.1} parent=1 // loop_footer_branch
      %14 = sbr.rel target = $region3
    $region8: #{tpu_custom_call.1} parent=1 // loop_exit
      _
    %3994 = vsyncpa [#allocation4], 1
    %s3995 = scalar_lea.sflag [#allocation4], 1
    %3996 = vsyncpa %s3995, 1
    %3997 = vsyncpa [#allocation5], 1
    %s3998 = scalar_lea.sflag [#allocation5], 1
    %3999 = vsyncpa %s3998, 1
    %4000 = vsyncpa [#allocation6], 1
    %s4001 = scalar_lea.sflag [#allocation6], 1
    %4002 = vsyncpa %s4001, 1

</llo_original>
